<compile_context>
chip_gen: v7x
topology: tpu7x:2x2x1
jax: 0.10.0
libtpu: 0.0.40
codegen_flags: <defaults>
</compile_context>

<pallas_src>
import functools

import jax
import jax.numpy as jnp
from jax.experimental import pallas as pl
from jax.experimental.pallas import tpu as pltpu

_MASK_VALUE = -1e30  # large finite negative (avoids exp(-inf - -inf) = NaN)


# -----------------------------------------------------------------------------
# Tiled linear projection:  y = x @ W + b   over M-blocks of flattened (B*T)
# -----------------------------------------------------------------------------
def _linear_kernel(x_ref, w_ref, b_ref, o_ref):
    acc = jnp.dot(x_ref[...], w_ref[...], preferred_element_type=jnp.float32)
    o_ref[...] = (acc + b_ref[...]).astype(o_ref.dtype)


def _linear(x2d, w, b, *, block_m, out_dtype):
    m_total, c_in = x2d.shape
    c_out = w.shape[1]
    assert m_total % block_m == 0
    return pl.pallas_call(
        _linear_kernel,
        out_shape=jax.ShapeDtypeStruct((m_total, c_out), out_dtype),
        grid_spec=pltpu.PrefetchScalarGridSpec(
            num_scalar_prefetch=0,
            grid=(m_total // block_m,),
            in_specs=[
                pl.BlockSpec((block_m, c_in), lambda m: (m, 0)),
                # Constant index map -> weight fetched once, stays resident (bf16).
                # TODO(synk): for very large C on v7x (64 MiB VMEM) tile c_out
                # with an extra grid axis instead of full residency.
                pl.BlockSpec((c_in, c_out), lambda m: (0, 0)),
                pl.BlockSpec((1, c_out), lambda m: (0, 0)),
            ],
            out_specs=pl.BlockSpec((block_m, c_out), lambda m: (m, 0)),
        ),
        compiler_params=pltpu.CompilerParams(
            dimension_semantics=("parallel",)),
    )(x2d, w, b)


# -----------------------------------------------------------------------------
# Causal flash attention, head-batched, online softmax
# -----------------------------------------------------------------------------
def _flash_attn_kernel(q_ref, k_ref, v_ref, o_ref, m_sc, l_sc, acc_sc,
                       *, block_q, block_k, scale):
    qi = pl.program_id(1)
    ki = pl.program_id(2)

    @pl.when(ki == 0)
    def _init():
        m_sc[...] = jnp.full_like(m_sc, _MASK_VALUE)
        l_sc[...] = jnp.zeros_like(l_sc)
        acc_sc[...] = jnp.zeros_like(acc_sc)

    # Causal block skipping: only process KV blocks intersecting the lower triangle.
    @pl.when(ki * block_k <= qi * block_q + (block_q - 1))
    def _step():
        q = q_ref[0]      # (H, block_q, D) bf16
        k = k_ref[0]      # (H, block_k, D) bf16
        v = v_ref[0]      # (H, block_k, D) bf16

        # Head-batched score matmul (f32 accumulation on the MXU).
        s = jnp.einsum("hqd,hkd->hqk", q, k,
                       preferred_element_type=jnp.float32) * scale

        # Causal mask using global row/col indices of this tile.
        row = qi * block_q + jax.lax.broadcasted_iota(
            jnp.int32, (block_q, block_k), 0)
        col = ki * block_k + jax.lax.broadcasted_iota(
            jnp.int32, (block_q, block_k), 1)
        s = jnp.where((col <= row)[None, :, :], s, _MASK_VALUE)

        m_prev = m_sc[...]
        m_new = jnp.maximum(m_prev, jnp.max(s, axis=-1, keepdims=True))
        alpha = jnp.exp(m_prev - m_new)
        p = jnp.exp(s - m_new)                              # f32
        l_sc[...] = alpha * l_sc[...] + jnp.sum(p, axis=-1, keepdims=True)
        acc_sc[...] = alpha * acc_sc[...] + jnp.einsum(
            "hqk,hkd->hqd", p.astype(v.dtype), v,
            preferred_element_type=jnp.float32)
        m_sc[...] = m_new

    @pl.when(ki == pl.num_programs(2) - 1)
    def _finalize():
        inv_l = pl.reciprocal(l_sc[...], approx=True)       # EUP slot, ~free
        o_ref[0] = (acc_sc[...] * inv_l).astype(o_ref.dtype)


def _flash_attention(q, k, v, *, block_q, block_k, scale):
    B, H, T, D = q.shape
    assert T % block_q == 0 and T % block_k == 0
    kernel = functools.partial(_flash_attn_kernel, block_q=block_q,
                               block_k=block_k, scale=scale)
    return pl.pallas_call(
        kernel,
        out_shape=jax.ShapeDtypeStruct((B, H, T, D), q.dtype),
        grid_spec=pltpu.PrefetchScalarGridSpec(
            num_scalar_prefetch=0,
            grid=(B, T // block_q, T // block_k),
            in_specs=[
                pl.BlockSpec((1, H, block_q, D), lambda b, qi, ki: (b, 0, qi, 0)),
                pl.BlockSpec((1, H, block_k, D), lambda b, qi, ki: (b, 0, ki, 0)),
                pl.BlockSpec((1, H, block_k, D), lambda b, qi, ki: (b, 0, ki, 0)),
            ],
            out_specs=pl.BlockSpec((1, H, block_q, D),
                                   lambda b, qi, ki: (b, 0, qi, 0)),
            scratch_shapes=[
                pltpu.VMEM((H, block_q, 1), jnp.float32),   # running max
                pltpu.VMEM((H, block_q, 1), jnp.float32),   # running sum
                pltpu.VMEM((H, block_q, D), jnp.float32),   # output accumulator
            ],
        ),
        compiler_params=pltpu.CompilerParams(
            dimension_semantics=("parallel", "parallel", "arbitrary")),
    )(q, k, v)


# -----------------------------------------------------------------------------
# Full forward (eval mode): qkv projection -> causal MHA -> output projection
# -----------------------------------------------------------------------------
def multi_head_attention(x, wqkv_t, bqkv, wout_t, bout, *, num_heads):
    """x: (B, T, C) f32; wqkv_t: (C, 3C); bqkv: (3C,); wout_t: (C, C); bout: (C,)."""
    B, T, C = x.shape
    assert C % num_heads == 0
    D = C // num_heads
    M = B * T

    # bf16 operands into the MXU; biases / accumulation stay f32.
    x2d = x.reshape(M, C).astype(jnp.bfloat16)
    wqkv_b = wqkv_t.astype(jnp.bfloat16)
    wout_b = wout_t.astype(jnp.bfloat16)
    bqkv2 = bqkv.reshape(1, 3 * C).astype(jnp.float32)
    bout2 = bout.reshape(1, C).astype(jnp.float32)

    block_m = 256 if M % 256 == 0 else (128 if M % 128 == 0 else M)
    block_q = min(128, T)
    block_k = min(128, T)

    # 1) QKV projection over M-tiles of flattened rows.
    qkv = _linear(x2d, wqkv_b, bqkv2, block_m=block_m,
                  out_dtype=jnp.bfloat16)                     # (M, 3C)

    # Wrapper-side layout plumbing to head-major (B, H, T, D).
    qkv = qkv.reshape(B, T, 3, num_heads, D).transpose(2, 0, 3, 1, 4)
    q, k, v = qkv[0], qkv[1], qkv[2]                          # (B, H, T, D) bf16

    # 2) Causal flash attention.
    y = _flash_attention(q, k, v, block_q=block_q, block_k=block_k,
                         scale=D ** -0.5)                     # (B, H, T, D) bf16

    # 3) Output projection over M-tiles.
    y2d = y.transpose(0, 2, 1, 3).reshape(M, C)               # (M, C) bf16
    out = _linear(y2d, wout_b, bout2, block_m=block_m,
                  out_dtype=x.dtype)                          # (M, C) f32
    # TODO(synk): dropout (p=0.5, training mode) omitted — eval-mode forward.
    return out.reshape(B, T, C)


# -----------------------------------------------------------------------------
# Pure-JAX reference mirroring the PyTorch forward (eval mode) with the same
# bf16-operand / f32-accumulation precision policy as the kernels.
# -----------------------------------------------------------------------------
def reference_mha(x, wqkv_t, bqkv, wout_t, bout, *, num_heads):
    B, T, C = x.shape
    D = C // num_heads
    xb = x.reshape(B * T, C).astype(jnp.bfloat16)
    qkv = jnp.dot(xb, wqkv_t.astype(jnp.bfloat16),
                  preferred_element_type=jnp.float32) + bqkv
    qkv = qkv.astype(jnp.bfloat16).reshape(B, T, 3 * C)
    q, k, v = jnp.split(qkv, 3, axis=-1)

    def to_heads(t):
        return t.reshape(B, T, num_heads, D).transpose(0, 2, 1, 3)
    q, k, v = map(to_heads, (q, k, v))

    s = jnp.einsum("bhqd,bhkd->bhqk", q, k,
                   preferred_element_type=jnp.float32) * (D ** -0.5)
    mask = jnp.tril(jnp.ones((T, T), bool))
    s = jnp.where(mask[None, None], s, -jnp.inf)
    w = jax.nn.softmax(s, axis=-1)
    y = jnp.einsum("bhqk,bhkd->bhqd", w.astype(jnp.bfloat16), v,
                   preferred_element_type=jnp.float32)
    y = y.astype(jnp.bfloat16).transpose(0, 2, 1, 3).reshape(B * T, C)
    out = jnp.dot(y, wout_t.astype(jnp.bfloat16),
                  preferred_element_type=jnp.float32) + bout
    return out.reshape(B, T, C).astype(x.dtype)


if __name__ == "__main__":
    # SEQ_LEN = 256 in the module spec; embed_dim=256, num_heads=2 -> head_dim=128
    # keeps every lane axis >= 128 wide (lane-dense loads/stores).
    B, T, C, H = 2, 256, 256, 2

    key = jax.random.PRNGKey(0)
    kx, k1, k2, k3, k4 = jax.random.split(key, 5)

    x = jax.random.normal(kx, (B, T, C), dtype=jnp.float32)
    # PyTorch Linear weights stored pre-transposed as (in, out) for x @ W.
    wqkv_t = jax.random.normal(k1, (C, 3 * C), dtype=jnp.float32) * (C ** -0.5)
    bqkv = jax.random.normal(k2, (3 * C,), dtype=jnp.float32) * 0.02
    wout_t = jax.random.normal(k3, (C, C), dtype=jnp.float32) * (C ** -0.5)
    bout = jax.random.normal(k4, (C,), dtype=jnp.float32) * 0.02

    mha = jax.jit(functools.partial(multi_head_attention, num_heads=H))
    out = jax.block_until_ready(mha(x, wqkv_t, bqkv, wout_t, bout))

    ref = reference_mha(x, wqkv_t, bqkv, wout_t, bout, num_heads=H)
    assert out.shape == (B, T, C)
    # bf16 MXU operands + flash-softmax reordering -> compare at bf16-level tolerance.
    assert jnp.allclose(out, ref, atol=3e-2, rtol=3e-2), "mismatch vs reference"

    print("KERNEL_OK")
</pallas_src>

<mosaic_0001>
module attributes {stable_mosaic.version = 11 : i64} {
  func.func @_linear_kernel(%arg0: i32, %arg1: memref<256x256xbf16, #tpu.memory_space<vmem>>, %arg2: memref<256x768xbf16, #tpu.memory_space<vmem>>, %arg3: memref<1x768xf32, #tpu.memory_space<vmem>>, %arg4: memref<256x768xbf16, #tpu.memory_space<vmem>>) attributes {dimension_semantics = [#tpu.dimension_semantics<parallel>], iteration_bounds = array<i64: 2>, scalar_prefetch = 0 : i64, scratch_operands = 0 : i64, tpu.core_type = #tpu.core_type<tc>, window_params = [{transform_indices = @transform_0, window_bounds = array<i64: 256, 256>}, {pipeline_mode = #tpu.pipeline_mode<synchronous>, transform_indices = @transform_1, window_bounds = array<i64: 256, 768>}, {pipeline_mode = #tpu.pipeline_mode<synchronous>, transform_indices = @transform_2, window_bounds = array<i64: 1, 768>}, {transform_indices = @transform_3, window_bounds = array<i64: 256, 768>}]} {
    %c0 = arith.constant 0 : index
    %c0_0 = arith.constant 0 : index
    %0 = vector.load %arg1[%c0, %c0_0] : memref<256x256xbf16, #tpu.memory_space<vmem>>, vector<256x256xbf16>
    %c0_1 = arith.constant 0 : index
    %c0_2 = arith.constant 0 : index
    %1 = vector.load %arg2[%c0_1, %c0_2] : memref<256x768xbf16, #tpu.memory_space<vmem>>, vector<256x768xbf16>
    %cst = arith.constant dense<0.000000e+00> : vector<256x768xf32>
    %2 = tpu.matmul %0, %1, %cst {dimension_numbers = #tpu.dot_dimension_numbers<[1], [0], [0], [1], [0, 0, 1, 1], [], []>} : vector<256x256xbf16>, vector<256x768xbf16>, vector<256x768xf32> -> vector<256x768xf32>
    %c0_3 = arith.constant 0 : index
    %c0_4 = arith.constant 0 : index
    %3 = vector.load %arg3[%c0_3, %c0_4] : memref<1x768xf32, #tpu.memory_space<vmem>>, vector<1x768xf32>
    %4 = vector.broadcast %3 : vector<1x768xf32> to vector<256x768xf32>
    %5 = arith.addf %2, %4 : vector<256x768xf32>
    %6 = arith.truncf %5 : vector<256x768xf32> to vector<256x768xbf16>
    %c0_5 = arith.constant 0 : index
    %c0_6 = arith.constant 0 : index
    %7 = vector.load %arg4[%c0_5, %c0_6] : memref<256x768xbf16, #tpu.memory_space<vmem>>, vector<256x768xbf16>
    tpu.vector_store %arg4[%c0_5, %c0_6], %6 {strides = array<i32>} : memref<256x768xbf16, #tpu.memory_space<vmem>>, vector<256x768xbf16>,
    return
  }
  func.func @transform_0(%arg0: i32) -> (i32, i32) {
    %c0_i32 = arith.constant 0 : i32
    %c0_i32_0 = arith.constant 0 : i32
    return %arg0, %c0_i32 : i32, i32
  }
  func.func @transform_1(%arg0: i32) -> (i32, i32) {
    %c0_i32 = arith.constant 0 : i32
    %c0_i32_0 = arith.constant 0 : i32
    %c0_i32_1 = arith.constant 0 : i32
    return %c0_i32, %c0_i32_0 : i32, i32
  }
  func.func @transform_2(%arg0: i32) -> (i32, i32) {
    %c0_i32 = arith.constant 0 : i32
    %c0_i32_0 = arith.constant 0 : i32
    %c0_i32_1 = arith.constant 0 : i32
    return %c0_i32, %c0_i32_0 : i32, i32
  }
  func.func @transform_3(%arg0: i32) -> (i32, i32) {
    %c0_i32 = arith.constant 0 : i32
    %c0_i32_0 = arith.constant 0 : i32
    return %arg0, %c0_i32 : i32, i32
  }
}

module attributes {stable_mosaic.version = 11 : i64} {
  func.func @_flash_attn_kernel(%arg0: i32, %arg1: i32, %arg2: i32, %arg3: memref<1x2x128x128xbf16, #tpu.memory_space<vmem>>, %arg4: memref<1x2x128x128xbf16, #tpu.memory_space<vmem>>, %arg5: memref<1x2x128x128xbf16, #tpu.memory_space<vmem>>, %arg6: memref<1x2x128x128xbf16, #tpu.memory_space<vmem>>, %arg7: memref<2x128x1xf32, #tpu.memory_space<vmem>>, %arg8: memref<2x128x1xf32, #tpu.memory_space<vmem>>, %arg9: memref<2x128x128xf32, #tpu.memory_space<vmem>>) attributes {dimension_semantics = [#tpu.dimension_semantics<parallel>, #tpu.dimension_semantics<parallel>, #tpu.dimension_semantics<arbitrary>], iteration_bounds = array<i64: 2, 2, 2>, scalar_prefetch = 0 : i64, scratch_operands = 3 : i64, tpu.core_type = #tpu.core_type<tc>, window_params = [{transform_indices = @transform_0, window_bounds = array<i64: 1, 2, 128, 128>}, {transform_indices = @transform_1, window_bounds = array<i64: 1, 2, 128, 128>}, {transform_indices = @transform_2, window_bounds = array<i64: 1, 2, 128, 128>}, {transform_indices = @transform_3, window_bounds = array<i64: 1, 2, 128, 128>}]} {
    %c0_i32 = arith.constant 0 : i32
    %0 = arith.cmpi eq, %arg2, %c0_i32 : i32
    %1 = arith.extui %0 : i1 to i32
    %c0_i32_0 = arith.constant 0 : i32
    %2 = arith.cmpi ne, %1, %c0_i32_0 : i32
    scf.if %2 {
      %cst = arith.constant -1.000000e+30 : f32
      %12 = vector.broadcast %cst : f32 to vector<2x128x1xf32>
      %c0 = arith.constant 0 : index
      %c0_4 = arith.constant 0 : index
      %c0_5 = arith.constant 0 : index
      %13 = vector.load %arg7[%c0, %c0_4, %c0_5] : memref<2x128x1xf32, #tpu.memory_space<vmem>>, vector<2x128x1xf32>
      tpu.vector_store %arg7[%c0, %c0_4, %c0_5], %12 {strides = array<i32>} : memref<2x128x1xf32, #tpu.memory_space<vmem>>, vector<2x128x1xf32>,
      %cst_6 = arith.constant 0.000000e+00 : f32
      %14 = vector.broadcast %cst_6 : f32 to vector<2x128x1xf32>
      %c0_7 = arith.constant 0 : index
      %c0_8 = arith.constant 0 : index
      %c0_9 = arith.constant 0 : index
      %15 = vector.load %arg8[%c0_7, %c0_8, %c0_9] : memref<2x128x1xf32, #tpu.memory_space<vmem>>, vector<2x128x1xf32>
      tpu.vector_store %arg8[%c0_7, %c0_8, %c0_9], %14 {strides = array<i32>} : memref<2x128x1xf32, #tpu.memory_space<vmem>>, vector<2x128x1xf32>,
      %cst_10 = arith.constant 0.000000e+00 : f32
      %16 = vector.broadcast %cst_10 : f32 to vector<2x128x128xf32>
      %c0_11 = arith.constant 0 : index
      %c0_12 = arith.constant 0 : index
      %c0_13 = arith.constant 0 : index
      %17 = vector.load %arg9[%c0_11, %c0_12, %c0_13] : memref<2x128x128xf32, #tpu.memory_space<vmem>>, vector<2x128x128xf32>
      tpu.vector_store %arg9[%c0_11, %c0_12, %c0_13], %16 {strides = array<i32>} : memref<2x128x128xf32, #tpu.memory_space<vmem>>, vector<2x128x128xf32>,
    } else {
    }
    %c128_i32 = arith.constant 128 : i32
    %3 = arith.muli %arg2, %c128_i32 : i32
    %c128_i32_1 = arith.constant 128 : i32
    %4 = arith.muli %arg1, %c128_i32_1 : i32
    %c127_i32 = arith.constant 127 : i32
    %5 = arith.addi %4, %c127_i32 : i32
    %6 = arith.cmpi sle, %3, %5 : i32
    %7 = arith.extui %6 : i1 to i32
    %c0_i32_2 = arith.constant 0 : i32
    %8 = arith.cmpi ne, %7, %c0_i32_2 : i32
    scf.if %8 {
      %c0 = arith.constant 0 : index
      %c0_4 = arith.constant 0 : index
      %c0_5 = arith.constant 0 : index
      %c0_6 = arith.constant 0 : index
      %12 = vector.load %arg3[%c0, %c0_4, %c0_5, %c0_6] : memref<1x2x128x128xbf16, #tpu.memory_space<vmem>>, vector<1x2x128x128xbf16>
      %13 = vector.shape_cast %12 : vector<1x2x128x128xbf16> to vector<2x128x128xbf16>
      %c0_7 = arith.constant 0 : index
      %c0_8 = arith.constant 0 : index
      %c0_9 = arith.constant 0 : index
      %c0_10 = arith.constant 0 : index
      %14 = vector.load %arg4[%c0_7, %c0_8, %c0_9, %c0_10] : memref<1x2x128x128xbf16, #tpu.memory_space<vmem>>, vector<1x2x128x128xbf16>
      %15 = vector.shape_cast %14 : vector<1x2x128x128xbf16> to vector<2x128x128xbf16>
      %c0_11 = arith.constant 0 : index
      %c0_12 = arith.constant 0 : index
      %c0_13 = arith.constant 0 : index
      %c0_14 = arith.constant 0 : index
      %16 = vector.load %arg5[%c0_11, %c0_12, %c0_13, %c0_14] : memref<1x2x128x128xbf16, #tpu.memory_space<vmem>>, vector<1x2x128x128xbf16>
      %17 = vector.shape_cast %16 : vector<1x2x128x128xbf16> to vector<2x128x128xbf16>
      "tpu.trace_start"() <{level = 10 : i32, message = "hqd,hkd->hqk"}> : () -> ()
      %cst = arith.constant dense<0.000000e+00> : vector<2x128x128xf32>
      %18 = tpu.matmul %13, %15, %cst {dimension_numbers = #tpu.dot_dimension_numbers<[2], [2], [1], [1], [0, 0, 0, 1, 1, 1], [0], [0]>} : vector<2x128x128xbf16>, vector<2x128x128xbf16>, vector<2x128x128xf32> -> vector<2x128x128xf32>
      "tpu.trace_stop"() : () -> ()
      %cst_15 = arith.constant 0.0883883461 : f32
      %19 = vector.broadcast %cst_15 : f32 to vector<2x128x128xf32>
      %20 = arith.mulf %18, %19 : vector<2x128x128xf32>
      %c128_i32_16 = arith.constant 128 : i32
      %21 = arith.muli %arg1, %c128_i32_16 : i32
      %22 = tpu.iota {dimensions = array<i32: 0>} : vector<128x128xi32>
      %23 = vector.broadcast %21 : i32 to vector<128x128xi32>
      %24 = arith.addi %23, %22 : vector<128x128xi32>
      %c128_i32_17 = arith.constant 128 : i32
      %25 = arith.muli %arg2, %c128_i32_17 : i32
      %26 = tpu.iota {dimensions = array<i32: 1>} : vector<128x128xi32>
      %27 = vector.broadcast %25 : i32 to vector<128x128xi32>
      %28 = arith.addi %27, %26 : vector<128x128xi32>
      %29 = arith.cmpi sle, %28, %24 : vector<128x128xi32>
      %30 = vector.shape_cast %29 : vector<128x128xi1> to vector<1x128x128xi1>
      %cst_18 = arith.constant -1.000000e+30 : f32
      %31 = vector.shape_cast %30 : vector<1x128x128xi1> to vector<1x128x128xi1>
      %32 = vector.broadcast %31 : vector<1x128x128xi1> to vector<2x128x128xi1>
      %33 = vector.broadcast %cst_18 : f32 to vector<2x128x128xf32>
      %34 = arith.select %32, %20, %33 : vector<2x128x128xi1>, vector<2x128x128xf32>
      %c0_19 = arith.constant 0 : index
      %c0_20 = arith.constant 0 : index
      %c0_21 = arith.constant 0 : index
      %35 = vector.load %arg7[%c0_19, %c0_20, %c0_21] : memref<2x128x1xf32, #tpu.memory_space<vmem>>, vector<2x128x1xf32>
      %cst_22 = arith.constant dense<0xFF800000> : vector<2x128xf32>
      %36 = vector.multi_reduction <maximumf>, %34, %cst_22 [2] : vector<2x128x128xf32> to vector<2x128xf32>
      %37 = vector.shape_cast %36 : vector<2x128xf32> to vector<2x128x1xf32>
      %38 = arith.maximumf %35, %37 : vector<2x128x1xf32>
      %39 = arith.subf %35, %38 : vector<2x128x1xf32>
      %40 = math.exp %39 : vector<2x128x1xf32>
      %41 = vector.broadcast %38 : vector<2x128x1xf32> to vector<2x128x128xf32>
      %42 = arith.subf %34, %41 : vector<2x128x128xf32>
      %43 = math.exp %42 : vector<2x128x128xf32>
      %c0_23 = arith.constant 0 : index
      %c0_24 = arith.constant 0 : index
      %c0_25 = arith.constant 0 : index
      %44 = vector.load %arg8[%c0_23, %c0_24, %c0_25] : memref<2x128x1xf32, #tpu.memory_space<vmem>>, vector<2x128x1xf32>
      %45 = arith.mulf %40, %44 : vector<2x128x1xf32>
      %cst_26 = arith.constant dense<0.000000e+00> : vector<2x128xf32>
      %46 = vector.multi_reduction <add>, %43, %cst_26 [2] : vector<2x128x128xf32> to vector<2x128xf32>
      %47 = vector.shape_cast %46 : vector<2x128xf32> to vector<2x128x1xf32>
      %48 = arith.addf %45, %47 : vector<2x128x1xf32>
      %c0_27 = arith.constant 0 : index
      %c0_28 = arith.constant 0 : index
      %c0_29 = arith.constant 0 : index
      %49 = vector.load %arg8[%c0_27, %c0_28, %c0_29] : memref<2x128x1xf32, #tpu.memory_space<vmem>>, vector<2x128x1xf32>
      tpu.vector_store %arg8[%c0_27, %c0_28, %c0_29], %48 {strides = array<i32>} : memref<2x128x1xf32, #tpu.memory_space<vmem>>, vector<2x128x1xf32>,
      %c0_30 = arith.constant 0 : index
      %c0_31 = arith.constant 0 : index
      %c0_32 = arith.constant 0 : index
      %50 = vector.load %arg9[%c0_30, %c0_31, %c0_32] : memref<2x128x128xf32, #tpu.memory_space<vmem>>, vector<2x128x128xf32>
      %51 = vector.broadcast %40 : vector<2x128x1xf32> to vector<2x128x128xf32>
      %52 = arith.mulf %51, %50 : vector<2x128x128xf32>
      %53 = arith.truncf %43 : vector<2x128x128xf32> to vector<2x128x128xbf16>
      "tpu.trace_start"() <{level = 10 : i32, message = "hqk,hkd->hqd"}> : () -> ()
      %cst_33 = arith.constant dense<0.000000e+00> : vector<2x128x128xf32>
      %54 = tpu.matmul %53, %17, %cst_33 {dimension_numbers = #tpu.dot_dimension_numbers<[2], [1], [1], [2], [0, 0, 0, 1, 1, 2], [0], [0]>} : vector<2x128x128xbf16>, vector<2x128x128xbf16>, vector<2x128x128xf32> -> vector<2x128x128xf32>
      "tpu.trace_stop"() : () -> ()
      %55 = arith.addf %52, %54 : vector<2x128x128xf32>
      %c0_34 = arith.constant 0 : index
      %c0_35 = arith.constant 0 : index
      %c0_36 = arith.constant 0 : index
      %56 = vector.load %arg9[%c0_34, %c0_35, %c0_36] : memref<2x128x128xf32, #tpu.memory_space<vmem>>, vector<2x128x128xf32>
      tpu.vector_store %arg9[%c0_34, %c0_35, %c0_36], %55 {strides = array<i32>} : memref<2x128x128xf32, #tpu.memory_space<vmem>>, vector<2x128x128xf32>,
      %c0_37 = arith.constant 0 : index
      %c0_38 = arith.constant 0 : index
      %c0_39 = arith.constant 0 : index
      %57 = vector.load %arg7[%c0_37, %c0_38, %c0_39] : memref<2x128x1xf32, #tpu.memory_space<vmem>>, vector<2x128x1xf32>
      tpu.vector_store %arg7[%c0_37, %c0_38, %c0_39], %38 {strides = array<i32>} : memref<2x128x1xf32, #tpu.memory_space<vmem>>, vector<2x128x1xf32>,
    } else {
    }
    %c1_i32 = arith.constant 1 : i32
    %9 = arith.cmpi eq, %arg2, %c1_i32 : i32
    %10 = arith.extui %9 : i1 to i32
    %c0_i32_3 = arith.constant 0 : i32
    %11 = arith.cmpi ne, %10, %c0_i32_3 : i32
    scf.if %11 {
      %c0 = arith.constant 0 : index
      %c0_4 = arith.constant 0 : index
      %c0_5 = arith.constant 0 : index
      %12 = vector.load %arg8[%c0, %c0_4, %c0_5] : memref<2x128x1xf32, #tpu.memory_space<vmem>>, vector<2x128x1xf32>
      %13 = tpu.reciprocal %12 {approx = true} : vector<2x128x1xf32> -> vector<2x128x1xf32>
      %c0_6 = arith.constant 0 : index
      %c0_7 = arith.constant 0 : index
      %c0_8 = arith.constant 0 : index
      %14 = vector.load %arg9[%c0_6, %c0_7, %c0_8] : memref<2x128x128xf32, #tpu.memory_space<vmem>>, vector<2x128x128xf32>
      %15 = vector.broadcast %13 : vector<2x128x1xf32> to vector<2x128x128xf32>
      %16 = arith.mulf %14, %15 : vector<2x128x128xf32>
      %17 = arith.truncf %16 : vector<2x128x128xf32> to vector<2x128x128xbf16>
      %c0_9 = arith.constant 0 : index
      %c0_10 = arith.constant 0 : index
      %c0_11 = arith.constant 0 : index
      %c0_12 = arith.constant 0 : index
      %18 = vector.load %arg6[%c0_9, %c0_10, %c0_11, %c0_12] : memref<1x2x128x128xbf16, #tpu.memory_space<vmem>>, vector<1x2x128x128xbf16>
      %19 = vector.shape_cast %18 : vector<1x2x128x128xbf16> to vector<2x128x128xbf16>
      %20 = vector.shape_cast %17 : vector<2x128x128xbf16> to vector<1x2x128x128xbf16>
      tpu.vector_store %arg6[%c0_9, %c0_10, %c0_11, %c0_12], %20 {strides = array<i32>} : memref<1x2x128x128xbf16, #tpu.memory_space<vmem>>, vector<1x2x128x128xbf16>,
    } else {
    }
    return
  }
  func.func @transform_0(%arg0: i32, %arg1: i32, %arg2: i32) -> (i32, i32, i32, i32) {
    %c0_i32 = arith.constant 0 : i32
    %c0_i32_0 = arith.constant 0 : i32
    %c0_i32_1 = arith.constant 0 : i32
    return %arg0, %c0_i32, %arg1, %c0_i32_0 : i32, i32, i32, i32
  }
  func.func @transform_1(%arg0: i32, %arg1: i32, %arg2: i32) -> (i32, i32, i32, i32) {
    %c0_i32 = arith.constant 0 : i32
    %c0_i32_0 = arith.constant 0 : i32
    %c0_i32_1 = arith.constant 0 : i32
    return %arg0, %c0_i32, %arg2, %c0_i32_0 : i32, i32, i32, i32
  }
  func.func @transform_2(%arg0: i32, %arg1: i32, %arg2: i32) -> (i32, i32, i32, i32) {
    %c0_i32 = arith.constant 0 : i32
    %c0_i32_0 = arith.constant 0 : i32
    %c0_i32_1 = arith.constant 0 : i32
    return %arg0, %c0_i32, %arg2, %c0_i32_0 : i32, i32, i32, i32
  }
  func.func @transform_3(%arg0: i32, %arg1: i32, %arg2: i32) -> (i32, i32, i32, i32) {
    %c0_i32 = arith.constant 0 : i32
    %c0_i32_0 = arith.constant 0 : i32
    %c0_i32_1 = arith.constant 0 : i32
    return %arg0, %c0_i32, %arg1, %c0_i32_0 : i32, i32, i32, i32
  }
}

module attributes {stable_mosaic.version = 11 : i64} {
  func.func @_linear_kernel(%arg0: i32, %arg1: memref<256x256xbf16, #tpu.memory_space<vmem>>, %arg2: memref<256x256xbf16, #tpu.memory_space<vmem>>, %arg3: memref<1x256xf32, #tpu.memory_space<vmem>>, %arg4: memref<256x256xf32, #tpu.memory_space<vmem>>) attributes {dimension_semantics = [#tpu.dimension_semantics<parallel>], iteration_bounds = array<i64: 2>, scalar_prefetch = 0 : i64, scratch_operands = 0 : i64, tpu.core_type = #tpu.core_type<tc>, window_params = [{transform_indices = @transform_0, window_bounds = array<i64: 256, 256>}, {pipeline_mode = #tpu.pipeline_mode<synchronous>, transform_indices = @transform_1, window_bounds = array<i64: 256, 256>}, {pipeline_mode = #tpu.pipeline_mode<synchronous>, transform_indices = @transform_2, window_bounds = array<i64: 1, 256>}, {transform_indices = @transform_3, window_bounds = array<i64: 256, 256>}]} {
    %c0 = arith.constant 0 : index
    %c0_0 = arith.constant 0 : index
    %0 = vector.load %arg1[%c0, %c0_0] : memref<256x256xbf16, #tpu.memory_space<vmem>>, vector<256x256xbf16>
    %c0_1 = arith.constant 0 : index
    %c0_2 = arith.constant 0 : index
    %1 = vector.load %arg2[%c0_1, %c0_2] : memref<256x256xbf16, #tpu.memory_space<vmem>>, vector<256x256xbf16>
    %cst = arith.constant dense<0.000000e+00> : vector<256x256xf32>
    %2 = tpu.matmul %0, %1, %cst {dimension_numbers = #tpu.dot_dimension_numbers<[1], [0], [0], [1], [0, 0, 1, 1], [], []>} : vector<256x256xbf16>, vector<256x256xbf16>, vector<256x256xf32> -> vector<256x256xf32>
    %c0_3 = arith.constant 0 : index
    %c0_4 = arith.constant 0 : index
    %3 = vector.load %arg3[%c0_3, %c0_4] : memref<1x256xf32, #tpu.memory_space<vmem>>, vector<1x256xf32>
    %4 = vector.broadcast %3 : vector<1x256xf32> to vector<256x256xf32>
    %5 = arith.addf %2, %4 : vector<256x256xf32>
    %c0_5 = arith.constant 0 : index
    %c0_6 = arith.constant 0 : index
    %6 = vector.load %arg4[%c0_5, %c0_6] : memref<256x256xf32, #tpu.memory_space<vmem>>, vector<256x256xf32>
    tpu.vector_store %arg4[%c0_5, %c0_6], %5 {strides = array<i32>} : memref<256x256xf32, #tpu.memory_space<vmem>>, vector<256x256xf32>,
    return
  }
  func.func @transform_0(%arg0: i32) -> (i32, i32) {
    %c0_i32 = arith.constant 0 : i32
    %c0_i32_0 = arith.constant 0 : i32
    return %arg0, %c0_i32 : i32, i32
  }
  func.func @transform_1(%arg0: i32) -> (i32, i32) {
    %c0_i32 = arith.constant 0 : i32
    %c0_i32_0 = arith.constant 0 : i32
    %c0_i32_1 = arith.constant 0 : i32
    return %c0_i32, %c0_i32_0 : i32, i32
  }
  func.func @transform_2(%arg0: i32) -> (i32, i32) {
    %c0_i32 = arith.constant 0 : i32
    %c0_i32_0 = arith.constant 0 : i32
    %c0_i32_1 = arith.constant 0 : i32
    return %c0_i32, %c0_i32_0 : i32, i32
  }
  func.func @transform_3(%arg0: i32) -> (i32, i32) {
    %c0_i32 = arith.constant 0 : i32
    %c0_i32_0 = arith.constant 0 : i32
    return %arg0, %c0_i32 : i32, i32
  }
}

</mosaic_0001>

<llo_original>
// kernel: multi_head_attention.3
$region0: #{multi_head_attention.3}
  #allocation0 [shape = 'u32[]', space=smem, size = 0x4, offset = 0x4, fixed_abs, tag = 'smem constant byte address 0x4 - core index']
  #allocation1 [shape = 'u32[144,128]{1,0:T(1,128)}', space=vmem, size = 0x12000, scoped, tag = 'internal scratch']
  %s0 = inlined_call_operand.vmem [shape: bf16[512,256], index: 0, kind: input, shape index: {}]
  %s1 = inlined_call_operand.vmem [shape: bf16[256,768], index: 1, kind: input, shape index: {}]
  %s2 = inlined_call_operand.vmem [shape: f32[1,768], index: 2, kind: input, shape index: {}]
  %s3 = inlined_call_operand.vmem [shape: bf16[512,768], index: 3, kind: output, shape index: {}]
  %s4 = sld [smem:[#allocation0]]
  $region45: #{multi_head_attention.3} parent=0
    _
  %s6 = ssub.s32 1, %s4
  %s7 = scalar_select 0, %s6, %s4
  loop: start=0, step=1, limit=4
  $region2: #{multi_head_attention.3} parent=0 // loop_pre_header
    _
  $region3: #{multi_head_attention.3} parent=0 // loop_header
    %s9 = sphi 0, %s13
    %p10 = scmp.ge.s32.totalorder %s9, 4
    %s19 = sphi 0, %s21
    %s22 = sphi 0, %s19
    %s23 = sphi 0, %s22
    %s39 = sphi 0, %s23
    %s43 = sphi 0, %s43
    %s45 = sphi 0, %s43
    %s46 = sphi 0, %s45
    %s60 = sphi 0, %s46
    %s64 = sphi 0, %s64
    %s66 = sphi 0, %s64
    %s67 = sphi 0, %s66
    %s81 = sphi 0, %s67
    %s87 = sphi 0, %s89
    %s90 = sphi 0, %s87
    %s91 = sphi 0, %s90
    %s107 = sphi 0, %s91
  $region4: #{multi_head_attention.3} parent=0 // loop_header_branch
    %12 = sbr.rel (%p10) target = $region8
  $region5: #{multi_head_attention.3} parent=0 // loop_body
    %s14 = ssub.s32 %s9, 1
    %s15 = ssub.s32 %s9, 2
    %s16 = sadd.s32 %s9, 1
    %s17 = ssub.s32 %s9, %s16
    %p18 = scmp.eq.s32.totalorder %s17, 0
    %s20 = sadd.s32 %s19, 1
    %s21 = scalar_select %p18, %s19, %s20
    %p24 = pneg %p18
    %p25 = scmp.eq.s32.totalorder %s9, 1
    %p26 = por %p24, %p25
    %p27 = scmp.ne.s32.totalorder %s19, %s22
    %p28 = scmp.eq.s32.totalorder %s9, 0
    %p29 = por %p27, %p28
    %p30 = scmp.ne.s32.totalorder %s19, %s22
    %p31 = scmp.eq.s32.totalorder %s14, 1
    %p32 = por %p30, %p31
    %p33 = scmp.ne.s32.totalorder %s22, %s23
    %p34 = scmp.eq.s32.totalorder %s14, 0
    %p35 = por %p33, %p34
    %p36 = scmp.ne.s32.totalorder %s22, %s23
    %p37 = scmp.eq.s32.totalorder %s15, 1
    %p38 = por %p36, %p37
    %p40 = scmp.ne.s32.totalorder %s23, %s39
    %p41 = scmp.eq.s32.totalorder %s15, 0
    %p42 = por %p40, %p41
    %s44 = sadd.s32 %s43, 1
    %p47 = scmp.eq.s32.totalorder %s9, 1
    %p48 = scmp.ne.s32.totalorder %s43, %s45
    %p49 = scmp.eq.s32.totalorder %s9, 0
    %p50 = por %p48, %p49
    %p51 = scmp.ne.s32.totalorder %s43, %s45
    %p52 = scmp.eq.s32.totalorder %s14, 1
    %p53 = por %p51, %p52
    %p54 = scmp.ne.s32.totalorder %s45, %s46
    %p55 = scmp.eq.s32.totalorder %s14, 0
    %p56 = por %p54, %p55
    %p57 = scmp.ne.s32.totalorder %s45, %s46
    %p58 = scmp.eq.s32.totalorder %s15, 1
    %p59 = por %p57, %p58
    %p61 = scmp.ne.s32.totalorder %s46, %s60
    %p62 = scmp.eq.s32.totalorder %s15, 0
    %p63 = por %p61, %p62
    %s65 = sadd.s32 %s64, 1
    %p68 = scmp.eq.s32.totalorder %s9, 1
    %p69 = scmp.ne.s32.totalorder %s64, %s66
    %p70 = scmp.eq.s32.totalorder %s9, 0
    %p71 = por %p69, %p70
    %p72 = scmp.ne.s32.totalorder %s64, %s66
    %p73 = scmp.eq.s32.totalorder %s14, 1
    %p74 = por %p72, %p73
    %p75 = scmp.ne.s32.totalorder %s66, %s67
    %p76 = scmp.eq.s32.totalorder %s14, 0
    %p77 = por %p75, %p76
    %p78 = scmp.ne.s32.totalorder %s66, %s67
    %p79 = scmp.eq.s32.totalorder %s15, 1
    %p80 = por %p78, %p79
    %p82 = scmp.ne.s32.totalorder %s67, %s81
    %p83 = scmp.eq.s32.totalorder %s15, 0
    %p84 = por %p82, %p83
    %s85 = ssub.s32 %s9, %s16
    %p86 = scmp.eq.s32.totalorder %s85, 0
    %s88 = sadd.s32 %s87, 1
    %s89 = scalar_select %p86, %s87, %s88
    %p92 = pneg %p86
    %p93 = scmp.eq.s32.totalorder %s9, 1
    %p94 = por %p92, %p93
    %p95 = scmp.ne.s32.totalorder %s87, %s90
    %p96 = scmp.eq.s32.totalorder %s9, 0
    %p97 = por %p95, %p96
    %p98 = scmp.ne.s32.totalorder %s87, %s90
    %p99 = scmp.eq.s32.totalorder %s14, 1
    %p100 = por %p98, %p99
    %p101 = scmp.ne.s32.totalorder %s90, %s91
    %p102 = scmp.eq.s32.totalorder %s14, 0
    %p103 = por %p101, %p102
    %p104 = scmp.ne.s32.totalorder %s90, %s91
    %p105 = scmp.eq.s32.totalorder %s15, 1
    %p106 = por %p104, %p105
    %p108 = scmp.ne.s32.totalorder %s91, %s107
    %p109 = scmp.eq.s32.totalorder %s15, 0
    %p110 = por %p108, %p109
    %p111 = scmp.le.s32.totalorder 1, %s9
    %p112 = scmp.lt.s32.totalorder %s9, 3
    %p113 = pnand %p111, %p112
    %p114 = pneg %p113
    // Predicated region
    $region9: #{multi_head_attention.3} parent=5 // pred_check
      _
    $region10: #{multi_head_attention.3} parent=5 // pred_check_branch
      %116 = sbr.rel (%p113) target = $region12
    $region11: #{multi_head_attention.3} parent=5 // pred_region
      %s117 = ssub.s32 %s9, 1
      // Predicated region
      $region13: #{multi_head_attention.3} parent=11 // pred_check
        %p118 = pneg %p56
      $region14: #{multi_head_attention.3} parent=11 // pred_check_branch
        %120 = sbr.rel (%p118) target = $region16
      $region15: #{multi_head_attention.3} parent=11 // pred_region
        _
      $region16: #{multi_head_attention.3} parent=11 // pred_fallthru
        _
      // Predicated region
      $region17: #{multi_head_attention.3} parent=11 // pred_check
        %p121 = pneg %p77
      $region18: #{multi_head_attention.3} parent=11 // pred_check_branch
        %123 = sbr.rel (%p121) target = $region20
      $region19: #{multi_head_attention.3} parent=11 // pred_region
        _
      $region20: #{multi_head_attention.3} parent=11 // pred_fallthru
        _
    $region12: #{multi_head_attention.3} parent=5 // pred_fallthru
      _
    %p124 = scmp.lt.s32.totalorder %s9, 2
    // Predicated region
    $region21: #{multi_head_attention.3} parent=5 // pred_check
      %p125 = pneg %p124
    $region22: #{multi_head_attention.3} parent=5 // pred_check_branch
      %127 = sbr.rel (%p125) target = $region24
    $region23: #{multi_head_attention.3} parent=5 // pred_region
      // Predicated region
      $region25: #{multi_head_attention.3} parent=23 // pred_check
        %p128 = pneg %p29
      $region26: #{multi_head_attention.3} parent=23 // pred_check_branch
        %130 = sbr.rel (%p128) target = $region28
      $region27: #{multi_head_attention.3} parent=23 // pred_region
        %s131 = smul.u32 32, %s9
        %p132 = scmp.lt.s32.totalorder %s131, 63
        %s133 = scalar_select %p132, %s131, 63
        %s134 = smul.addr %s133, 2
        %s135 = smul.addr %s134, 4
        %s136 = scalar_lea.vmem %s0, %s135
        %s137 = smul.u32 32, %s9
      $region28: #{multi_head_attention.3} parent=23 // pred_fallthru
        _
    $region24: #{multi_head_attention.3} parent=5 // pred_fallthru
      _
    %p138 = scmp.le.s32.totalorder 1, %s9
    %p139 = scmp.lt.s32.totalorder %s9, 3
    %p140 = pnand %p138, %p139
    %p141 = pneg %p140
    // Predicated region
    $region29: #{multi_head_attention.3} parent=5 // pred_check
      _
    $region30: #{multi_head_attention.3} parent=5 // pred_check_branch
      %143 = sbr.rel (%p140) target = $region32
    $region31: #{multi_head_attention.3} parent=5 // pred_region
      %s144 = ssub.s32 %s9, 1
      %s145 = smul.u32 32, %s14
      %p146 = scmp.lt.s32.totalorder %s145, 63
      %s147 = scalar_select %p146, %s145, 63
      %s148 = smul.addr %s147, 2
      %s149 = smul.addr %s148, 4
      %s150 = scalar_lea.vmem %s0, %s149
      %p151 = pneg %p35
      %p152 = pneg %p32
      %p153 = pneg %p56
      %p154 = pneg %p53
      %p155 = pneg %p77
      %p156 = pneg %p74
      %p157 = pneg %p103
      %p158 = pneg %p100
      %s159 = smul.u32 32, %s14
      %p160 = scmp.lt.s32.totalorder %s159, 63
      %s161 = scalar_select %p160, %s159, 63
      %s162 = smul.addr %s161, 6
      %s163 = smul.addr %s162, 4
      %s164 = scalar_lea.vmem %s3, %s163
      %s165 = smul.u32 32, %s14
      %p166 = scmp.lt.s32.totalorder %s165, 63
      %s167 = scalar_select %p166, %s165, 63
      %s168 = smul.addr %s167, 2
      %s169 = smul.addr %s168, 4
      %s170 = scalar_lea.vmem %s0, %s169
      %s171 = smul.u32 32, %s14
      %s172 = smul.u32 32, %s14
      %p173 = scmp.lt.s32.totalorder %s172, 63
      %s174 = scalar_select %p173, %s172, 63
      %s175 = smul.addr %s174, 6
      %s176 = smul.addr %s175, 4
      %s177 = scalar_lea.vmem %s3, %s176
      %s178 = smul.u32 32, %s14
      %v179 = vld [vmem:[%s170] sm:$0xff]
      %v180 = vld [vmem:[%s170 + $0x8] sm:$0xff]
      %v181 = vld [vmem:[%s170 + $0x10] sm:$0xff]
      %v182 = vld [vmem:[%s170 + $0x18] sm:$0xff]
      %v183 = vld [vmem:[%s170 + $0x20] sm:$0xff]
      %v184 = vld [vmem:[%s170 + $0x28] sm:$0xff]
      %v185 = vld [vmem:[%s170 + $0x30] sm:$0xff]
      %v186 = vld [vmem:[%s170 + $0x38] sm:$0xff]
      %v187 = vld [vmem:[%s170 + $0x40] sm:$0xff]
      %v188 = vld [vmem:[%s170 + $0x48] sm:$0xff]
      %v189 = vld [vmem:[%s170 + $0x50] sm:$0xff]
      %v190 = vld [vmem:[%s170 + $0x58] sm:$0xff]
      %v191 = vld [vmem:[%s170 + $0x60] sm:$0xff]
      %v192 = vld [vmem:[%s170 + $0x68] sm:$0xff]
      %v193 = vld [vmem:[%s170 + $0x70] sm:$0xff]
      %v194 = vld [vmem:[%s170 + $0x78] sm:$0xff]
      %v195 = vld [vmem:[%s170 + $0x80] sm:$0xff]
      %v196 = vld [vmem:[%s170 + $0x88] sm:$0xff]
      %v197 = vld [vmem:[%s170 + $0x90] sm:$0xff]
      %v198 = vld [vmem:[%s170 + $0x98] sm:$0xff]
      %v199 = vld [vmem:[%s170 + $0xa0] sm:$0xff]
      %v200 = vld [vmem:[%s170 + $0xa8] sm:$0xff]
      %v201 = vld [vmem:[%s170 + $0xb0] sm:$0xff]
      %v202 = vld [vmem:[%s170 + $0xb8] sm:$0xff]
      %v203 = vld [vmem:[%s170 + $0xc0] sm:$0xff]
      %v204 = vld [vmem:[%s170 + $0xc8] sm:$0xff]
      %v205 = vld [vmem:[%s170 + $0xd0] sm:$0xff]
      %v206 = vld [vmem:[%s170 + $0xd8] sm:$0xff]
      %v207 = vld [vmem:[%s170 + $0xe0] sm:$0xff]
      %v208 = vld [vmem:[%s170 + $0xe8] sm:$0xff]
      %v209 = vld [vmem:[%s170 + $0xf0] sm:$0xff]
      %v210 = vld [vmem:[%s170 + $0xf8] sm:$0xff]
      %v211 = vld [vmem:[%s1] sm:$0xff]
      %v212 = vld [vmem:[%s1 + $0x8] sm:$0xff]
      %v213 = vld [vmem:[%s1 + $0x10] sm:$0xff]
      %v214 = vld [vmem:[%s1 + $0x18] sm:$0xff]
      %v215 = vld [vmem:[%s1 + $0x20] sm:$0xff]
      %v216 = vld [vmem:[%s1 + $0x28] sm:$0xff]
      %v217 = vld [vmem:[%s1 + $0x30] sm:$0xff]
      %v218 = vld [vmem:[%s1 + $0x38] sm:$0xff]
      %v219 = vld [vmem:[%s1 + $0x40] sm:$0xff]
      %v220 = vld [vmem:[%s1 + $0x48] sm:$0xff]
      %v221 = vld [vmem:[%s1 + $0x50] sm:$0xff]
      %v222 = vld [vmem:[%s1 + $0x58] sm:$0xff]
      %v223 = vld [vmem:[%s1 + $0x60] sm:$0xff]
      %v224 = vld [vmem:[%s1 + $0x68] sm:$0xff]
      %v225 = vld [vmem:[%s1 + $0x70] sm:$0xff]
      %v226 = vld [vmem:[%s1 + $0x78] sm:$0xff]
      %v227 = vld [vmem:[%s1 + $0x80] sm:$0xff]
      %v228 = vld [vmem:[%s1 + $0x88] sm:$0xff]
      %v229 = vld [vmem:[%s1 + $0x90] sm:$0xff]
      %v230 = vld [vmem:[%s1 + $0x98] sm:$0xff]
      %v231 = vld [vmem:[%s1 + $0xa0] sm:$0xff]
      %v232 = vld [vmem:[%s1 + $0xa8] sm:$0xff]
      %v233 = vld [vmem:[%s1 + $0xb0] sm:$0xff]
      %v234 = vld [vmem:[%s1 + $0xb8] sm:$0xff]
      %v235 = vld [vmem:[%s1 + $0xc0] sm:$0xff]
      %v236 = vld [vmem:[%s1 + $0xc8] sm:$0xff]
      %v237 = vld [vmem:[%s1 + $0xd0] sm:$0xff]
      %v238 = vld [vmem:[%s1 + $0xd8] sm:$0xff]
      %v239 = vld [vmem:[%s1 + $0xe0] sm:$0xff]
      %v240 = vld [vmem:[%s1 + $0xe8] sm:$0xff]
      %v241 = vld [vmem:[%s1 + $0xf0] sm:$0xff]
      %v242 = vld [vmem:[%s1 + $0xf8] sm:$0xff]
      %v243 = vld [vmem:[%s1 + $0x100] sm:$0xff]
      %v244 = vld [vmem:[%s1 + $0x108] sm:$0xff]
      %v245 = vld [vmem:[%s1 + $0x110] sm:$0xff]
      %v246 = vld [vmem:[%s1 + $0x118] sm:$0xff]
      %v247 = vld [vmem:[%s1 + $0x120] sm:$0xff]
      %v248 = vld [vmem:[%s1 + $0x128] sm:$0xff]
      %v249 = vld [vmem:[%s1 + $0x130] sm:$0xff]
      %v250 = vld [vmem:[%s1 + $0x138] sm:$0xff]
      %v251 = vld [vmem:[%s1 + $0x140] sm:$0xff]
      %v252 = vld [vmem:[%s1 + $0x148] sm:$0xff]
      %v253 = vld [vmem:[%s1 + $0x150] sm:$0xff]
      %v254 = vld [vmem:[%s1 + $0x158] sm:$0xff]
      %v255 = vld [vmem:[%s1 + $0x160] sm:$0xff]
      %v256 = vld [vmem:[%s1 + $0x168] sm:$0xff]
      %v257 = vld [vmem:[%s1 + $0x170] sm:$0xff]
      %v258 = vld [vmem:[%s1 + $0x178] sm:$0xff]
      %v259 = vld [vmem:[%s1 + $0x180] sm:$0xff]
      %v260 = vld [vmem:[%s1 + $0x188] sm:$0xff]
      %v261 = vld [vmem:[%s1 + $0x190] sm:$0xff]
      %v262 = vld [vmem:[%s1 + $0x198] sm:$0xff]
      %v263 = vld [vmem:[%s1 + $0x1a0] sm:$0xff]
      %v264 = vld [vmem:[%s1 + $0x1a8] sm:$0xff]
      %v265 = vld [vmem:[%s1 + $0x1b0] sm:$0xff]
      %v266 = vld [vmem:[%s1 + $0x1b8] sm:$0xff]
      %v267 = vld [vmem:[%s1 + $0x1c0] sm:$0xff]
      %v268 = vld [vmem:[%s1 + $0x1c8] sm:$0xff]
      %v269 = vld [vmem:[%s1 + $0x1d0] sm:$0xff]
      %v270 = vld [vmem:[%s1 + $0x1d8] sm:$0xff]
      %v271 = vld [vmem:[%s1 + $0x1e0] sm:$0xff]
      %v272 = vld [vmem:[%s1 + $0x1e8] sm:$0xff]
      %v273 = vld [vmem:[%s1 + $0x1f0] sm:$0xff]
      %v274 = vld [vmem:[%s1 + $0x1f8] sm:$0xff]
      %v275 = vld [vmem:[%s1 + $0x200] sm:$0xff]
      %v276 = vld [vmem:[%s1 + $0x208] sm:$0xff]
      %v277 = vld [vmem:[%s1 + $0x210] sm:$0xff]
      %v278 = vld [vmem:[%s1 + $0x218] sm:$0xff]
      %v279 = vld [vmem:[%s1 + $0x220] sm:$0xff]
      %v280 = vld [vmem:[%s1 + $0x228] sm:$0xff]
      %v281 = vld [vmem:[%s1 + $0x230] sm:$0xff]
      %v282 = vld [vmem:[%s1 + $0x238] sm:$0xff]
      %v283 = vld [vmem:[%s1 + $0x240] sm:$0xff]
      %v284 = vld [vmem:[%s1 + $0x248] sm:$0xff]
      %v285 = vld [vmem:[%s1 + $0x250] sm:$0xff]
      %v286 = vld [vmem:[%s1 + $0x258] sm:$0xff]
      %v287 = vld [vmem:[%s1 + $0x260] sm:$0xff]
      %v288 = vld [vmem:[%s1 + $0x268] sm:$0xff]
      %v289 = vld [vmem:[%s1 + $0x270] sm:$0xff]
      %v290 = vld [vmem:[%s1 + $0x278] sm:$0xff]
      %v291 = vld [vmem:[%s1 + $0x280] sm:$0xff]
      %v292 = vld [vmem:[%s1 + $0x288] sm:$0xff]
      %v293 = vld [vmem:[%s1 + $0x290] sm:$0xff]
      %v294 = vld [vmem:[%s1 + $0x298] sm:$0xff]
      %v295 = vld [vmem:[%s1 + $0x2a0] sm:$0xff]
      %v296 = vld [vmem:[%s1 + $0x2a8] sm:$0xff]
      %v297 = vld [vmem:[%s1 + $0x2b0] sm:$0xff]
      %v298 = vld [vmem:[%s1 + $0x2b8] sm:$0xff]
      %v299 = vld [vmem:[%s1 + $0x2c0] sm:$0xff]
      %v300 = vld [vmem:[%s1 + $0x2c8] sm:$0xff]
      %v301 = vld [vmem:[%s1 + $0x2d0] sm:$0xff]
      %v302 = vld [vmem:[%s1 + $0x2d8] sm:$0xff]
      %v303 = vld [vmem:[%s1 + $0x2e0] sm:$0xff]
      %v304 = vld [vmem:[%s1 + $0x2e8] sm:$0xff]
      %v305 = vld [vmem:[%s1 + $0x2f0] sm:$0xff]
      %v306 = vld [vmem:[%s1 + $0x2f8] sm:$0xff]
      %v307 = vld [vmem:[%s2] sm:$0x3f]
      %v309 = vlaneseq
      %v310 = vshrl.u32 %v309, 7
      %v311 = vsub.s32 0, %v310
      %v312 = vrot.slane %v307, %v311
      %v313 = vlaneseq
      %v314 = vshrl.u32 %v313, 7
      %v315 = vsub.s32 1, %v314
      %v316 = vrot.slane %v307, %v315
      %v317 = vlaneseq
      %v318 = vshrl.u32 %v317, 7
      %v319 = vsub.s32 2, %v318
      %v320 = vrot.slane %v307, %v319
      %v321 = vlaneseq
      %v322 = vshrl.u32 %v321, 7
      %v323 = vsub.s32 3, %v322
      %v324 = vrot.slane %v307, %v323
      %v325 = vlaneseq
      %v326 = vshrl.u32 %v325, 7
      %v327 = vsub.s32 4, %v326
      %v328 = vrot.slane %v307, %v327
      %v329 = vlaneseq
      %v330 = vshrl.u32 %v329, 7
      %v331 = vsub.s32 5, %v330
      %v332 = vrot.slane %v307, %v331
      %v371 = vunpack.c.l.b16 %v179
      %v372 = vunpack.c.h.b16 %v179
      %v373 = vunpack.c.l.b16 %v180
      %v374 = vunpack.c.h.b16 %v180
      %v375 = vunpack.c.l.b16 %v181
      %v376 = vunpack.c.h.b16 %v181
      %v377 = vunpack.c.l.b16 %v182
      %v378 = vunpack.c.h.b16 %v182
      %v379 = vunpack.c.l.b16 %v183
      %v380 = vunpack.c.h.b16 %v183
      %v381 = vunpack.c.l.b16 %v184
      %v382 = vunpack.c.h.b16 %v184
      %v383 = vunpack.c.l.b16 %v185
      %v384 = vunpack.c.h.b16 %v185
      %v385 = vunpack.c.l.b16 %v186
      %v386 = vunpack.c.h.b16 %v186
      %v387 = vunpack.c.l.b16 %v187
      %v388 = vunpack.c.h.b16 %v187
      %v389 = vunpack.c.l.b16 %v188
      %v390 = vunpack.c.h.b16 %v188
      %v391 = vunpack.c.l.b16 %v189
      %v392 = vunpack.c.h.b16 %v189
      %v393 = vunpack.c.l.b16 %v190
      %v394 = vunpack.c.h.b16 %v190
      %v395 = vunpack.c.l.b16 %v191
      %v396 = vunpack.c.h.b16 %v191
      %v397 = vunpack.c.l.b16 %v192
      %v398 = vunpack.c.h.b16 %v192
      %v399 = vunpack.c.l.b16 %v193
      %v400 = vunpack.c.h.b16 %v193
      %v401 = vunpack.c.l.b16 %v194
      %v402 = vunpack.c.h.b16 %v194
      %v403 = vunpack.c.l.b16 %v195
      %v404 = vunpack.c.h.b16 %v195
      %v405 = vunpack.c.l.b16 %v196
      %v406 = vunpack.c.h.b16 %v196
      %v407 = vunpack.c.l.b16 %v197
      %v408 = vunpack.c.h.b16 %v197
      %v409 = vunpack.c.l.b16 %v198
      %v410 = vunpack.c.h.b16 %v198
      %v411 = vunpack.c.l.b16 %v199
      %v412 = vunpack.c.h.b16 %v199
      %v413 = vunpack.c.l.b16 %v200
      %v414 = vunpack.c.h.b16 %v200
      %v415 = vunpack.c.l.b16 %v201
      %v416 = vunpack.c.h.b16 %v201
      %v417 = vunpack.c.l.b16 %v202
      %v418 = vunpack.c.h.b16 %v202
      %v419 = vunpack.c.l.b16 %v203
      %v420 = vunpack.c.h.b16 %v203
      %v421 = vunpack.c.l.b16 %v204
      %v422 = vunpack.c.h.b16 %v204
      %v423 = vunpack.c.l.b16 %v205
      %v424 = vunpack.c.h.b16 %v205
      %v425 = vunpack.c.l.b16 %v206
      %v426 = vunpack.c.h.b16 %v206
      %v427 = vunpack.c.l.b16 %v207
      %v428 = vunpack.c.h.b16 %v207
      %v429 = vunpack.c.l.b16 %v208
      %v430 = vunpack.c.h.b16 %v208
      %v431 = vunpack.c.l.b16 %v209
      %v432 = vunpack.c.h.b16 %v209
      %v433 = vunpack.c.l.b16 %v210
      %v434 = vunpack.c.h.b16 %v210
      %v435 = vpack.c.b16 %v373, %v371
      %v436 = vpack.c.b16 %v374, %v372
      %v437 = vpack.c.b16 %v377, %v375
      %v438 = vpack.c.b16 %v378, %v376
      %v439 = vpack.c.b16 %v381, %v379
      %v440 = vpack.c.b16 %v382, %v380
      %v441 = vpack.c.b16 %v385, %v383
      %v442 = vpack.c.b16 %v386, %v384
      %v443 = vpack.c.b16 %v389, %v387
      %v444 = vpack.c.b16 %v390, %v388
      %v445 = vpack.c.b16 %v393, %v391
      %v446 = vpack.c.b16 %v394, %v392
      %v447 = vpack.c.b16 %v397, %v395
      %v448 = vpack.c.b16 %v398, %v396
      %v449 = vpack.c.b16 %v401, %v399
      %v450 = vpack.c.b16 %v402, %v400
      %v451 = vpack.c.b16 %v405, %v403
      %v452 = vpack.c.b16 %v406, %v404
      %v453 = vpack.c.b16 %v409, %v407
      %v454 = vpack.c.b16 %v410, %v408
      %v455 = vpack.c.b16 %v413, %v411
      %v456 = vpack.c.b16 %v414, %v412
      %v457 = vpack.c.b16 %v417, %v415
      %v458 = vpack.c.b16 %v418, %v416
      %v459 = vpack.c.b16 %v421, %v419
      %v460 = vpack.c.b16 %v422, %v420
      %v461 = vpack.c.b16 %v425, %v423
      %v462 = vpack.c.b16 %v426, %v424
      %v463 = vpack.c.b16 %v429, %v427
      %v464 = vpack.c.b16 %v430, %v428
      %v465 = vpack.c.b16 %v433, %v431
      %v466 = vpack.c.b16 %v434, %v432
      %v595 = vunpack.c.l.b16 %v211
      %v596 = vunpack.c.h.b16 %v211
      %v597 = vunpack.c.l.b16 %v212
      %v598 = vunpack.c.h.b16 %v212
      %v599 = vunpack.c.l.b16 %v213
      %v600 = vunpack.c.h.b16 %v213
      %v601 = vunpack.c.l.b16 %v214
      %v602 = vunpack.c.h.b16 %v214
      %v603 = vunpack.c.l.b16 %v215
      %v604 = vunpack.c.h.b16 %v215
      %v605 = vunpack.c.l.b16 %v216
      %v606 = vunpack.c.h.b16 %v216
      %v607 = vunpack.c.l.b16 %v217
      %v608 = vunpack.c.h.b16 %v217
      %v609 = vunpack.c.l.b16 %v218
      %v610 = vunpack.c.h.b16 %v218
      %v611 = vunpack.c.l.b16 %v219
      %v612 = vunpack.c.h.b16 %v219
      %v613 = vunpack.c.l.b16 %v220
      %v614 = vunpack.c.h.b16 %v220
      %v615 = vunpack.c.l.b16 %v221
      %v616 = vunpack.c.h.b16 %v221
      %v617 = vunpack.c.l.b16 %v222
      %v618 = vunpack.c.h.b16 %v222
      %v619 = vunpack.c.l.b16 %v223
      %v620 = vunpack.c.h.b16 %v223
      %v621 = vunpack.c.l.b16 %v224
      %v622 = vunpack.c.h.b16 %v224
      %v623 = vunpack.c.l.b16 %v225
      %v624 = vunpack.c.h.b16 %v225
      %v625 = vunpack.c.l.b16 %v226
      %v626 = vunpack.c.h.b16 %v226
      %v627 = vunpack.c.l.b16 %v227
      %v628 = vunpack.c.h.b16 %v227
      %v629 = vunpack.c.l.b16 %v228
      %v630 = vunpack.c.h.b16 %v228
      %v631 = vunpack.c.l.b16 %v229
      %v632 = vunpack.c.h.b16 %v229
      %v633 = vunpack.c.l.b16 %v230
      %v634 = vunpack.c.h.b16 %v230
      %v635 = vunpack.c.l.b16 %v231
      %v636 = vunpack.c.h.b16 %v231
      %v637 = vunpack.c.l.b16 %v232
      %v638 = vunpack.c.h.b16 %v232
      %v639 = vunpack.c.l.b16 %v233
      %v640 = vunpack.c.h.b16 %v233
      %v641 = vunpack.c.l.b16 %v234
      %v642 = vunpack.c.h.b16 %v234
      %v643 = vunpack.c.l.b16 %v235
      %v644 = vunpack.c.h.b16 %v235
      %v645 = vunpack.c.l.b16 %v236
      %v646 = vunpack.c.h.b16 %v236
      %v647 = vunpack.c.l.b16 %v237
      %v648 = vunpack.c.h.b16 %v237
      %v649 = vunpack.c.l.b16 %v238
      %v650 = vunpack.c.h.b16 %v238
      %v651 = vunpack.c.l.b16 %v239
      %v652 = vunpack.c.h.b16 %v239
      %v653 = vunpack.c.l.b16 %v240
      %v654 = vunpack.c.h.b16 %v240
      %v655 = vunpack.c.l.b16 %v241
      %v656 = vunpack.c.h.b16 %v241
      %v657 = vunpack.c.l.b16 %v242
      %v658 = vunpack.c.h.b16 %v242
      %v659 = vunpack.c.l.b16 %v243
      %v660 = vunpack.c.h.b16 %v243
      %v661 = vunpack.c.l.b16 %v244
      %v662 = vunpack.c.h.b16 %v244
      %v663 = vunpack.c.l.b16 %v245
      %v664 = vunpack.c.h.b16 %v245
      %v665 = vunpack.c.l.b16 %v246
      %v666 = vunpack.c.h.b16 %v246
      %v667 = vunpack.c.l.b16 %v247
      %v668 = vunpack.c.h.b16 %v247
      %v669 = vunpack.c.l.b16 %v248
      %v670 = vunpack.c.h.b16 %v248
      %v671 = vunpack.c.l.b16 %v249
      %v672 = vunpack.c.h.b16 %v249
      %v673 = vunpack.c.l.b16 %v250
      %v674 = vunpack.c.h.b16 %v250
      %v675 = vunpack.c.l.b16 %v251
      %v676 = vunpack.c.h.b16 %v251
      %v677 = vunpack.c.l.b16 %v252
      %v678 = vunpack.c.h.b16 %v252
      %v679 = vunpack.c.l.b16 %v253
      %v680 = vunpack.c.h.b16 %v253
      %v681 = vunpack.c.l.b16 %v254
      %v682 = vunpack.c.h.b16 %v254
      %v683 = vunpack.c.l.b16 %v255
      %v684 = vunpack.c.h.b16 %v255
      %v685 = vunpack.c.l.b16 %v256
      %v686 = vunpack.c.h.b16 %v256
      %v687 = vunpack.c.l.b16 %v257
      %v688 = vunpack.c.h.b16 %v257
      %v689 = vunpack.c.l.b16 %v258
      %v690 = vunpack.c.h.b16 %v258
      %v691 = vunpack.c.l.b16 %v259
      %v692 = vunpack.c.h.b16 %v259
      %v693 = vunpack.c.l.b16 %v260
      %v694 = vunpack.c.h.b16 %v260
      %v695 = vunpack.c.l.b16 %v261
      %v696 = vunpack.c.h.b16 %v261
      %v697 = vunpack.c.l.b16 %v262
      %v698 = vunpack.c.h.b16 %v262
      %v699 = vunpack.c.l.b16 %v263
      %v700 = vunpack.c.h.b16 %v263
      %v701 = vunpack.c.l.b16 %v264
      %v702 = vunpack.c.h.b16 %v264
      %v703 = vunpack.c.l.b16 %v265
      %v704 = vunpack.c.h.b16 %v265
      %v705 = vunpack.c.l.b16 %v266
      %v706 = vunpack.c.h.b16 %v266
      %v707 = vunpack.c.l.b16 %v267
      %v708 = vunpack.c.h.b16 %v267
      %v709 = vunpack.c.l.b16 %v268
      %v710 = vunpack.c.h.b16 %v268
      %v711 = vunpack.c.l.b16 %v269
      %v712 = vunpack.c.h.b16 %v269
      %v713 = vunpack.c.l.b16 %v270
      %v714 = vunpack.c.h.b16 %v270
      %v715 = vunpack.c.l.b16 %v271
      %v716 = vunpack.c.h.b16 %v271
      %v717 = vunpack.c.l.b16 %v272
      %v718 = vunpack.c.h.b16 %v272
      %v719 = vunpack.c.l.b16 %v273
      %v720 = vunpack.c.h.b16 %v273
      %v721 = vunpack.c.l.b16 %v274
      %v722 = vunpack.c.h.b16 %v274
      %v723 = vunpack.c.l.b16 %v275
      %v724 = vunpack.c.h.b16 %v275
      %v725 = vunpack.c.l.b16 %v276
      %v726 = vunpack.c.h.b16 %v276
      %v727 = vunpack.c.l.b16 %v277
      %v728 = vunpack.c.h.b16 %v277
      %v729 = vunpack.c.l.b16 %v278
      %v730 = vunpack.c.h.b16 %v278
      %v731 = vunpack.c.l.b16 %v279
      %v732 = vunpack.c.h.b16 %v279
      %v733 = vunpack.c.l.b16 %v280
      %v734 = vunpack.c.h.b16 %v280
      %v735 = vunpack.c.l.b16 %v281
      %v736 = vunpack.c.h.b16 %v281
      %v737 = vunpack.c.l.b16 %v282
      %v738 = vunpack.c.h.b16 %v282
      %v739 = vunpack.c.l.b16 %v283
      %v740 = vunpack.c.h.b16 %v283
      %v741 = vunpack.c.l.b16 %v284
      %v742 = vunpack.c.h.b16 %v284
      %v743 = vunpack.c.l.b16 %v285
      %v744 = vunpack.c.h.b16 %v285
      %v745 = vunpack.c.l.b16 %v286
      %v746 = vunpack.c.h.b16 %v286
      %v747 = vunpack.c.l.b16 %v287
      %v748 = vunpack.c.h.b16 %v287
      %v749 = vunpack.c.l.b16 %v288
      %v750 = vunpack.c.h.b16 %v288
      %v751 = vunpack.c.l.b16 %v289
      %v752 = vunpack.c.h.b16 %v289
      %v753 = vunpack.c.l.b16 %v290
      %v754 = vunpack.c.h.b16 %v290
      %v755 = vunpack.c.l.b16 %v291
      %v756 = vunpack.c.h.b16 %v291
      %v757 = vunpack.c.l.b16 %v292
      %v758 = vunpack.c.h.b16 %v292
      %v759 = vunpack.c.l.b16 %v293
      %v760 = vunpack.c.h.b16 %v293
      %v761 = vunpack.c.l.b16 %v294
      %v762 = vunpack.c.h.b16 %v294
      %v763 = vunpack.c.l.b16 %v295
      %v764 = vunpack.c.h.b16 %v295
      %v765 = vunpack.c.l.b16 %v296
      %v766 = vunpack.c.h.b16 %v296
      %v767 = vunpack.c.l.b16 %v297
      %v768 = vunpack.c.h.b16 %v297
      %v769 = vunpack.c.l.b16 %v298
      %v770 = vunpack.c.h.b16 %v298
      %v771 = vunpack.c.l.b16 %v299
      %v772 = vunpack.c.h.b16 %v299
      %v773 = vunpack.c.l.b16 %v300
      %v774 = vunpack.c.h.b16 %v300
      %v775 = vunpack.c.l.b16 %v301
      %v776 = vunpack.c.h.b16 %v301
      %v777 = vunpack.c.l.b16 %v302
      %v778 = vunpack.c.h.b16 %v302
      %v779 = vunpack.c.l.b16 %v303
      %v780 = vunpack.c.h.b16 %v303
      %v781 = vunpack.c.l.b16 %v304
      %v782 = vunpack.c.h.b16 %v304
      %v783 = vunpack.c.l.b16 %v305
      %v784 = vunpack.c.h.b16 %v305
      %v785 = vunpack.c.l.b16 %v306
      %v786 = vunpack.c.h.b16 %v306
      %v787 = vpack.c.b16 %v601, %v595
      %v788 = vpack.c.b16 %v602, %v596
      %v789 = vpack.c.b16 %v603, %v597
      %v790 = vpack.c.b16 %v604, %v598
      %v791 = vpack.c.b16 %v605, %v599
      %v792 = vpack.c.b16 %v606, %v600
      %v793 = vpack.c.b16 %v613, %v607
      %v794 = vpack.c.b16 %v614, %v608
      %v795 = vpack.c.b16 %v615, %v609
      %v796 = vpack.c.b16 %v616, %v610
      %v797 = vpack.c.b16 %v617, %v611
      %v798 = vpack.c.b16 %v618, %v612
      %v799 = vpack.c.b16 %v625, %v619
      %v800 = vpack.c.b16 %v626, %v620
      %v801 = vpack.c.b16 %v627, %v621
      %v802 = vpack.c.b16 %v628, %v622
      %v803 = vpack.c.b16 %v629, %v623
      %v804 = vpack.c.b16 %v630, %v624
      %v805 = vpack.c.b16 %v637, %v631
      %v806 = vpack.c.b16 %v638, %v632
      %v807 = vpack.c.b16 %v639, %v633
      %v808 = vpack.c.b16 %v640, %v634
      %v809 = vpack.c.b16 %v641, %v635
      %v810 = vpack.c.b16 %v642, %v636
      %v811 = vpack.c.b16 %v649, %v643
      %v812 = vpack.c.b16 %v650, %v644
      %v813 = vpack.c.b16 %v651, %v645
      %v814 = vpack.c.b16 %v652, %v646
      %v815 = vpack.c.b16 %v653, %v647
      %v816 = vpack.c.b16 %v654, %v648
      %v817 = vpack.c.b16 %v661, %v655
      %v818 = vpack.c.b16 %v662, %v656
      %v819 = vpack.c.b16 %v663, %v657
      %v820 = vpack.c.b16 %v664, %v658
      %v821 = vpack.c.b16 %v665, %v659
      %v822 = vpack.c.b16 %v666, %v660
      %v823 = vpack.c.b16 %v673, %v667
      %v824 = vpack.c.b16 %v674, %v668
      %v825 = vpack.c.b16 %v675, %v669
      %v826 = vpack.c.b16 %v676, %v670
      %v827 = vpack.c.b16 %v677, %v671
      %v828 = vpack.c.b16 %v678, %v672
      %v829 = vpack.c.b16 %v685, %v679
      %v830 = vpack.c.b16 %v686, %v680
      %v831 = vpack.c.b16 %v687, %v681
      %v832 = vpack.c.b16 %v688, %v682
      %v833 = vpack.c.b16 %v689, %v683
      %v834 = vpack.c.b16 %v690, %v684
      %v835 = vpack.c.b16 %v697, %v691
      %v836 = vpack.c.b16 %v698, %v692
      %v837 = vpack.c.b16 %v699, %v693
      %v838 = vpack.c.b16 %v700, %v694
      %v839 = vpack.c.b16 %v701, %v695
      %v840 = vpack.c.b16 %v702, %v696
      %v841 = vpack.c.b16 %v709, %v703
      %v842 = vpack.c.b16 %v710, %v704
      %v843 = vpack.c.b16 %v711, %v705
      %v844 = vpack.c.b16 %v712, %v706
      %v845 = vpack.c.b16 %v713, %v707
      %v846 = vpack.c.b16 %v714, %v708
      %v847 = vpack.c.b16 %v721, %v715
      %v848 = vpack.c.b16 %v722, %v716
      %v849 = vpack.c.b16 %v723, %v717
      %v850 = vpack.c.b16 %v724, %v718
      %v851 = vpack.c.b16 %v725, %v719
      %v852 = vpack.c.b16 %v726, %v720
      %v853 = vpack.c.b16 %v733, %v727
      %v854 = vpack.c.b16 %v734, %v728
      %v855 = vpack.c.b16 %v735, %v729
      %v856 = vpack.c.b16 %v736, %v730
      %v857 = vpack.c.b16 %v737, %v731
      %v858 = vpack.c.b16 %v738, %v732
      %v859 = vpack.c.b16 %v745, %v739
      %v860 = vpack.c.b16 %v746, %v740
      %v861 = vpack.c.b16 %v747, %v741
      %v862 = vpack.c.b16 %v748, %v742
      %v863 = vpack.c.b16 %v749, %v743
      %v864 = vpack.c.b16 %v750, %v744
      %v865 = vpack.c.b16 %v757, %v751
      %v866 = vpack.c.b16 %v758, %v752
      %v867 = vpack.c.b16 %v759, %v753
      %v868 = vpack.c.b16 %v760, %v754
      %v869 = vpack.c.b16 %v761, %v755
      %v870 = vpack.c.b16 %v762, %v756
      %v871 = vpack.c.b16 %v769, %v763
      %v872 = vpack.c.b16 %v770, %v764
      %v873 = vpack.c.b16 %v771, %v765
      %v874 = vpack.c.b16 %v772, %v766
      %v875 = vpack.c.b16 %v773, %v767
      %v876 = vpack.c.b16 %v774, %v768
      %v877 = vpack.c.b16 %v781, %v775
      %v878 = vpack.c.b16 %v782, %v776
      %v879 = vpack.c.b16 %v783, %v777
      %v880 = vpack.c.b16 %v784, %v778
      %v881 = vpack.c.b16 %v785, %v779
      %v882 = vpack.c.b16 %v786, %v780
      %979 = vmatprep.subr.bf16.mxu0 %v788
      %980 = vmatpush1.bf16.msra.mxu0 %v787
      %981 = vmatprep.subr.bf16.mxu0 %v794
      %982 = vmatpush1.bf16.msra.mxu0 %v793
      %983 = vmatprep.subr.bf16.mxu0 %v800
      %984 = vmatpush1.bf16.msra.mxu0 %v799
      %985 = vmatprep.subr.bf16.mxu0 %v806
      %986 = vmatpush1.bf16.msra.mxu0 %v805
      %987 = vmatprep.subr.bf16.mxu0 %v812
      %988 = vmatpush1.bf16.msra.mxu0 %v811
      %989 = vmatprep.subr.bf16.mxu0 %v818
      %990 = vmatpush1.bf16.msra.mxu0 %v817
      %991 = vmatprep.subr.bf16.mxu0 %v824
      %992 = vmatpush1.bf16.msra.mxu0 %v823
      %993 = vmatprep.subr.bf16.mxu0 %v830
      %994 = vmatpush1.bf16.msra.mxu0 %v829
      %995 = vmatprep.subr.bf16.mxu0 %v836
      %996 = vmatpush1.bf16.msra.mxu0 %v835
      %997 = vmatprep.subr.bf16.mxu0 %v842
      %998 = vmatpush1.bf16.msra.mxu0 %v841
      %999 = vmatprep.subr.bf16.mxu0 %v848
      %1000 = vmatpush1.bf16.msra.mxu0 %v847
      %1001 = vmatprep.subr.bf16.mxu0 %v854
      %1002 = vmatpush1.bf16.msra.mxu0 %v853
      %1003 = vmatprep.subr.bf16.mxu0 %v860
      %1004 = vmatpush1.bf16.msra.mxu0 %v859
      %1005 = vmatprep.subr.bf16.mxu0 %v866
      %1006 = vmatpush1.bf16.msra.mxu0 %v865
      %1007 = vmatprep.subr.bf16.mxu0 %v872
      %1008 = vmatpush1.bf16.msra.mxu0 %v871
      %1009 = vmatprep.subr.bf16.mxu0 %v878
      %1010 = vmatpush1.bf16.msra.mxu0 %v877
      %1011 = vmatprep.mubr.bf16.mxu0 %v436
      %1012 = vmatmul.mubr.bf16.gmra.mrb[0].mxu0 %v435
      %v1013 = vpop.f32.mrb[0].mxu0
      %v1014 = vadd.f32 %v312, %v1013
      %v1015 = vpop.f32.mrb[0].mxu0
      %v1016 = vadd.f32 %v316, %v1015
      %v1017 = vpop.f32.mrb[0].mxu0
      %v1018 = vadd.f32 %v312, %v1017
      %v1019 = vpop.f32.mrb[0].mxu0
      %v1020 = vadd.f32 %v316, %v1019
      %1021 = vmatprep.mubr.bf16.mxu0 %v438
      %1022 = vmatmul.mubr.bf16.gmra.mrb[0].mxu0 %v437
      %v1023 = vpop.f32.mrb[0].mxu0
      %v1024 = vadd.f32 %v312, %v1023
      %v1025 = vpop.f32.mrb[0].mxu0
      %v1026 = vadd.f32 %v316, %v1025
      %v1027 = vpop.f32.mrb[0].mxu0
      %v1028 = vadd.f32 %v312, %v1027
      %v1029 = vpop.f32.mrb[0].mxu0
      %v1030 = vadd.f32 %v316, %v1029
      %1031 = vmatprep.mubr.bf16.mxu0 %v440
      %1032 = vmatmul.mubr.bf16.gmra.mrb[0].mxu0 %v439
      %v1033 = vpop.f32.mrb[0].mxu0
      %v1034 = vadd.f32 %v312, %v1033
      %v1035 = vpop.f32.mrb[0].mxu0
      %v1036 = vadd.f32 %v316, %v1035
      %v1037 = vpop.f32.mrb[0].mxu0
      %v1038 = vadd.f32 %v312, %v1037
      %v1039 = vpop.f32.mrb[0].mxu0
      %v1040 = vadd.f32 %v316, %v1039
      %1041 = vmatprep.mubr.bf16.mxu0 %v442
      %1042 = vmatmul.mubr.bf16.gmra.mrb[0].mxu0 %v441
      %v1043 = vpop.f32.mrb[0].mxu0
      %v1044 = vadd.f32 %v312, %v1043
      %v1045 = vpop.f32.mrb[0].mxu0
      %v1046 = vadd.f32 %v316, %v1045
      %v1047 = vpop.f32.mrb[0].mxu0
      %v1048 = vadd.f32 %v312, %v1047
      %v1049 = vpop.f32.mrb[0].mxu0
      %v1050 = vadd.f32 %v316, %v1049
      %1051 = vmatprep.mubr.bf16.mxu0 %v444
      %1052 = vmatmul.mubr.bf16.gmra.mrb[0].mxu0 %v443
      %v1053 = vpop.f32.mrb[0].mxu0
      %v1054 = vadd.f32 %v312, %v1053
      %v1055 = vpop.f32.mrb[0].mxu0
      %v1056 = vadd.f32 %v316, %v1055
      %v1057 = vpop.f32.mrb[0].mxu0
      %v1058 = vadd.f32 %v312, %v1057
      %v1059 = vpop.f32.mrb[0].mxu0
      %v1060 = vadd.f32 %v316, %v1059
      %1061 = vmatprep.mubr.bf16.mxu0 %v446
      %1062 = vmatmul.mubr.bf16.gmra.mrb[0].mxu0 %v445
      %v1063 = vpop.f32.mrb[0].mxu0
      %v1064 = vadd.f32 %v312, %v1063
      %v1065 = vpop.f32.mrb[0].mxu0
      %v1066 = vadd.f32 %v316, %v1065
      %v1067 = vpop.f32.mrb[0].mxu0
      %v1068 = vadd.f32 %v312, %v1067
      %v1069 = vpop.f32.mrb[0].mxu0
      %v1070 = vadd.f32 %v316, %v1069
      %1071 = vmatprep.mubr.bf16.mxu0 %v448
      %1072 = vmatmul.mubr.bf16.gmra.mrb[0].mxu0 %v447
      %v1073 = vpop.f32.mrb[0].mxu0
      %v1074 = vadd.f32 %v312, %v1073
      %v1075 = vpop.f32.mrb[0].mxu0
      %v1076 = vadd.f32 %v316, %v1075
      %v1077 = vpop.f32.mrb[0].mxu0
      %v1078 = vadd.f32 %v312, %v1077
      %v1079 = vpop.f32.mrb[0].mxu0
      %v1080 = vadd.f32 %v316, %v1079
      %1081 = vmatprep.mubr.bf16.mxu0 %v450
      %1082 = vmatmul.mubr.bf16.gmra.mrb[0].mxu0 %v449
      %v1083 = vpop.f32.mrb[0].mxu0
      %v1084 = vadd.f32 %v312, %v1083
      %v1085 = vpop.f32.mrb[0].mxu0
      %v1086 = vadd.f32 %v316, %v1085
      %v1087 = vpop.f32.mrb[0].mxu0
      %v1088 = vadd.f32 %v312, %v1087
      %v1089 = vpop.f32.mrb[0].mxu0
      %v1090 = vadd.f32 %v316, %v1089
      %1091 = vmatprep.mubr.bf16.mxu0 %v452
      %1092 = vmatmul.mubr.bf16.gmra.mrb[0].mxu0 %v451
      %v1093 = vpop.f32.mrb[0].mxu0
      %v1094 = vadd.f32 %v312, %v1093
      %v1095 = vpop.f32.mrb[0].mxu0
      %v1096 = vadd.f32 %v316, %v1095
      %v1097 = vpop.f32.mrb[0].mxu0
      %v1098 = vadd.f32 %v312, %v1097
      %v1099 = vpop.f32.mrb[0].mxu0
      %v1100 = vadd.f32 %v316, %v1099
      %1101 = vmatprep.mubr.bf16.mxu0 %v454
      %1102 = vmatmul.mubr.bf16.gmra.mrb[0].mxu0 %v453
      %v1103 = vpop.f32.mrb[0].mxu0
      %v1104 = vadd.f32 %v312, %v1103
      %v1105 = vpop.f32.mrb[0].mxu0
      %v1106 = vadd.f32 %v316, %v1105
      %v1107 = vpop.f32.mrb[0].mxu0
      %v1108 = vadd.f32 %v312, %v1107
      %v1109 = vpop.f32.mrb[0].mxu0
      %v1110 = vadd.f32 %v316, %v1109
      %1111 = vmatprep.mubr.bf16.mxu0 %v456
      %1112 = vmatmul.mubr.bf16.gmra.mrb[0].mxu0 %v455
      %v1113 = vpop.f32.mrb[0].mxu0
      %v1114 = vadd.f32 %v312, %v1113
      %v1115 = vpop.f32.mrb[0].mxu0
      %v1116 = vadd.f32 %v316, %v1115
      %v1117 = vpop.f32.mrb[0].mxu0
      %v1118 = vadd.f32 %v312, %v1117
      %v1119 = vpop.f32.mrb[0].mxu0
      %v1120 = vadd.f32 %v316, %v1119
      %1121 = vmatprep.mubr.bf16.mxu0 %v458
      %1122 = vmatmul.mubr.bf16.gmra.mrb[0].mxu0 %v457
      %v1123 = vpop.f32.mrb[0].mxu0
      %v1124 = vadd.f32 %v312, %v1123
      %v1125 = vpop.f32.mrb[0].mxu0
      %v1126 = vadd.f32 %v316, %v1125
      %v1127 = vpop.f32.mrb[0].mxu0
      %v1128 = vadd.f32 %v312, %v1127
      %v1129 = vpop.f32.mrb[0].mxu0
      %v1130 = vadd.f32 %v316, %v1129
      %1131 = vmatprep.mubr.bf16.mxu0 %v460
      %1132 = vmatmul.mubr.bf16.gmra.mrb[0].mxu0 %v459
      %v1133 = vpop.f32.mrb[0].mxu0
      %v1134 = vadd.f32 %v312, %v1133
      %v1135 = vpop.f32.mrb[0].mxu0
      %v1136 = vadd.f32 %v316, %v1135
      %v1137 = vpop.f32.mrb[0].mxu0
      %v1138 = vadd.f32 %v312, %v1137
      %v1139 = vpop.f32.mrb[0].mxu0
      %v1140 = vadd.f32 %v316, %v1139
      %1141 = vmatprep.mubr.bf16.mxu0 %v462
      %1142 = vmatmul.mubr.bf16.gmra.mrb[0].mxu0 %v461
      %v1143 = vpop.f32.mrb[0].mxu0
      %v1144 = vadd.f32 %v312, %v1143
      %v1145 = vpop.f32.mrb[0].mxu0
      %v1146 = vadd.f32 %v316, %v1145
      %v1147 = vpop.f32.mrb[0].mxu0
      %v1148 = vadd.f32 %v312, %v1147
      %v1149 = vpop.f32.mrb[0].mxu0
      %v1150 = vadd.f32 %v316, %v1149
      %1151 = vmatprep.mubr.bf16.mxu0 %v464
      %1152 = vmatmul.mubr.bf16.gmra.mrb[0].mxu0 %v463
      %v1153 = vpop.f32.mrb[0].mxu0
      %v1154 = vadd.f32 %v312, %v1153
      %v1155 = vpop.f32.mrb[0].mxu0
      %v1156 = vadd.f32 %v316, %v1155
      %v1157 = vpop.f32.mrb[0].mxu0
      %v1158 = vadd.f32 %v312, %v1157
      %v1159 = vpop.f32.mrb[0].mxu0
      %v1160 = vadd.f32 %v316, %v1159
      %1161 = vmatprep.mubr.bf16.mxu0 %v466
      %1162 = vmatmul.mubr.bf16.gmra.mrb[0].mxu0 %v465
      %v1163 = vpop.f32.mrb[0].mxu0
      %v1164 = vadd.f32 %v312, %v1163
      %v1165 = vpop.f32.mrb[0].mxu0
      %v1166 = vadd.f32 %v316, %v1165
      %v1167 = vpop.f32.mrb[0].mxu0
      %v1168 = vadd.f32 %v312, %v1167
      %v1169 = vpop.f32.mrb[0].mxu0
      %v1170 = vadd.f32 %v316, %v1169
      %1171 = vdwg.mxu0
      %1172 = vmatprep.subr.bf16.mxu0 %v790
      %1173 = vmatpush1.bf16.msra.mxu0 %v789
      %1174 = vmatprep.subr.bf16.mxu0 %v796
      %1175 = vmatpush1.bf16.msra.mxu0 %v795
      %1176 = vmatprep.subr.bf16.mxu0 %v802
      %1177 = vmatpush1.bf16.msra.mxu0 %v801
      %1178 = vmatprep.subr.bf16.mxu0 %v808
      %1179 = vmatpush1.bf16.msra.mxu0 %v807
      %1180 = vmatprep.subr.bf16.mxu0 %v814
      %1181 = vmatpush1.bf16.msra.mxu0 %v813
      %1182 = vmatprep.subr.bf16.mxu0 %v820
      %1183 = vmatpush1.bf16.msra.mxu0 %v819
      %1184 = vmatprep.subr.bf16.mxu0 %v826
      %1185 = vmatpush1.bf16.msra.mxu0 %v825
      %1186 = vmatprep.subr.bf16.mxu0 %v832
      %1187 = vmatpush1.bf16.msra.mxu0 %v831
      %1188 = vmatprep.subr.bf16.mxu0 %v838
      %1189 = vmatpush1.bf16.msra.mxu0 %v837
      %1190 = vmatprep.subr.bf16.mxu0 %v844
      %1191 = vmatpush1.bf16.msra.mxu0 %v843
      %1192 = vmatprep.subr.bf16.mxu0 %v850
      %1193 = vmatpush1.bf16.msra.mxu0 %v849
      %1194 = vmatprep.subr.bf16.mxu0 %v856
      %1195 = vmatpush1.bf16.msra.mxu0 %v855
      %1196 = vmatprep.subr.bf16.mxu0 %v862
      %1197 = vmatpush1.bf16.msra.mxu0 %v861
      %1198 = vmatprep.subr.bf16.mxu0 %v868
      %1199 = vmatpush1.bf16.msra.mxu0 %v867
      %1200 = vmatprep.subr.bf16.mxu0 %v874
      %1201 = vmatpush1.bf16.msra.mxu0 %v873
      %1202 = vmatprep.subr.bf16.mxu0 %v880
      %1203 = vmatpush1.bf16.msra.mxu0 %v879
      %1204 = vmatprep.mubr.bf16.mxu0 %v436
      %1205 = vmatmul.mubr.bf16.gmra.mrb[0].mxu0 %v435
      %v1206 = vpop.f32.mrb[0].mxu0
      %v1207 = vadd.f32 %v320, %v1206
      %v1208 = vpop.f32.mrb[0].mxu0
      %v1209 = vadd.f32 %v324, %v1208
      %v1210 = vpop.f32.mrb[0].mxu0
      %v1211 = vadd.f32 %v320, %v1210
      %v1212 = vpop.f32.mrb[0].mxu0
      %v1213 = vadd.f32 %v324, %v1212
      %1214 = vmatprep.mubr.bf16.mxu0 %v438
      %1215 = vmatmul.mubr.bf16.gmra.mrb[0].mxu0 %v437
      %v1216 = vpop.f32.mrb[0].mxu0
      %v1217 = vadd.f32 %v320, %v1216
      %v1218 = vpop.f32.mrb[0].mxu0
      %v1219 = vadd.f32 %v324, %v1218
      %v1220 = vpop.f32.mrb[0].mxu0
      %v1221 = vadd.f32 %v320, %v1220
      %v1222 = vpop.f32.mrb[0].mxu0
      %v1223 = vadd.f32 %v324, %v1222
      %1224 = vmatprep.mubr.bf16.mxu0 %v440
      %1225 = vmatmul.mubr.bf16.gmra.mrb[0].mxu0 %v439
      %v1226 = vpop.f32.mrb[0].mxu0
      %v1227 = vadd.f32 %v320, %v1226
      %v1228 = vpop.f32.mrb[0].mxu0
      %v1229 = vadd.f32 %v324, %v1228
      %v1230 = vpop.f32.mrb[0].mxu0
      %v1231 = vadd.f32 %v320, %v1230
      %v1232 = vpop.f32.mrb[0].mxu0
      %v1233 = vadd.f32 %v324, %v1232
      %1234 = vmatprep.mubr.bf16.mxu0 %v442
      %1235 = vmatmul.mubr.bf16.gmra.mrb[0].mxu0 %v441
      %v1236 = vpop.f32.mrb[0].mxu0
      %v1237 = vadd.f32 %v320, %v1236
      %v1238 = vpop.f32.mrb[0].mxu0
      %v1239 = vadd.f32 %v324, %v1238
      %v1240 = vpop.f32.mrb[0].mxu0
      %v1241 = vadd.f32 %v320, %v1240
      %v1242 = vpop.f32.mrb[0].mxu0
      %v1243 = vadd.f32 %v324, %v1242
      %1244 = vmatprep.mubr.bf16.mxu0 %v444
      %1245 = vmatmul.mubr.bf16.gmra.mrb[0].mxu0 %v443
      %v1246 = vpop.f32.mrb[0].mxu0
      %v1247 = vadd.f32 %v320, %v1246
      %v1248 = vpop.f32.mrb[0].mxu0
      %v1249 = vadd.f32 %v324, %v1248
      %v1250 = vpop.f32.mrb[0].mxu0
      %v1251 = vadd.f32 %v320, %v1250
      %v1252 = vpop.f32.mrb[0].mxu0
      %v1253 = vadd.f32 %v324, %v1252
      %1254 = vmatprep.mubr.bf16.mxu0 %v446
      %1255 = vmatmul.mubr.bf16.gmra.mrb[0].mxu0 %v445
      %v1256 = vpop.f32.mrb[0].mxu0
      %v1257 = vadd.f32 %v320, %v1256
      %v1258 = vpop.f32.mrb[0].mxu0
      %v1259 = vadd.f32 %v324, %v1258
      %v1260 = vpop.f32.mrb[0].mxu0
      %v1261 = vadd.f32 %v320, %v1260
      %v1262 = vpop.f32.mrb[0].mxu0
      %v1263 = vadd.f32 %v324, %v1262
      %1264 = vmatprep.mubr.bf16.mxu0 %v448
      %1265 = vmatmul.mubr.bf16.gmra.mrb[0].mxu0 %v447
      %v1266 = vpop.f32.mrb[0].mxu0
      %v1267 = vadd.f32 %v320, %v1266
      %v1268 = vpop.f32.mrb[0].mxu0
      %v1269 = vadd.f32 %v324, %v1268
      %v1270 = vpop.f32.mrb[0].mxu0
      %v1271 = vadd.f32 %v320, %v1270
      %v1272 = vpop.f32.mrb[0].mxu0
      %v1273 = vadd.f32 %v324, %v1272
      %1274 = vmatprep.mubr.bf16.mxu0 %v450
      %1275 = vmatmul.mubr.bf16.gmra.mrb[0].mxu0 %v449
      %v1276 = vpop.f32.mrb[0].mxu0
      %v1277 = vadd.f32 %v320, %v1276
      %v1278 = vpop.f32.mrb[0].mxu0
      %v1279 = vadd.f32 %v324, %v1278
      %v1280 = vpop.f32.mrb[0].mxu0
      %v1281 = vadd.f32 %v320, %v1280
      %v1282 = vpop.f32.mrb[0].mxu0
      %v1283 = vadd.f32 %v324, %v1282
      %1284 = vmatprep.mubr.bf16.mxu0 %v452
      %1285 = vmatmul.mubr.bf16.gmra.mrb[0].mxu0 %v451
      %v1286 = vpop.f32.mrb[0].mxu0
      %v1287 = vadd.f32 %v320, %v1286
      %v1288 = vpop.f32.mrb[0].mxu0
      %v1289 = vadd.f32 %v324, %v1288
      %v1290 = vpop.f32.mrb[0].mxu0
      %v1291 = vadd.f32 %v320, %v1290
      %v1292 = vpop.f32.mrb[0].mxu0
      %v1293 = vadd.f32 %v324, %v1292
      %1294 = vmatprep.mubr.bf16.mxu0 %v454
      %1295 = vmatmul.mubr.bf16.gmra.mrb[0].mxu0 %v453
      %v1296 = vpop.f32.mrb[0].mxu0
      %v1297 = vadd.f32 %v320, %v1296
      %v1298 = vpop.f32.mrb[0].mxu0
      %v1299 = vadd.f32 %v324, %v1298
      %v1300 = vpop.f32.mrb[0].mxu0
      %v1301 = vadd.f32 %v320, %v1300
      %v1302 = vpop.f32.mrb[0].mxu0
      %v1303 = vadd.f32 %v324, %v1302
      %1304 = vmatprep.mubr.bf16.mxu0 %v456
      %1305 = vmatmul.mubr.bf16.gmra.mrb[0].mxu0 %v455
      %v1306 = vpop.f32.mrb[0].mxu0
      %v1307 = vadd.f32 %v320, %v1306
      %v1308 = vpop.f32.mrb[0].mxu0
      %v1309 = vadd.f32 %v324, %v1308
      %v1310 = vpop.f32.mrb[0].mxu0
      %v1311 = vadd.f32 %v320, %v1310
      %v1312 = vpop.f32.mrb[0].mxu0
      %v1313 = vadd.f32 %v324, %v1312
      %1314 = vmatprep.mubr.bf16.mxu0 %v458
      %1315 = vmatmul.mubr.bf16.gmra.mrb[0].mxu0 %v457
      %v1316 = vpop.f32.mrb[0].mxu0
      %v1317 = vadd.f32 %v320, %v1316
      %v1318 = vpop.f32.mrb[0].mxu0
      %v1319 = vadd.f32 %v324, %v1318
      %v1320 = vpop.f32.mrb[0].mxu0
      %v1321 = vadd.f32 %v320, %v1320
      %v1322 = vpop.f32.mrb[0].mxu0
      %v1323 = vadd.f32 %v324, %v1322
      %1324 = vmatprep.mubr.bf16.mxu0 %v460
      %1325 = vmatmul.mubr.bf16.gmra.mrb[0].mxu0 %v459
      %v1326 = vpop.f32.mrb[0].mxu0
      %v1327 = vadd.f32 %v320, %v1326
      %v1328 = vpop.f32.mrb[0].mxu0
      %v1329 = vadd.f32 %v324, %v1328
      %v1330 = vpop.f32.mrb[0].mxu0
      %v1331 = vadd.f32 %v320, %v1330
      %v1332 = vpop.f32.mrb[0].mxu0
      %v1333 = vadd.f32 %v324, %v1332
      %1334 = vmatprep.mubr.bf16.mxu0 %v462
      %1335 = vmatmul.mubr.bf16.gmra.mrb[0].mxu0 %v461
      %v1336 = vpop.f32.mrb[0].mxu0
      %v1337 = vadd.f32 %v320, %v1336
      %v1338 = vpop.f32.mrb[0].mxu0
      %v1339 = vadd.f32 %v324, %v1338
      %v1340 = vpop.f32.mrb[0].mxu0
      %v1341 = vadd.f32 %v320, %v1340
      %v1342 = vpop.f32.mrb[0].mxu0
      %v1343 = vadd.f32 %v324, %v1342
      %1344 = vmatprep.mubr.bf16.mxu0 %v464
      %1345 = vmatmul.mubr.bf16.gmra.mrb[0].mxu0 %v463
      %v1346 = vpop.f32.mrb[0].mxu0
      %v1347 = vadd.f32 %v320, %v1346
      %v1348 = vpop.f32.mrb[0].mxu0
      %v1349 = vadd.f32 %v324, %v1348
      %v1350 = vpop.f32.mrb[0].mxu0
      %v1351 = vadd.f32 %v320, %v1350
      %v1352 = vpop.f32.mrb[0].mxu0
      %v1353 = vadd.f32 %v324, %v1352
      %1354 = vmatprep.mubr.bf16.mxu0 %v466
      %1355 = vmatmul.mubr.bf16.gmra.mrb[0].mxu0 %v465
      %v1356 = vpop.f32.mrb[0].mxu0
      %v1357 = vadd.f32 %v320, %v1356
      %v1358 = vpop.f32.mrb[0].mxu0
      %v1359 = vadd.f32 %v324, %v1358
      %v1360 = vpop.f32.mrb[0].mxu0
      %v1361 = vadd.f32 %v320, %v1360
      %v1362 = vpop.f32.mrb[0].mxu0
      %v1363 = vadd.f32 %v324, %v1362
      %1364 = vdwg.mxu0
      %1365 = vmatprep.subr.bf16.mxu0 %v792
      %1366 = vmatpush1.bf16.msra.mxu0 %v791
      %1367 = vmatprep.subr.bf16.mxu0 %v798
      %1368 = vmatpush1.bf16.msra.mxu0 %v797
      %1369 = vmatprep.subr.bf16.mxu0 %v804
      %1370 = vmatpush1.bf16.msra.mxu0 %v803
      %1371 = vmatprep.subr.bf16.mxu0 %v810
      %1372 = vmatpush1.bf16.msra.mxu0 %v809
      %1373 = vmatprep.subr.bf16.mxu0 %v816
      %1374 = vmatpush1.bf16.msra.mxu0 %v815
      %1375 = vmatprep.subr.bf16.mxu0 %v822
      %1376 = vmatpush1.bf16.msra.mxu0 %v821
      %1377 = vmatprep.subr.bf16.mxu0 %v828
      %1378 = vmatpush1.bf16.msra.mxu0 %v827
      %1379 = vmatprep.subr.bf16.mxu0 %v834
      %1380 = vmatpush1.bf16.msra.mxu0 %v833
      %1381 = vmatprep.subr.bf16.mxu0 %v840
      %1382 = vmatpush1.bf16.msra.mxu0 %v839
      %1383 = vmatprep.subr.bf16.mxu0 %v846
      %1384 = vmatpush1.bf16.msra.mxu0 %v845
      %1385 = vmatprep.subr.bf16.mxu0 %v852
      %1386 = vmatpush1.bf16.msra.mxu0 %v851
      %1387 = vmatprep.subr.bf16.mxu0 %v858
      %1388 = vmatpush1.bf16.msra.mxu0 %v857
      %1389 = vmatprep.subr.bf16.mxu0 %v864
      %1390 = vmatpush1.bf16.msra.mxu0 %v863
      %1391 = vmatprep.subr.bf16.mxu0 %v870
      %1392 = vmatpush1.bf16.msra.mxu0 %v869
      %1393 = vmatprep.subr.bf16.mxu0 %v876
      %1394 = vmatpush1.bf16.msra.mxu0 %v875
      %1395 = vmatprep.subr.bf16.mxu0 %v882
      %1396 = vmatpush1.bf16.msra.mxu0 %v881
      %1397 = vmatprep.mubr.bf16.mxu0 %v436
      %1398 = vmatmul.mubr.bf16.gmra.mrb[0].mxu0 %v435
      %v1399 = vpop.f32.mrb[0].mxu0
      %v1400 = vadd.f32 %v328, %v1399
      %v1401 = vpop.f32.mrb[0].mxu0
      %v1402 = vadd.f32 %v332, %v1401
      %v1403 = vpop.f32.mrb[0].mxu0
      %v1404 = vadd.f32 %v328, %v1403
      %v1405 = vpop.f32.mrb[0].mxu0
      %v1406 = vadd.f32 %v332, %v1405
      %1407 = vmatprep.mubr.bf16.mxu0 %v438
      %1408 = vmatmul.mubr.bf16.gmra.mrb[0].mxu0 %v437
      %v1409 = vpop.f32.mrb[0].mxu0
      %v1410 = vadd.f32 %v328, %v1409
      %v1411 = vpop.f32.mrb[0].mxu0
      %v1412 = vadd.f32 %v332, %v1411
      %v1413 = vpop.f32.mrb[0].mxu0
      %v1414 = vadd.f32 %v328, %v1413
      %v1415 = vpop.f32.mrb[0].mxu0
      %v1416 = vadd.f32 %v332, %v1415
      %1417 = vmatprep.mubr.bf16.mxu0 %v440
      %1418 = vmatmul.mubr.bf16.gmra.mrb[0].mxu0 %v439
      %v1419 = vpop.f32.mrb[0].mxu0
      %v1420 = vadd.f32 %v328, %v1419
      %v1421 = vpop.f32.mrb[0].mxu0
      %v1422 = vadd.f32 %v332, %v1421
      %v1423 = vpop.f32.mrb[0].mxu0
      %v1424 = vadd.f32 %v328, %v1423
      %v1425 = vpop.f32.mrb[0].mxu0
      %v1426 = vadd.f32 %v332, %v1425
      %1427 = vmatprep.mubr.bf16.mxu0 %v442
      %1428 = vmatmul.mubr.bf16.gmra.mrb[0].mxu0 %v441
      %v1429 = vpop.f32.mrb[0].mxu0
      %v1430 = vadd.f32 %v328, %v1429
      %v1431 = vpop.f32.mrb[0].mxu0
      %v1432 = vadd.f32 %v332, %v1431
      %v1433 = vpop.f32.mrb[0].mxu0
      %v1434 = vadd.f32 %v328, %v1433
      %v1435 = vpop.f32.mrb[0].mxu0
      %v1436 = vadd.f32 %v332, %v1435
      %1437 = vmatprep.mubr.bf16.mxu0 %v444
      %1438 = vmatmul.mubr.bf16.gmra.mrb[0].mxu0 %v443
      %v1439 = vpop.f32.mrb[0].mxu0
      %v1440 = vadd.f32 %v328, %v1439
      %v1441 = vpop.f32.mrb[0].mxu0
      %v1442 = vadd.f32 %v332, %v1441
      %v1443 = vpop.f32.mrb[0].mxu0
      %v1444 = vadd.f32 %v328, %v1443
      %v1445 = vpop.f32.mrb[0].mxu0
      %v1446 = vadd.f32 %v332, %v1445
      %1447 = vmatprep.mubr.bf16.mxu0 %v446
      %1448 = vmatmul.mubr.bf16.gmra.mrb[0].mxu0 %v445
      %v1449 = vpop.f32.mrb[0].mxu0
      %v1450 = vadd.f32 %v328, %v1449
      %v1451 = vpop.f32.mrb[0].mxu0
      %v1452 = vadd.f32 %v332, %v1451
      %v1453 = vpop.f32.mrb[0].mxu0
      %v1454 = vadd.f32 %v328, %v1453
      %v1455 = vpop.f32.mrb[0].mxu0
      %v1456 = vadd.f32 %v332, %v1455
      %1457 = vmatprep.mubr.bf16.mxu0 %v448
      %1458 = vmatmul.mubr.bf16.gmra.mrb[0].mxu0 %v447
      %v1459 = vpop.f32.mrb[0].mxu0
      %v1460 = vadd.f32 %v328, %v1459
      %v1461 = vpop.f32.mrb[0].mxu0
      %v1462 = vadd.f32 %v332, %v1461
      %v1463 = vpop.f32.mrb[0].mxu0
      %v1464 = vadd.f32 %v328, %v1463
      %v1465 = vpop.f32.mrb[0].mxu0
      %v1466 = vadd.f32 %v332, %v1465
      %1467 = vmatprep.mubr.bf16.mxu0 %v450
      %1468 = vmatmul.mubr.bf16.gmra.mrb[0].mxu0 %v449
      %v1469 = vpop.f32.mrb[0].mxu0
      %v1470 = vadd.f32 %v328, %v1469
      %v1471 = vpop.f32.mrb[0].mxu0
      %v1472 = vadd.f32 %v332, %v1471
      %v1473 = vpop.f32.mrb[0].mxu0
      %v1474 = vadd.f32 %v328, %v1473
      %v1475 = vpop.f32.mrb[0].mxu0
      %v1476 = vadd.f32 %v332, %v1475
      %1477 = vmatprep.mubr.bf16.mxu0 %v452
      %1478 = vmatmul.mubr.bf16.gmra.mrb[0].mxu0 %v451
      %v1479 = vpop.f32.mrb[0].mxu0
      %v1480 = vadd.f32 %v328, %v1479
      %v1481 = vpop.f32.mrb[0].mxu0
      %v1482 = vadd.f32 %v332, %v1481
      %v1483 = vpop.f32.mrb[0].mxu0
      %v1484 = vadd.f32 %v328, %v1483
      %v1485 = vpop.f32.mrb[0].mxu0
      %v1486 = vadd.f32 %v332, %v1485
      %1487 = vmatprep.mubr.bf16.mxu0 %v454
      %1488 = vmatmul.mubr.bf16.gmra.mrb[0].mxu0 %v453
      %v1489 = vpop.f32.mrb[0].mxu0
      %v1490 = vadd.f32 %v328, %v1489
      %v1491 = vpop.f32.mrb[0].mxu0
      %v1492 = vadd.f32 %v332, %v1491
      %v1493 = vpop.f32.mrb[0].mxu0
      %v1494 = vadd.f32 %v328, %v1493
      %v1495 = vpop.f32.mrb[0].mxu0
      %v1496 = vadd.f32 %v332, %v1495
      %1497 = vmatprep.mubr.bf16.mxu0 %v456
      %1498 = vmatmul.mubr.bf16.gmra.mrb[0].mxu0 %v455
      %v1499 = vpop.f32.mrb[0].mxu0
      %v1500 = vadd.f32 %v328, %v1499
      %v1501 = vpop.f32.mrb[0].mxu0
      %v1502 = vadd.f32 %v332, %v1501
      %v1503 = vpop.f32.mrb[0].mxu0
      %v1504 = vadd.f32 %v328, %v1503
      %v1505 = vpop.f32.mrb[0].mxu0
      %v1506 = vadd.f32 %v332, %v1505
      %1507 = vmatprep.mubr.bf16.mxu0 %v458
      %1508 = vmatmul.mubr.bf16.gmra.mrb[0].mxu0 %v457
      %v1509 = vpop.f32.mrb[0].mxu0
      %v1510 = vadd.f32 %v328, %v1509
      %v1511 = vpop.f32.mrb[0].mxu0
      %v1512 = vadd.f32 %v332, %v1511
      %v1513 = vpop.f32.mrb[0].mxu0
      %v1514 = vadd.f32 %v328, %v1513
      %v1515 = vpop.f32.mrb[0].mxu0
      %v1516 = vadd.f32 %v332, %v1515
      %1517 = vmatprep.mubr.bf16.mxu0 %v460
      %1518 = vmatmul.mubr.bf16.gmra.mrb[0].mxu0 %v459
      %v1519 = vpop.f32.mrb[0].mxu0
      %v1520 = vadd.f32 %v328, %v1519
      %v1521 = vpop.f32.mrb[0].mxu0
      %v1522 = vadd.f32 %v332, %v1521
      %v1523 = vpop.f32.mrb[0].mxu0
      %v1524 = vadd.f32 %v328, %v1523
      %v1525 = vpop.f32.mrb[0].mxu0
      %v1526 = vadd.f32 %v332, %v1525
      %1527 = vmatprep.mubr.bf16.mxu0 %v462
      %1528 = vmatmul.mubr.bf16.gmra.mrb[0].mxu0 %v461
      %v1529 = vpop.f32.mrb[0].mxu0
      %v1530 = vadd.f32 %v328, %v1529
      %v1531 = vpop.f32.mrb[0].mxu0
      %v1532 = vadd.f32 %v332, %v1531
      %v1533 = vpop.f32.mrb[0].mxu0
      %v1534 = vadd.f32 %v328, %v1533
      %v1535 = vpop.f32.mrb[0].mxu0
      %v1536 = vadd.f32 %v332, %v1535
      %1537 = vmatprep.mubr.bf16.mxu0 %v464
      %1538 = vmatmul.mubr.bf16.gmra.mrb[0].mxu0 %v463
      %v1539 = vpop.f32.mrb[0].mxu0
      %v1540 = vadd.f32 %v328, %v1539
      %v1541 = vpop.f32.mrb[0].mxu0
      %v1542 = vadd.f32 %v332, %v1541
      %v1543 = vpop.f32.mrb[0].mxu0
      %v1544 = vadd.f32 %v328, %v1543
      %v1545 = vpop.f32.mrb[0].mxu0
      %v1546 = vadd.f32 %v332, %v1545
      %1547 = vmatprep.mubr.bf16.mxu0 %v466
      %1548 = vmatmul.mubr.bf16.gmra.mrb[0].mxu0 %v465
      %v1549 = vpop.f32.mrb[0].mxu0
      %v1550 = vadd.f32 %v328, %v1549
      %v1551 = vpop.f32.mrb[0].mxu0
      %v1552 = vadd.f32 %v332, %v1551
      %v1553 = vpop.f32.mrb[0].mxu0
      %v1554 = vadd.f32 %v328, %v1553
      %v1555 = vpop.f32.mrb[0].mxu0
      %v1556 = vadd.f32 %v332, %v1555
      %1557 = vdwg.mxu0
      %v1558 = vpack.c.bf16 %v1018, %v1014
      %v1559 = vpack.c.bf16 %v1020, %v1016
      %v1560 = vpack.c.bf16 %v1211, %v1207
      %v1561 = vpack.c.bf16 %v1213, %v1209
      %v1562 = vpack.c.bf16 %v1404, %v1400
      %v1563 = vpack.c.bf16 %v1406, %v1402
      %v1564 = vpack.c.bf16 %v1028, %v1024
      %v1565 = vpack.c.bf16 %v1030, %v1026
      %v1566 = vpack.c.bf16 %v1221, %v1217
      %v1567 = vpack.c.bf16 %v1223, %v1219
      %v1568 = vpack.c.bf16 %v1414, %v1410
      %v1569 = vpack.c.bf16 %v1416, %v1412
      %v1570 = vpack.c.bf16 %v1038, %v1034
      %v1571 = vpack.c.bf16 %v1040, %v1036
      %v1572 = vpack.c.bf16 %v1231, %v1227
      %v1573 = vpack.c.bf16 %v1233, %v1229
      %v1574 = vpack.c.bf16 %v1424, %v1420
      %v1575 = vpack.c.bf16 %v1426, %v1422
      %v1576 = vpack.c.bf16 %v1048, %v1044
      %v1577 = vpack.c.bf16 %v1050, %v1046
      %v1578 = vpack.c.bf16 %v1241, %v1237
      %v1579 = vpack.c.bf16 %v1243, %v1239
      %v1580 = vpack.c.bf16 %v1434, %v1430
      %v1581 = vpack.c.bf16 %v1436, %v1432
      %v1582 = vpack.c.bf16 %v1058, %v1054
      %v1583 = vpack.c.bf16 %v1060, %v1056
      %v1584 = vpack.c.bf16 %v1251, %v1247
      %v1585 = vpack.c.bf16 %v1253, %v1249
      %v1586 = vpack.c.bf16 %v1444, %v1440
      %v1587 = vpack.c.bf16 %v1446, %v1442
      %v1588 = vpack.c.bf16 %v1068, %v1064
      %v1589 = vpack.c.bf16 %v1070, %v1066
      %v1590 = vpack.c.bf16 %v1261, %v1257
      %v1591 = vpack.c.bf16 %v1263, %v1259
      %v1592 = vpack.c.bf16 %v1454, %v1450
      %v1593 = vpack.c.bf16 %v1456, %v1452
      %v1594 = vpack.c.bf16 %v1078, %v1074
      %v1595 = vpack.c.bf16 %v1080, %v1076
      %v1596 = vpack.c.bf16 %v1271, %v1267
      %v1597 = vpack.c.bf16 %v1273, %v1269
      %v1598 = vpack.c.bf16 %v1464, %v1460
      %v1599 = vpack.c.bf16 %v1466, %v1462
      %v1600 = vpack.c.bf16 %v1088, %v1084
      %v1601 = vpack.c.bf16 %v1090, %v1086
      %v1602 = vpack.c.bf16 %v1281, %v1277
      %v1603 = vpack.c.bf16 %v1283, %v1279
      %v1604 = vpack.c.bf16 %v1474, %v1470
      %v1605 = vpack.c.bf16 %v1476, %v1472
      %v1606 = vpack.c.bf16 %v1098, %v1094
      %v1607 = vpack.c.bf16 %v1100, %v1096
      %v1608 = vpack.c.bf16 %v1291, %v1287
      %v1609 = vpack.c.bf16 %v1293, %v1289
      %v1610 = vpack.c.bf16 %v1484, %v1480
      %v1611 = vpack.c.bf16 %v1486, %v1482
      %v1612 = vpack.c.bf16 %v1108, %v1104
      %v1613 = vpack.c.bf16 %v1110, %v1106
      %v1614 = vpack.c.bf16 %v1301, %v1297
      %v1615 = vpack.c.bf16 %v1303, %v1299
      %v1616 = vpack.c.bf16 %v1494, %v1490
      %v1617 = vpack.c.bf16 %v1496, %v1492
      %v1618 = vpack.c.bf16 %v1118, %v1114
      %v1619 = vpack.c.bf16 %v1120, %v1116
      %v1620 = vpack.c.bf16 %v1311, %v1307
      %v1621 = vpack.c.bf16 %v1313, %v1309
      %v1622 = vpack.c.bf16 %v1504, %v1500
      %v1623 = vpack.c.bf16 %v1506, %v1502
      %v1624 = vpack.c.bf16 %v1128, %v1124
      %v1625 = vpack.c.bf16 %v1130, %v1126
      %v1626 = vpack.c.bf16 %v1321, %v1317
      %v1627 = vpack.c.bf16 %v1323, %v1319
      %v1628 = vpack.c.bf16 %v1514, %v1510
      %v1629 = vpack.c.bf16 %v1516, %v1512
      %v1630 = vpack.c.bf16 %v1138, %v1134
      %v1631 = vpack.c.bf16 %v1140, %v1136
      %v1632 = vpack.c.bf16 %v1331, %v1327
      %v1633 = vpack.c.bf16 %v1333, %v1329
      %v1634 = vpack.c.bf16 %v1524, %v1520
      %v1635 = vpack.c.bf16 %v1526, %v1522
      %v1636 = vpack.c.bf16 %v1148, %v1144
      %v1637 = vpack.c.bf16 %v1150, %v1146
      %v1638 = vpack.c.bf16 %v1341, %v1337
      %v1639 = vpack.c.bf16 %v1343, %v1339
      %v1640 = vpack.c.bf16 %v1534, %v1530
      %v1641 = vpack.c.bf16 %v1536, %v1532
      %v1642 = vpack.c.bf16 %v1158, %v1154
      %v1643 = vpack.c.bf16 %v1160, %v1156
      %v1644 = vpack.c.bf16 %v1351, %v1347
      %v1645 = vpack.c.bf16 %v1353, %v1349
      %v1646 = vpack.c.bf16 %v1544, %v1540
      %v1647 = vpack.c.bf16 %v1546, %v1542
      %v1648 = vpack.c.bf16 %v1168, %v1164
      %v1649 = vpack.c.bf16 %v1170, %v1166
      %v1650 = vpack.c.bf16 %v1361, %v1357
      %v1651 = vpack.c.bf16 %v1363, %v1359
      %v1652 = vpack.c.bf16 %v1554, %v1550
      %v1653 = vpack.c.bf16 %v1556, %v1552
      %v1750 = vunpack.c.l.b16 %v1558
      %v1751 = vunpack.c.l.b16 %v1559
      %v1752 = vunpack.c.l.b16 %v1560
      %v1753 = vunpack.c.l.b16 %v1561
      %v1754 = vunpack.c.l.b16 %v1562
      %v1755 = vunpack.c.l.b16 %v1563
      %v1756 = vunpack.c.h.b16 %v1558
      %v1757 = vunpack.c.h.b16 %v1559
      %v1758 = vunpack.c.h.b16 %v1560
      %v1759 = vunpack.c.h.b16 %v1561
      %v1760 = vunpack.c.h.b16 %v1562
      %v1761 = vunpack.c.h.b16 %v1563
      %v1762 = vunpack.c.l.b16 %v1564
      %v1763 = vunpack.c.l.b16 %v1565
      %v1764 = vunpack.c.l.b16 %v1566
      %v1765 = vunpack.c.l.b16 %v1567
      %v1766 = vunpack.c.l.b16 %v1568
      %v1767 = vunpack.c.l.b16 %v1569
      %v1768 = vunpack.c.h.b16 %v1564
      %v1769 = vunpack.c.h.b16 %v1565
      %v1770 = vunpack.c.h.b16 %v1566
      %v1771 = vunpack.c.h.b16 %v1567
      %v1772 = vunpack.c.h.b16 %v1568
      %v1773 = vunpack.c.h.b16 %v1569
      %v1774 = vunpack.c.l.b16 %v1570
      %v1775 = vunpack.c.l.b16 %v1571
      %v1776 = vunpack.c.l.b16 %v1572
      %v1777 = vunpack.c.l.b16 %v1573
      %v1778 = vunpack.c.l.b16 %v1574
      %v1779 = vunpack.c.l.b16 %v1575
      %v1780 = vunpack.c.h.b16 %v1570
      %v1781 = vunpack.c.h.b16 %v1571
      %v1782 = vunpack.c.h.b16 %v1572
      %v1783 = vunpack.c.h.b16 %v1573
      %v1784 = vunpack.c.h.b16 %v1574
      %v1785 = vunpack.c.h.b16 %v1575
      %v1786 = vunpack.c.l.b16 %v1576
      %v1787 = vunpack.c.l.b16 %v1577
      %v1788 = vunpack.c.l.b16 %v1578
      %v1789 = vunpack.c.l.b16 %v1579
      %v1790 = vunpack.c.l.b16 %v1580
      %v1791 = vunpack.c.l.b16 %v1581
      %v1792 = vunpack.c.h.b16 %v1576
      %v1793 = vunpack.c.h.b16 %v1577
      %v1794 = vunpack.c.h.b16 %v1578
      %v1795 = vunpack.c.h.b16 %v1579
      %v1796 = vunpack.c.h.b16 %v1580
      %v1797 = vunpack.c.h.b16 %v1581
      %v1798 = vunpack.c.l.b16 %v1582
      %v1799 = vunpack.c.l.b16 %v1583
      %v1800 = vunpack.c.l.b16 %v1584
      %v1801 = vunpack.c.l.b16 %v1585
      %v1802 = vunpack.c.l.b16 %v1586
      %v1803 = vunpack.c.l.b16 %v1587
      %v1804 = vunpack.c.h.b16 %v1582
      %v1805 = vunpack.c.h.b16 %v1583
      %v1806 = vunpack.c.h.b16 %v1584
      %v1807 = vunpack.c.h.b16 %v1585
      %v1808 = vunpack.c.h.b16 %v1586
      %v1809 = vunpack.c.h.b16 %v1587
      %v1810 = vunpack.c.l.b16 %v1588
      %v1811 = vunpack.c.l.b16 %v1589
      %v1812 = vunpack.c.l.b16 %v1590
      %v1813 = vunpack.c.l.b16 %v1591
      %v1814 = vunpack.c.l.b16 %v1592
      %v1815 = vunpack.c.l.b16 %v1593
      %v1816 = vunpack.c.h.b16 %v1588
      %v1817 = vunpack.c.h.b16 %v1589
      %v1818 = vunpack.c.h.b16 %v1590
      %v1819 = vunpack.c.h.b16 %v1591
      %v1820 = vunpack.c.h.b16 %v1592
      %v1821 = vunpack.c.h.b16 %v1593
      %v1822 = vunpack.c.l.b16 %v1594
      %v1823 = vunpack.c.l.b16 %v1595
      %v1824 = vunpack.c.l.b16 %v1596
      %v1825 = vunpack.c.l.b16 %v1597
      %v1826 = vunpack.c.l.b16 %v1598
      %v1827 = vunpack.c.l.b16 %v1599
      %v1828 = vunpack.c.h.b16 %v1594
      %v1829 = vunpack.c.h.b16 %v1595
      %v1830 = vunpack.c.h.b16 %v1596
      %v1831 = vunpack.c.h.b16 %v1597
      %v1832 = vunpack.c.h.b16 %v1598
      %v1833 = vunpack.c.h.b16 %v1599
      %v1834 = vunpack.c.l.b16 %v1600
      %v1835 = vunpack.c.l.b16 %v1601
      %v1836 = vunpack.c.l.b16 %v1602
      %v1837 = vunpack.c.l.b16 %v1603
      %v1838 = vunpack.c.l.b16 %v1604
      %v1839 = vunpack.c.l.b16 %v1605
      %v1840 = vunpack.c.h.b16 %v1600
      %v1841 = vunpack.c.h.b16 %v1601
      %v1842 = vunpack.c.h.b16 %v1602
      %v1843 = vunpack.c.h.b16 %v1603
      %v1844 = vunpack.c.h.b16 %v1604
      %v1845 = vunpack.c.h.b16 %v1605
      %v1846 = vunpack.c.l.b16 %v1606
      %v1847 = vunpack.c.l.b16 %v1607
      %v1848 = vunpack.c.l.b16 %v1608
      %v1849 = vunpack.c.l.b16 %v1609
      %v1850 = vunpack.c.l.b16 %v1610
      %v1851 = vunpack.c.l.b16 %v1611
      %v1852 = vunpack.c.h.b16 %v1606
      %v1853 = vunpack.c.h.b16 %v1607
      %v1854 = vunpack.c.h.b16 %v1608
      %v1855 = vunpack.c.h.b16 %v1609
      %v1856 = vunpack.c.h.b16 %v1610
      %v1857 = vunpack.c.h.b16 %v1611
      %v1858 = vunpack.c.l.b16 %v1612
      %v1859 = vunpack.c.l.b16 %v1613
      %v1860 = vunpack.c.l.b16 %v1614
      %v1861 = vunpack.c.l.b16 %v1615
      %v1862 = vunpack.c.l.b16 %v1616
      %v1863 = vunpack.c.l.b16 %v1617
      %v1864 = vunpack.c.h.b16 %v1612
      %v1865 = vunpack.c.h.b16 %v1613
      %v1866 = vunpack.c.h.b16 %v1614
      %v1867 = vunpack.c.h.b16 %v1615
      %v1868 = vunpack.c.h.b16 %v1616
      %v1869 = vunpack.c.h.b16 %v1617
      %v1870 = vunpack.c.l.b16 %v1618
      %v1871 = vunpack.c.l.b16 %v1619
      %v1872 = vunpack.c.l.b16 %v1620
      %v1873 = vunpack.c.l.b16 %v1621
      %v1874 = vunpack.c.l.b16 %v1622
      %v1875 = vunpack.c.l.b16 %v1623
      %v1876 = vunpack.c.h.b16 %v1618
      %v1877 = vunpack.c.h.b16 %v1619
      %v1878 = vunpack.c.h.b16 %v1620
      %v1879 = vunpack.c.h.b16 %v1621
      %v1880 = vunpack.c.h.b16 %v1622
      %v1881 = vunpack.c.h.b16 %v1623
      %v1882 = vunpack.c.l.b16 %v1624
      %v1883 = vunpack.c.l.b16 %v1625
      %v1884 = vunpack.c.l.b16 %v1626
      %v1885 = vunpack.c.l.b16 %v1627
      %v1886 = vunpack.c.l.b16 %v1628
      %v1887 = vunpack.c.l.b16 %v1629
      %v1888 = vunpack.c.h.b16 %v1624
      %v1889 = vunpack.c.h.b16 %v1625
      %v1890 = vunpack.c.h.b16 %v1626
      %v1891 = vunpack.c.h.b16 %v1627
      %v1892 = vunpack.c.h.b16 %v1628
      %v1893 = vunpack.c.h.b16 %v1629
      %v1894 = vunpack.c.l.b16 %v1630
      %v1895 = vunpack.c.l.b16 %v1631
      %v1896 = vunpack.c.l.b16 %v1632
      %v1897 = vunpack.c.l.b16 %v1633
      %v1898 = vunpack.c.l.b16 %v1634
      %v1899 = vunpack.c.l.b16 %v1635
      %v1900 = vunpack.c.h.b16 %v1630
      %v1901 = vunpack.c.h.b16 %v1631
      %v1902 = vunpack.c.h.b16 %v1632
      %v1903 = vunpack.c.h.b16 %v1633
      %v1904 = vunpack.c.h.b16 %v1634
      %v1905 = vunpack.c.h.b16 %v1635
      %v1906 = vunpack.c.l.b16 %v1636
      %v1907 = vunpack.c.l.b16 %v1637
      %v1908 = vunpack.c.l.b16 %v1638
      %v1909 = vunpack.c.l.b16 %v1639
      %v1910 = vunpack.c.l.b16 %v1640
      %v1911 = vunpack.c.l.b16 %v1641
      %v1912 = vunpack.c.h.b16 %v1636
      %v1913 = vunpack.c.h.b16 %v1637
      %v1914 = vunpack.c.h.b16 %v1638
      %v1915 = vunpack.c.h.b16 %v1639
      %v1916 = vunpack.c.h.b16 %v1640
      %v1917 = vunpack.c.h.b16 %v1641
      %v1918 = vunpack.c.l.b16 %v1642
      %v1919 = vunpack.c.l.b16 %v1643
      %v1920 = vunpack.c.l.b16 %v1644
      %v1921 = vunpack.c.l.b16 %v1645
      %v1922 = vunpack.c.l.b16 %v1646
      %v1923 = vunpack.c.l.b16 %v1647
      %v1924 = vunpack.c.h.b16 %v1642
      %v1925 = vunpack.c.h.b16 %v1643
      %v1926 = vunpack.c.h.b16 %v1644
      %v1927 = vunpack.c.h.b16 %v1645
      %v1928 = vunpack.c.h.b16 %v1646
      %v1929 = vunpack.c.h.b16 %v1647
      %v1930 = vunpack.c.l.b16 %v1648
      %v1931 = vunpack.c.l.b16 %v1649
      %v1932 = vunpack.c.l.b16 %v1650
      %v1933 = vunpack.c.l.b16 %v1651
      %v1934 = vunpack.c.l.b16 %v1652
      %v1935 = vunpack.c.l.b16 %v1653
      %v1936 = vunpack.c.h.b16 %v1648
      %v1937 = vunpack.c.h.b16 %v1649
      %v1938 = vunpack.c.h.b16 %v1650
      %v1939 = vunpack.c.h.b16 %v1651
      %v1940 = vunpack.c.h.b16 %v1652
      %v1941 = vunpack.c.h.b16 %v1653
      %v1942 = vpack.c.b16 %v1751, %v1750
      %v1943 = vpack.c.b16 %v1753, %v1752
      %v1944 = vpack.c.b16 %v1755, %v1754
      %v1945 = vpack.c.b16 %v1757, %v1756
      %v1946 = vpack.c.b16 %v1759, %v1758
      %v1947 = vpack.c.b16 %v1761, %v1760
      %v1948 = vpack.c.b16 %v1763, %v1762
      %v1949 = vpack.c.b16 %v1765, %v1764
      %v1950 = vpack.c.b16 %v1767, %v1766
      %v1951 = vpack.c.b16 %v1769, %v1768
      %v1952 = vpack.c.b16 %v1771, %v1770
      %v1953 = vpack.c.b16 %v1773, %v1772
      %v1954 = vpack.c.b16 %v1775, %v1774
      %v1955 = vpack.c.b16 %v1777, %v1776
      %v1956 = vpack.c.b16 %v1779, %v1778
      %v1957 = vpack.c.b16 %v1781, %v1780
      %v1958 = vpack.c.b16 %v1783, %v1782
      %v1959 = vpack.c.b16 %v1785, %v1784
      %v1960 = vpack.c.b16 %v1787, %v1786
      %v1961 = vpack.c.b16 %v1789, %v1788
      %v1962 = vpack.c.b16 %v1791, %v1790
      %v1963 = vpack.c.b16 %v1793, %v1792
      %v1964 = vpack.c.b16 %v1795, %v1794
      %v1965 = vpack.c.b16 %v1797, %v1796
      %v1966 = vpack.c.b16 %v1799, %v1798
      %v1967 = vpack.c.b16 %v1801, %v1800
      %v1968 = vpack.c.b16 %v1803, %v1802
      %v1969 = vpack.c.b16 %v1805, %v1804
      %v1970 = vpack.c.b16 %v1807, %v1806
      %v1971 = vpack.c.b16 %v1809, %v1808
      %v1972 = vpack.c.b16 %v1811, %v1810
      %v1973 = vpack.c.b16 %v1813, %v1812
      %v1974 = vpack.c.b16 %v1815, %v1814
      %v1975 = vpack.c.b16 %v1817, %v1816
      %v1976 = vpack.c.b16 %v1819, %v1818
      %v1977 = vpack.c.b16 %v1821, %v1820
      %v1978 = vpack.c.b16 %v1823, %v1822
      %v1979 = vpack.c.b16 %v1825, %v1824
      %v1980 = vpack.c.b16 %v1827, %v1826
      %v1981 = vpack.c.b16 %v1829, %v1828
      %v1982 = vpack.c.b16 %v1831, %v1830
      %v1983 = vpack.c.b16 %v1833, %v1832
      %v1984 = vpack.c.b16 %v1835, %v1834
      %v1985 = vpack.c.b16 %v1837, %v1836
      %v1986 = vpack.c.b16 %v1839, %v1838
      %v1987 = vpack.c.b16 %v1841, %v1840
      %v1988 = vpack.c.b16 %v1843, %v1842
      %v1989 = vpack.c.b16 %v1845, %v1844
      %v1990 = vpack.c.b16 %v1847, %v1846
      %v1991 = vpack.c.b16 %v1849, %v1848
      %v1992 = vpack.c.b16 %v1851, %v1850
      %v1993 = vpack.c.b16 %v1853, %v1852
      %v1994 = vpack.c.b16 %v1855, %v1854
      %v1995 = vpack.c.b16 %v1857, %v1856
      %v1996 = vpack.c.b16 %v1859, %v1858
      %v1997 = vpack.c.b16 %v1861, %v1860
      %v1998 = vpack.c.b16 %v1863, %v1862
      %v1999 = vpack.c.b16 %v1865, %v1864
      %v2000 = vpack.c.b16 %v1867, %v1866
      %v2001 = vpack.c.b16 %v1869, %v1868
      %v2002 = vpack.c.b16 %v1871, %v1870
      %v2003 = vpack.c.b16 %v1873, %v1872
      %v2004 = vpack.c.b16 %v1875, %v1874
      %v2005 = vpack.c.b16 %v1877, %v1876
      %v2006 = vpack.c.b16 %v1879, %v1878
      %v2007 = vpack.c.b16 %v1881, %v1880
      %v2008 = vpack.c.b16 %v1883, %v1882
      %v2009 = vpack.c.b16 %v1885, %v1884
      %v2010 = vpack.c.b16 %v1887, %v1886
      %v2011 = vpack.c.b16 %v1889, %v1888
      %v2012 = vpack.c.b16 %v1891, %v1890
      %v2013 = vpack.c.b16 %v1893, %v1892
      %v2014 = vpack.c.b16 %v1895, %v1894
      %v2015 = vpack.c.b16 %v1897, %v1896
      %v2016 = vpack.c.b16 %v1899, %v1898
      %v2017 = vpack.c.b16 %v1901, %v1900
      %v2018 = vpack.c.b16 %v1903, %v1902
      %v2019 = vpack.c.b16 %v1905, %v1904
      %v2020 = vpack.c.b16 %v1907, %v1906
      %v2021 = vpack.c.b16 %v1909, %v1908
      %v2022 = vpack.c.b16 %v1911, %v1910
      %v2023 = vpack.c.b16 %v1913, %v1912
      %v2024 = vpack.c.b16 %v1915, %v1914
      %v2025 = vpack.c.b16 %v1917, %v1916
      %v2026 = vpack.c.b16 %v1919, %v1918
      %v2027 = vpack.c.b16 %v1921, %v1920
      %v2028 = vpack.c.b16 %v1923, %v1922
      %v2029 = vpack.c.b16 %v1925, %v1924
      %v2030 = vpack.c.b16 %v1927, %v1926
      %v2031 = vpack.c.b16 %v1929, %v1928
      %v2032 = vpack.c.b16 %v1931, %v1930
      %v2033 = vpack.c.b16 %v1933, %v1932
      %v2034 = vpack.c.b16 %v1935, %v1934
      %v2035 = vpack.c.b16 %v1937, %v1936
      %v2036 = vpack.c.b16 %v1939, %v1938
      %v2037 = vpack.c.b16 %v1941, %v1940
      %2134 = vst [vmem:[%s177] sm:$0xff] %v1942
      %2135 = vst [vmem:[%s177 + $0x8] sm:$0xff] %v1943
      %2136 = vst [vmem:[%s177 + $0x10] sm:$0xff] %v1944
      %2137 = vst [vmem:[%s177 + $0x18] sm:$0xff] %v1945
      %2138 = vst [vmem:[%s177 + $0x20] sm:$0xff] %v1946
      %2139 = vst [vmem:[%s177 + $0x28] sm:$0xff] %v1947
      %2140 = vst [vmem:[%s177 + $0x30] sm:$0xff] %v1948
      %2141 = vst [vmem:[%s177 + $0x38] sm:$0xff] %v1949
      %2142 = vst [vmem:[%s177 + $0x40] sm:$0xff] %v1950
      %2143 = vst [vmem:[%s177 + $0x48] sm:$0xff] %v1951
      %2144 = vst [vmem:[%s177 + $0x50] sm:$0xff] %v1952
      %2145 = vst [vmem:[%s177 + $0x58] sm:$0xff] %v1953
      %2146 = vst [vmem:[%s177 + $0x60] sm:$0xff] %v1954
      %2147 = vst [vmem:[%s177 + $0x68] sm:$0xff] %v1955
      %2148 = vst [vmem:[%s177 + $0x70] sm:$0xff] %v1956
      %2149 = vst [vmem:[%s177 + $0x78] sm:$0xff] %v1957
      %2150 = vst [vmem:[%s177 + $0x80] sm:$0xff] %v1958
      %2151 = vst [vmem:[%s177 + $0x88] sm:$0xff] %v1959
      %2152 = vst [vmem:[%s177 + $0x90] sm:$0xff] %v1960
      %2153 = vst [vmem:[%s177 + $0x98] sm:$0xff] %v1961
      %2154 = vst [vmem:[%s177 + $0xa0] sm:$0xff] %v1962
      %2155 = vst [vmem:[%s177 + $0xa8] sm:$0xff] %v1963
      %2156 = vst [vmem:[%s177 + $0xb0] sm:$0xff] %v1964
      %2157 = vst [vmem:[%s177 + $0xb8] sm:$0xff] %v1965
      %2158 = vst [vmem:[%s177 + $0xc0] sm:$0xff] %v1966
      %2159 = vst [vmem:[%s177 + $0xc8] sm:$0xff] %v1967
      %2160 = vst [vmem:[%s177 + $0xd0] sm:$0xff] %v1968
      %2161 = vst [vmem:[%s177 + $0xd8] sm:$0xff] %v1969
      %2162 = vst [vmem:[%s177 + $0xe0] sm:$0xff] %v1970
      %2163 = vst [vmem:[%s177 + $0xe8] sm:$0xff] %v1971
      %2164 = vst [vmem:[%s177 + $0xf0] sm:$0xff] %v1972
      %2165 = vst [vmem:[%s177 + $0xf8] sm:$0xff] %v1973
      %2166 = vst [vmem:[%s177 + $0x100] sm:$0xff] %v1974
      %2167 = vst [vmem:[%s177 + $0x108] sm:$0xff] %v1975
      %2168 = vst [vmem:[%s177 + $0x110] sm:$0xff] %v1976
      %2169 = vst [vmem:[%s177 + $0x118] sm:$0xff] %v1977
      %2170 = vst [vmem:[%s177 + $0x120] sm:$0xff] %v1978
      %2171 = vst [vmem:[%s177 + $0x128] sm:$0xff] %v1979
      %2172 = vst [vmem:[%s177 + $0x130] sm:$0xff] %v1980
      %2173 = vst [vmem:[%s177 + $0x138] sm:$0xff] %v1981
      %2174 = vst [vmem:[%s177 + $0x140] sm:$0xff] %v1982
      %2175 = vst [vmem:[%s177 + $0x148] sm:$0xff] %v1983
      %2176 = vst [vmem:[%s177 + $0x150] sm:$0xff] %v1984
      %2177 = vst [vmem:[%s177 + $0x158] sm:$0xff] %v1985
      %2178 = vst [vmem:[%s177 + $0x160] sm:$0xff] %v1986
      %2179 = vst [vmem:[%s177 + $0x168] sm:$0xff] %v1987
      %2180 = vst [vmem:[%s177 + $0x170] sm:$0xff] %v1988
      %2181 = vst [vmem:[%s177 + $0x178] sm:$0xff] %v1989
      %2182 = vst [vmem:[%s177 + $0x180] sm:$0xff] %v1990
      %2183 = vst [vmem:[%s177 + $0x188] sm:$0xff] %v1991
      %2184 = vst [vmem:[%s177 + $0x190] sm:$0xff] %v1992
      %2185 = vst [vmem:[%s177 + $0x198] sm:$0xff] %v1993
      %2186 = vst [vmem:[%s177 + $0x1a0] sm:$0xff] %v1994
      %2187 = vst [vmem:[%s177 + $0x1a8] sm:$0xff] %v1995
      %2188 = vst [vmem:[%s177 + $0x1b0] sm:$0xff] %v1996
      %2189 = vst [vmem:[%s177 + $0x1b8] sm:$0xff] %v1997
      %2190 = vst [vmem:[%s177 + $0x1c0] sm:$0xff] %v1998
      %2191 = vst [vmem:[%s177 + $0x1c8] sm:$0xff] %v1999
      %2192 = vst [vmem:[%s177 + $0x1d0] sm:$0xff] %v2000
      %2193 = vst [vmem:[%s177 + $0x1d8] sm:$0xff] %v2001
      %2194 = vst [vmem:[%s177 + $0x1e0] sm:$0xff] %v2002
      %2195 = vst [vmem:[%s177 + $0x1e8] sm:$0xff] %v2003
      %2196 = vst [vmem:[%s177 + $0x1f0] sm:$0xff] %v2004
      %2197 = vst [vmem:[%s177 + $0x1f8] sm:$0xff] %v2005
      %2198 = vst [vmem:[%s177 + $0x200] sm:$0xff] %v2006
      %2199 = vst [vmem:[%s177 + $0x208] sm:$0xff] %v2007
      %2200 = vst [vmem:[%s177 + $0x210] sm:$0xff] %v2008
      %2201 = vst [vmem:[%s177 + $0x218] sm:$0xff] %v2009
      %2202 = vst [vmem:[%s177 + $0x220] sm:$0xff] %v2010
      %2203 = vst [vmem:[%s177 + $0x228] sm:$0xff] %v2011
      %2204 = vst [vmem:[%s177 + $0x230] sm:$0xff] %v2012
      %2205 = vst [vmem:[%s177 + $0x238] sm:$0xff] %v2013
      %2206 = vst [vmem:[%s177 + $0x240] sm:$0xff] %v2014
      %2207 = vst [vmem:[%s177 + $0x248] sm:$0xff] %v2015
      %2208 = vst [vmem:[%s177 + $0x250] sm:$0xff] %v2016
      %2209 = vst [vmem:[%s177 + $0x258] sm:$0xff] %v2017
      %2210 = vst [vmem:[%s177 + $0x260] sm:$0xff] %v2018
      %2211 = vst [vmem:[%s177 + $0x268] sm:$0xff] %v2019
      %2212 = vst [vmem:[%s177 + $0x270] sm:$0xff] %v2020
      %2213 = vst [vmem:[%s177 + $0x278] sm:$0xff] %v2021
      %2214 = vst [vmem:[%s177 + $0x280] sm:$0xff] %v2022
      %2215 = vst [vmem:[%s177 + $0x288] sm:$0xff] %v2023
      %2216 = vst [vmem:[%s177 + $0x290] sm:$0xff] %v2024
      %2217 = vst [vmem:[%s177 + $0x298] sm:$0xff] %v2025
      %2218 = vst [vmem:[%s177 + $0x2a0] sm:$0xff] %v2026
      %2219 = vst [vmem:[%s177 + $0x2a8] sm:$0xff] %v2027
      %2220 = vst [vmem:[%s177 + $0x2b0] sm:$0xff] %v2028
      %2221 = vst [vmem:[%s177 + $0x2b8] sm:$0xff] %v2029
      %2222 = vst [vmem:[%s177 + $0x2c0] sm:$0xff] %v2030
      %2223 = vst [vmem:[%s177 + $0x2c8] sm:$0xff] %v2031
      %2224 = vst [vmem:[%s177 + $0x2d0] sm:$0xff] %v2032
      %2225 = vst [vmem:[%s177 + $0x2d8] sm:$0xff] %v2033
      %2226 = vst [vmem:[%s177 + $0x2e0] sm:$0xff] %v2034
      %2227 = vst [vmem:[%s177 + $0x2e8] sm:$0xff] %v2035
      %2228 = vst [vmem:[%s177 + $0x2f0] sm:$0xff] %v2036
      %2229 = vst [vmem:[%s177 + $0x2f8] sm:$0xff] %v2037
      %s2230 = smul.u32 32, %s14
      %p2231 = scmp.lt.s32.totalorder %s2230, 63
      %s2232 = scalar_select %p2231, %s2230, 63
      %s2233 = smul.addr %s2232, 6
      %s2234 = smul.addr %s2233, 4
      %s2235 = scalar_lea.vmem %s3, %s2234
      // Predicated region
      $region33: #{multi_head_attention.3} parent=31 // pred_check
        %p2236 = pneg %p100
      $region34: #{multi_head_attention.3} parent=31 // pred_check_branch
        %2238 = sbr.rel (%p2236) target = $region36
      $region35: #{multi_head_attention.3} parent=31 // pred_region
        %s2239 = smul.u32 32, %s14
      $region36: #{multi_head_attention.3} parent=31 // pred_fallthru
        _
    $region32: #{multi_head_attention.3} parent=5 // pred_fallthru
      _
    %p2240 = scmp.le.s32.totalorder 2, %s9
    // Predicated region
    $region37: #{multi_head_attention.3} parent=5 // pred_check
      %p2241 = pneg %p2240
    $region38: #{multi_head_attention.3} parent=5 // pred_check_branch
      %2243 = sbr.rel (%p2241) target = $region40
    $region39: #{multi_head_attention.3} parent=5 // pred_region
      %s2244 = ssub.s32 %s9, 2
      // Predicated region
      $region41: #{multi_head_attention.3} parent=39 // pred_check
        %p2245 = pneg %p106
      $region42: #{multi_head_attention.3} parent=39 // pred_check_branch
        %2247 = sbr.rel (%p2245) target = $region44
      $region43: #{multi_head_attention.3} parent=39 // pred_region
        %s2248 = smul.u32 32, %s15
        %p2249 = scmp.lt.s32.totalorder %s2248, 63
        %s2250 = scalar_select %p2249, %s2248, 63
        %s2251 = smul.addr %s2250, 6
        %s2252 = smul.addr %s2251, 4
        %s2253 = scalar_lea.vmem %s3, %s2252
      $region44: #{multi_head_attention.3} parent=39 // pred_fallthru
        _
    $region40: #{multi_head_attention.3} parent=5 // pred_fallthru
      _
  $region6: #{multi_head_attention.3} parent=0 // loop_footer
    %s13 = sadd.s32 1, %s9
  $region7: #{multi_head_attention.3} parent=0 // loop_footer_branch
    %8 = sbr.rel target = $region3
  $region8: #{multi_head_attention.3} parent=0 // loop_exit
    _

// kernel: multi_head_attention.4
$region0: #{multi_head_attention.4}
  #allocation0 [shape = 'u32[]', space=smem, size = 0x4, offset = 0x4, fixed_abs, tag = 'smem constant byte address 0x4 - core index']
  #allocation1 [shape = 'u32[144,128]{1,0:T(1,128)}', space=vmem, size = 0x12000, scoped, tag = 'internal scratch']
  #allocation2 [shape = 'f32[2,128,1]{2,1,0:T(8,128)}', space=vmem, size = 0x20000, scoped, tag = 'scratch operand']
  #allocation3 [shape = 'f32[2,128,1]{2,1,0:T(8,128)}', space=vmem, size = 0x20000, scoped, tag = 'scratch operand']
  #allocation4 [shape = 'f32[2,128,128]{2,1,0:T(8,128)}', space=vmem, size = 0x20000, scoped, tag = 'scratch operand']
  %s0 = inlined_call_operand.vmem [shape: bf16[2,2,256,128], index: 0, kind: input, shape index: {}]
  %s1 = inlined_call_operand.vmem [shape: bf16[2,2,256,128], index: 1, kind: input, shape index: {}]
  %s2 = inlined_call_operand.vmem [shape: bf16[2,2,256,128], index: 2, kind: input, shape index: {}]
  %s3 = inlined_call_operand.vmem [shape: bf16[2,2,256,128], index: 3, kind: output, shape index: {}]
  %s4 = sld [smem:[#allocation0]]
  $region217: #{multi_head_attention.4} parent=0
    _
  %s6 = ssub.s32 1, %s4
  %s7 = scalar_select 0, %s6, %s4
  $region1: #{multi_head_attention.4} parent=0
    #allocation5 [shape = 'u8[131072]{0}', space=vmem, size = 0x20000, scoped, tag = 'input window, operand 0']
    #allocation6 [shape = 'u8[131072]{0}', space=vmem, size = 0x20000, scoped, tag = 'input window, operand 1']
    #allocation7 [shape = 'u8[131072]{0}', space=vmem, size = 0x20000, scoped, tag = 'input window, operand 2']
    #allocation8 [shape = 'u8[131072]{0}', space=vmem, size = 0x20000, scoped, tag = 'output window, operand 0']
    loop: start=0, step=1, limit=10
    $region2: #{multi_head_attention.4} parent=1 // loop_pre_header
      _
    $region3: #{multi_head_attention.4} parent=1 // loop_header
      %s9 = sphi 0, %s13
      %p10 = scmp.ge.s32.totalorder %s9, 10
      %s16 = sphi 0, %s35
      %s17 = sphi 0, %s31
      %s18 = sphi 0, %s27
      %s19 = sphi 0, %s16
      %s20 = sphi 0, %s17
      %s21 = sphi 0, %s18
      %s22 = sphi 0, %s19
      %s23 = sphi 0, %s20
      %s24 = sphi 0, %s21
      %s40 = sphi 0, %s42
      %s43 = sphi 0, %s40
      %s44 = sphi 0, %s43
      %s60 = sphi 0, %s44
      %s68 = sphi 0, %s70
      %s71 = sphi 0, %s68
      %s72 = sphi 0, %s71
      %s88 = sphi 0, %s72
      %s96 = sphi 0, %s98
      %s99 = sphi 0, %s96
      %s100 = sphi 0, %s99
      %s116 = sphi 0, %s100
      %s124 = sphi 0, %s126
      %s127 = sphi 0, %s124
      %s128 = sphi 0, %s127
      %s144 = sphi 0, %s128
    $region4: #{multi_head_attention.4} parent=1 // loop_header_branch
      %12 = sbr.rel (%p10) target = $region8
    $region5: #{multi_head_attention.4} parent=1 // loop_body
      %s14 = ssub.s32 %s9, 1
      %s15 = ssub.s32 %s9, 2
      %s25 = sadd.s32 1, %s18
      %p26 = scmp.ge.s32.totalorder %s25, 2
      %s27 = scalar_select %p26, 0, %s25
      %s28 = sadd.s32 1, %s17
      %s29 = scalar_select %p26, %s28, %s17
      %p30 = scmp.ge.s32.totalorder %s29, 2
      %s31 = scalar_select %p30, 0, %s29
      %s32 = sadd.s32 1, %s16
      %s33 = scalar_select %p30, %s32, %s16
      %p34 = scmp.ge.s32.totalorder %s33, 2
      %s35 = scalar_select %p34, 0, %s33
      %s36 = ssub.s32 %s16, %s35
      %s37 = ssub.s32 %s17, %s31
      %s38 = sor.u32 %s36, %s37
      %p39 = scmp.eq.s32.totalorder %s38, 0
      %s41 = sadd.s32 %s40, 1
      %s42 = scalar_select %p39, %s40, %s41
      %p45 = pneg %p39
      %p46 = scmp.eq.s32.totalorder %s9, 7
      %p47 = por %p45, %p46
      %p48 = scmp.ne.s32.totalorder %s40, %s43
      %p49 = scmp.eq.s32.totalorder %s9, 0
      %p50 = por %p48, %p49
      %p51 = scmp.ne.s32.totalorder %s40, %s43
      %p52 = scmp.eq.s32.totalorder %s14, 7
      %p53 = por %p51, %p52
      %p54 = scmp.ne.s32.totalorder %s43, %s44
      %p55 = scmp.eq.s32.totalorder %s14, 0
      %p56 = por %p54, %p55
      %p57 = scmp.ne.s32.totalorder %s43, %s44
      %p58 = scmp.eq.s32.totalorder %s15, 7
      %p59 = por %p57, %p58
      %p61 = scmp.ne.s32.totalorder %s44, %s60
      %p62 = scmp.eq.s32.totalorder %s15, 0
      %p63 = por %p61, %p62
      %s64 = ssub.s32 %s16, %s35
      %s65 = ssub.s32 %s18, %s27
      %s66 = sor.u32 %s64, %s65
      %p67 = scmp.eq.s32.totalorder %s66, 0
      %s69 = sadd.s32 %s68, 1
      %s70 = scalar_select %p67, %s68, %s69
      %p73 = pneg %p67
      %p74 = scmp.eq.s32.totalorder %s9, 7
      %p75 = por %p73, %p74
      %p76 = scmp.ne.s32.totalorder %s68, %s71
      %p77 = scmp.eq.s32.totalorder %s9, 0
      %p78 = por %p76, %p77
      %p79 = scmp.ne.s32.totalorder %s68, %s71
      %p80 = scmp.eq.s32.totalorder %s14, 7
      %p81 = por %p79, %p80
      %p82 = scmp.ne.s32.totalorder %s71, %s72
      %p83 = scmp.eq.s32.totalorder %s14, 0
      %p84 = por %p82, %p83
      %p85 = scmp.ne.s32.totalorder %s71, %s72
      %p86 = scmp.eq.s32.totalorder %s15, 7
      %p87 = por %p85, %p86
      %p89 = scmp.ne.s32.totalorder %s72, %s88
      %p90 = scmp.eq.s32.totalorder %s15, 0
      %p91 = por %p89, %p90
      %s92 = ssub.s32 %s16, %s35
      %s93 = ssub.s32 %s18, %s27
      %s94 = sor.u32 %s92, %s93
      %p95 = scmp.eq.s32.totalorder %s94, 0
      %s97 = sadd.s32 %s96, 1
      %s98 = scalar_select %p95, %s96, %s97
      %p101 = pneg %p95
      %p102 = scmp.eq.s32.totalorder %s9, 7
      %p103 = por %p101, %p102
      %p104 = scmp.ne.s32.totalorder %s96, %s99
      %p105 = scmp.eq.s32.totalorder %s9, 0
      %p106 = por %p104, %p105
      %p107 = scmp.ne.s32.totalorder %s96, %s99
      %p108 = scmp.eq.s32.totalorder %s14, 7
      %p109 = por %p107, %p108
      %p110 = scmp.ne.s32.totalorder %s99, %s100
      %p111 = scmp.eq.s32.totalorder %s14, 0
      %p112 = por %p110, %p111
      %p113 = scmp.ne.s32.totalorder %s99, %s100
      %p114 = scmp.eq.s32.totalorder %s15, 7
      %p115 = por %p113, %p114
      %p117 = scmp.ne.s32.totalorder %s100, %s116
      %p118 = scmp.eq.s32.totalorder %s15, 0
      %p119 = por %p117, %p118
      %s120 = ssub.s32 %s16, %s35
      %s121 = ssub.s32 %s17, %s31
      %s122 = sor.u32 %s120, %s121
      %p123 = scmp.eq.s32.totalorder %s122, 0
      %s125 = sadd.s32 %s124, 1
      %s126 = scalar_select %p123, %s124, %s125
      %p129 = pneg %p123
      %p130 = scmp.eq.s32.totalorder %s9, 7
      %p131 = por %p129, %p130
      %p132 = scmp.ne.s32.totalorder %s124, %s127
      %p133 = scmp.eq.s32.totalorder %s9, 0
      %p134 = por %p132, %p133
      %p135 = scmp.ne.s32.totalorder %s124, %s127
      %p136 = scmp.eq.s32.totalorder %s14, 7
      %p137 = por %p135, %p136
      %p138 = scmp.ne.s32.totalorder %s127, %s128
      %p139 = scmp.eq.s32.totalorder %s14, 0
      %p140 = por %p138, %p139
      %p141 = scmp.ne.s32.totalorder %s127, %s128
      %p142 = scmp.eq.s32.totalorder %s15, 7
      %p143 = por %p141, %p142
      %p145 = scmp.ne.s32.totalorder %s128, %s144
      %p146 = scmp.eq.s32.totalorder %s15, 0
      %p147 = por %p145, %p146
      %p148 = scmp.le.s32.totalorder 1, %s9
      %p149 = scmp.lt.s32.totalorder %s9, 9
      %p150 = pnand %p148, %p149
      %p151 = pneg %p150
      // Predicated region
      $region9: #{multi_head_attention.4} parent=5 // pred_check
        _
      $region10: #{multi_head_attention.4} parent=5 // pred_check_branch
        %153 = sbr.rel (%p150) target = $region12
      $region11: #{multi_head_attention.4} parent=5 // pred_region
        %s154 = ssub.s32 %s9, 1
      $region12: #{multi_head_attention.4} parent=5 // pred_fallthru
        _
      %p155 = scmp.lt.s32.totalorder %s9, 8
      // Predicated region
      $region13: #{multi_head_attention.4} parent=5 // pred_check
        %p156 = pneg %p155
      $region14: #{multi_head_attention.4} parent=5 // pred_check_branch
        %158 = sbr.rel (%p156) target = $region16
      $region15: #{multi_head_attention.4} parent=5 // pred_region
        // Predicated region
        $region17: #{multi_head_attention.4} parent=15 // pred_check
          %p159 = pneg %p50
        $region18: #{multi_head_attention.4} parent=15 // pred_check_branch
          %161 = sbr.rel (%p159) target = $region20
        $region19: #{multi_head_attention.4} parent=15 // pred_region
          %s162 = sand.u32 %s40, 1
          %s163 = sand.u32 %s40, 1
          %s164 = smul.addr %s163, 128
          %s165 = scalar_lea.vmem [#allocation5], %s164
          %s166 = smul.u32 16, %s17
          %s167 = smul.addr %s16, 64
          %s168 = sadd.s32 %s166, %s167
          %s169 = smul.addr %s168, 4
          %s170 = scalar_lea.vmem %s0, %s169
          // Predicated region
          $region21: #{multi_head_attention.4} parent=19 // pred_check
            _
          $region22: #{multi_head_attention.4} parent=19 // pred_check_branch
            %172 = sbr.rel (0) target = $region24
          $region23: #{multi_head_attention.4} parent=19 // pred_region
            // Predicated region
            $region25: #{multi_head_attention.4} parent=23 // pred_check
              _
            $region26: #{multi_head_attention.4} parent=23 // pred_check_branch
              %174 = sbr.rel target = $region28
            $region27: #{multi_head_attention.4} parent=23 // pred_region
              // Predicated region
              $region40: #{multi_head_attention.4} parent=27 // pred_check
                _
              $region41: #{multi_head_attention.4} parent=27 // pred_check_branch
                %251 = sbr.rel (0) target = $region43
              $region42: #{multi_head_attention.4} parent=27 // pred_region
                loop: start=0, step=1, limit=1
                $region44: #{multi_head_attention.4} parent=42 // loop_pre_header
                  _
                $region45: #{multi_head_attention.4} parent=42 // loop_header
                  %s253 = sphi 0, %s257
                  %p254 = scmp.ge.s32.totalorder %s253, 1
                  %s258 = sphi %s170, %s170
                  %s259 = sphi %s165, %s165
                $region46: #{multi_head_attention.4} parent=42 // loop_header_branch
                  %256 = sbr.rel (%p254) target = $region50
                $region47: #{multi_head_attention.4} parent=42 // loop_body
                  _
                $region48: #{multi_head_attention.4} parent=42 // loop_footer
                  %s257 = sadd.s32 1, %s253
                $region49: #{multi_head_attention.4} parent=42 // loop_footer_branch
                  %252 = sbr.rel target = $region45
                $region50: #{multi_head_attention.4} parent=42 // loop_exit
                  _
                loop: start=0, step=1, limit=1
                $region51: #{multi_head_attention.4} parent=42 // loop_pre_header
                  _
                $region52: #{multi_head_attention.4} parent=42 // loop_header
                  %s262 = sphi 0, %s266
                  %p263 = scmp.ge.s32.totalorder %s262, 1
                  %s267 = sphi %s170, %s170
                  %s268 = sphi %s165, %s165
                $region53: #{multi_head_attention.4} parent=42 // loop_header_branch
                  %265 = sbr.rel (%p263) target = $region57
                $region54: #{multi_head_attention.4} parent=42 // loop_body
                  %v269 = vld [vmem:[%s267] sm:$0xf]
                  %270 = vst [vmem:[%s268] sm:$0xf] %v269
                  %v271 = vld [vmem:[%s267 + $0x4] sm:$0xf]
                  %272 = vst [vmem:[%s268 + $0x4] sm:$0xf] %v271
                  %v273 = vld [vmem:[%s267 + $0x8] sm:$0xf]
                  %274 = vst [vmem:[%s268 + $0x8] sm:$0xf] %v273
                  %v275 = vld [vmem:[%s267 + $0xc] sm:$0xf]
                  %276 = vst [vmem:[%s268 + $0xc] sm:$0xf] %v275
                  %v277 = vld [vmem:[%s267 + $0x10] sm:$0xf]
                  %278 = vst [vmem:[%s268 + $0x10] sm:$0xf] %v277
                  %v279 = vld [vmem:[%s267 + $0x14] sm:$0xf]
                  %280 = vst [vmem:[%s268 + $0x14] sm:$0xf] %v279
                  %v281 = vld [vmem:[%s267 + $0x18] sm:$0xf]
                  %282 = vst [vmem:[%s268 + $0x18] sm:$0xf] %v281
                  %v283 = vld [vmem:[%s267 + $0x1c] sm:$0xf]
                  %284 = vst [vmem:[%s268 + $0x1c] sm:$0xf] %v283
                  %v285 = vld [vmem:[%s267 + $0x20] sm:$0xf]
                  %286 = vst [vmem:[%s268 + $0x20] sm:$0xf] %v285
                  %v287 = vld [vmem:[%s267 + $0x24] sm:$0xf]
                  %288 = vst [vmem:[%s268 + $0x24] sm:$0xf] %v287
                  %v289 = vld [vmem:[%s267 + $0x28] sm:$0xf]
                  %290 = vst [vmem:[%s268 + $0x28] sm:$0xf] %v289
                  %v291 = vld [vmem:[%s267 + $0x2c] sm:$0xf]
                  %292 = vst [vmem:[%s268 + $0x2c] sm:$0xf] %v291
                  %v293 = vld [vmem:[%s267 + $0x30] sm:$0xf]
                  %294 = vst [vmem:[%s268 + $0x30] sm:$0xf] %v293
                  %v295 = vld [vmem:[%s267 + $0x34] sm:$0xf]
                  %296 = vst [vmem:[%s268 + $0x34] sm:$0xf] %v295
                  %v297 = vld [vmem:[%s267 + $0x38] sm:$0xf]
                  %298 = vst [vmem:[%s268 + $0x38] sm:$0xf] %v297
                  %v299 = vld [vmem:[%s267 + $0x3c] sm:$0xf]
                  %300 = vst [vmem:[%s268 + $0x3c] sm:$0xf] %v299
                  %v301 = vld [vmem:[%s267 + $0x80] sm:$0xf]
                  %302 = vst [vmem:[%s268 + $0x40] sm:$0xf] %v301
                  %v303 = vld [vmem:[%s267 + $0x84] sm:$0xf]
                  %304 = vst [vmem:[%s268 + $0x44] sm:$0xf] %v303
                  %v305 = vld [vmem:[%s267 + $0x88] sm:$0xf]
                  %306 = vst [vmem:[%s268 + $0x48] sm:$0xf] %v305
                  %v307 = vld [vmem:[%s267 + $0x8c] sm:$0xf]
                  %308 = vst [vmem:[%s268 + $0x4c] sm:$0xf] %v307
                  %v309 = vld [vmem:[%s267 + $0x90] sm:$0xf]
                  %310 = vst [vmem:[%s268 + $0x50] sm:$0xf] %v309
                  %v311 = vld [vmem:[%s267 + $0x94] sm:$0xf]
                  %312 = vst [vmem:[%s268 + $0x54] sm:$0xf] %v311
                  %v313 = vld [vmem:[%s267 + $0x98] sm:$0xf]
                  %314 = vst [vmem:[%s268 + $0x58] sm:$0xf] %v313
                  %v315 = vld [vmem:[%s267 + $0x9c] sm:$0xf]
                  %316 = vst [vmem:[%s268 + $0x5c] sm:$0xf] %v315
                  %v317 = vld [vmem:[%s267 + $0xa0] sm:$0xf]
                  %318 = vst [vmem:[%s268 + $0x60] sm:$0xf] %v317
                  %v319 = vld [vmem:[%s267 + $0xa4] sm:$0xf]
                  %320 = vst [vmem:[%s268 + $0x64] sm:$0xf] %v319
                  %v321 = vld [vmem:[%s267 + $0xa8] sm:$0xf]
                  %322 = vst [vmem:[%s268 + $0x68] sm:$0xf] %v321
                  %v323 = vld [vmem:[%s267 + $0xac] sm:$0xf]
                  %324 = vst [vmem:[%s268 + $0x6c] sm:$0xf] %v323
                  %v325 = vld [vmem:[%s267 + $0xb0] sm:$0xf]
                  %326 = vst [vmem:[%s268 + $0x70] sm:$0xf] %v325
                  %v327 = vld [vmem:[%s267 + $0xb4] sm:$0xf]
                  %328 = vst [vmem:[%s268 + $0x74] sm:$0xf] %v327
                  %v329 = vld [vmem:[%s267 + $0xb8] sm:$0xf]
                  %330 = vst [vmem:[%s268 + $0x78] sm:$0xf] %v329
                  %v331 = vld [vmem:[%s267 + $0xbc] sm:$0xf]
                  %332 = vst [vmem:[%s268 + $0x7c] sm:$0xf] %v331
                $region55: #{multi_head_attention.4} parent=42 // loop_footer
                  %s266 = sadd.s32 1, %s262
                $region56: #{multi_head_attention.4} parent=42 // loop_footer_branch
                  %261 = sbr.rel target = $region52
                $region57: #{multi_head_attention.4} parent=42 // loop_exit
                  _
              $region43: #{multi_head_attention.4} parent=27 // pred_fallthru
                _
            $region28: #{multi_head_attention.4} parent=23 // pred_fallthru
              _
            // Predicated region
            $region29: #{multi_head_attention.4} parent=23 // pred_check
              _
            $region30: #{multi_head_attention.4} parent=23 // pred_check_branch
              %176 = sbr.rel (0) target = $region32
            $region31: #{multi_head_attention.4} parent=23 // pred_region
              loop: start=0, step=1, limit=1
              $region33: #{multi_head_attention.4} parent=31 // loop_pre_header
                _
              $region34: #{multi_head_attention.4} parent=31 // loop_header
                %s179 = sphi 0, %s183
                %p180 = scmp.ge.s32.totalorder %s179, 1
                %s184 = sphi %s170, %s170
                %s185 = sphi %s165, %s165
              $region35: #{multi_head_attention.4} parent=31 // loop_header_branch
                %182 = sbr.rel (%p180) target = $region39
              $region36: #{multi_head_attention.4} parent=31 // loop_body
                %v186 = vld [vmem:[%s184] sm:$0xf]
                %187 = vst [vmem:[%s185] sm:$0xf] %v186
                %v188 = vld [vmem:[%s184 + $0x4] sm:$0xf]
                %189 = vst [vmem:[%s185 + $0x4] sm:$0xf] %v188
                %v190 = vld [vmem:[%s184 + $0x8] sm:$0xf]
                %191 = vst [vmem:[%s185 + $0x8] sm:$0xf] %v190
                %v192 = vld [vmem:[%s184 + $0xc] sm:$0xf]
                %193 = vst [vmem:[%s185 + $0xc] sm:$0xf] %v192
                %v194 = vld [vmem:[%s184 + $0x10] sm:$0xf]
                %195 = vst [vmem:[%s185 + $0x10] sm:$0xf] %v194
                %v196 = vld [vmem:[%s184 + $0x14] sm:$0xf]
                %197 = vst [vmem:[%s185 + $0x14] sm:$0xf] %v196
                %v198 = vld [vmem:[%s184 + $0x18] sm:$0xf]
                %199 = vst [vmem:[%s185 + $0x18] sm:$0xf] %v198
                %v200 = vld [vmem:[%s184 + $0x1c] sm:$0xf]
                %201 = vst [vmem:[%s185 + $0x1c] sm:$0xf] %v200
                %v202 = vld [vmem:[%s184 + $0x20] sm:$0xf]
                %203 = vst [vmem:[%s185 + $0x20] sm:$0xf] %v202
                %v204 = vld [vmem:[%s184 + $0x24] sm:$0xf]
                %205 = vst [vmem:[%s185 + $0x24] sm:$0xf] %v204
                %v206 = vld [vmem:[%s184 + $0x28] sm:$0xf]
                %207 = vst [vmem:[%s185 + $0x28] sm:$0xf] %v206
                %v208 = vld [vmem:[%s184 + $0x2c] sm:$0xf]
                %209 = vst [vmem:[%s185 + $0x2c] sm:$0xf] %v208
                %v210 = vld [vmem:[%s184 + $0x30] sm:$0xf]
                %211 = vst [vmem:[%s185 + $0x30] sm:$0xf] %v210
                %v212 = vld [vmem:[%s184 + $0x34] sm:$0xf]
                %213 = vst [vmem:[%s185 + $0x34] sm:$0xf] %v212
                %v214 = vld [vmem:[%s184 + $0x38] sm:$0xf]
                %215 = vst [vmem:[%s185 + $0x38] sm:$0xf] %v214
                %v216 = vld [vmem:[%s184 + $0x3c] sm:$0xf]
                %217 = vst [vmem:[%s185 + $0x3c] sm:$0xf] %v216
                %v218 = vld [vmem:[%s184 + $0x80] sm:$0xf]
                %219 = vst [vmem:[%s185 + $0x40] sm:$0xf] %v218
                %v220 = vld [vmem:[%s184 + $0x84] sm:$0xf]
                %221 = vst [vmem:[%s185 + $0x44] sm:$0xf] %v220
                %v222 = vld [vmem:[%s184 + $0x88] sm:$0xf]
                %223 = vst [vmem:[%s185 + $0x48] sm:$0xf] %v222
                %v224 = vld [vmem:[%s184 + $0x8c] sm:$0xf]
                %225 = vst [vmem:[%s185 + $0x4c] sm:$0xf] %v224
                %v226 = vld [vmem:[%s184 + $0x90] sm:$0xf]
                %227 = vst [vmem:[%s185 + $0x50] sm:$0xf] %v226
                %v228 = vld [vmem:[%s184 + $0x94] sm:$0xf]
                %229 = vst [vmem:[%s185 + $0x54] sm:$0xf] %v228
                %v230 = vld [vmem:[%s184 + $0x98] sm:$0xf]
                %231 = vst [vmem:[%s185 + $0x58] sm:$0xf] %v230
                %v232 = vld [vmem:[%s184 + $0x9c] sm:$0xf]
                %233 = vst [vmem:[%s185 + $0x5c] sm:$0xf] %v232
                %v234 = vld [vmem:[%s184 + $0xa0] sm:$0xf]
                %235 = vst [vmem:[%s185 + $0x60] sm:$0xf] %v234
                %v236 = vld [vmem:[%s184 + $0xa4] sm:$0xf]
                %237 = vst [vmem:[%s185 + $0x64] sm:$0xf] %v236
                %v238 = vld [vmem:[%s184 + $0xa8] sm:$0xf]
                %239 = vst [vmem:[%s185 + $0x68] sm:$0xf] %v238
                %v240 = vld [vmem:[%s184 + $0xac] sm:$0xf]
                %241 = vst [vmem:[%s185 + $0x6c] sm:$0xf] %v240
                %v242 = vld [vmem:[%s184 + $0xb0] sm:$0xf]
                %243 = vst [vmem:[%s185 + $0x70] sm:$0xf] %v242
                %v244 = vld [vmem:[%s184 + $0xb4] sm:$0xf]
                %245 = vst [vmem:[%s185 + $0x74] sm:$0xf] %v244
                %v246 = vld [vmem:[%s184 + $0xb8] sm:$0xf]
                %247 = vst [vmem:[%s185 + $0x78] sm:$0xf] %v246
                %v248 = vld [vmem:[%s184 + $0xbc] sm:$0xf]
                %249 = vst [vmem:[%s185 + $0x7c] sm:$0xf] %v248
              $region37: #{multi_head_attention.4} parent=31 // loop_footer
                %s183 = sadd.s32 1, %s179
              $region38: #{multi_head_attention.4} parent=31 // loop_footer_branch
                %178 = sbr.rel target = $region34
              $region39: #{multi_head_attention.4} parent=31 // loop_exit
                _
            $region32: #{multi_head_attention.4} parent=23 // pred_fallthru
              _
          $region24: #{multi_head_attention.4} parent=19 // pred_fallthru
            _
          %333 = vnop
        $region20: #{multi_head_attention.4} parent=15 // pred_fallthru
          _
        // Predicated region
        $region58: #{multi_head_attention.4} parent=15 // pred_check
          %p334 = pneg %p78
        $region59: #{multi_head_attention.4} parent=15 // pred_check_branch
          %336 = sbr.rel (%p334) target = $region61
        $region60: #{multi_head_attention.4} parent=15 // pred_region
          %s337 = sand.u32 %s68, 1
          %s338 = sand.u32 %s68, 1
          %s339 = smul.addr %s338, 128
          %s340 = scalar_lea.vmem [#allocation6], %s339
          %s341 = smul.u32 16, %s18
          %s342 = smul.addr %s16, 64
          %s343 = sadd.s32 %s341, %s342
          %s344 = smul.addr %s343, 4
          %s345 = scalar_lea.vmem %s1, %s344
          // Predicated region
          $region62: #{multi_head_attention.4} parent=60 // pred_check
            _
          $region63: #{multi_head_attention.4} parent=60 // pred_check_branch
            %347 = sbr.rel (0) target = $region65
          $region64: #{multi_head_attention.4} parent=60 // pred_region
            // Predicated region
            $region66: #{multi_head_attention.4} parent=64 // pred_check
              _
            $region67: #{multi_head_attention.4} parent=64 // pred_check_branch
              %349 = sbr.rel target = $region69
            $region68: #{multi_head_attention.4} parent=64 // pred_region
              // Predicated region
              $region81: #{multi_head_attention.4} parent=68 // pred_check
                _
              $region82: #{multi_head_attention.4} parent=68 // pred_check_branch
                %426 = sbr.rel (0) target = $region84
              $region83: #{multi_head_attention.4} parent=68 // pred_region
                loop: start=0, step=1, limit=1
                $region85: #{multi_head_attention.4} parent=83 // loop_pre_header
                  _
                $region86: #{multi_head_attention.4} parent=83 // loop_header
                  %s428 = sphi 0, %s432
                  %p429 = scmp.ge.s32.totalorder %s428, 1
                  %s433 = sphi %s345, %s345
                  %s434 = sphi %s340, %s340
                $region87: #{multi_head_attention.4} parent=83 // loop_header_branch
                  %431 = sbr.rel (%p429) target = $region91
                $region88: #{multi_head_attention.4} parent=83 // loop_body
                  _
                $region89: #{multi_head_attention.4} parent=83 // loop_footer
                  %s432 = sadd.s32 1, %s428
                $region90: #{multi_head_attention.4} parent=83 // loop_footer_branch
                  %427 = sbr.rel target = $region86
                $region91: #{multi_head_attention.4} parent=83 // loop_exit
                  _
                loop: start=0, step=1, limit=1
                $region92: #{multi_head_attention.4} parent=83 // loop_pre_header
                  _
                $region93: #{multi_head_attention.4} parent=83 // loop_header
                  %s437 = sphi 0, %s441
                  %p438 = scmp.ge.s32.totalorder %s437, 1
                  %s442 = sphi %s345, %s345
                  %s443 = sphi %s340, %s340
                $region94: #{multi_head_attention.4} parent=83 // loop_header_branch
                  %440 = sbr.rel (%p438) target = $region98
                $region95: #{multi_head_attention.4} parent=83 // loop_body
                  %v444 = vld [vmem:[%s442] sm:$0xf]
                  %445 = vst [vmem:[%s443] sm:$0xf] %v444
                  %v446 = vld [vmem:[%s442 + $0x4] sm:$0xf]
                  %447 = vst [vmem:[%s443 + $0x4] sm:$0xf] %v446
                  %v448 = vld [vmem:[%s442 + $0x8] sm:$0xf]
                  %449 = vst [vmem:[%s443 + $0x8] sm:$0xf] %v448
                  %v450 = vld [vmem:[%s442 + $0xc] sm:$0xf]
                  %451 = vst [vmem:[%s443 + $0xc] sm:$0xf] %v450
                  %v452 = vld [vmem:[%s442 + $0x10] sm:$0xf]
                  %453 = vst [vmem:[%s443 + $0x10] sm:$0xf] %v452
                  %v454 = vld [vmem:[%s442 + $0x14] sm:$0xf]
                  %455 = vst [vmem:[%s443 + $0x14] sm:$0xf] %v454
                  %v456 = vld [vmem:[%s442 + $0x18] sm:$0xf]
                  %457 = vst [vmem:[%s443 + $0x18] sm:$0xf] %v456
                  %v458 = vld [vmem:[%s442 + $0x1c] sm:$0xf]
                  %459 = vst [vmem:[%s443 + $0x1c] sm:$0xf] %v458
                  %v460 = vld [vmem:[%s442 + $0x20] sm:$0xf]
                  %461 = vst [vmem:[%s443 + $0x20] sm:$0xf] %v460
                  %v462 = vld [vmem:[%s442 + $0x24] sm:$0xf]
                  %463 = vst [vmem:[%s443 + $0x24] sm:$0xf] %v462
                  %v464 = vld [vmem:[%s442 + $0x28] sm:$0xf]
                  %465 = vst [vmem:[%s443 + $0x28] sm:$0xf] %v464
                  %v466 = vld [vmem:[%s442 + $0x2c] sm:$0xf]
                  %467 = vst [vmem:[%s443 + $0x2c] sm:$0xf] %v466
                  %v468 = vld [vmem:[%s442 + $0x30] sm:$0xf]
                  %469 = vst [vmem:[%s443 + $0x30] sm:$0xf] %v468
                  %v470 = vld [vmem:[%s442 + $0x34] sm:$0xf]
                  %471 = vst [vmem:[%s443 + $0x34] sm:$0xf] %v470
                  %v472 = vld [vmem:[%s442 + $0x38] sm:$0xf]
                  %473 = vst [vmem:[%s443 + $0x38] sm:$0xf] %v472
                  %v474 = vld [vmem:[%s442 + $0x3c] sm:$0xf]
                  %475 = vst [vmem:[%s443 + $0x3c] sm:$0xf] %v474
                  %v476 = vld [vmem:[%s442 + $0x80] sm:$0xf]
                  %477 = vst [vmem:[%s443 + $0x40] sm:$0xf] %v476
                  %v478 = vld [vmem:[%s442 + $0x84] sm:$0xf]
                  %479 = vst [vmem:[%s443 + $0x44] sm:$0xf] %v478
                  %v480 = vld [vmem:[%s442 + $0x88] sm:$0xf]
                  %481 = vst [vmem:[%s443 + $0x48] sm:$0xf] %v480
                  %v482 = vld [vmem:[%s442 + $0x8c] sm:$0xf]
                  %483 = vst [vmem:[%s443 + $0x4c] sm:$0xf] %v482
                  %v484 = vld [vmem:[%s442 + $0x90] sm:$0xf]
                  %485 = vst [vmem:[%s443 + $0x50] sm:$0xf] %v484
                  %v486 = vld [vmem:[%s442 + $0x94] sm:$0xf]
                  %487 = vst [vmem:[%s443 + $0x54] sm:$0xf] %v486
                  %v488 = vld [vmem:[%s442 + $0x98] sm:$0xf]
                  %489 = vst [vmem:[%s443 + $0x58] sm:$0xf] %v488
                  %v490 = vld [vmem:[%s442 + $0x9c] sm:$0xf]
                  %491 = vst [vmem:[%s443 + $0x5c] sm:$0xf] %v490
                  %v492 = vld [vmem:[%s442 + $0xa0] sm:$0xf]
                  %493 = vst [vmem:[%s443 + $0x60] sm:$0xf] %v492
                  %v494 = vld [vmem:[%s442 + $0xa4] sm:$0xf]
                  %495 = vst [vmem:[%s443 + $0x64] sm:$0xf] %v494
                  %v496 = vld [vmem:[%s442 + $0xa8] sm:$0xf]
                  %497 = vst [vmem:[%s443 + $0x68] sm:$0xf] %v496
                  %v498 = vld [vmem:[%s442 + $0xac] sm:$0xf]
                  %499 = vst [vmem:[%s443 + $0x6c] sm:$0xf] %v498
                  %v500 = vld [vmem:[%s442 + $0xb0] sm:$0xf]
                  %501 = vst [vmem:[%s443 + $0x70] sm:$0xf] %v500
                  %v502 = vld [vmem:[%s442 + $0xb4] sm:$0xf]
                  %503 = vst [vmem:[%s443 + $0x74] sm:$0xf] %v502
                  %v504 = vld [vmem:[%s442 + $0xb8] sm:$0xf]
                  %505 = vst [vmem:[%s443 + $0x78] sm:$0xf] %v504
                  %v506 = vld [vmem:[%s442 + $0xbc] sm:$0xf]
                  %507 = vst [vmem:[%s443 + $0x7c] sm:$0xf] %v506
                $region96: #{multi_head_attention.4} parent=83 // loop_footer
                  %s441 = sadd.s32 1, %s437
                $region97: #{multi_head_attention.4} parent=83 // loop_footer_branch
                  %436 = sbr.rel target = $region93
                $region98: #{multi_head_attention.4} parent=83 // loop_exit
                  _
              $region84: #{multi_head_attention.4} parent=68 // pred_fallthru
                _
            $region69: #{multi_head_attention.4} parent=64 // pred_fallthru
              _
            // Predicated region
            $region70: #{multi_head_attention.4} parent=64 // pred_check
              _
            $region71: #{multi_head_attention.4} parent=64 // pred_check_branch
              %351 = sbr.rel (0) target = $region73
            $region72: #{multi_head_attention.4} parent=64 // pred_region
              loop: start=0, step=1, limit=1
              $region74: #{multi_head_attention.4} parent=72 // loop_pre_header
                _
              $region75: #{multi_head_attention.4} parent=72 // loop_header
                %s354 = sphi 0, %s358
                %p355 = scmp.ge.s32.totalorder %s354, 1
                %s359 = sphi %s345, %s345
                %s360 = sphi %s340, %s340
              $region76: #{multi_head_attention.4} parent=72 // loop_header_branch
                %357 = sbr.rel (%p355) target = $region80
              $region77: #{multi_head_attention.4} parent=72 // loop_body
                %v361 = vld [vmem:[%s359] sm:$0xf]
                %362 = vst [vmem:[%s360] sm:$0xf] %v361
                %v363 = vld [vmem:[%s359 + $0x4] sm:$0xf]
                %364 = vst [vmem:[%s360 + $0x4] sm:$0xf] %v363
                %v365 = vld [vmem:[%s359 + $0x8] sm:$0xf]
                %366 = vst [vmem:[%s360 + $0x8] sm:$0xf] %v365
                %v367 = vld [vmem:[%s359 + $0xc] sm:$0xf]
                %368 = vst [vmem:[%s360 + $0xc] sm:$0xf] %v367
                %v369 = vld [vmem:[%s359 + $0x10] sm:$0xf]
                %370 = vst [vmem:[%s360 + $0x10] sm:$0xf] %v369
                %v371 = vld [vmem:[%s359 + $0x14] sm:$0xf]
                %372 = vst [vmem:[%s360 + $0x14] sm:$0xf] %v371
                %v373 = vld [vmem:[%s359 + $0x18] sm:$0xf]
                %374 = vst [vmem:[%s360 + $0x18] sm:$0xf] %v373
                %v375 = vld [vmem:[%s359 + $0x1c] sm:$0xf]
                %376 = vst [vmem:[%s360 + $0x1c] sm:$0xf] %v375
                %v377 = vld [vmem:[%s359 + $0x20] sm:$0xf]
                %378 = vst [vmem:[%s360 + $0x20] sm:$0xf] %v377
                %v379 = vld [vmem:[%s359 + $0x24] sm:$0xf]
                %380 = vst [vmem:[%s360 + $0x24] sm:$0xf] %v379
                %v381 = vld [vmem:[%s359 + $0x28] sm:$0xf]
                %382 = vst [vmem:[%s360 + $0x28] sm:$0xf] %v381
                %v383 = vld [vmem:[%s359 + $0x2c] sm:$0xf]
                %384 = vst [vmem:[%s360 + $0x2c] sm:$0xf] %v383
                %v385 = vld [vmem:[%s359 + $0x30] sm:$0xf]
                %386 = vst [vmem:[%s360 + $0x30] sm:$0xf] %v385
                %v387 = vld [vmem:[%s359 + $0x34] sm:$0xf]
                %388 = vst [vmem:[%s360 + $0x34] sm:$0xf] %v387
                %v389 = vld [vmem:[%s359 + $0x38] sm:$0xf]
                %390 = vst [vmem:[%s360 + $0x38] sm:$0xf] %v389
                %v391 = vld [vmem:[%s359 + $0x3c] sm:$0xf]
                %392 = vst [vmem:[%s360 + $0x3c] sm:$0xf] %v391
                %v393 = vld [vmem:[%s359 + $0x80] sm:$0xf]
                %394 = vst [vmem:[%s360 + $0x40] sm:$0xf] %v393
                %v395 = vld [vmem:[%s359 + $0x84] sm:$0xf]
                %396 = vst [vmem:[%s360 + $0x44] sm:$0xf] %v395
                %v397 = vld [vmem:[%s359 + $0x88] sm:$0xf]
                %398 = vst [vmem:[%s360 + $0x48] sm:$0xf] %v397
                %v399 = vld [vmem:[%s359 + $0x8c] sm:$0xf]
                %400 = vst [vmem:[%s360 + $0x4c] sm:$0xf] %v399
                %v401 = vld [vmem:[%s359 + $0x90] sm:$0xf]
                %402 = vst [vmem:[%s360 + $0x50] sm:$0xf] %v401
                %v403 = vld [vmem:[%s359 + $0x94] sm:$0xf]
                %404 = vst [vmem:[%s360 + $0x54] sm:$0xf] %v403
                %v405 = vld [vmem:[%s359 + $0x98] sm:$0xf]
                %406 = vst [vmem:[%s360 + $0x58] sm:$0xf] %v405
                %v407 = vld [vmem:[%s359 + $0x9c] sm:$0xf]
                %408 = vst [vmem:[%s360 + $0x5c] sm:$0xf] %v407
                %v409 = vld [vmem:[%s359 + $0xa0] sm:$0xf]
                %410 = vst [vmem:[%s360 + $0x60] sm:$0xf] %v409
                %v411 = vld [vmem:[%s359 + $0xa4] sm:$0xf]
                %412 = vst [vmem:[%s360 + $0x64] sm:$0xf] %v411
                %v413 = vld [vmem:[%s359 + $0xa8] sm:$0xf]
                %414 = vst [vmem:[%s360 + $0x68] sm:$0xf] %v413
                %v415 = vld [vmem:[%s359 + $0xac] sm:$0xf]
                %416 = vst [vmem:[%s360 + $0x6c] sm:$0xf] %v415
                %v417 = vld [vmem:[%s359 + $0xb0] sm:$0xf]
                %418 = vst [vmem:[%s360 + $0x70] sm:$0xf] %v417
                %v419 = vld [vmem:[%s359 + $0xb4] sm:$0xf]
                %420 = vst [vmem:[%s360 + $0x74] sm:$0xf] %v419
                %v421 = vld [vmem:[%s359 + $0xb8] sm:$0xf]
                %422 = vst [vmem:[%s360 + $0x78] sm:$0xf] %v421
                %v423 = vld [vmem:[%s359 + $0xbc] sm:$0xf]
                %424 = vst [vmem:[%s360 + $0x7c] sm:$0xf] %v423
              $region78: #{multi_head_attention.4} parent=72 // loop_footer
                %s358 = sadd.s32 1, %s354
              $region79: #{multi_head_attention.4} parent=72 // loop_footer_branch
                %353 = sbr.rel target = $region75
              $region80: #{multi_head_attention.4} parent=72 // loop_exit
                _
            $region73: #{multi_head_attention.4} parent=64 // pred_fallthru
              _
          $region65: #{multi_head_attention.4} parent=60 // pred_fallthru
            _
          %508 = vnop
        $region61: #{multi_head_attention.4} parent=15 // pred_fallthru
          _
        // Predicated region
        $region99: #{multi_head_attention.4} parent=15 // pred_check
          %p509 = pneg %p106
        $region100: #{multi_head_attention.4} parent=15 // pred_check_branch
          %511 = sbr.rel (%p509) target = $region102
        $region101: #{multi_head_attention.4} parent=15 // pred_region
          %s512 = sand.u32 %s96, 1
          %s513 = sand.u32 %s96, 1
          %s514 = smul.addr %s513, 128
          %s515 = scalar_lea.vmem [#allocation7], %s514
          %s516 = smul.u32 16, %s18
          %s517 = smul.addr %s16, 64
          %s518 = sadd.s32 %s516, %s517
          %s519 = smul.addr %s518, 4
          %s520 = scalar_lea.vmem %s2, %s519
          // Predicated region
          $region103: #{multi_head_attention.4} parent=101 // pred_check
            _
          $region104: #{multi_head_attention.4} parent=101 // pred_check_branch
            %522 = sbr.rel (0) target = $region106
          $region105: #{multi_head_attention.4} parent=101 // pred_region
            // Predicated region
            $region107: #{multi_head_attention.4} parent=105 // pred_check
              _
            $region108: #{multi_head_attention.4} parent=105 // pred_check_branch
              %524 = sbr.rel target = $region110
            $region109: #{multi_head_attention.4} parent=105 // pred_region
              // Predicated region
              $region122: #{multi_head_attention.4} parent=109 // pred_check
                _
              $region123: #{multi_head_attention.4} parent=109 // pred_check_branch
                %601 = sbr.rel (0) target = $region125
              $region124: #{multi_head_attention.4} parent=109 // pred_region
                loop: start=0, step=1, limit=1
                $region126: #{multi_head_attention.4} parent=124 // loop_pre_header
                  _
                $region127: #{multi_head_attention.4} parent=124 // loop_header
                  %s603 = sphi 0, %s607
                  %p604 = scmp.ge.s32.totalorder %s603, 1
                  %s608 = sphi %s520, %s520
                  %s609 = sphi %s515, %s515
                $region128: #{multi_head_attention.4} parent=124 // loop_header_branch
                  %606 = sbr.rel (%p604) target = $region132
                $region129: #{multi_head_attention.4} parent=124 // loop_body
                  _
                $region130: #{multi_head_attention.4} parent=124 // loop_footer
                  %s607 = sadd.s32 1, %s603
                $region131: #{multi_head_attention.4} parent=124 // loop_footer_branch
                  %602 = sbr.rel target = $region127
                $region132: #{multi_head_attention.4} parent=124 // loop_exit
                  _
                loop: start=0, step=1, limit=1
                $region133: #{multi_head_attention.4} parent=124 // loop_pre_header
                  _
                $region134: #{multi_head_attention.4} parent=124 // loop_header
                  %s612 = sphi 0, %s616
                  %p613 = scmp.ge.s32.totalorder %s612, 1
                  %s617 = sphi %s520, %s520
                  %s618 = sphi %s515, %s515
                $region135: #{multi_head_attention.4} parent=124 // loop_header_branch
                  %615 = sbr.rel (%p613) target = $region139
                $region136: #{multi_head_attention.4} parent=124 // loop_body
                  %v619 = vld [vmem:[%s617] sm:$0xf]
                  %620 = vst [vmem:[%s618] sm:$0xf] %v619
                  %v621 = vld [vmem:[%s617 + $0x4] sm:$0xf]
                  %622 = vst [vmem:[%s618 + $0x4] sm:$0xf] %v621
                  %v623 = vld [vmem:[%s617 + $0x8] sm:$0xf]
                  %624 = vst [vmem:[%s618 + $0x8] sm:$0xf] %v623
                  %v625 = vld [vmem:[%s617 + $0xc] sm:$0xf]
                  %626 = vst [vmem:[%s618 + $0xc] sm:$0xf] %v625
                  %v627 = vld [vmem:[%s617 + $0x10] sm:$0xf]
                  %628 = vst [vmem:[%s618 + $0x10] sm:$0xf] %v627
                  %v629 = vld [vmem:[%s617 + $0x14] sm:$0xf]
                  %630 = vst [vmem:[%s618 + $0x14] sm:$0xf] %v629
                  %v631 = vld [vmem:[%s617 + $0x18] sm:$0xf]
                  %632 = vst [vmem:[%s618 + $0x18] sm:$0xf] %v631
                  %v633 = vld [vmem:[%s617 + $0x1c] sm:$0xf]
                  %634 = vst [vmem:[%s618 + $0x1c] sm:$0xf] %v633
                  %v635 = vld [vmem:[%s617 + $0x20] sm:$0xf]
                  %636 = vst [vmem:[%s618 + $0x20] sm:$0xf] %v635
                  %v637 = vld [vmem:[%s617 + $0x24] sm:$0xf]
                  %638 = vst [vmem:[%s618 + $0x24] sm:$0xf] %v637
                  %v639 = vld [vmem:[%s617 + $0x28] sm:$0xf]
                  %640 = vst [vmem:[%s618 + $0x28] sm:$0xf] %v639
                  %v641 = vld [vmem:[%s617 + $0x2c] sm:$0xf]
                  %642 = vst [vmem:[%s618 + $0x2c] sm:$0xf] %v641
                  %v643 = vld [vmem:[%s617 + $0x30] sm:$0xf]
                  %644 = vst [vmem:[%s618 + $0x30] sm:$0xf] %v643
                  %v645 = vld [vmem:[%s617 + $0x34] sm:$0xf]
                  %646 = vst [vmem:[%s618 + $0x34] sm:$0xf] %v645
                  %v647 = vld [vmem:[%s617 + $0x38] sm:$0xf]
                  %648 = vst [vmem:[%s618 + $0x38] sm:$0xf] %v647
                  %v649 = vld [vmem:[%s617 + $0x3c] sm:$0xf]
                  %650 = vst [vmem:[%s618 + $0x3c] sm:$0xf] %v649
                  %v651 = vld [vmem:[%s617 + $0x80] sm:$0xf]
                  %652 = vst [vmem:[%s618 + $0x40] sm:$0xf] %v651
                  %v653 = vld [vmem:[%s617 + $0x84] sm:$0xf]
                  %654 = vst [vmem:[%s618 + $0x44] sm:$0xf] %v653
                  %v655 = vld [vmem:[%s617 + $0x88] sm:$0xf]
                  %656 = vst [vmem:[%s618 + $0x48] sm:$0xf] %v655
                  %v657 = vld [vmem:[%s617 + $0x8c] sm:$0xf]
                  %658 = vst [vmem:[%s618 + $0x4c] sm:$0xf] %v657
                  %v659 = vld [vmem:[%s617 + $0x90] sm:$0xf]
                  %660 = vst [vmem:[%s618 + $0x50] sm:$0xf] %v659
                  %v661 = vld [vmem:[%s617 + $0x94] sm:$0xf]
                  %662 = vst [vmem:[%s618 + $0x54] sm:$0xf] %v661
                  %v663 = vld [vmem:[%s617 + $0x98] sm:$0xf]
                  %664 = vst [vmem:[%s618 + $0x58] sm:$0xf] %v663
                  %v665 = vld [vmem:[%s617 + $0x9c] sm:$0xf]
                  %666 = vst [vmem:[%s618 + $0x5c] sm:$0xf] %v665
                  %v667 = vld [vmem:[%s617 + $0xa0] sm:$0xf]
                  %668 = vst [vmem:[%s618 + $0x60] sm:$0xf] %v667
                  %v669 = vld [vmem:[%s617 + $0xa4] sm:$0xf]
                  %670 = vst [vmem:[%s618 + $0x64] sm:$0xf] %v669
                  %v671 = vld [vmem:[%s617 + $0xa8] sm:$0xf]
                  %672 = vst [vmem:[%s618 + $0x68] sm:$0xf] %v671
                  %v673 = vld [vmem:[%s617 + $0xac] sm:$0xf]
                  %674 = vst [vmem:[%s618 + $0x6c] sm:$0xf] %v673
                  %v675 = vld [vmem:[%s617 + $0xb0] sm:$0xf]
                  %676 = vst [vmem:[%s618 + $0x70] sm:$0xf] %v675
                  %v677 = vld [vmem:[%s617 + $0xb4] sm:$0xf]
                  %678 = vst [vmem:[%s618 + $0x74] sm:$0xf] %v677
                  %v679 = vld [vmem:[%s617 + $0xb8] sm:$0xf]
                  %680 = vst [vmem:[%s618 + $0x78] sm:$0xf] %v679
                  %v681 = vld [vmem:[%s617 + $0xbc] sm:$0xf]
                  %682 = vst [vmem:[%s618 + $0x7c] sm:$0xf] %v681
                $region137: #{multi_head_attention.4} parent=124 // loop_footer
                  %s616 = sadd.s32 1, %s612
                $region138: #{multi_head_attention.4} parent=124 // loop_footer_branch
                  %611 = sbr.rel target = $region134
                $region139: #{multi_head_attention.4} parent=124 // loop_exit
                  _
              $region125: #{multi_head_attention.4} parent=109 // pred_fallthru
                _
            $region110: #{multi_head_attention.4} parent=105 // pred_fallthru
              _
            // Predicated region
            $region111: #{multi_head_attention.4} parent=105 // pred_check
              _
            $region112: #{multi_head_attention.4} parent=105 // pred_check_branch
              %526 = sbr.rel (0) target = $region114
            $region113: #{multi_head_attention.4} parent=105 // pred_region
              loop: start=0, step=1, limit=1
              $region115: #{multi_head_attention.4} parent=113 // loop_pre_header
                _
              $region116: #{multi_head_attention.4} parent=113 // loop_header
                %s529 = sphi 0, %s533
                %p530 = scmp.ge.s32.totalorder %s529, 1
                %s534 = sphi %s520, %s520
                %s535 = sphi %s515, %s515
              $region117: #{multi_head_attention.4} parent=113 // loop_header_branch
                %532 = sbr.rel (%p530) target = $region121
              $region118: #{multi_head_attention.4} parent=113 // loop_body
                %v536 = vld [vmem:[%s534] sm:$0xf]
                %537 = vst [vmem:[%s535] sm:$0xf] %v536
                %v538 = vld [vmem:[%s534 + $0x4] sm:$0xf]
                %539 = vst [vmem:[%s535 + $0x4] sm:$0xf] %v538
                %v540 = vld [vmem:[%s534 + $0x8] sm:$0xf]
                %541 = vst [vmem:[%s535 + $0x8] sm:$0xf] %v540
                %v542 = vld [vmem:[%s534 + $0xc] sm:$0xf]
                %543 = vst [vmem:[%s535 + $0xc] sm:$0xf] %v542
                %v544 = vld [vmem:[%s534 + $0x10] sm:$0xf]
                %545 = vst [vmem:[%s535 + $0x10] sm:$0xf] %v544
                %v546 = vld [vmem:[%s534 + $0x14] sm:$0xf]
                %547 = vst [vmem:[%s535 + $0x14] sm:$0xf] %v546
                %v548 = vld [vmem:[%s534 + $0x18] sm:$0xf]
                %549 = vst [vmem:[%s535 + $0x18] sm:$0xf] %v548
                %v550 = vld [vmem:[%s534 + $0x1c] sm:$0xf]
                %551 = vst [vmem:[%s535 + $0x1c] sm:$0xf] %v550
                %v552 = vld [vmem:[%s534 + $0x20] sm:$0xf]
                %553 = vst [vmem:[%s535 + $0x20] sm:$0xf] %v552
                %v554 = vld [vmem:[%s534 + $0x24] sm:$0xf]
                %555 = vst [vmem:[%s535 + $0x24] sm:$0xf] %v554
                %v556 = vld [vmem:[%s534 + $0x28] sm:$0xf]
                %557 = vst [vmem:[%s535 + $0x28] sm:$0xf] %v556
                %v558 = vld [vmem:[%s534 + $0x2c] sm:$0xf]
                %559 = vst [vmem:[%s535 + $0x2c] sm:$0xf] %v558
                %v560 = vld [vmem:[%s534 + $0x30] sm:$0xf]
                %561 = vst [vmem:[%s535 + $0x30] sm:$0xf] %v560
                %v562 = vld [vmem:[%s534 + $0x34] sm:$0xf]
                %563 = vst [vmem:[%s535 + $0x34] sm:$0xf] %v562
                %v564 = vld [vmem:[%s534 + $0x38] sm:$0xf]
                %565 = vst [vmem:[%s535 + $0x38] sm:$0xf] %v564
                %v566 = vld [vmem:[%s534 + $0x3c] sm:$0xf]
                %567 = vst [vmem:[%s535 + $0x3c] sm:$0xf] %v566
                %v568 = vld [vmem:[%s534 + $0x80] sm:$0xf]
                %569 = vst [vmem:[%s535 + $0x40] sm:$0xf] %v568
                %v570 = vld [vmem:[%s534 + $0x84] sm:$0xf]
                %571 = vst [vmem:[%s535 + $0x44] sm:$0xf] %v570
                %v572 = vld [vmem:[%s534 + $0x88] sm:$0xf]
                %573 = vst [vmem:[%s535 + $0x48] sm:$0xf] %v572
                %v574 = vld [vmem:[%s534 + $0x8c] sm:$0xf]
                %575 = vst [vmem:[%s535 + $0x4c] sm:$0xf] %v574
                %v576 = vld [vmem:[%s534 + $0x90] sm:$0xf]
                %577 = vst [vmem:[%s535 + $0x50] sm:$0xf] %v576
                %v578 = vld [vmem:[%s534 + $0x94] sm:$0xf]
                %579 = vst [vmem:[%s535 + $0x54] sm:$0xf] %v578
                %v580 = vld [vmem:[%s534 + $0x98] sm:$0xf]
                %581 = vst [vmem:[%s535 + $0x58] sm:$0xf] %v580
                %v582 = vld [vmem:[%s534 + $0x9c] sm:$0xf]
                %583 = vst [vmem:[%s535 + $0x5c] sm:$0xf] %v582
                %v584 = vld [vmem:[%s534 + $0xa0] sm:$0xf]
                %585 = vst [vmem:[%s535 + $0x60] sm:$0xf] %v584
                %v586 = vld [vmem:[%s534 + $0xa4] sm:$0xf]
                %587 = vst [vmem:[%s535 + $0x64] sm:$0xf] %v586
                %v588 = vld [vmem:[%s534 + $0xa8] sm:$0xf]
                %589 = vst [vmem:[%s535 + $0x68] sm:$0xf] %v588
                %v590 = vld [vmem:[%s534 + $0xac] sm:$0xf]
                %591 = vst [vmem:[%s535 + $0x6c] sm:$0xf] %v590
                %v592 = vld [vmem:[%s534 + $0xb0] sm:$0xf]
                %593 = vst [vmem:[%s535 + $0x70] sm:$0xf] %v592
                %v594 = vld [vmem:[%s534 + $0xb4] sm:$0xf]
                %595 = vst [vmem:[%s535 + $0x74] sm:$0xf] %v594
                %v596 = vld [vmem:[%s534 + $0xb8] sm:$0xf]
                %597 = vst [vmem:[%s535 + $0x78] sm:$0xf] %v596
                %v598 = vld [vmem:[%s534 + $0xbc] sm:$0xf]
                %599 = vst [vmem:[%s535 + $0x7c] sm:$0xf] %v598
              $region119: #{multi_head_attention.4} parent=113 // loop_footer
                %s533 = sadd.s32 1, %s529
              $region120: #{multi_head_attention.4} parent=113 // loop_footer_branch
                %528 = sbr.rel target = $region116
              $region121: #{multi_head_attention.4} parent=113 // loop_exit
                _
            $region114: #{multi_head_attention.4} parent=105 // pred_fallthru
              _
          $region106: #{multi_head_attention.4} parent=101 // pred_fallthru
            _
          %683 = vnop
        $region102: #{multi_head_attention.4} parent=15 // pred_fallthru
          _
      $region16: #{multi_head_attention.4} parent=5 // pred_fallthru
        _
      %p684 = scmp.le.s32.totalorder 1, %s9
      %p685 = scmp.lt.s32.totalorder %s9, 9
      %p686 = pnand %p684, %p685
      %p687 = pneg %p686
      // Predicated region
      $region140: #{multi_head_attention.4} parent=5 // pred_check
        _
      $region141: #{multi_head_attention.4} parent=5 // pred_check_branch
        %689 = sbr.rel (%p686) target = $region143
      $region142: #{multi_head_attention.4} parent=5 // pred_region
        %s690 = ssub.s32 %s9, 1
        %s691 = sand.u32 %s43, 1
        %s692 = sand.u32 %s43, 1
        %s693 = smul.addr %s692, 128
        %s694 = scalar_lea.vmem [#allocation5], %s693
        // Predicated region
        $region144: #{multi_head_attention.4} parent=142 // pred_check
          %p695 = pneg %p56
        $region145: #{multi_head_attention.4} parent=142 // pred_check_branch
          %697 = sbr.rel (%p695) target = $region147
        $region146: #{multi_head_attention.4} parent=142 // pred_region
          _
        $region147: #{multi_head_attention.4} parent=142 // pred_fallthru
          _
        %s698 = sand.u32 %s71, 1
        %s699 = sand.u32 %s71, 1
        %s700 = smul.addr %s699, 128
        %s701 = scalar_lea.vmem [#allocation6], %s700
        // Predicated region
        $region148: #{multi_head_attention.4} parent=142 // pred_check
          %p702 = pneg %p84
        $region149: #{multi_head_attention.4} parent=142 // pred_check_branch
          %704 = sbr.rel (%p702) target = $region151
        $region150: #{multi_head_attention.4} parent=142 // pred_region
          _
        $region151: #{multi_head_attention.4} parent=142 // pred_fallthru
          _
        %s705 = sand.u32 %s99, 1
        %s706 = sand.u32 %s99, 1
        %s707 = smul.addr %s706, 128
        %s708 = scalar_lea.vmem [#allocation7], %s707
        // Predicated region
        $region152: #{multi_head_attention.4} parent=142 // pred_check
          %p709 = pneg %p112
        $region153: #{multi_head_attention.4} parent=142 // pred_check_branch
          %711 = sbr.rel (%p709) target = $region155
        $region154: #{multi_head_attention.4} parent=142 // pred_region
          _
        $region155: #{multi_head_attention.4} parent=142 // pred_fallthru
          _
        %s712 = sand.u32 %s43, 1
        %s713 = sand.u32 %s43, 1
        %s714 = smul.addr %s713, 128
        %s715 = scalar_lea.vmem [#allocation5], %s714
        %p716 = pneg %p56
        %p717 = pneg %p53
        %s718 = sand.u32 %s71, 1
        %s719 = sand.u32 %s71, 1
        %s720 = smul.addr %s719, 128
        %s721 = scalar_lea.vmem [#allocation6], %s720
        %p722 = pneg %p84
        %p723 = pneg %p81
        %s724 = sand.u32 %s99, 1
        %s725 = sand.u32 %s99, 1
        %s726 = smul.addr %s725, 128
        %s727 = scalar_lea.vmem [#allocation7], %s726
        %p728 = pneg %p112
        %p729 = pneg %p109
        %p730 = pneg %p140
        %p731 = pneg %p137
        %s732 = sand.u32 %s127, 1
        %s733 = sand.u32 %s127, 1
        %s734 = smul.addr %s733, 128
        %s735 = scalar_lea.vmem [#allocation8], %s734
        %s736 = smul.u32 16, %s20
        %s737 = smul.u32 16, %s21
        %s738 = smul.u32 16, %s21
        %s739 = smul.u32 16, %s20
        %p741 = scmp.eq.s32.totalorder %s21, 0
        // Predicated region
        $region156: #{multi_head_attention.4} parent=142 // pred_check
          %p742 = pneg %p741
        $region157: #{multi_head_attention.4} parent=142 // pred_check_branch
          %744 = sbr.rel (%p742) target = $region159
        $region158: #{multi_head_attention.4} parent=142 // pred_region
          %vm745 = vcmask 7168
          %746 = vst.msk [vmem:[#allocation2] sm:$0xff] %vm745, -1e+30
          %747 = vst.msk [vmem:[#allocation2 + $0x8] sm:$0xff] %vm745, -1e+30
          %748 = vst.msk [vmem:[#allocation2 + $0x10] sm:$0xff] %vm745, -1e+30
          %749 = vst.msk [vmem:[#allocation2 + $0x18] sm:$0xff] %vm745, -1e+30
          %750 = vst.msk [vmem:[#allocation2 + $0x20] sm:$0xff] %vm745, -1e+30
          %751 = vst.msk [vmem:[#allocation2 + $0x28] sm:$0xff] %vm745, -1e+30
          %752 = vst.msk [vmem:[#allocation2 + $0x30] sm:$0xff] %vm745, -1e+30
          %753 = vst.msk [vmem:[#allocation2 + $0x38] sm:$0xff] %vm745, -1e+30
          %754 = vst.msk [vmem:[#allocation2 + $0x40] sm:$0xff] %vm745, -1e+30
          %755 = vst.msk [vmem:[#allocation2 + $0x48] sm:$0xff] %vm745, -1e+30
          %756 = vst.msk [vmem:[#allocation2 + $0x50] sm:$0xff] %vm745, -1e+30
          %757 = vst.msk [vmem:[#allocation2 + $0x58] sm:$0xff] %vm745, -1e+30
          %758 = vst.msk [vmem:[#allocation2 + $0x60] sm:$0xff] %vm745, -1e+30
          %759 = vst.msk [vmem:[#allocation2 + $0x68] sm:$0xff] %vm745, -1e+30
          %760 = vst.msk [vmem:[#allocation2 + $0x70] sm:$0xff] %vm745, -1e+30
          %761 = vst.msk [vmem:[#allocation2 + $0x78] sm:$0xff] %vm745, -1e+30
          %762 = vst.msk [vmem:[#allocation2 + $0x80] sm:$0xff] %vm745, -1e+30
          %763 = vst.msk [vmem:[#allocation2 + $0x88] sm:$0xff] %vm745, -1e+30
          %764 = vst.msk [vmem:[#allocation2 + $0x90] sm:$0xff] %vm745, -1e+30
          %765 = vst.msk [vmem:[#allocation2 + $0x98] sm:$0xff] %vm745, -1e+30
          %766 = vst.msk [vmem:[#allocation2 + $0xa0] sm:$0xff] %vm745, -1e+30
          %767 = vst.msk [vmem:[#allocation2 + $0xa8] sm:$0xff] %vm745, -1e+30
          %768 = vst.msk [vmem:[#allocation2 + $0xb0] sm:$0xff] %vm745, -1e+30
          %769 = vst.msk [vmem:[#allocation2 + $0xb8] sm:$0xff] %vm745, -1e+30
          %770 = vst.msk [vmem:[#allocation2 + $0xc0] sm:$0xff] %vm745, -1e+30
          %771 = vst.msk [vmem:[#allocation2 + $0xc8] sm:$0xff] %vm745, -1e+30
          %772 = vst.msk [vmem:[#allocation2 + $0xd0] sm:$0xff] %vm745, -1e+30
          %773 = vst.msk [vmem:[#allocation2 + $0xd8] sm:$0xff] %vm745, -1e+30
          %774 = vst.msk [vmem:[#allocation2 + $0xe0] sm:$0xff] %vm745, -1e+30
          %775 = vst.msk [vmem:[#allocation2 + $0xe8] sm:$0xff] %vm745, -1e+30
          %776 = vst.msk [vmem:[#allocation2 + $0xf0] sm:$0xff] %vm745, -1e+30
          %777 = vst.msk [vmem:[#allocation2 + $0xf8] sm:$0xff] %vm745, -1e+30
          %778 = vst.msk [vmem:[#allocation3] sm:$0xff] %vm745, 0.0
          %779 = vst.msk [vmem:[#allocation3 + $0x8] sm:$0xff] %vm745, 0.0
          %780 = vst.msk [vmem:[#allocation3 + $0x10] sm:$0xff] %vm745, 0.0
          %781 = vst.msk [vmem:[#allocation3 + $0x18] sm:$0xff] %vm745, 0.0
          %782 = vst.msk [vmem:[#allocation3 + $0x20] sm:$0xff] %vm745, 0.0
          %783 = vst.msk [vmem:[#allocation3 + $0x28] sm:$0xff] %vm745, 0.0
          %784 = vst.msk [vmem:[#allocation3 + $0x30] sm:$0xff] %vm745, 0.0
          %785 = vst.msk [vmem:[#allocation3 + $0x38] sm:$0xff] %vm745, 0.0
          %786 = vst.msk [vmem:[#allocation3 + $0x40] sm:$0xff] %vm745, 0.0
          %787 = vst.msk [vmem:[#allocation3 + $0x48] sm:$0xff] %vm745, 0.0
          %788 = vst.msk [vmem:[#allocation3 + $0x50] sm:$0xff] %vm745, 0.0
          %789 = vst.msk [vmem:[#allocation3 + $0x58] sm:$0xff] %vm745, 0.0
          %790 = vst.msk [vmem:[#allocation3 + $0x60] sm:$0xff] %vm745, 0.0
          %791 = vst.msk [vmem:[#allocation3 + $0x68] sm:$0xff] %vm745, 0.0
          %792 = vst.msk [vmem:[#allocation3 + $0x70] sm:$0xff] %vm745, 0.0
          %793 = vst.msk [vmem:[#allocation3 + $0x78] sm:$0xff] %vm745, 0.0
          %794 = vst.msk [vmem:[#allocation3 + $0x80] sm:$0xff] %vm745, 0.0
          %795 = vst.msk [vmem:[#allocation3 + $0x88] sm:$0xff] %vm745, 0.0
          %796 = vst.msk [vmem:[#allocation3 + $0x90] sm:$0xff] %vm745, 0.0
          %797 = vst.msk [vmem:[#allocation3 + $0x98] sm:$0xff] %vm745, 0.0
          %798 = vst.msk [vmem:[#allocation3 + $0xa0] sm:$0xff] %vm745, 0.0
          %799 = vst.msk [vmem:[#allocation3 + $0xa8] sm:$0xff] %vm745, 0.0
          %800 = vst.msk [vmem:[#allocation3 + $0xb0] sm:$0xff] %vm745, 0.0
          %801 = vst.msk [vmem:[#allocation3 + $0xb8] sm:$0xff] %vm745, 0.0
          %802 = vst.msk [vmem:[#allocation3 + $0xc0] sm:$0xff] %vm745, 0.0
          %803 = vst.msk [vmem:[#allocation3 + $0xc8] sm:$0xff] %vm745, 0.0
          %804 = vst.msk [vmem:[#allocation3 + $0xd0] sm:$0xff] %vm745, 0.0
          %805 = vst.msk [vmem:[#allocation3 + $0xd8] sm:$0xff] %vm745, 0.0
          %806 = vst.msk [vmem:[#allocation3 + $0xe0] sm:$0xff] %vm745, 0.0
          %807 = vst.msk [vmem:[#allocation3 + $0xe8] sm:$0xff] %vm745, 0.0
          %808 = vst.msk [vmem:[#allocation3 + $0xf0] sm:$0xff] %vm745, 0.0
          %809 = vst.msk [vmem:[#allocation3 + $0xf8] sm:$0xff] %vm745, 0.0
          %810 = vst [vmem:[#allocation4] sm:$0xff] 0.0
          %811 = vst [vmem:[#allocation4 + $0x8] sm:$0xff] 0.0
          %812 = vst [vmem:[#allocation4 + $0x10] sm:$0xff] 0.0
          %813 = vst [vmem:[#allocation4 + $0x18] sm:$0xff] 0.0
          %814 = vst [vmem:[#allocation4 + $0x20] sm:$0xff] 0.0
          %815 = vst [vmem:[#allocation4 + $0x28] sm:$0xff] 0.0
          %816 = vst [vmem:[#allocation4 + $0x30] sm:$0xff] 0.0
          %817 = vst [vmem:[#allocation4 + $0x38] sm:$0xff] 0.0
          %818 = vst [vmem:[#allocation4 + $0x40] sm:$0xff] 0.0
          %819 = vst [vmem:[#allocation4 + $0x48] sm:$0xff] 0.0
          %820 = vst [vmem:[#allocation4 + $0x50] sm:$0xff] 0.0
          %821 = vst [vmem:[#allocation4 + $0x58] sm:$0xff] 0.0
          %822 = vst [vmem:[#allocation4 + $0x60] sm:$0xff] 0.0
          %823 = vst [vmem:[#allocation4 + $0x68] sm:$0xff] 0.0
          %824 = vst [vmem:[#allocation4 + $0x70] sm:$0xff] 0.0
          %825 = vst [vmem:[#allocation4 + $0x78] sm:$0xff] 0.0
          %826 = vst [vmem:[#allocation4 + $0x80] sm:$0xff] 0.0
          %827 = vst [vmem:[#allocation4 + $0x88] sm:$0xff] 0.0
          %828 = vst [vmem:[#allocation4 + $0x90] sm:$0xff] 0.0
          %829 = vst [vmem:[#allocation4 + $0x98] sm:$0xff] 0.0
          %830 = vst [vmem:[#allocation4 + $0xa0] sm:$0xff] 0.0
          %831 = vst [vmem:[#allocation4 + $0xa8] sm:$0xff] 0.0
          %832 = vst [vmem:[#allocation4 + $0xb0] sm:$0xff] 0.0
          %833 = vst [vmem:[#allocation4 + $0xb8] sm:$0xff] 0.0
          %834 = vst [vmem:[#allocation4 + $0xc0] sm:$0xff] 0.0
          %835 = vst [vmem:[#allocation4 + $0xc8] sm:$0xff] 0.0
          %836 = vst [vmem:[#allocation4 + $0xd0] sm:$0xff] 0.0
          %837 = vst [vmem:[#allocation4 + $0xd8] sm:$0xff] 0.0
          %838 = vst [vmem:[#allocation4 + $0xe0] sm:$0xff] 0.0
          %839 = vst [vmem:[#allocation4 + $0xe8] sm:$0xff] 0.0
          %840 = vst [vmem:[#allocation4 + $0xf0] sm:$0xff] 0.0
          %841 = vst [vmem:[#allocation4 + $0xf8] sm:$0xff] 0.0
        $region159: #{multi_head_attention.4} parent=142 // pred_fallthru
          _
        %s842 = smul.u32 %s21, 128
        %s843 = smul.u32 %s20, 128
        %s844 = sadd.s32 %s843, 127
        %p845 = scmp.le.s32.totalorder %s842, %s844
        // Predicated region
        $region160: #{multi_head_attention.4} parent=142 // pred_check
          %p846 = pneg %p845
        $region161: #{multi_head_attention.4} parent=142 // pred_check_branch
          %848 = sbr.rel (%p846) target = $region163
        $region162: #{multi_head_attention.4} parent=142 // pred_region
          %v849 = vld [vmem:[%s694] sm:$0xf]
          %v850 = vld [vmem:[%s694 + $0x4] sm:$0xf]
          %v851 = vld [vmem:[%s694 + $0x8] sm:$0xf]
          %v852 = vld [vmem:[%s694 + $0xc] sm:$0xf]
          %v853 = vld [vmem:[%s694 + $0x10] sm:$0xf]
          %v854 = vld [vmem:[%s694 + $0x14] sm:$0xf]
          %v855 = vld [vmem:[%s694 + $0x18] sm:$0xf]
          %v856 = vld [vmem:[%s694 + $0x1c] sm:$0xf]
          %v857 = vld [vmem:[%s694 + $0x20] sm:$0xf]
          %v858 = vld [vmem:[%s694 + $0x24] sm:$0xf]
          %v859 = vld [vmem:[%s694 + $0x28] sm:$0xf]
          %v860 = vld [vmem:[%s694 + $0x2c] sm:$0xf]
          %v861 = vld [vmem:[%s694 + $0x30] sm:$0xf]
          %v862 = vld [vmem:[%s694 + $0x34] sm:$0xf]
          %v863 = vld [vmem:[%s694 + $0x38] sm:$0xf]
          %v864 = vld [vmem:[%s694 + $0x3c] sm:$0xf]
          %v865 = vld [vmem:[%s694 + $0x40] sm:$0xf]
          %v866 = vld [vmem:[%s694 + $0x44] sm:$0xf]
          %v867 = vld [vmem:[%s694 + $0x48] sm:$0xf]
          %v868 = vld [vmem:[%s694 + $0x4c] sm:$0xf]
          %v869 = vld [vmem:[%s694 + $0x50] sm:$0xf]
          %v870 = vld [vmem:[%s694 + $0x54] sm:$0xf]
          %v871 = vld [vmem:[%s694 + $0x58] sm:$0xf]
          %v872 = vld [vmem:[%s694 + $0x5c] sm:$0xf]
          %v873 = vld [vmem:[%s694 + $0x60] sm:$0xf]
          %v874 = vld [vmem:[%s694 + $0x64] sm:$0xf]
          %v875 = vld [vmem:[%s694 + $0x68] sm:$0xf]
          %v876 = vld [vmem:[%s694 + $0x6c] sm:$0xf]
          %v877 = vld [vmem:[%s694 + $0x70] sm:$0xf]
          %v878 = vld [vmem:[%s694 + $0x74] sm:$0xf]
          %v879 = vld [vmem:[%s694 + $0x78] sm:$0xf]
          %v880 = vld [vmem:[%s694 + $0x7c] sm:$0xf]
          %v881 = vld [vmem:[%s701] sm:$0xf]
          %v882 = vld [vmem:[%s701 + $0x4] sm:$0xf]
          %v883 = vld [vmem:[%s701 + $0x8] sm:$0xf]
          %v884 = vld [vmem:[%s701 + $0xc] sm:$0xf]
          %v885 = vld [vmem:[%s701 + $0x10] sm:$0xf]
          %v886 = vld [vmem:[%s701 + $0x14] sm:$0xf]
          %v887 = vld [vmem:[%s701 + $0x18] sm:$0xf]
          %v888 = vld [vmem:[%s701 + $0x1c] sm:$0xf]
          %v889 = vld [vmem:[%s701 + $0x20] sm:$0xf]
          %v890 = vld [vmem:[%s701 + $0x24] sm:$0xf]
          %v891 = vld [vmem:[%s701 + $0x28] sm:$0xf]
          %v892 = vld [vmem:[%s701 + $0x2c] sm:$0xf]
          %v893 = vld [vmem:[%s701 + $0x30] sm:$0xf]
          %v894 = vld [vmem:[%s701 + $0x34] sm:$0xf]
          %v895 = vld [vmem:[%s701 + $0x38] sm:$0xf]
          %v896 = vld [vmem:[%s701 + $0x3c] sm:$0xf]
          %v897 = vld [vmem:[%s701 + $0x40] sm:$0xf]
          %v898 = vld [vmem:[%s701 + $0x44] sm:$0xf]
          %v899 = vld [vmem:[%s701 + $0x48] sm:$0xf]
          %v900 = vld [vmem:[%s701 + $0x4c] sm:$0xf]
          %v901 = vld [vmem:[%s701 + $0x50] sm:$0xf]
          %v902 = vld [vmem:[%s701 + $0x54] sm:$0xf]
          %v903 = vld [vmem:[%s701 + $0x58] sm:$0xf]
          %v904 = vld [vmem:[%s701 + $0x5c] sm:$0xf]
          %v905 = vld [vmem:[%s701 + $0x60] sm:$0xf]
          %v906 = vld [vmem:[%s701 + $0x64] sm:$0xf]
          %v907 = vld [vmem:[%s701 + $0x68] sm:$0xf]
          %v908 = vld [vmem:[%s701 + $0x6c] sm:$0xf]
          %v909 = vld [vmem:[%s701 + $0x70] sm:$0xf]
          %v910 = vld [vmem:[%s701 + $0x74] sm:$0xf]
          %v911 = vld [vmem:[%s701 + $0x78] sm:$0xf]
          %v912 = vld [vmem:[%s701 + $0x7c] sm:$0xf]
          %v913 = vld [vmem:[%s708] sm:$0xf]
          %v914 = vld [vmem:[%s708 + $0x4] sm:$0xf]
          %v915 = vld [vmem:[%s708 + $0x8] sm:$0xf]
          %v916 = vld [vmem:[%s708 + $0xc] sm:$0xf]
          %v917 = vld [vmem:[%s708 + $0x10] sm:$0xf]
          %v918 = vld [vmem:[%s708 + $0x14] sm:$0xf]
          %v919 = vld [vmem:[%s708 + $0x18] sm:$0xf]
          %v920 = vld [vmem:[%s708 + $0x1c] sm:$0xf]
          %v921 = vld [vmem:[%s708 + $0x20] sm:$0xf]
          %v922 = vld [vmem:[%s708 + $0x24] sm:$0xf]
          %v923 = vld [vmem:[%s708 + $0x28] sm:$0xf]
          %v924 = vld [vmem:[%s708 + $0x2c] sm:$0xf]
          %v925 = vld [vmem:[%s708 + $0x30] sm:$0xf]
          %v926 = vld [vmem:[%s708 + $0x34] sm:$0xf]
          %v927 = vld [vmem:[%s708 + $0x38] sm:$0xf]
          %v928 = vld [vmem:[%s708 + $0x3c] sm:$0xf]
          %v929 = vld [vmem:[%s708 + $0x40] sm:$0xf]
          %v930 = vld [vmem:[%s708 + $0x44] sm:$0xf]
          %v931 = vld [vmem:[%s708 + $0x48] sm:$0xf]
          %v932 = vld [vmem:[%s708 + $0x4c] sm:$0xf]
          %v933 = vld [vmem:[%s708 + $0x50] sm:$0xf]
          %v934 = vld [vmem:[%s708 + $0x54] sm:$0xf]
          %v935 = vld [vmem:[%s708 + $0x58] sm:$0xf]
          %v936 = vld [vmem:[%s708 + $0x5c] sm:$0xf]
          %v937 = vld [vmem:[%s708 + $0x60] sm:$0xf]
          %v938 = vld [vmem:[%s708 + $0x64] sm:$0xf]
          %v939 = vld [vmem:[%s708 + $0x68] sm:$0xf]
          %v940 = vld [vmem:[%s708 + $0x6c] sm:$0xf]
          %v941 = vld [vmem:[%s708 + $0x70] sm:$0xf]
          %v942 = vld [vmem:[%s708 + $0x74] sm:$0xf]
          %v943 = vld [vmem:[%s708 + $0x78] sm:$0xf]
          %v944 = vld [vmem:[%s708 + $0x7c] sm:$0xf]
          %v961 = vunpack.c.l.b16 %v849
          %v962 = vunpack.c.l.b16 %v850
          %v963 = vunpack.c.l.b16 %v851
          %v964 = vunpack.c.l.b16 %v852
          %v965 = vunpack.c.l.b16 %v853
          %v966 = vunpack.c.l.b16 %v854
          %v967 = vunpack.c.l.b16 %v855
          %v968 = vunpack.c.l.b16 %v856
          %v969 = vunpack.c.l.b16 %v857
          %v970 = vunpack.c.l.b16 %v858
          %v971 = vunpack.c.l.b16 %v859
          %v972 = vunpack.c.l.b16 %v860
          %v973 = vunpack.c.l.b16 %v861
          %v974 = vunpack.c.l.b16 %v862
          %v975 = vunpack.c.l.b16 %v863
          %v976 = vunpack.c.l.b16 %v864
          %v977 = vpack.c.b16 %v962, %v961
          %v978 = vpack.c.b16 %v964, %v963
          %v979 = vpack.c.b16 %v966, %v965
          %v980 = vpack.c.b16 %v968, %v967
          %v981 = vpack.c.b16 %v970, %v969
          %v982 = vpack.c.b16 %v972, %v971
          %v983 = vpack.c.b16 %v974, %v973
          %v984 = vpack.c.b16 %v976, %v975
          %v1009 = vunpack.c.l.b16 %v881
          %v1010 = vunpack.c.l.b16 %v882
          %v1011 = vunpack.c.l.b16 %v883
          %v1012 = vunpack.c.l.b16 %v884
          %v1013 = vunpack.c.l.b16 %v885
          %v1014 = vunpack.c.l.b16 %v886
          %v1015 = vunpack.c.l.b16 %v887
          %v1016 = vunpack.c.l.b16 %v888
          %v1017 = vunpack.c.l.b16 %v889
          %v1018 = vunpack.c.l.b16 %v890
          %v1019 = vunpack.c.l.b16 %v891
          %v1020 = vunpack.c.l.b16 %v892
          %v1021 = vunpack.c.l.b16 %v893
          %v1022 = vunpack.c.l.b16 %v894
          %v1023 = vunpack.c.l.b16 %v895
          %v1024 = vunpack.c.l.b16 %v896
          %v1025 = vpack.c.b16 %v1010, %v1009
          %v1026 = vpack.c.b16 %v1012, %v1011
          %v1027 = vpack.c.b16 %v1014, %v1013
          %v1028 = vpack.c.b16 %v1016, %v1015
          %v1029 = vpack.c.b16 %v1018, %v1017
          %v1030 = vpack.c.b16 %v1020, %v1019
          %v1031 = vpack.c.b16 %v1022, %v1021
          %v1032 = vpack.c.b16 %v1024, %v1023
          %1041 = vmatprep.subr.bf16.mxu0 0
          %1042 = vmatpush1.bf16.xpose.msra.mxu0 %v1025
          %1043 = vmatprep.subr.bf16.mxu0 0
          %1044 = vmatpush1.bf16.xpose.msra.mxu0 %v1026
          %1045 = vmatprep.subr.bf16.mxu0 0
          %1046 = vmatpush1.bf16.xpose.msra.mxu0 %v1027
          %1047 = vmatprep.subr.bf16.mxu0 0
          %1048 = vmatpush1.bf16.xpose.msra.mxu0 %v1028
          %1049 = vmatprep.subr.bf16.mxu0 0
          %1050 = vmatpush1.bf16.xpose.msra.mxu0 %v1029
          %1051 = vmatprep.subr.bf16.mxu0 0
          %1052 = vmatpush1.bf16.xpose.msra.mxu0 %v1030
          %1053 = vmatprep.subr.bf16.mxu0 0
          %1054 = vmatpush1.bf16.xpose.msra.mxu0 %v1031
          %1055 = vmatprep.subr.bf16.mxu0 0
          %1056 = vmatpush1.bf16.xpose.msra.mxu0 %v1032
          %1057 = vmatprep.subr.bf16.mxu0 0
          %1058 = vmatpush1.bf16.xpose.msra.mxu0 0
          %1059 = vmatprep.subr.bf16.mxu0 0
          %1060 = vmatpush1.bf16.xpose.msra.mxu0 0
          %1061 = vmatprep.subr.bf16.mxu0 0
          %1062 = vmatpush1.bf16.xpose.msra.mxu0 0
          %1063 = vmatprep.subr.bf16.mxu0 0
          %1064 = vmatpush1.bf16.xpose.msra.mxu0 0
          %1065 = vmatprep.subr.bf16.mxu0 0
          %1066 = vmatpush1.bf16.xpose.msra.mxu0 0
          %1067 = vmatprep.subr.bf16.mxu0 0
          %1068 = vmatpush1.bf16.xpose.msra.mxu0 0
          %1069 = vmatprep.subr.bf16.mxu0 0
          %1070 = vmatpush1.bf16.xpose.msra.mxu0 0
          %1071 = vmatprep.subr.bf16.mxu0 0
          %1072 = vmatpush1.bf16.xpose.msra.mxu0 0
          %1073 = vmatprep.mubr.bf16.mxu0 0
          %1074 = vmatmul.mubr.bf16.gmra.mrb[0].mxu0 %v977
          %v1075 = vpop.f32.mrb[0].mxu0
          %v1076 = vadd.f32 0.0, %v1075
          %v1077 = vpop.f32.mrb[0].mxu0
          %v1078 = vpop.f32.mrb[0].mxu0
          %v1079 = vadd.f32 0.0, %v1078
          %v1080 = vpop.f32.mrb[0].mxu0
          %1081 = vmatprep.mubr.bf16.mxu0 0
          %1082 = vmatmul.mubr.bf16.gmra.mrb[0].mxu0 %v978
          %v1083 = vpop.f32.mrb[0].mxu0
          %v1084 = vadd.f32 0.0, %v1083
          %v1085 = vpop.f32.mrb[0].mxu0
          %v1086 = vpop.f32.mrb[0].mxu0
          %v1087 = vadd.f32 0.0, %v1086
          %v1088 = vpop.f32.mrb[0].mxu0
          %1089 = vmatprep.mubr.bf16.mxu0 0
          %1090 = vmatmul.mubr.bf16.gmra.mrb[0].mxu0 %v979
          %v1091 = vpop.f32.mrb[0].mxu0
          %v1092 = vadd.f32 0.0, %v1091
          %v1093 = vpop.f32.mrb[0].mxu0
          %v1094 = vpop.f32.mrb[0].mxu0
          %v1095 = vadd.f32 0.0, %v1094
          %v1096 = vpop.f32.mrb[0].mxu0
          %1097 = vmatprep.mubr.bf16.mxu0 0
          %1098 = vmatmul.mubr.bf16.gmra.mrb[0].mxu0 %v980
          %v1099 = vpop.f32.mrb[0].mxu0
          %v1100 = vadd.f32 0.0, %v1099
          %v1101 = vpop.f32.mrb[0].mxu0
          %v1102 = vpop.f32.mrb[0].mxu0
          %v1103 = vadd.f32 0.0, %v1102
          %v1104 = vpop.f32.mrb[0].mxu0
          %1105 = vmatprep.mubr.bf16.mxu0 0
          %1106 = vmatmul.mubr.bf16.gmra.mrb[0].mxu0 %v981
          %v1107 = vpop.f32.mrb[0].mxu0
          %v1108 = vadd.f32 0.0, %v1107
          %v1109 = vpop.f32.mrb[0].mxu0
          %v1110 = vpop.f32.mrb[0].mxu0
          %v1111 = vadd.f32 0.0, %v1110
          %v1112 = vpop.f32.mrb[0].mxu0
          %1113 = vmatprep.mubr.bf16.mxu0 0
          %1114 = vmatmul.mubr.bf16.gmra.mrb[0].mxu0 %v982
          %v1115 = vpop.f32.mrb[0].mxu0
          %v1116 = vadd.f32 0.0, %v1115
          %v1117 = vpop.f32.mrb[0].mxu0
          %v1118 = vpop.f32.mrb[0].mxu0
          %v1119 = vadd.f32 0.0, %v1118
          %v1120 = vpop.f32.mrb[0].mxu0
          %1121 = vmatprep.mubr.bf16.mxu0 0
          %1122 = vmatmul.mubr.bf16.gmra.mrb[0].mxu0 %v983
          %v1123 = vpop.f32.mrb[0].mxu0
          %v1124 = vadd.f32 0.0, %v1123
          %v1125 = vpop.f32.mrb[0].mxu0
          %v1126 = vpop.f32.mrb[0].mxu0
          %v1127 = vadd.f32 0.0, %v1126
          %v1128 = vpop.f32.mrb[0].mxu0
          %1129 = vmatprep.mubr.bf16.mxu0 0
          %1130 = vmatmul.mubr.bf16.gmra.mrb[0].mxu0 %v984
          %v1131 = vpop.f32.mrb[0].mxu0
          %v1132 = vadd.f32 0.0, %v1131
          %v1133 = vpop.f32.mrb[0].mxu0
          %v1134 = vpop.f32.mrb[0].mxu0
          %v1135 = vadd.f32 0.0, %v1134
          %v1136 = vpop.f32.mrb[0].mxu0
          %1137 = vdwg.mxu0
          %v1154 = vunpack.c.l.b16 %v865
          %v1155 = vunpack.c.l.b16 %v866
          %v1156 = vunpack.c.l.b16 %v867
          %v1157 = vunpack.c.l.b16 %v868
          %v1158 = vunpack.c.l.b16 %v869
          %v1159 = vunpack.c.l.b16 %v870
          %v1160 = vunpack.c.l.b16 %v871
          %v1161 = vunpack.c.l.b16 %v872
          %v1162 = vunpack.c.l.b16 %v873
          %v1163 = vunpack.c.l.b16 %v874
          %v1164 = vunpack.c.l.b16 %v875
          %v1165 = vunpack.c.l.b16 %v876
          %v1166 = vunpack.c.l.b16 %v877
          %v1167 = vunpack.c.l.b16 %v878
          %v1168 = vunpack.c.l.b16 %v879
          %v1169 = vunpack.c.l.b16 %v880
          %v1170 = vpack.c.b16 %v1155, %v1154
          %v1171 = vpack.c.b16 %v1157, %v1156
          %v1172 = vpack.c.b16 %v1159, %v1158
          %v1173 = vpack.c.b16 %v1161, %v1160
          %v1174 = vpack.c.b16 %v1163, %v1162
          %v1175 = vpack.c.b16 %v1165, %v1164
          %v1176 = vpack.c.b16 %v1167, %v1166
          %v1177 = vpack.c.b16 %v1169, %v1168
          %v1202 = vunpack.c.l.b16 %v897
          %v1203 = vunpack.c.l.b16 %v898
          %v1204 = vunpack.c.l.b16 %v899
          %v1205 = vunpack.c.l.b16 %v900
          %v1206 = vunpack.c.l.b16 %v901
          %v1207 = vunpack.c.l.b16 %v902
          %v1208 = vunpack.c.l.b16 %v903
          %v1209 = vunpack.c.l.b16 %v904
          %v1210 = vunpack.c.l.b16 %v905
          %v1211 = vunpack.c.l.b16 %v906
          %v1212 = vunpack.c.l.b16 %v907
          %v1213 = vunpack.c.l.b16 %v908
          %v1214 = vunpack.c.l.b16 %v909
          %v1215 = vunpack.c.l.b16 %v910
          %v1216 = vunpack.c.l.b16 %v911
          %v1217 = vunpack.c.l.b16 %v912
          %v1218 = vpack.c.b16 %v1203, %v1202
          %v1219 = vpack.c.b16 %v1205, %v1204
          %v1220 = vpack.c.b16 %v1207, %v1206
          %v1221 = vpack.c.b16 %v1209, %v1208
          %v1222 = vpack.c.b16 %v1211, %v1210
          %v1223 = vpack.c.b16 %v1213, %v1212
          %v1224 = vpack.c.b16 %v1215, %v1214
          %v1225 = vpack.c.b16 %v1217, %v1216
          %1234 = vmatprep.subr.bf16.mxu0 0
          %1235 = vmatpush1.bf16.xpose.msra.mxu0 %v1218
          %1236 = vmatprep.subr.bf16.mxu0 0
          %1237 = vmatpush1.bf16.xpose.msra.mxu0 %v1219
          %1238 = vmatprep.subr.bf16.mxu0 0
          %1239 = vmatpush1.bf16.xpose.msra.mxu0 %v1220
          %1240 = vmatprep.subr.bf16.mxu0 0
          %1241 = vmatpush1.bf16.xpose.msra.mxu0 %v1221
          %1242 = vmatprep.subr.bf16.mxu0 0
          %1243 = vmatpush1.bf16.xpose.msra.mxu0 %v1222
          %1244 = vmatprep.subr.bf16.mxu0 0
          %1245 = vmatpush1.bf16.xpose.msra.mxu0 %v1223
          %1246 = vmatprep.subr.bf16.mxu0 0
          %1247 = vmatpush1.bf16.xpose.msra.mxu0 %v1224
          %1248 = vmatprep.subr.bf16.mxu0 0
          %1249 = vmatpush1.bf16.xpose.msra.mxu0 %v1225
          %1250 = vmatprep.subr.bf16.mxu0 0
          %1251 = vmatpush1.bf16.xpose.msra.mxu0 0
          %1252 = vmatprep.subr.bf16.mxu0 0
          %1253 = vmatpush1.bf16.xpose.msra.mxu0 0
          %1254 = vmatprep.subr.bf16.mxu0 0
          %1255 = vmatpush1.bf16.xpose.msra.mxu0 0
          %1256 = vmatprep.subr.bf16.mxu0 0
          %1257 = vmatpush1.bf16.xpose.msra.mxu0 0
          %1258 = vmatprep.subr.bf16.mxu0 0
          %1259 = vmatpush1.bf16.xpose.msra.mxu0 0
          %1260 = vmatprep.subr.bf16.mxu0 0
          %1261 = vmatpush1.bf16.xpose.msra.mxu0 0
          %1262 = vmatprep.subr.bf16.mxu0 0
          %1263 = vmatpush1.bf16.xpose.msra.mxu0 0
          %1264 = vmatprep.subr.bf16.mxu0 0
          %1265 = vmatpush1.bf16.xpose.msra.mxu0 0
          %1266 = vmatprep.mubr.bf16.mxu0 0
          %1267 = vmatmul.mubr.bf16.gmra.mrb[0].mxu0 %v1170
          %v1268 = vpop.f32.mrb[0].mxu0
          %v1269 = vadd.f32 0.0, %v1268
          %v1270 = vpop.f32.mrb[0].mxu0
          %v1271 = vpop.f32.mrb[0].mxu0
          %v1272 = vadd.f32 0.0, %v1271
          %v1273 = vpop.f32.mrb[0].mxu0
          %1274 = vmatprep.mubr.bf16.mxu0 0
          %1275 = vmatmul.mubr.bf16.gmra.mrb[0].mxu0 %v1171
          %v1276 = vpop.f32.mrb[0].mxu0
          %v1277 = vadd.f32 0.0, %v1276
          %v1278 = vpop.f32.mrb[0].mxu0
          %v1279 = vpop.f32.mrb[0].mxu0
          %v1280 = vadd.f32 0.0, %v1279
          %v1281 = vpop.f32.mrb[0].mxu0
          %1282 = vmatprep.mubr.bf16.mxu0 0
          %1283 = vmatmul.mubr.bf16.gmra.mrb[0].mxu0 %v1172
          %v1284 = vpop.f32.mrb[0].mxu0
          %v1285 = vadd.f32 0.0, %v1284
          %v1286 = vpop.f32.mrb[0].mxu0
          %v1287 = vpop.f32.mrb[0].mxu0
          %v1288 = vadd.f32 0.0, %v1287
          %v1289 = vpop.f32.mrb[0].mxu0
          %1290 = vmatprep.mubr.bf16.mxu0 0
          %1291 = vmatmul.mubr.bf16.gmra.mrb[0].mxu0 %v1173
          %v1292 = vpop.f32.mrb[0].mxu0
          %v1293 = vadd.f32 0.0, %v1292
          %v1294 = vpop.f32.mrb[0].mxu0
          %v1295 = vpop.f32.mrb[0].mxu0
          %v1296 = vadd.f32 0.0, %v1295
          %v1297 = vpop.f32.mrb[0].mxu0
          %1298 = vmatprep.mubr.bf16.mxu0 0
          %1299 = vmatmul.mubr.bf16.gmra.mrb[0].mxu0 %v1174
          %v1300 = vpop.f32.mrb[0].mxu0
          %v1301 = vadd.f32 0.0, %v1300
          %v1302 = vpop.f32.mrb[0].mxu0
          %v1303 = vpop.f32.mrb[0].mxu0
          %v1304 = vadd.f32 0.0, %v1303
          %v1305 = vpop.f32.mrb[0].mxu0
          %1306 = vmatprep.mubr.bf16.mxu0 0
          %1307 = vmatmul.mubr.bf16.gmra.mrb[0].mxu0 %v1175
          %v1308 = vpop.f32.mrb[0].mxu0
          %v1309 = vadd.f32 0.0, %v1308
          %v1310 = vpop.f32.mrb[0].mxu0
          %v1311 = vpop.f32.mrb[0].mxu0
          %v1312 = vadd.f32 0.0, %v1311
          %v1313 = vpop.f32.mrb[0].mxu0
          %1314 = vmatprep.mubr.bf16.mxu0 0
          %1315 = vmatmul.mubr.bf16.gmra.mrb[0].mxu0 %v1176
          %v1316 = vpop.f32.mrb[0].mxu0
          %v1317 = vadd.f32 0.0, %v1316
          %v1318 = vpop.f32.mrb[0].mxu0
          %v1319 = vpop.f32.mrb[0].mxu0
          %v1320 = vadd.f32 0.0, %v1319
          %v1321 = vpop.f32.mrb[0].mxu0
          %1322 = vmatprep.mubr.bf16.mxu0 0
          %1323 = vmatmul.mubr.bf16.gmra.mrb[0].mxu0 %v1177
          %v1324 = vpop.f32.mrb[0].mxu0
          %v1325 = vadd.f32 0.0, %v1324
          %v1326 = vpop.f32.mrb[0].mxu0
          %v1327 = vpop.f32.mrb[0].mxu0
          %v1328 = vadd.f32 0.0, %v1327
          %v1329 = vpop.f32.mrb[0].mxu0
          %1330 = vdwg.mxu0
          %v1331 = vmul.f32 %v1076, 0.088388346
          %v1332 = vmul.f32 %v1079, 0.088388346
          %v1333 = vmul.f32 %v1084, 0.088388346
          %v1334 = vmul.f32 %v1087, 0.088388346
          %v1335 = vmul.f32 %v1092, 0.088388346
          %v1336 = vmul.f32 %v1095, 0.088388346
          %v1337 = vmul.f32 %v1100, 0.088388346
          %v1338 = vmul.f32 %v1103, 0.088388346
          %v1339 = vmul.f32 %v1108, 0.088388346
          %v1340 = vmul.f32 %v1111, 0.088388346
          %v1341 = vmul.f32 %v1116, 0.088388346
          %v1342 = vmul.f32 %v1119, 0.088388346
          %v1343 = vmul.f32 %v1124, 0.088388346
          %v1344 = vmul.f32 %v1127, 0.088388346
          %v1345 = vmul.f32 %v1132, 0.088388346
          %v1346 = vmul.f32 %v1135, 0.088388346
          %v1347 = vmul.f32 %v1269, 0.088388346
          %v1348 = vmul.f32 %v1272, 0.088388346
          %v1349 = vmul.f32 %v1277, 0.088388346
          %v1350 = vmul.f32 %v1280, 0.088388346
          %v1351 = vmul.f32 %v1285, 0.088388346
          %v1352 = vmul.f32 %v1288, 0.088388346
          %v1353 = vmul.f32 %v1293, 0.088388346
          %v1354 = vmul.f32 %v1296, 0.088388346
          %v1355 = vmul.f32 %v1301, 0.088388346
          %v1356 = vmul.f32 %v1304, 0.088388346
          %v1357 = vmul.f32 %v1309, 0.088388346
          %v1358 = vmul.f32 %v1312, 0.088388346
          %v1359 = vmul.f32 %v1317, 0.088388346
          %v1360 = vmul.f32 %v1320, 0.088388346
          %v1361 = vmul.f32 %v1325, 0.088388346
          %v1362 = vmul.f32 %v1328, 0.088388346
          %v1363 = vlaneseq
          %v1364 = vshrl.u32 %v1363, 7
          %v1365 = vadd.s32 %v1364, 8
          %v1366 = vadd.s32 %v1364, 16
          %v1367 = vadd.s32 %v1364, 24
          %v1368 = vadd.s32 %v1364, 32
          %v1369 = vadd.s32 %v1364, 40
          %v1370 = vadd.s32 %v1364, 48
          %v1371 = vadd.s32 %v1364, 56
          %v1372 = vadd.s32 %v1364, 64
          %v1373 = vadd.s32 %v1364, 72
          %v1374 = vadd.s32 %v1364, 80
          %v1375 = vadd.s32 %v1364, 88
          %v1376 = vadd.s32 %v1364, 96
          %v1377 = vadd.s32 %v1364, 104
          %v1378 = vadd.s32 %v1364, 112
          %v1379 = vadd.s32 %v1364, 120
          %v1380 = vstv %s843
          %v1381 = vadd.s32 %v1380, %v1364
          %v1382 = vadd.s32 %v1380, %v1365
          %v1383 = vadd.s32 %v1380, %v1366
          %v1384 = vadd.s32 %v1380, %v1367
          %v1385 = vadd.s32 %v1380, %v1368
          %v1386 = vadd.s32 %v1380, %v1369
          %v1387 = vadd.s32 %v1380, %v1370
          %v1388 = vadd.s32 %v1380, %v1371
          %v1389 = vadd.s32 %v1380, %v1372
          %v1390 = vadd.s32 %v1380, %v1373
          %v1391 = vadd.s32 %v1380, %v1374
          %v1392 = vadd.s32 %v1380, %v1375
          %v1393 = vadd.s32 %v1380, %v1376
          %v1394 = vadd.s32 %v1380, %v1377
          %v1395 = vadd.s32 %v1380, %v1378
          %v1396 = vadd.s32 %v1380, %v1379
          %v1397 = vlaneseq
          %v1398 = vand.u32 %v1397, 127
          %v1399 = vstv %s842
          %v1400 = vadd.s32 %v1399, %v1398
          %vm1401 = vcmp.le.s32.totalorder %v1400, %v1381
          %vm1402 = vcmp.le.s32.totalorder %v1400, %v1382
          %vm1403 = vcmp.le.s32.totalorder %v1400, %v1383
          %vm1404 = vcmp.le.s32.totalorder %v1400, %v1384
          %vm1405 = vcmp.le.s32.totalorder %v1400, %v1385
          %vm1406 = vcmp.le.s32.totalorder %v1400, %v1386
          %vm1407 = vcmp.le.s32.totalorder %v1400, %v1387
          %vm1408 = vcmp.le.s32.totalorder %v1400, %v1388
          %vm1409 = vcmp.le.s32.totalorder %v1400, %v1389
          %vm1410 = vcmp.le.s32.totalorder %v1400, %v1390
          %vm1411 = vcmp.le.s32.totalorder %v1400, %v1391
          %vm1412 = vcmp.le.s32.totalorder %v1400, %v1392
          %vm1413 = vcmp.le.s32.totalorder %v1400, %v1393
          %vm1414 = vcmp.le.s32.totalorder %v1400, %v1394
          %vm1415 = vcmp.le.s32.totalorder %v1400, %v1395
          %vm1416 = vcmp.le.s32.totalorder %v1400, %v1396
          %v1417 = vsel %vm1401, 1, 0
          %v1418 = vsel %vm1402, 1, 0
          %v1419 = vsel %vm1403, 1, 0
          %v1420 = vsel %vm1404, 1, 0
          %v1421 = vsel %vm1405, 1, 0
          %v1422 = vsel %vm1406, 1, 0
          %v1423 = vsel %vm1407, 1, 0
          %v1424 = vsel %vm1408, 1, 0
          %v1425 = vsel %vm1409, 1, 0
          %v1426 = vsel %vm1410, 1, 0
          %v1427 = vsel %vm1411, 1, 0
          %v1428 = vsel %vm1412, 1, 0
          %v1429 = vsel %vm1413, 1, 0
          %v1430 = vsel %vm1414, 1, 0
          %v1431 = vsel %vm1415, 1, 0
          %v1432 = vsel %vm1416, 1, 0
          %vm1433 = vcmp.eq.s32.totalorder %v1417, 1
          %vm1434 = vcmp.eq.s32.totalorder %v1418, 1
          %vm1435 = vcmp.eq.s32.totalorder %v1419, 1
          %vm1436 = vcmp.eq.s32.totalorder %v1420, 1
          %vm1437 = vcmp.eq.s32.totalorder %v1421, 1
          %vm1438 = vcmp.eq.s32.totalorder %v1422, 1
          %vm1439 = vcmp.eq.s32.totalorder %v1423, 1
          %vm1440 = vcmp.eq.s32.totalorder %v1424, 1
          %vm1441 = vcmp.eq.s32.totalorder %v1425, 1
          %vm1442 = vcmp.eq.s32.totalorder %v1426, 1
          %vm1443 = vcmp.eq.s32.totalorder %v1427, 1
          %vm1444 = vcmp.eq.s32.totalorder %v1428, 1
          %vm1445 = vcmp.eq.s32.totalorder %v1429, 1
          %vm1446 = vcmp.eq.s32.totalorder %v1430, 1
          %vm1447 = vcmp.eq.s32.totalorder %v1431, 1
          %vm1448 = vcmp.eq.s32.totalorder %v1432, 1
          %v1449 = vsel %vm1433, %v1331, -1e+30
          %v1450 = vsel %vm1434, %v1332, -1e+30
          %v1451 = vsel %vm1435, %v1333, -1e+30
          %v1452 = vsel %vm1436, %v1334, -1e+30
          %v1453 = vsel %vm1437, %v1335, -1e+30
          %v1454 = vsel %vm1438, %v1336, -1e+30
          %v1455 = vsel %vm1439, %v1337, -1e+30
          %v1456 = vsel %vm1440, %v1338, -1e+30
          %v1457 = vsel %vm1441, %v1339, -1e+30
          %v1458 = vsel %vm1442, %v1340, -1e+30
          %v1459 = vsel %vm1443, %v1341, -1e+30
          %v1460 = vsel %vm1444, %v1342, -1e+30
          %v1461 = vsel %vm1445, %v1343, -1e+30
          %v1462 = vsel %vm1446, %v1344, -1e+30
          %v1463 = vsel %vm1447, %v1345, -1e+30
          %v1464 = vsel %vm1448, %v1346, -1e+30
          %v1465 = vsel %vm1433, %v1347, -1e+30
          %v1466 = vsel %vm1434, %v1348, -1e+30
          %v1467 = vsel %vm1435, %v1349, -1e+30
          %v1468 = vsel %vm1436, %v1350, -1e+30
          %v1469 = vsel %vm1437, %v1351, -1e+30
          %v1470 = vsel %vm1438, %v1352, -1e+30
          %v1471 = vsel %vm1439, %v1353, -1e+30
          %v1472 = vsel %vm1440, %v1354, -1e+30
          %v1473 = vsel %vm1441, %v1355, -1e+30
          %v1474 = vsel %vm1442, %v1356, -1e+30
          %v1475 = vsel %vm1443, %v1357, -1e+30
          %v1476 = vsel %vm1444, %v1358, -1e+30
          %v1477 = vsel %vm1445, %v1359, -1e+30
          %v1478 = vsel %vm1446, %v1360, -1e+30
          %v1479 = vsel %vm1447, %v1361, -1e+30
          %v1480 = vsel %vm1448, %v1362, -1e+30
          %v1481 = vld [vmem:[#allocation2] sm:$0xff]
          %v1482 = vld [vmem:[#allocation2 + $0x8] sm:$0xff]
          %v1483 = vld [vmem:[#allocation2 + $0x10] sm:$0xff]
          %v1484 = vld [vmem:[#allocation2 + $0x18] sm:$0xff]
          %v1485 = vld [vmem:[#allocation2 + $0x20] sm:$0xff]
          %v1486 = vld [vmem:[#allocation2 + $0x28] sm:$0xff]
          %v1487 = vld [vmem:[#allocation2 + $0x30] sm:$0xff]
          %v1488 = vld [vmem:[#allocation2 + $0x38] sm:$0xff]
          %v1489 = vld [vmem:[#allocation2 + $0x40] sm:$0xff]
          %v1490 = vld [vmem:[#allocation2 + $0x48] sm:$0xff]
          %v1491 = vld [vmem:[#allocation2 + $0x50] sm:$0xff]
          %v1492 = vld [vmem:[#allocation2 + $0x58] sm:$0xff]
          %v1493 = vld [vmem:[#allocation2 + $0x60] sm:$0xff]
          %v1494 = vld [vmem:[#allocation2 + $0x68] sm:$0xff]
          %v1495 = vld [vmem:[#allocation2 + $0x70] sm:$0xff]
          %v1496 = vld [vmem:[#allocation2 + $0x78] sm:$0xff]
          %v1497 = vld [vmem:[#allocation2 + $0x80] sm:$0xff]
          %v1498 = vld [vmem:[#allocation2 + $0x88] sm:$0xff]
          %v1499 = vld [vmem:[#allocation2 + $0x90] sm:$0xff]
          %v1500 = vld [vmem:[#allocation2 + $0x98] sm:$0xff]
          %v1501 = vld [vmem:[#allocation2 + $0xa0] sm:$0xff]
          %v1502 = vld [vmem:[#allocation2 + $0xa8] sm:$0xff]
          %v1503 = vld [vmem:[#allocation2 + $0xb0] sm:$0xff]
          %v1504 = vld [vmem:[#allocation2 + $0xb8] sm:$0xff]
          %v1505 = vld [vmem:[#allocation2 + $0xc0] sm:$0xff]
          %v1506 = vld [vmem:[#allocation2 + $0xc8] sm:$0xff]
          %v1507 = vld [vmem:[#allocation2 + $0xd0] sm:$0xff]
          %v1508 = vld [vmem:[#allocation2 + $0xd8] sm:$0xff]
          %v1509 = vld [vmem:[#allocation2 + $0xe0] sm:$0xff]
          %v1510 = vld [vmem:[#allocation2 + $0xe8] sm:$0xff]
          %v1511 = vld [vmem:[#allocation2 + $0xf0] sm:$0xff]
          %v1512 = vld [vmem:[#allocation2 + $0xf8] sm:$0xff]
          %1513 = vmax.xlane.f32.xlu0 %v1449
          %v1514 = vpop.xlane.xlu0 %1513
          %1515 = vmax.xlane.f32.xlu0 %v1450
          %v1516 = vpop.xlane.xlu0 %1515
          %1517 = vmax.xlane.f32.xlu0 %v1451
          %v1518 = vpop.xlane.xlu0 %1517
          %1519 = vmax.xlane.f32.xlu0 %v1452
          %v1520 = vpop.xlane.xlu0 %1519
          %1521 = vmax.xlane.f32.xlu0 %v1453
          %v1522 = vpop.xlane.xlu0 %1521
          %1523 = vmax.xlane.f32.xlu0 %v1454
          %v1524 = vpop.xlane.xlu0 %1523
          %1525 = vmax.xlane.f32.xlu0 %v1455
          %v1526 = vpop.xlane.xlu0 %1525
          %1527 = vmax.xlane.f32.xlu0 %v1456
          %v1528 = vpop.xlane.xlu0 %1527
          %1529 = vmax.xlane.f32.xlu0 %v1457
          %v1530 = vpop.xlane.xlu0 %1529
          %1531 = vmax.xlane.f32.xlu0 %v1458
          %v1532 = vpop.xlane.xlu0 %1531
          %1533 = vmax.xlane.f32.xlu0 %v1459
          %v1534 = vpop.xlane.xlu0 %1533
          %1535 = vmax.xlane.f32.xlu0 %v1460
          %v1536 = vpop.xlane.xlu0 %1535
          %1537 = vmax.xlane.f32.xlu0 %v1461
          %v1538 = vpop.xlane.xlu0 %1537
          %1539 = vmax.xlane.f32.xlu0 %v1462
          %v1540 = vpop.xlane.xlu0 %1539
          %1541 = vmax.xlane.f32.xlu0 %v1463
          %v1542 = vpop.xlane.xlu0 %1541
          %1543 = vmax.xlane.f32.xlu0 %v1464
          %v1544 = vpop.xlane.xlu0 %1543
          %1545 = vmax.xlane.f32.xlu0 %v1465
          %v1546 = vpop.xlane.xlu0 %1545
          %1547 = vmax.xlane.f32.xlu0 %v1466
          %v1548 = vpop.xlane.xlu0 %1547
          %1549 = vmax.xlane.f32.xlu0 %v1467
          %v1550 = vpop.xlane.xlu0 %1549
          %1551 = vmax.xlane.f32.xlu0 %v1468
          %v1552 = vpop.xlane.xlu0 %1551
          %1553 = vmax.xlane.f32.xlu0 %v1469
          %v1554 = vpop.xlane.xlu0 %1553
          %1555 = vmax.xlane.f32.xlu0 %v1470
          %v1556 = vpop.xlane.xlu0 %1555
          %1557 = vmax.xlane.f32.xlu0 %v1471
          %v1558 = vpop.xlane.xlu0 %1557
          %1559 = vmax.xlane.f32.xlu0 %v1472
          %v1560 = vpop.xlane.xlu0 %1559
          %1561 = vmax.xlane.f32.xlu0 %v1473
          %v1562 = vpop.xlane.xlu0 %1561
          %1563 = vmax.xlane.f32.xlu0 %v1474
          %v1564 = vpop.xlane.xlu0 %1563
          %1565 = vmax.xlane.f32.xlu0 %v1475
          %v1566 = vpop.xlane.xlu0 %1565
          %1567 = vmax.xlane.f32.xlu0 %v1476
          %v1568 = vpop.xlane.xlu0 %1567
          %1569 = vmax.xlane.f32.xlu0 %v1477
          %v1570 = vpop.xlane.xlu0 %1569
          %1571 = vmax.xlane.f32.xlu0 %v1478
          %v1572 = vpop.xlane.xlu0 %1571
          %1573 = vmax.xlane.f32.xlu0 %v1479
          %v1574 = vpop.xlane.xlu0 %1573
          %1575 = vmax.xlane.f32.xlu0 %v1480
          %v1576 = vpop.xlane.xlu0 %1575
          %v1577 = vmax.f32 %v1481, %v1514
          %v1578 = vmax.f32 %v1482, %v1516
          %v1579 = vmax.f32 %v1483, %v1518
          %v1580 = vmax.f32 %v1484, %v1520
          %v1581 = vmax.f32 %v1485, %v1522
          %v1582 = vmax.f32 %v1486, %v1524
          %v1583 = vmax.f32 %v1487, %v1526
          %v1584 = vmax.f32 %v1488, %v1528
          %v1585 = vmax.f32 %v1489, %v1530
          %v1586 = vmax.f32 %v1490, %v1532
          %v1587 = vmax.f32 %v1491, %v1534
          %v1588 = vmax.f32 %v1492, %v1536
          %v1589 = vmax.f32 %v1493, %v1538
          %v1590 = vmax.f32 %v1494, %v1540
          %v1591 = vmax.f32 %v1495, %v1542
          %v1592 = vmax.f32 %v1496, %v1544
          %v1593 = vmax.f32 %v1497, %v1546
          %v1594 = vmax.f32 %v1498, %v1548
          %v1595 = vmax.f32 %v1499, %v1550
          %v1596 = vmax.f32 %v1500, %v1552
          %v1597 = vmax.f32 %v1501, %v1554
          %v1598 = vmax.f32 %v1502, %v1556
          %v1599 = vmax.f32 %v1503, %v1558
          %v1600 = vmax.f32 %v1504, %v1560
          %v1601 = vmax.f32 %v1505, %v1562
          %v1602 = vmax.f32 %v1506, %v1564
          %v1603 = vmax.f32 %v1507, %v1566
          %v1604 = vmax.f32 %v1508, %v1568
          %v1605 = vmax.f32 %v1509, %v1570
          %v1606 = vmax.f32 %v1510, %v1572
          %v1607 = vmax.f32 %v1511, %v1574
          %v1608 = vmax.f32 %v1512, %v1576
          %v1609 = vsub.f32 %v1481, %v1577
          %v1610 = vsub.f32 %v1482, %v1578
          %v1611 = vsub.f32 %v1483, %v1579
          %v1612 = vsub.f32 %v1484, %v1580
          %v1613 = vsub.f32 %v1485, %v1581
          %v1614 = vsub.f32 %v1486, %v1582
          %v1615 = vsub.f32 %v1487, %v1583
          %v1616 = vsub.f32 %v1488, %v1584
          %v1617 = vsub.f32 %v1489, %v1585
          %v1618 = vsub.f32 %v1490, %v1586
          %v1619 = vsub.f32 %v1491, %v1587
          %v1620 = vsub.f32 %v1492, %v1588
          %v1621 = vsub.f32 %v1493, %v1589
          %v1622 = vsub.f32 %v1494, %v1590
          %v1623 = vsub.f32 %v1495, %v1591
          %v1624 = vsub.f32 %v1496, %v1592
          %v1625 = vsub.f32 %v1497, %v1593
          %v1626 = vsub.f32 %v1498, %v1594
          %v1627 = vsub.f32 %v1499, %v1595
          %v1628 = vsub.f32 %v1500, %v1596
          %v1629 = vsub.f32 %v1501, %v1597
          %v1630 = vsub.f32 %v1502, %v1598
          %v1631 = vsub.f32 %v1503, %v1599
          %v1632 = vsub.f32 %v1504, %v1600
          %v1633 = vsub.f32 %v1505, %v1601
          %v1634 = vsub.f32 %v1506, %v1602
          %v1635 = vsub.f32 %v1507, %v1603
          %v1636 = vsub.f32 %v1508, %v1604
          %v1637 = vsub.f32 %v1509, %v1605
          %v1638 = vsub.f32 %v1510, %v1606
          %v1639 = vsub.f32 %v1511, %v1607
          %v1640 = vsub.f32 %v1512, %v1608
          %v1641 = vmul.f32 %v1609, 1.442695
          %v1642 = vpow.pop %v1641
          %v1643 = vmul.f32 %v1610, 1.442695
          %v1644 = vpow.pop %v1643
          %v1645 = vmul.f32 %v1611, 1.442695
          %v1646 = vpow.pop %v1645
          %v1647 = vmul.f32 %v1612, 1.442695
          %v1648 = vpow.pop %v1647
          %v1649 = vmul.f32 %v1613, 1.442695
          %v1650 = vpow.pop %v1649
          %v1651 = vmul.f32 %v1614, 1.442695
          %v1652 = vpow.pop %v1651
          %v1653 = vmul.f32 %v1615, 1.442695
          %v1654 = vpow.pop %v1653
          %v1655 = vmul.f32 %v1616, 1.442695
          %v1656 = vpow.pop %v1655
          %v1657 = vmul.f32 %v1617, 1.442695
          %v1658 = vpow.pop %v1657
          %v1659 = vmul.f32 %v1618, 1.442695
          %v1660 = vpow.pop %v1659
          %v1661 = vmul.f32 %v1619, 1.442695
          %v1662 = vpow.pop %v1661
          %v1663 = vmul.f32 %v1620, 1.442695
          %v1664 = vpow.pop %v1663
          %v1665 = vmul.f32 %v1621, 1.442695
          %v1666 = vpow.pop %v1665
          %v1667 = vmul.f32 %v1622, 1.442695
          %v1668 = vpow.pop %v1667
          %v1669 = vmul.f32 %v1623, 1.442695
          %v1670 = vpow.pop %v1669
          %v1671 = vmul.f32 %v1624, 1.442695
          %v1672 = vpow.pop %v1671
          %v1673 = vmul.f32 %v1625, 1.442695
          %v1674 = vpow.pop %v1673
          %v1675 = vmul.f32 %v1626, 1.442695
          %v1676 = vpow.pop %v1675
          %v1677 = vmul.f32 %v1627, 1.442695
          %v1678 = vpow.pop %v1677
          %v1679 = vmul.f32 %v1628, 1.442695
          %v1680 = vpow.pop %v1679
          %v1681 = vmul.f32 %v1629, 1.442695
          %v1682 = vpow.pop %v1681
          %v1683 = vmul.f32 %v1630, 1.442695
          %v1684 = vpow.pop %v1683
          %v1685 = vmul.f32 %v1631, 1.442695
          %v1686 = vpow.pop %v1685
          %v1687 = vmul.f32 %v1632, 1.442695
          %v1688 = vpow.pop %v1687
          %v1689 = vmul.f32 %v1633, 1.442695
          %v1690 = vpow.pop %v1689
          %v1691 = vmul.f32 %v1634, 1.442695
          %v1692 = vpow.pop %v1691
          %v1693 = vmul.f32 %v1635, 1.442695
          %v1694 = vpow.pop %v1693
          %v1695 = vmul.f32 %v1636, 1.442695
          %v1696 = vpow.pop %v1695
          %v1697 = vmul.f32 %v1637, 1.442695
          %v1698 = vpow.pop %v1697
          %v1699 = vmul.f32 %v1638, 1.442695
          %v1700 = vpow.pop %v1699
          %v1701 = vmul.f32 %v1639, 1.442695
          %v1702 = vpow.pop %v1701
          %v1703 = vmul.f32 %v1640, 1.442695
          %v1704 = vpow.pop %v1703
          %1706 = vset.pattern.permute.xlu0 0
          %1707 = vperm.xlu0 %1706, %v1577
          %v1708 = vpop.permute.xlu0 %1707
          %1711 = vset.pattern.permute.xlu0 0
          %1712 = vperm.xlu0 %1711, %v1578
          %v1713 = vpop.permute.xlu0 %1712
          %1716 = vset.pattern.permute.xlu0 0
          %1717 = vperm.xlu0 %1716, %v1579
          %v1718 = vpop.permute.xlu0 %1717
          %1721 = vset.pattern.permute.xlu0 0
          %1722 = vperm.xlu0 %1721, %v1580
          %v1723 = vpop.permute.xlu0 %1722
          %1726 = vset.pattern.permute.xlu0 0
          %1727 = vperm.xlu0 %1726, %v1581
          %v1728 = vpop.permute.xlu0 %1727
          %1731 = vset.pattern.permute.xlu0 0
          %1732 = vperm.xlu0 %1731, %v1582
          %v1733 = vpop.permute.xlu0 %1732
          %1736 = vset.pattern.permute.xlu0 0
          %1737 = vperm.xlu0 %1736, %v1583
          %v1738 = vpop.permute.xlu0 %1737
          %1741 = vset.pattern.permute.xlu0 0
          %1742 = vperm.xlu0 %1741, %v1584
          %v1743 = vpop.permute.xlu0 %1742
          %1746 = vset.pattern.permute.xlu0 0
          %1747 = vperm.xlu0 %1746, %v1585
          %v1748 = vpop.permute.xlu0 %1747
          %1751 = vset.pattern.permute.xlu0 0
          %1752 = vperm.xlu0 %1751, %v1586
          %v1753 = vpop.permute.xlu0 %1752
          %1756 = vset.pattern.permute.xlu0 0
          %1757 = vperm.xlu0 %1756, %v1587
          %v1758 = vpop.permute.xlu0 %1757
          %1761 = vset.pattern.permute.xlu0 0
          %1762 = vperm.xlu0 %1761, %v1588
          %v1763 = vpop.permute.xlu0 %1762
          %1766 = vset.pattern.permute.xlu0 0
          %1767 = vperm.xlu0 %1766, %v1589
          %v1768 = vpop.permute.xlu0 %1767
          %1771 = vset.pattern.permute.xlu0 0
          %1772 = vperm.xlu0 %1771, %v1590
          %v1773 = vpop.permute.xlu0 %1772
          %1776 = vset.pattern.permute.xlu0 0
          %1777 = vperm.xlu0 %1776, %v1591
          %v1778 = vpop.permute.xlu0 %1777
          %1781 = vset.pattern.permute.xlu0 0
          %1782 = vperm.xlu0 %1781, %v1592
          %v1783 = vpop.permute.xlu0 %1782
          %1786 = vset.pattern.permute.xlu0 0
          %1787 = vperm.xlu0 %1786, %v1593
          %v1788 = vpop.permute.xlu0 %1787
          %1791 = vset.pattern.permute.xlu0 0
          %1792 = vperm.xlu0 %1791, %v1594
          %v1793 = vpop.permute.xlu0 %1792
          %1796 = vset.pattern.permute.xlu0 0
          %1797 = vperm.xlu0 %1796, %v1595
          %v1798 = vpop.permute.xlu0 %1797
          %1801 = vset.pattern.permute.xlu0 0
          %1802 = vperm.xlu0 %1801, %v1596
          %v1803 = vpop.permute.xlu0 %1802
          %1806 = vset.pattern.permute.xlu0 0
          %1807 = vperm.xlu0 %1806, %v1597
          %v1808 = vpop.permute.xlu0 %1807
          %1811 = vset.pattern.permute.xlu0 0
          %1812 = vperm.xlu0 %1811, %v1598
          %v1813 = vpop.permute.xlu0 %1812
          %1816 = vset.pattern.permute.xlu0 0
          %1817 = vperm.xlu0 %1816, %v1599
          %v1818 = vpop.permute.xlu0 %1817
          %1821 = vset.pattern.permute.xlu0 0
          %1822 = vperm.xlu0 %1821, %v1600
          %v1823 = vpop.permute.xlu0 %1822
          %1826 = vset.pattern.permute.xlu0 0
          %1827 = vperm.xlu0 %1826, %v1601
          %v1828 = vpop.permute.xlu0 %1827
          %1831 = vset.pattern.permute.xlu0 0
          %1832 = vperm.xlu0 %1831, %v1602
          %v1833 = vpop.permute.xlu0 %1832
          %1836 = vset.pattern.permute.xlu0 0
          %1837 = vperm.xlu0 %1836, %v1603
          %v1838 = vpop.permute.xlu0 %1837
          %1841 = vset.pattern.permute.xlu0 0
          %1842 = vperm.xlu0 %1841, %v1604
          %v1843 = vpop.permute.xlu0 %1842
          %1846 = vset.pattern.permute.xlu0 0
          %1847 = vperm.xlu0 %1846, %v1605
          %v1848 = vpop.permute.xlu0 %1847
          %1851 = vset.pattern.permute.xlu0 0
          %1852 = vperm.xlu0 %1851, %v1606
          %v1853 = vpop.permute.xlu0 %1852
          %1856 = vset.pattern.permute.xlu0 0
          %1857 = vperm.xlu0 %1856, %v1607
          %v1858 = vpop.permute.xlu0 %1857
          %1861 = vset.pattern.permute.xlu0 0
          %1862 = vperm.xlu0 %1861, %v1608
          %v1863 = vpop.permute.xlu0 %1862
          %v1865 = vsub.f32 %v1449, %v1708
          %v1866 = vsub.f32 %v1450, %v1713
          %v1867 = vsub.f32 %v1451, %v1718
          %v1868 = vsub.f32 %v1452, %v1723
          %v1869 = vsub.f32 %v1453, %v1728
          %v1870 = vsub.f32 %v1454, %v1733
          %v1871 = vsub.f32 %v1455, %v1738
          %v1872 = vsub.f32 %v1456, %v1743
          %v1873 = vsub.f32 %v1457, %v1748
          %v1874 = vsub.f32 %v1458, %v1753
          %v1875 = vsub.f32 %v1459, %v1758
          %v1876 = vsub.f32 %v1460, %v1763
          %v1877 = vsub.f32 %v1461, %v1768
          %v1878 = vsub.f32 %v1462, %v1773
          %v1879 = vsub.f32 %v1463, %v1778
          %v1880 = vsub.f32 %v1464, %v1783
          %v1881 = vsub.f32 %v1465, %v1788
          %v1882 = vsub.f32 %v1466, %v1793
          %v1883 = vsub.f32 %v1467, %v1798
          %v1884 = vsub.f32 %v1468, %v1803
          %v1885 = vsub.f32 %v1469, %v1808
          %v1886 = vsub.f32 %v1470, %v1813
          %v1887 = vsub.f32 %v1471, %v1818
          %v1888 = vsub.f32 %v1472, %v1823
          %v1889 = vsub.f32 %v1473, %v1828
          %v1890 = vsub.f32 %v1474, %v1833
          %v1891 = vsub.f32 %v1475, %v1838
          %v1892 = vsub.f32 %v1476, %v1843
          %v1893 = vsub.f32 %v1477, %v1848
          %v1894 = vsub.f32 %v1478, %v1853
          %v1895 = vsub.f32 %v1479, %v1858
          %v1896 = vsub.f32 %v1480, %v1863
          %v1897 = vmul.f32 %v1865, 1.442695
          %v1898 = vpow.pop %v1897
          %v1899 = vmul.f32 %v1866, 1.442695
          %v1900 = vpow.pop %v1899
          %v1901 = vmul.f32 %v1867, 1.442695
          %v1902 = vpow.pop %v1901
          %v1903 = vmul.f32 %v1868, 1.442695
          %v1904 = vpow.pop %v1903
          %v1905 = vmul.f32 %v1869, 1.442695
          %v1906 = vpow.pop %v1905
          %v1907 = vmul.f32 %v1870, 1.442695
          %v1908 = vpow.pop %v1907
          %v1909 = vmul.f32 %v1871, 1.442695
          %v1910 = vpow.pop %v1909
          %v1911 = vmul.f32 %v1872, 1.442695
          %v1912 = vpow.pop %v1911
          %v1913 = vmul.f32 %v1873, 1.442695
          %v1914 = vpow.pop %v1913
          %v1915 = vmul.f32 %v1874, 1.442695
          %v1916 = vpow.pop %v1915
          %v1917 = vmul.f32 %v1875, 1.442695
          %v1918 = vpow.pop %v1917
          %v1919 = vmul.f32 %v1876, 1.442695
          %v1920 = vpow.pop %v1919
          %v1921 = vmul.f32 %v1877, 1.442695
          %v1922 = vpow.pop %v1921
          %v1923 = vmul.f32 %v1878, 1.442695
          %v1924 = vpow.pop %v1923
          %v1925 = vmul.f32 %v1879, 1.442695
          %v1926 = vpow.pop %v1925
          %v1927 = vmul.f32 %v1880, 1.442695
          %v1928 = vpow.pop %v1927
          %v1929 = vmul.f32 %v1881, 1.442695
          %v1930 = vpow.pop %v1929
          %v1931 = vmul.f32 %v1882, 1.442695
          %v1932 = vpow.pop %v1931
          %v1933 = vmul.f32 %v1883, 1.442695
          %v1934 = vpow.pop %v1933
          %v1935 = vmul.f32 %v1884, 1.442695
          %v1936 = vpow.pop %v1935
          %v1937 = vmul.f32 %v1885, 1.442695
          %v1938 = vpow.pop %v1937
          %v1939 = vmul.f32 %v1886, 1.442695
          %v1940 = vpow.pop %v1939
          %v1941 = vmul.f32 %v1887, 1.442695
          %v1942 = vpow.pop %v1941
          %v1943 = vmul.f32 %v1888, 1.442695
          %v1944 = vpow.pop %v1943
          %v1945 = vmul.f32 %v1889, 1.442695
          %v1946 = vpow.pop %v1945
          %v1947 = vmul.f32 %v1890, 1.442695
          %v1948 = vpow.pop %v1947
          %v1949 = vmul.f32 %v1891, 1.442695
          %v1950 = vpow.pop %v1949
          %v1951 = vmul.f32 %v1892, 1.442695
          %v1952 = vpow.pop %v1951
          %v1953 = vmul.f32 %v1893, 1.442695
          %v1954 = vpow.pop %v1953
          %v1955 = vmul.f32 %v1894, 1.442695
          %v1956 = vpow.pop %v1955
          %v1957 = vmul.f32 %v1895, 1.442695
          %v1958 = vpow.pop %v1957
          %v1959 = vmul.f32 %v1896, 1.442695
          %v1960 = vpow.pop %v1959
          %v1961 = vld [vmem:[#allocation3] sm:$0xff]
          %v1962 = vld [vmem:[#allocation3 + $0x8] sm:$0xff]
          %v1963 = vld [vmem:[#allocation3 + $0x10] sm:$0xff]
          %v1964 = vld [vmem:[#allocation3 + $0x18] sm:$0xff]
          %v1965 = vld [vmem:[#allocation3 + $0x20] sm:$0xff]
          %v1966 = vld [vmem:[#allocation3 + $0x28] sm:$0xff]
          %v1967 = vld [vmem:[#allocation3 + $0x30] sm:$0xff]
          %v1968 = vld [vmem:[#allocation3 + $0x38] sm:$0xff]
          %v1969 = vld [vmem:[#allocation3 + $0x40] sm:$0xff]
          %v1970 = vld [vmem:[#allocation3 + $0x48] sm:$0xff]
          %v1971 = vld [vmem:[#allocation3 + $0x50] sm:$0xff]
          %v1972 = vld [vmem:[#allocation3 + $0x58] sm:$0xff]
          %v1973 = vld [vmem:[#allocation3 + $0x60] sm:$0xff]
          %v1974 = vld [vmem:[#allocation3 + $0x68] sm:$0xff]
          %v1975 = vld [vmem:[#allocation3 + $0x70] sm:$0xff]
          %v1976 = vld [vmem:[#allocation3 + $0x78] sm:$0xff]
          %v1977 = vld [vmem:[#allocation3 + $0x80] sm:$0xff]
          %v1978 = vld [vmem:[#allocation3 + $0x88] sm:$0xff]
          %v1979 = vld [vmem:[#allocation3 + $0x90] sm:$0xff]
          %v1980 = vld [vmem:[#allocation3 + $0x98] sm:$0xff]
          %v1981 = vld [vmem:[#allocation3 + $0xa0] sm:$0xff]
          %v1982 = vld [vmem:[#allocation3 + $0xa8] sm:$0xff]
          %v1983 = vld [vmem:[#allocation3 + $0xb0] sm:$0xff]
          %v1984 = vld [vmem:[#allocation3 + $0xb8] sm:$0xff]
          %v1985 = vld [vmem:[#allocation3 + $0xc0] sm:$0xff]
          %v1986 = vld [vmem:[#allocation3 + $0xc8] sm:$0xff]
          %v1987 = vld [vmem:[#allocation3 + $0xd0] sm:$0xff]
          %v1988 = vld [vmem:[#allocation3 + $0xd8] sm:$0xff]
          %v1989 = vld [vmem:[#allocation3 + $0xe0] sm:$0xff]
          %v1990 = vld [vmem:[#allocation3 + $0xe8] sm:$0xff]
          %v1991 = vld [vmem:[#allocation3 + $0xf0] sm:$0xff]
          %v1992 = vld [vmem:[#allocation3 + $0xf8] sm:$0xff]
          %v1993 = vmul.f32 %v1642, %v1961
          %v1994 = vmul.f32 %v1644, %v1962
          %v1995 = vmul.f32 %v1646, %v1963
          %v1996 = vmul.f32 %v1648, %v1964
          %v1997 = vmul.f32 %v1650, %v1965
          %v1998 = vmul.f32 %v1652, %v1966
          %v1999 = vmul.f32 %v1654, %v1967
          %v2000 = vmul.f32 %v1656, %v1968
          %v2001 = vmul.f32 %v1658, %v1969
          %v2002 = vmul.f32 %v1660, %v1970
          %v2003 = vmul.f32 %v1662, %v1971
          %v2004 = vmul.f32 %v1664, %v1972
          %v2005 = vmul.f32 %v1666, %v1973
          %v2006 = vmul.f32 %v1668, %v1974
          %v2007 = vmul.f32 %v1670, %v1975
          %v2008 = vmul.f32 %v1672, %v1976
          %v2009 = vmul.f32 %v1674, %v1977
          %v2010 = vmul.f32 %v1676, %v1978
          %v2011 = vmul.f32 %v1678, %v1979
          %v2012 = vmul.f32 %v1680, %v1980
          %v2013 = vmul.f32 %v1682, %v1981
          %v2014 = vmul.f32 %v1684, %v1982
          %v2015 = vmul.f32 %v1686, %v1983
          %v2016 = vmul.f32 %v1688, %v1984
          %v2017 = vmul.f32 %v1690, %v1985
          %v2018 = vmul.f32 %v1692, %v1986
          %v2019 = vmul.f32 %v1694, %v1987
          %v2020 = vmul.f32 %v1696, %v1988
          %v2021 = vmul.f32 %v1698, %v1989
          %v2022 = vmul.f32 %v1700, %v1990
          %v2023 = vmul.f32 %v1702, %v1991
          %v2024 = vmul.f32 %v1704, %v1992
          %2025 = vadd.xlane.f32.xlu0 %v1898
          %v2026 = vpop.xlane.xlu0 %2025
          %2027 = vadd.xlane.f32.xlu0 %v1900
          %v2028 = vpop.xlane.xlu0 %2027
          %2029 = vadd.xlane.f32.xlu0 %v1902
          %v2030 = vpop.xlane.xlu0 %2029
          %2031 = vadd.xlane.f32.xlu0 %v1904
          %v2032 = vpop.xlane.xlu0 %2031
          %2033 = vadd.xlane.f32.xlu0 %v1906
          %v2034 = vpop.xlane.xlu0 %2033
          %2035 = vadd.xlane.f32.xlu0 %v1908
          %v2036 = vpop.xlane.xlu0 %2035
          %2037 = vadd.xlane.f32.xlu0 %v1910
          %v2038 = vpop.xlane.xlu0 %2037
          %2039 = vadd.xlane.f32.xlu0 %v1912
          %v2040 = vpop.xlane.xlu0 %2039
          %2041 = vadd.xlane.f32.xlu0 %v1914
          %v2042 = vpop.xlane.xlu0 %2041
          %2043 = vadd.xlane.f32.xlu0 %v1916
          %v2044 = vpop.xlane.xlu0 %2043
          %2045 = vadd.xlane.f32.xlu0 %v1918
          %v2046 = vpop.xlane.xlu0 %2045
          %2047 = vadd.xlane.f32.xlu0 %v1920
          %v2048 = vpop.xlane.xlu0 %2047
          %2049 = vadd.xlane.f32.xlu0 %v1922
          %v2050 = vpop.xlane.xlu0 %2049
          %2051 = vadd.xlane.f32.xlu0 %v1924
          %v2052 = vpop.xlane.xlu0 %2051
          %2053 = vadd.xlane.f32.xlu0 %v1926
          %v2054 = vpop.xlane.xlu0 %2053
          %2055 = vadd.xlane.f32.xlu0 %v1928
          %v2056 = vpop.xlane.xlu0 %2055
          %2057 = vadd.xlane.f32.xlu0 %v1930
          %v2058 = vpop.xlane.xlu0 %2057
          %2059 = vadd.xlane.f32.xlu0 %v1932
          %v2060 = vpop.xlane.xlu0 %2059
          %2061 = vadd.xlane.f32.xlu0 %v1934
          %v2062 = vpop.xlane.xlu0 %2061
          %2063 = vadd.xlane.f32.xlu0 %v1936
          %v2064 = vpop.xlane.xlu0 %2063
          %2065 = vadd.xlane.f32.xlu0 %v1938
          %v2066 = vpop.xlane.xlu0 %2065
          %2067 = vadd.xlane.f32.xlu0 %v1940
          %v2068 = vpop.xlane.xlu0 %2067
          %2069 = vadd.xlane.f32.xlu0 %v1942
          %v2070 = vpop.xlane.xlu0 %2069
          %2071 = vadd.xlane.f32.xlu0 %v1944
          %v2072 = vpop.xlane.xlu0 %2071
          %2073 = vadd.xlane.f32.xlu0 %v1946
          %v2074 = vpop.xlane.xlu0 %2073
          %2075 = vadd.xlane.f32.xlu0 %v1948
          %v2076 = vpop.xlane.xlu0 %2075
          %2077 = vadd.xlane.f32.xlu0 %v1950
          %v2078 = vpop.xlane.xlu0 %2077
          %2079 = vadd.xlane.f32.xlu0 %v1952
          %v2080 = vpop.xlane.xlu0 %2079
          %2081 = vadd.xlane.f32.xlu0 %v1954
          %v2082 = vpop.xlane.xlu0 %2081
          %2083 = vadd.xlane.f32.xlu0 %v1956
          %v2084 = vpop.xlane.xlu0 %2083
          %2085 = vadd.xlane.f32.xlu0 %v1958
          %v2086 = vpop.xlane.xlu0 %2085
          %2087 = vadd.xlane.f32.xlu0 %v1960
          %v2088 = vpop.xlane.xlu0 %2087
          %v2089 = vadd.f32 %v1993, %v2026
          %v2090 = vadd.f32 %v1994, %v2028
          %v2091 = vadd.f32 %v1995, %v2030
          %v2092 = vadd.f32 %v1996, %v2032
          %v2093 = vadd.f32 %v1997, %v2034
          %v2094 = vadd.f32 %v1998, %v2036
          %v2095 = vadd.f32 %v1999, %v2038
          %v2096 = vadd.f32 %v2000, %v2040
          %v2097 = vadd.f32 %v2001, %v2042
          %v2098 = vadd.f32 %v2002, %v2044
          %v2099 = vadd.f32 %v2003, %v2046
          %v2100 = vadd.f32 %v2004, %v2048
          %v2101 = vadd.f32 %v2005, %v2050
          %v2102 = vadd.f32 %v2006, %v2052
          %v2103 = vadd.f32 %v2007, %v2054
          %v2104 = vadd.f32 %v2008, %v2056
          %v2105 = vadd.f32 %v2009, %v2058
          %v2106 = vadd.f32 %v2010, %v2060
          %v2107 = vadd.f32 %v2011, %v2062
          %v2108 = vadd.f32 %v2012, %v2064
          %v2109 = vadd.f32 %v2013, %v2066
          %v2110 = vadd.f32 %v2014, %v2068
          %v2111 = vadd.f32 %v2015, %v2070
          %v2112 = vadd.f32 %v2016, %v2072
          %v2113 = vadd.f32 %v2017, %v2074
          %v2114 = vadd.f32 %v2018, %v2076
          %v2115 = vadd.f32 %v2019, %v2078
          %v2116 = vadd.f32 %v2020, %v2080
          %v2117 = vadd.f32 %v2021, %v2082
          %v2118 = vadd.f32 %v2022, %v2084
          %v2119 = vadd.f32 %v2023, %v2086
          %v2120 = vadd.f32 %v2024, %v2088
          %vm2121 = vcmask 7168
          %2122 = vst.msk [vmem:[#allocation3] sm:$0xff] %vm2121, %v2089
          %2123 = vst.msk [vmem:[#allocation3 + $0x8] sm:$0xff] %vm2121, %v2090
          %2124 = vst.msk [vmem:[#allocation3 + $0x10] sm:$0xff] %vm2121, %v2091
          %2125 = vst.msk [vmem:[#allocation3 + $0x18] sm:$0xff] %vm2121, %v2092
          %2126 = vst.msk [vmem:[#allocation3 + $0x20] sm:$0xff] %vm2121, %v2093
          %2127 = vst.msk [vmem:[#allocation3 + $0x28] sm:$0xff] %vm2121, %v2094
          %2128 = vst.msk [vmem:[#allocation3 + $0x30] sm:$0xff] %vm2121, %v2095
          %2129 = vst.msk [vmem:[#allocation3 + $0x38] sm:$0xff] %vm2121, %v2096
          %2130 = vst.msk [vmem:[#allocation3 + $0x40] sm:$0xff] %vm2121, %v2097
          %2131 = vst.msk [vmem:[#allocation3 + $0x48] sm:$0xff] %vm2121, %v2098
          %2132 = vst.msk [vmem:[#allocation3 + $0x50] sm:$0xff] %vm2121, %v2099
          %2133 = vst.msk [vmem:[#allocation3 + $0x58] sm:$0xff] %vm2121, %v2100
          %2134 = vst.msk [vmem:[#allocation3 + $0x60] sm:$0xff] %vm2121, %v2101
          %2135 = vst.msk [vmem:[#allocation3 + $0x68] sm:$0xff] %vm2121, %v2102
          %2136 = vst.msk [vmem:[#allocation3 + $0x70] sm:$0xff] %vm2121, %v2103
          %2137 = vst.msk [vmem:[#allocation3 + $0x78] sm:$0xff] %vm2121, %v2104
          %2138 = vst.msk [vmem:[#allocation3 + $0x80] sm:$0xff] %vm2121, %v2105
          %2139 = vst.msk [vmem:[#allocation3 + $0x88] sm:$0xff] %vm2121, %v2106
          %2140 = vst.msk [vmem:[#allocation3 + $0x90] sm:$0xff] %vm2121, %v2107
          %2141 = vst.msk [vmem:[#allocation3 + $0x98] sm:$0xff] %vm2121, %v2108
          %2142 = vst.msk [vmem:[#allocation3 + $0xa0] sm:$0xff] %vm2121, %v2109
          %2143 = vst.msk [vmem:[#allocation3 + $0xa8] sm:$0xff] %vm2121, %v2110
          %2144 = vst.msk [vmem:[#allocation3 + $0xb0] sm:$0xff] %vm2121, %v2111
          %2145 = vst.msk [vmem:[#allocation3 + $0xb8] sm:$0xff] %vm2121, %v2112
          %2146 = vst.msk [vmem:[#allocation3 + $0xc0] sm:$0xff] %vm2121, %v2113
          %2147 = vst.msk [vmem:[#allocation3 + $0xc8] sm:$0xff] %vm2121, %v2114
          %2148 = vst.msk [vmem:[#allocation3 + $0xd0] sm:$0xff] %vm2121, %v2115
          %2149 = vst.msk [vmem:[#allocation3 + $0xd8] sm:$0xff] %vm2121, %v2116
          %2150 = vst.msk [vmem:[#allocation3 + $0xe0] sm:$0xff] %vm2121, %v2117
          %2151 = vst.msk [vmem:[#allocation3 + $0xe8] sm:$0xff] %vm2121, %v2118
          %2152 = vst.msk [vmem:[#allocation3 + $0xf0] sm:$0xff] %vm2121, %v2119
          %2153 = vst.msk [vmem:[#allocation3 + $0xf8] sm:$0xff] %vm2121, %v2120
          %v2154 = vld [vmem:[#allocation4] sm:$0xff]
          %v2155 = vld [vmem:[#allocation4 + $0x8] sm:$0xff]
          %v2156 = vld [vmem:[#allocation4 + $0x10] sm:$0xff]
          %v2157 = vld [vmem:[#allocation4 + $0x18] sm:$0xff]
          %v2158 = vld [vmem:[#allocation4 + $0x20] sm:$0xff]
          %v2159 = vld [vmem:[#allocation4 + $0x28] sm:$0xff]
          %v2160 = vld [vmem:[#allocation4 + $0x30] sm:$0xff]
          %v2161 = vld [vmem:[#allocation4 + $0x38] sm:$0xff]
          %v2162 = vld [vmem:[#allocation4 + $0x40] sm:$0xff]
          %v2163 = vld [vmem:[#allocation4 + $0x48] sm:$0xff]
          %v2164 = vld [vmem:[#allocation4 + $0x50] sm:$0xff]
          %v2165 = vld [vmem:[#allocation4 + $0x58] sm:$0xff]
          %v2166 = vld [vmem:[#allocation4 + $0x60] sm:$0xff]
          %v2167 = vld [vmem:[#allocation4 + $0x68] sm:$0xff]
          %v2168 = vld [vmem:[#allocation4 + $0x70] sm:$0xff]
          %v2169 = vld [vmem:[#allocation4 + $0x78] sm:$0xff]
          %v2170 = vld [vmem:[#allocation4 + $0x80] sm:$0xff]
          %v2171 = vld [vmem:[#allocation4 + $0x88] sm:$0xff]
          %v2172 = vld [vmem:[#allocation4 + $0x90] sm:$0xff]
          %v2173 = vld [vmem:[#allocation4 + $0x98] sm:$0xff]
          %v2174 = vld [vmem:[#allocation4 + $0xa0] sm:$0xff]
          %v2175 = vld [vmem:[#allocation4 + $0xa8] sm:$0xff]
          %v2176 = vld [vmem:[#allocation4 + $0xb0] sm:$0xff]
          %v2177 = vld [vmem:[#allocation4 + $0xb8] sm:$0xff]
          %v2178 = vld [vmem:[#allocation4 + $0xc0] sm:$0xff]
          %v2179 = vld [vmem:[#allocation4 + $0xc8] sm:$0xff]
          %v2180 = vld [vmem:[#allocation4 + $0xd0] sm:$0xff]
          %v2181 = vld [vmem:[#allocation4 + $0xd8] sm:$0xff]
          %v2182 = vld [vmem:[#allocation4 + $0xe0] sm:$0xff]
          %v2183 = vld [vmem:[#allocation4 + $0xe8] sm:$0xff]
          %v2184 = vld [vmem:[#allocation4 + $0xf0] sm:$0xff]
          %v2185 = vld [vmem:[#allocation4 + $0xf8] sm:$0xff]
          %2187 = vset.pattern.permute.xlu0 0
          %2188 = vperm.xlu0 %2187, %v1642
          %v2189 = vpop.permute.xlu0 %2188
          %2192 = vset.pattern.permute.xlu0 0
          %2193 = vperm.xlu0 %2192, %v1644
          %v2194 = vpop.permute.xlu0 %2193
          %2197 = vset.pattern.permute.xlu0 0
          %2198 = vperm.xlu0 %2197, %v1646
          %v2199 = vpop.permute.xlu0 %2198
          %2202 = vset.pattern.permute.xlu0 0
          %2203 = vperm.xlu0 %2202, %v1648
          %v2204 = vpop.permute.xlu0 %2203
          %2207 = vset.pattern.permute.xlu0 0
          %2208 = vperm.xlu0 %2207, %v1650
          %v2209 = vpop.permute.xlu0 %2208
          %2212 = vset.pattern.permute.xlu0 0
          %2213 = vperm.xlu0 %2212, %v1652
          %v2214 = vpop.permute.xlu0 %2213
          %2217 = vset.pattern.permute.xlu0 0
          %2218 = vperm.xlu0 %2217, %v1654
          %v2219 = vpop.permute.xlu0 %2218
          %2222 = vset.pattern.permute.xlu0 0
          %2223 = vperm.xlu0 %2222, %v1656
          %v2224 = vpop.permute.xlu0 %2223
          %2227 = vset.pattern.permute.xlu0 0
          %2228 = vperm.xlu0 %2227, %v1658
          %v2229 = vpop.permute.xlu0 %2228
          %2232 = vset.pattern.permute.xlu0 0
          %2233 = vperm.xlu0 %2232, %v1660
          %v2234 = vpop.permute.xlu0 %2233
          %2237 = vset.pattern.permute.xlu0 0
          %2238 = vperm.xlu0 %2237, %v1662
          %v2239 = vpop.permute.xlu0 %2238
          %2242 = vset.pattern.permute.xlu0 0
          %2243 = vperm.xlu0 %2242, %v1664
          %v2244 = vpop.permute.xlu0 %2243
          %2247 = vset.pattern.permute.xlu0 0
          %2248 = vperm.xlu0 %2247, %v1666
          %v2249 = vpop.permute.xlu0 %2248
          %2252 = vset.pattern.permute.xlu0 0
          %2253 = vperm.xlu0 %2252, %v1668
          %v2254 = vpop.permute.xlu0 %2253
          %2257 = vset.pattern.permute.xlu0 0
          %2258 = vperm.xlu0 %2257, %v1670
          %v2259 = vpop.permute.xlu0 %2258
          %2262 = vset.pattern.permute.xlu0 0
          %2263 = vperm.xlu0 %2262, %v1672
          %v2264 = vpop.permute.xlu0 %2263
          %2267 = vset.pattern.permute.xlu0 0
          %2268 = vperm.xlu0 %2267, %v1674
          %v2269 = vpop.permute.xlu0 %2268
          %2272 = vset.pattern.permute.xlu0 0
          %2273 = vperm.xlu0 %2272, %v1676
          %v2274 = vpop.permute.xlu0 %2273
          %2277 = vset.pattern.permute.xlu0 0
          %2278 = vperm.xlu0 %2277, %v1678
          %v2279 = vpop.permute.xlu0 %2278
          %2282 = vset.pattern.permute.xlu0 0
          %2283 = vperm.xlu0 %2282, %v1680
          %v2284 = vpop.permute.xlu0 %2283
          %2287 = vset.pattern.permute.xlu0 0
          %2288 = vperm.xlu0 %2287, %v1682
          %v2289 = vpop.permute.xlu0 %2288
          %2292 = vset.pattern.permute.xlu0 0
          %2293 = vperm.xlu0 %2292, %v1684
          %v2294 = vpop.permute.xlu0 %2293
          %2297 = vset.pattern.permute.xlu0 0
          %2298 = vperm.xlu0 %2297, %v1686
          %v2299 = vpop.permute.xlu0 %2298
          %2302 = vset.pattern.permute.xlu0 0
          %2303 = vperm.xlu0 %2302, %v1688
          %v2304 = vpop.permute.xlu0 %2303
          %2307 = vset.pattern.permute.xlu0 0
          %2308 = vperm.xlu0 %2307, %v1690
          %v2309 = vpop.permute.xlu0 %2308
          %2312 = vset.pattern.permute.xlu0 0
          %2313 = vperm.xlu0 %2312, %v1692
          %v2314 = vpop.permute.xlu0 %2313
          %2317 = vset.pattern.permute.xlu0 0
          %2318 = vperm.xlu0 %2317, %v1694
          %v2319 = vpop.permute.xlu0 %2318
          %2322 = vset.pattern.permute.xlu0 0
          %2323 = vperm.xlu0 %2322, %v1696
          %v2324 = vpop.permute.xlu0 %2323
          %2327 = vset.pattern.permute.xlu0 0
          %2328 = vperm.xlu0 %2327, %v1698
          %v2329 = vpop.permute.xlu0 %2328
          %2332 = vset.pattern.permute.xlu0 0
          %2333 = vperm.xlu0 %2332, %v1700
          %v2334 = vpop.permute.xlu0 %2333
          %2337 = vset.pattern.permute.xlu0 0
          %2338 = vperm.xlu0 %2337, %v1702
          %v2339 = vpop.permute.xlu0 %2338
          %2342 = vset.pattern.permute.xlu0 0
          %2343 = vperm.xlu0 %2342, %v1704
          %v2344 = vpop.permute.xlu0 %2343
          %v2346 = vmul.f32 %v2189, %v2154
          %v2347 = vmul.f32 %v2194, %v2155
          %v2348 = vmul.f32 %v2199, %v2156
          %v2349 = vmul.f32 %v2204, %v2157
          %v2350 = vmul.f32 %v2209, %v2158
          %v2351 = vmul.f32 %v2214, %v2159
          %v2352 = vmul.f32 %v2219, %v2160
          %v2353 = vmul.f32 %v2224, %v2161
          %v2354 = vmul.f32 %v2229, %v2162
          %v2355 = vmul.f32 %v2234, %v2163
          %v2356 = vmul.f32 %v2239, %v2164
          %v2357 = vmul.f32 %v2244, %v2165
          %v2358 = vmul.f32 %v2249, %v2166
          %v2359 = vmul.f32 %v2254, %v2167
          %v2360 = vmul.f32 %v2259, %v2168
          %v2361 = vmul.f32 %v2264, %v2169
          %v2362 = vmul.f32 %v2269, %v2170
          %v2363 = vmul.f32 %v2274, %v2171
          %v2364 = vmul.f32 %v2279, %v2172
          %v2365 = vmul.f32 %v2284, %v2173
          %v2366 = vmul.f32 %v2289, %v2174
          %v2367 = vmul.f32 %v2294, %v2175
          %v2368 = vmul.f32 %v2299, %v2176
          %v2369 = vmul.f32 %v2304, %v2177
          %v2370 = vmul.f32 %v2309, %v2178
          %v2371 = vmul.f32 %v2314, %v2179
          %v2372 = vmul.f32 %v2319, %v2180
          %v2373 = vmul.f32 %v2324, %v2181
          %v2374 = vmul.f32 %v2329, %v2182
          %v2375 = vmul.f32 %v2334, %v2183
          %v2376 = vmul.f32 %v2339, %v2184
          %v2377 = vmul.f32 %v2344, %v2185
          %v2378 = vpack.c.bf16 %v1900, %v1898
          %v2379 = vpack.c.bf16 %v1904, %v1902
          %v2380 = vpack.c.bf16 %v1908, %v1906
          %v2381 = vpack.c.bf16 %v1912, %v1910
          %v2382 = vpack.c.bf16 %v1916, %v1914
          %v2383 = vpack.c.bf16 %v1920, %v1918
          %v2384 = vpack.c.bf16 %v1924, %v1922
          %v2385 = vpack.c.bf16 %v1928, %v1926
          %v2386 = vpack.c.bf16 %v1932, %v1930
          %v2387 = vpack.c.bf16 %v1936, %v1934
          %v2388 = vpack.c.bf16 %v1940, %v1938
          %v2389 = vpack.c.bf16 %v1944, %v1942
          %v2390 = vpack.c.bf16 %v1948, %v1946
          %v2391 = vpack.c.bf16 %v1952, %v1950
          %v2392 = vpack.c.bf16 %v1956, %v1954
          %v2393 = vpack.c.bf16 %v1960, %v1958
          %v2410 = vunpack.c.l.b16 %v913
          %v2411 = vunpack.c.l.b16 %v914
          %v2412 = vunpack.c.l.b16 %v915
          %v2413 = vunpack.c.l.b16 %v916
          %v2414 = vunpack.c.l.b16 %v917
          %v2415 = vunpack.c.l.b16 %v918
          %v2416 = vunpack.c.l.b16 %v919
          %v2417 = vunpack.c.l.b16 %v920
          %v2418 = vunpack.c.l.b16 %v921
          %v2419 = vunpack.c.l.b16 %v922
          %v2420 = vunpack.c.l.b16 %v923
          %v2421 = vunpack.c.l.b16 %v924
          %v2422 = vunpack.c.l.b16 %v925
          %v2423 = vunpack.c.l.b16 %v926
          %v2424 = vunpack.c.l.b16 %v927
          %v2425 = vunpack.c.l.b16 %v928
          %v2426 = vpack.c.b16 %v2411, %v2410
          %v2427 = vpack.c.b16 %v2413, %v2412
          %v2428 = vpack.c.b16 %v2415, %v2414
          %v2429 = vpack.c.b16 %v2417, %v2416
          %v2430 = vpack.c.b16 %v2419, %v2418
          %v2431 = vpack.c.b16 %v2421, %v2420
          %v2432 = vpack.c.b16 %v2423, %v2422
          %v2433 = vpack.c.b16 %v2425, %v2424
          %2442 = vmatprep.subr.bf16.mxu0 0
          %2443 = vmatpush1.bf16.msra.mxu0 %v2426
          %2444 = vmatprep.subr.bf16.mxu0 0
          %2445 = vmatpush1.bf16.msra.mxu0 %v2427
          %2446 = vmatprep.subr.bf16.mxu0 0
          %2447 = vmatpush1.bf16.msra.mxu0 %v2428
          %2448 = vmatprep.subr.bf16.mxu0 0
          %2449 = vmatpush1.bf16.msra.mxu0 %v2429
          %2450 = vmatprep.subr.bf16.mxu0 0
          %2451 = vmatpush1.bf16.msra.mxu0 %v2430
          %2452 = vmatprep.subr.bf16.mxu0 0
          %2453 = vmatpush1.bf16.msra.mxu0 %v2431
          %2454 = vmatprep.subr.bf16.mxu0 0
          %2455 = vmatpush1.bf16.msra.mxu0 %v2432
          %2456 = vmatprep.subr.bf16.mxu0 0
          %2457 = vmatpush1.bf16.msra.mxu0 %v2433
          %2458 = vmatprep.subr.bf16.mxu0 0
          %2459 = vmatpush1.bf16.msra.mxu0 0
          %2460 = vmatprep.subr.bf16.mxu0 0
          %2461 = vmatpush1.bf16.msra.mxu0 0
          %2462 = vmatprep.subr.bf16.mxu0 0
          %2463 = vmatpush1.bf16.msra.mxu0 0
          %2464 = vmatprep.subr.bf16.mxu0 0
          %2465 = vmatpush1.bf16.msra.mxu0 0
          %2466 = vmatprep.subr.bf16.mxu0 0
          %2467 = vmatpush1.bf16.msra.mxu0 0
          %2468 = vmatprep.subr.bf16.mxu0 0
          %2469 = vmatpush1.bf16.msra.mxu0 0
          %2470 = vmatprep.subr.bf16.mxu0 0
          %2471 = vmatpush1.bf16.msra.mxu0 0
          %2472 = vmatprep.subr.bf16.mxu0 0
          %2473 = vmatpush1.bf16.msra.mxu0 0
          %2474 = vmatprep.mubr.bf16.mxu0 0
          %2475 = vmatmul.mubr.bf16.gmra.mrb[0].mxu0 %v2378
          %v2476 = vpop.f32.mrb[0].mxu0
          %v2477 = vadd.f32 0.0, %v2476
          %v2478 = vpop.f32.mrb[0].mxu0
          %v2479 = vpop.f32.mrb[0].mxu0
          %v2480 = vadd.f32 0.0, %v2479
          %v2481 = vpop.f32.mrb[0].mxu0
          %2482 = vmatprep.mubr.bf16.mxu0 0
          %2483 = vmatmul.mubr.bf16.gmra.mrb[0].mxu0 %v2379
          %v2484 = vpop.f32.mrb[0].mxu0
          %v2485 = vadd.f32 0.0, %v2484
          %v2486 = vpop.f32.mrb[0].mxu0
          %v2487 = vpop.f32.mrb[0].mxu0
          %v2488 = vadd.f32 0.0, %v2487
          %v2489 = vpop.f32.mrb[0].mxu0
          %2490 = vmatprep.mubr.bf16.mxu0 0
          %2491 = vmatmul.mubr.bf16.gmra.mrb[0].mxu0 %v2380
          %v2492 = vpop.f32.mrb[0].mxu0
          %v2493 = vadd.f32 0.0, %v2492
          %v2494 = vpop.f32.mrb[0].mxu0
          %v2495 = vpop.f32.mrb[0].mxu0
          %v2496 = vadd.f32 0.0, %v2495
          %v2497 = vpop.f32.mrb[0].mxu0
          %2498 = vmatprep.mubr.bf16.mxu0 0
          %2499 = vmatmul.mubr.bf16.gmra.mrb[0].mxu0 %v2381
          %v2500 = vpop.f32.mrb[0].mxu0
          %v2501 = vadd.f32 0.0, %v2500
          %v2502 = vpop.f32.mrb[0].mxu0
          %v2503 = vpop.f32.mrb[0].mxu0
          %v2504 = vadd.f32 0.0, %v2503
          %v2505 = vpop.f32.mrb[0].mxu0
          %2506 = vmatprep.mubr.bf16.mxu0 0
          %2507 = vmatmul.mubr.bf16.gmra.mrb[0].mxu0 %v2382
          %v2508 = vpop.f32.mrb[0].mxu0
          %v2509 = vadd.f32 0.0, %v2508
          %v2510 = vpop.f32.mrb[0].mxu0
          %v2511 = vpop.f32.mrb[0].mxu0
          %v2512 = vadd.f32 0.0, %v2511
          %v2513 = vpop.f32.mrb[0].mxu0
          %2514 = vmatprep.mubr.bf16.mxu0 0
          %2515 = vmatmul.mubr.bf16.gmra.mrb[0].mxu0 %v2383
          %v2516 = vpop.f32.mrb[0].mxu0
          %v2517 = vadd.f32 0.0, %v2516
          %v2518 = vpop.f32.mrb[0].mxu0
          %v2519 = vpop.f32.mrb[0].mxu0
          %v2520 = vadd.f32 0.0, %v2519
          %v2521 = vpop.f32.mrb[0].mxu0
          %2522 = vmatprep.mubr.bf16.mxu0 0
          %2523 = vmatmul.mubr.bf16.gmra.mrb[0].mxu0 %v2384
          %v2524 = vpop.f32.mrb[0].mxu0
          %v2525 = vadd.f32 0.0, %v2524
          %v2526 = vpop.f32.mrb[0].mxu0
          %v2527 = vpop.f32.mrb[0].mxu0
          %v2528 = vadd.f32 0.0, %v2527
          %v2529 = vpop.f32.mrb[0].mxu0
          %2530 = vmatprep.mubr.bf16.mxu0 0
          %2531 = vmatmul.mubr.bf16.gmra.mrb[0].mxu0 %v2385
          %v2532 = vpop.f32.mrb[0].mxu0
          %v2533 = vadd.f32 0.0, %v2532
          %v2534 = vpop.f32.mrb[0].mxu0
          %v2535 = vpop.f32.mrb[0].mxu0
          %v2536 = vadd.f32 0.0, %v2535
          %v2537 = vpop.f32.mrb[0].mxu0
          %2538 = vdwg.mxu0
          %v2555 = vunpack.c.l.b16 %v929
          %v2556 = vunpack.c.l.b16 %v930
          %v2557 = vunpack.c.l.b16 %v931
          %v2558 = vunpack.c.l.b16 %v932
          %v2559 = vunpack.c.l.b16 %v933
          %v2560 = vunpack.c.l.b16 %v934
          %v2561 = vunpack.c.l.b16 %v935
          %v2562 = vunpack.c.l.b16 %v936
          %v2563 = vunpack.c.l.b16 %v937
          %v2564 = vunpack.c.l.b16 %v938
          %v2565 = vunpack.c.l.b16 %v939
          %v2566 = vunpack.c.l.b16 %v940
          %v2567 = vunpack.c.l.b16 %v941
          %v2568 = vunpack.c.l.b16 %v942
          %v2569 = vunpack.c.l.b16 %v943
          %v2570 = vunpack.c.l.b16 %v944
          %v2571 = vpack.c.b16 %v2556, %v2555
          %v2572 = vpack.c.b16 %v2558, %v2557
          %v2573 = vpack.c.b16 %v2560, %v2559
          %v2574 = vpack.c.b16 %v2562, %v2561
          %v2575 = vpack.c.b16 %v2564, %v2563
          %v2576 = vpack.c.b16 %v2566, %v2565
          %v2577 = vpack.c.b16 %v2568, %v2567
          %v2578 = vpack.c.b16 %v2570, %v2569
          %2587 = vmatprep.subr.bf16.mxu0 0
          %2588 = vmatpush1.bf16.msra.mxu0 %v2571
          %2589 = vmatprep.subr.bf16.mxu0 0
          %2590 = vmatpush1.bf16.msra.mxu0 %v2572
          %2591 = vmatprep.subr.bf16.mxu0 0
          %2592 = vmatpush1.bf16.msra.mxu0 %v2573
          %2593 = vmatprep.subr.bf16.mxu0 0
          %2594 = vmatpush1.bf16.msra.mxu0 %v2574
          %2595 = vmatprep.subr.bf16.mxu0 0
          %2596 = vmatpush1.bf16.msra.mxu0 %v2575
          %2597 = vmatprep.subr.bf16.mxu0 0
          %2598 = vmatpush1.bf16.msra.mxu0 %v2576
          %2599 = vmatprep.subr.bf16.mxu0 0
          %2600 = vmatpush1.bf16.msra.mxu0 %v2577
          %2601 = vmatprep.subr.bf16.mxu0 0
          %2602 = vmatpush1.bf16.msra.mxu0 %v2578
          %2603 = vmatprep.subr.bf16.mxu0 0
          %2604 = vmatpush1.bf16.msra.mxu0 0
          %2605 = vmatprep.subr.bf16.mxu0 0
          %2606 = vmatpush1.bf16.msra.mxu0 0
          %2607 = vmatprep.subr.bf16.mxu0 0
          %2608 = vmatpush1.bf16.msra.mxu0 0
          %2609 = vmatprep.subr.bf16.mxu0 0
          %2610 = vmatpush1.bf16.msra.mxu0 0
          %2611 = vmatprep.subr.bf16.mxu0 0
          %2612 = vmatpush1.bf16.msra.mxu0 0
          %2613 = vmatprep.subr.bf16.mxu0 0
          %2614 = vmatpush1.bf16.msra.mxu0 0
          %2615 = vmatprep.subr.bf16.mxu0 0
          %2616 = vmatpush1.bf16.msra.mxu0 0
          %2617 = vmatprep.subr.bf16.mxu0 0
          %2618 = vmatpush1.bf16.msra.mxu0 0
          %2619 = vmatprep.mubr.bf16.mxu0 0
          %2620 = vmatmul.mubr.bf16.gmra.mrb[0].mxu0 %v2386
          %v2621 = vpop.f32.mrb[0].mxu0
          %v2622 = vadd.f32 0.0, %v2621
          %v2623 = vpop.f32.mrb[0].mxu0
          %v2624 = vpop.f32.mrb[0].mxu0
          %v2625 = vadd.f32 0.0, %v2624
          %v2626 = vpop.f32.mrb[0].mxu0
          %2627 = vmatprep.mubr.bf16.mxu0 0
          %2628 = vmatmul.mubr.bf16.gmra.mrb[0].mxu0 %v2387
          %v2629 = vpop.f32.mrb[0].mxu0
          %v2630 = vadd.f32 0.0, %v2629
          %v2631 = vpop.f32.mrb[0].mxu0
          %v2632 = vpop.f32.mrb[0].mxu0
          %v2633 = vadd.f32 0.0, %v2632
          %v2634 = vpop.f32.mrb[0].mxu0
          %2635 = vmatprep.mubr.bf16.mxu0 0
          %2636 = vmatmul.mubr.bf16.gmra.mrb[0].mxu0 %v2388
          %v2637 = vpop.f32.mrb[0].mxu0
          %v2638 = vadd.f32 0.0, %v2637
          %v2639 = vpop.f32.mrb[0].mxu0
          %v2640 = vpop.f32.mrb[0].mxu0
          %v2641 = vadd.f32 0.0, %v2640
          %v2642 = vpop.f32.mrb[0].mxu0
          %2643 = vmatprep.mubr.bf16.mxu0 0
          %2644 = vmatmul.mubr.bf16.gmra.mrb[0].mxu0 %v2389
          %v2645 = vpop.f32.mrb[0].mxu0
          %v2646 = vadd.f32 0.0, %v2645
          %v2647 = vpop.f32.mrb[0].mxu0
          %v2648 = vpop.f32.mrb[0].mxu0
          %v2649 = vadd.f32 0.0, %v2648
          %v2650 = vpop.f32.mrb[0].mxu0
          %2651 = vmatprep.mubr.bf16.mxu0 0
          %2652 = vmatmul.mubr.bf16.gmra.mrb[0].mxu0 %v2390
          %v2653 = vpop.f32.mrb[0].mxu0
          %v2654 = vadd.f32 0.0, %v2653
          %v2655 = vpop.f32.mrb[0].mxu0
          %v2656 = vpop.f32.mrb[0].mxu0
          %v2657 = vadd.f32 0.0, %v2656
          %v2658 = vpop.f32.mrb[0].mxu0
          %2659 = vmatprep.mubr.bf16.mxu0 0
          %2660 = vmatmul.mubr.bf16.gmra.mrb[0].mxu0 %v2391
          %v2661 = vpop.f32.mrb[0].mxu0
          %v2662 = vadd.f32 0.0, %v2661
          %v2663 = vpop.f32.mrb[0].mxu0
          %v2664 = vpop.f32.mrb[0].mxu0
          %v2665 = vadd.f32 0.0, %v2664
          %v2666 = vpop.f32.mrb[0].mxu0
          %2667 = vmatprep.mubr.bf16.mxu0 0
          %2668 = vmatmul.mubr.bf16.gmra.mrb[0].mxu0 %v2392
          %v2669 = vpop.f32.mrb[0].mxu0
          %v2670 = vadd.f32 0.0, %v2669
          %v2671 = vpop.f32.mrb[0].mxu0
          %v2672 = vpop.f32.mrb[0].mxu0
          %v2673 = vadd.f32 0.0, %v2672
          %v2674 = vpop.f32.mrb[0].mxu0
          %2675 = vmatprep.mubr.bf16.mxu0 0
          %2676 = vmatmul.mubr.bf16.gmra.mrb[0].mxu0 %v2393
          %v2677 = vpop.f32.mrb[0].mxu0
          %v2678 = vadd.f32 0.0, %v2677
          %v2679 = vpop.f32.mrb[0].mxu0
          %v2680 = vpop.f32.mrb[0].mxu0
          %v2681 = vadd.f32 0.0, %v2680
          %v2682 = vpop.f32.mrb[0].mxu0
          %2683 = vdwg.mxu0
          %v2684 = vadd.f32 %v2346, %v2477
          %v2685 = vadd.f32 %v2347, %v2480
          %v2686 = vadd.f32 %v2348, %v2485
          %v2687 = vadd.f32 %v2349, %v2488
          %v2688 = vadd.f32 %v2350, %v2493
          %v2689 = vadd.f32 %v2351, %v2496
          %v2690 = vadd.f32 %v2352, %v2501
          %v2691 = vadd.f32 %v2353, %v2504
          %v2692 = vadd.f32 %v2354, %v2509
          %v2693 = vadd.f32 %v2355, %v2512
          %v2694 = vadd.f32 %v2356, %v2517
          %v2695 = vadd.f32 %v2357, %v2520
          %v2696 = vadd.f32 %v2358, %v2525
          %v2697 = vadd.f32 %v2359, %v2528
          %v2698 = vadd.f32 %v2360, %v2533
          %v2699 = vadd.f32 %v2361, %v2536
          %v2700 = vadd.f32 %v2362, %v2622
          %v2701 = vadd.f32 %v2363, %v2625
          %v2702 = vadd.f32 %v2364, %v2630
          %v2703 = vadd.f32 %v2365, %v2633
          %v2704 = vadd.f32 %v2366, %v2638
          %v2705 = vadd.f32 %v2367, %v2641
          %v2706 = vadd.f32 %v2368, %v2646
          %v2707 = vadd.f32 %v2369, %v2649
          %v2708 = vadd.f32 %v2370, %v2654
          %v2709 = vadd.f32 %v2371, %v2657
          %v2710 = vadd.f32 %v2372, %v2662
          %v2711 = vadd.f32 %v2373, %v2665
          %v2712 = vadd.f32 %v2374, %v2670
          %v2713 = vadd.f32 %v2375, %v2673
          %v2714 = vadd.f32 %v2376, %v2678
          %v2715 = vadd.f32 %v2377, %v2681
          %2716 = vst [vmem:[#allocation4] sm:$0xff] %v2684
          %2717 = vst [vmem:[#allocation4 + $0x8] sm:$0xff] %v2685
          %2718 = vst [vmem:[#allocation4 + $0x10] sm:$0xff] %v2686
          %2719 = vst [vmem:[#allocation4 + $0x18] sm:$0xff] %v2687
          %2720 = vst [vmem:[#allocation4 + $0x20] sm:$0xff] %v2688
          %2721 = vst [vmem:[#allocation4 + $0x28] sm:$0xff] %v2689
          %2722 = vst [vmem:[#allocation4 + $0x30] sm:$0xff] %v2690
          %2723 = vst [vmem:[#allocation4 + $0x38] sm:$0xff] %v2691
          %2724 = vst [vmem:[#allocation4 + $0x40] sm:$0xff] %v2692
          %2725 = vst [vmem:[#allocation4 + $0x48] sm:$0xff] %v2693
          %2726 = vst [vmem:[#allocation4 + $0x50] sm:$0xff] %v2694
          %2727 = vst [vmem:[#allocation4 + $0x58] sm:$0xff] %v2695
          %2728 = vst [vmem:[#allocation4 + $0x60] sm:$0xff] %v2696
          %2729 = vst [vmem:[#allocation4 + $0x68] sm:$0xff] %v2697
          %2730 = vst [vmem:[#allocation4 + $0x70] sm:$0xff] %v2698
          %2731 = vst [vmem:[#allocation4 + $0x78] sm:$0xff] %v2699
          %2732 = vst [vmem:[#allocation4 + $0x80] sm:$0xff] %v2700
          %2733 = vst [vmem:[#allocation4 + $0x88] sm:$0xff] %v2701
          %2734 = vst [vmem:[#allocation4 + $0x90] sm:$0xff] %v2702
          %2735 = vst [vmem:[#allocation4 + $0x98] sm:$0xff] %v2703
          %2736 = vst [vmem:[#allocation4 + $0xa0] sm:$0xff] %v2704
          %2737 = vst [vmem:[#allocation4 + $0xa8] sm:$0xff] %v2705
          %2738 = vst [vmem:[#allocation4 + $0xb0] sm:$0xff] %v2706
          %2739 = vst [vmem:[#allocation4 + $0xb8] sm:$0xff] %v2707
          %2740 = vst [vmem:[#allocation4 + $0xc0] sm:$0xff] %v2708
          %2741 = vst [vmem:[#allocation4 + $0xc8] sm:$0xff] %v2709
          %2742 = vst [vmem:[#allocation4 + $0xd0] sm:$0xff] %v2710
          %2743 = vst [vmem:[#allocation4 + $0xd8] sm:$0xff] %v2711
          %2744 = vst [vmem:[#allocation4 + $0xe0] sm:$0xff] %v2712
          %2745 = vst [vmem:[#allocation4 + $0xe8] sm:$0xff] %v2713
          %2746 = vst [vmem:[#allocation4 + $0xf0] sm:$0xff] %v2714
          %2747 = vst [vmem:[#allocation4 + $0xf8] sm:$0xff] %v2715
          %2748 = vst.msk [vmem:[#allocation2] sm:$0xff] %vm2121, %v1577
          %2749 = vst.msk [vmem:[#allocation2 + $0x8] sm:$0xff] %vm2121, %v1578
          %2750 = vst.msk [vmem:[#allocation2 + $0x10] sm:$0xff] %vm2121, %v1579
          %2751 = vst.msk [vmem:[#allocation2 + $0x18] sm:$0xff] %vm2121, %v1580
          %2752 = vst.msk [vmem:[#allocation2 + $0x20] sm:$0xff] %vm2121, %v1581
          %2753 = vst.msk [vmem:[#allocation2 + $0x28] sm:$0xff] %vm2121, %v1582
          %2754 = vst.msk [vmem:[#allocation2 + $0x30] sm:$0xff] %vm2121, %v1583
          %2755 = vst.msk [vmem:[#allocation2 + $0x38] sm:$0xff] %vm2121, %v1584
          %2756 = vst.msk [vmem:[#allocation2 + $0x40] sm:$0xff] %vm2121, %v1585
          %2757 = vst.msk [vmem:[#allocation2 + $0x48] sm:$0xff] %vm2121, %v1586
          %2758 = vst.msk [vmem:[#allocation2 + $0x50] sm:$0xff] %vm2121, %v1587
          %2759 = vst.msk [vmem:[#allocation2 + $0x58] sm:$0xff] %vm2121, %v1588
          %2760 = vst.msk [vmem:[#allocation2 + $0x60] sm:$0xff] %vm2121, %v1589
          %2761 = vst.msk [vmem:[#allocation2 + $0x68] sm:$0xff] %vm2121, %v1590
          %2762 = vst.msk [vmem:[#allocation2 + $0x70] sm:$0xff] %vm2121, %v1591
          %2763 = vst.msk [vmem:[#allocation2 + $0x78] sm:$0xff] %vm2121, %v1592
          %2764 = vst.msk [vmem:[#allocation2 + $0x80] sm:$0xff] %vm2121, %v1593
          %2765 = vst.msk [vmem:[#allocation2 + $0x88] sm:$0xff] %vm2121, %v1594
          %2766 = vst.msk [vmem:[#allocation2 + $0x90] sm:$0xff] %vm2121, %v1595
          %2767 = vst.msk [vmem:[#allocation2 + $0x98] sm:$0xff] %vm2121, %v1596
          %2768 = vst.msk [vmem:[#allocation2 + $0xa0] sm:$0xff] %vm2121, %v1597
          %2769 = vst.msk [vmem:[#allocation2 + $0xa8] sm:$0xff] %vm2121, %v1598
          %2770 = vst.msk [vmem:[#allocation2 + $0xb0] sm:$0xff] %vm2121, %v1599
          %2771 = vst.msk [vmem:[#allocation2 + $0xb8] sm:$0xff] %vm2121, %v1600
          %2772 = vst.msk [vmem:[#allocation2 + $0xc0] sm:$0xff] %vm2121, %v1601
          %2773 = vst.msk [vmem:[#allocation2 + $0xc8] sm:$0xff] %vm2121, %v1602
          %2774 = vst.msk [vmem:[#allocation2 + $0xd0] sm:$0xff] %vm2121, %v1603
          %2775 = vst.msk [vmem:[#allocation2 + $0xd8] sm:$0xff] %vm2121, %v1604
          %2776 = vst.msk [vmem:[#allocation2 + $0xe0] sm:$0xff] %vm2121, %v1605
          %2777 = vst.msk [vmem:[#allocation2 + $0xe8] sm:$0xff] %vm2121, %v1606
          %2778 = vst.msk [vmem:[#allocation2 + $0xf0] sm:$0xff] %vm2121, %v1607
          %2779 = vst.msk [vmem:[#allocation2 + $0xf8] sm:$0xff] %vm2121, %v1608
        $region163: #{multi_head_attention.4} parent=142 // pred_fallthru
          _
        %p2780 = scmp.eq.s32.totalorder %s21, 1
        // Predicated region
        $region164: #{multi_head_attention.4} parent=142 // pred_check
          %p2781 = pneg %p2780
        $region165: #{multi_head_attention.4} parent=142 // pred_check_branch
          %2783 = sbr.rel (%p2781) target = $region167
        $region166: #{multi_head_attention.4} parent=142 // pred_region
          %v2784 = vld [vmem:[#allocation3] sm:$0xff]
          %v2785 = vld [vmem:[#allocation3 + $0x8] sm:$0xff]
          %v2786 = vld [vmem:[#allocation3 + $0x10] sm:$0xff]
          %v2787 = vld [vmem:[#allocation3 + $0x18] sm:$0xff]
          %v2788 = vld [vmem:[#allocation3 + $0x20] sm:$0xff]
          %v2789 = vld [vmem:[#allocation3 + $0x28] sm:$0xff]
          %v2790 = vld [vmem:[#allocation3 + $0x30] sm:$0xff]
          %v2791 = vld [vmem:[#allocation3 + $0x38] sm:$0xff]
          %v2792 = vld [vmem:[#allocation3 + $0x40] sm:$0xff]
          %v2793 = vld [vmem:[#allocation3 + $0x48] sm:$0xff]
          %v2794 = vld [vmem:[#allocation3 + $0x50] sm:$0xff]
          %v2795 = vld [vmem:[#allocation3 + $0x58] sm:$0xff]
          %v2796 = vld [vmem:[#allocation3 + $0x60] sm:$0xff]
          %v2797 = vld [vmem:[#allocation3 + $0x68] sm:$0xff]
          %v2798 = vld [vmem:[#allocation3 + $0x70] sm:$0xff]
          %v2799 = vld [vmem:[#allocation3 + $0x78] sm:$0xff]
          %v2800 = vld [vmem:[#allocation3 + $0x80] sm:$0xff]
          %v2801 = vld [vmem:[#allocation3 + $0x88] sm:$0xff]
          %v2802 = vld [vmem:[#allocation3 + $0x90] sm:$0xff]
          %v2803 = vld [vmem:[#allocation3 + $0x98] sm:$0xff]
          %v2804 = vld [vmem:[#allocation3 + $0xa0] sm:$0xff]
          %v2805 = vld [vmem:[#allocation3 + $0xa8] sm:$0xff]
          %v2806 = vld [vmem:[#allocation3 + $0xb0] sm:$0xff]
          %v2807 = vld [vmem:[#allocation3 + $0xb8] sm:$0xff]
          %v2808 = vld [vmem:[#allocation3 + $0xc0] sm:$0xff]
          %v2809 = vld [vmem:[#allocation3 + $0xc8] sm:$0xff]
          %v2810 = vld [vmem:[#allocation3 + $0xd0] sm:$0xff]
          %v2811 = vld [vmem:[#allocation3 + $0xd8] sm:$0xff]
          %v2812 = vld [vmem:[#allocation3 + $0xe0] sm:$0xff]
          %v2813 = vld [vmem:[#allocation3 + $0xe8] sm:$0xff]
          %v2814 = vld [vmem:[#allocation3 + $0xf0] sm:$0xff]
          %v2815 = vld [vmem:[#allocation3 + $0xf8] sm:$0xff]
          %v2816 = vrcp.pop %v2784
          %v2817 = vrcp.pop %v2785
          %v2818 = vrcp.pop %v2786
          %v2819 = vrcp.pop %v2787
          %v2820 = vrcp.pop %v2788
          %v2821 = vrcp.pop %v2789
          %v2822 = vrcp.pop %v2790
          %v2823 = vrcp.pop %v2791
          %v2824 = vrcp.pop %v2792
          %v2825 = vrcp.pop %v2793
          %v2826 = vrcp.pop %v2794
          %v2827 = vrcp.pop %v2795
          %v2828 = vrcp.pop %v2796
          %v2829 = vrcp.pop %v2797
          %v2830 = vrcp.pop %v2798
          %v2831 = vrcp.pop %v2799
          %v2832 = vrcp.pop %v2800
          %v2833 = vrcp.pop %v2801
          %v2834 = vrcp.pop %v2802
          %v2835 = vrcp.pop %v2803
          %v2836 = vrcp.pop %v2804
          %v2837 = vrcp.pop %v2805
          %v2838 = vrcp.pop %v2806
          %v2839 = vrcp.pop %v2807
          %v2840 = vrcp.pop %v2808
          %v2841 = vrcp.pop %v2809
          %v2842 = vrcp.pop %v2810
          %v2843 = vrcp.pop %v2811
          %v2844 = vrcp.pop %v2812
          %v2845 = vrcp.pop %v2813
          %v2846 = vrcp.pop %v2814
          %v2847 = vrcp.pop %v2815
          %v2848 = vld [vmem:[#allocation4] sm:$0xff]
          %v2849 = vld [vmem:[#allocation4 + $0x8] sm:$0xff]
          %v2850 = vld [vmem:[#allocation4 + $0x10] sm:$0xff]
          %v2851 = vld [vmem:[#allocation4 + $0x18] sm:$0xff]
          %v2852 = vld [vmem:[#allocation4 + $0x20] sm:$0xff]
          %v2853 = vld [vmem:[#allocation4 + $0x28] sm:$0xff]
          %v2854 = vld [vmem:[#allocation4 + $0x30] sm:$0xff]
          %v2855 = vld [vmem:[#allocation4 + $0x38] sm:$0xff]
          %v2856 = vld [vmem:[#allocation4 + $0x40] sm:$0xff]
          %v2857 = vld [vmem:[#allocation4 + $0x48] sm:$0xff]
          %v2858 = vld [vmem:[#allocation4 + $0x50] sm:$0xff]
          %v2859 = vld [vmem:[#allocation4 + $0x58] sm:$0xff]
          %v2860 = vld [vmem:[#allocation4 + $0x60] sm:$0xff]
          %v2861 = vld [vmem:[#allocation4 + $0x68] sm:$0xff]
          %v2862 = vld [vmem:[#allocation4 + $0x70] sm:$0xff]
          %v2863 = vld [vmem:[#allocation4 + $0x78] sm:$0xff]
          %v2864 = vld [vmem:[#allocation4 + $0x80] sm:$0xff]
          %v2865 = vld [vmem:[#allocation4 + $0x88] sm:$0xff]
          %v2866 = vld [vmem:[#allocation4 + $0x90] sm:$0xff]
          %v2867 = vld [vmem:[#allocation4 + $0x98] sm:$0xff]
          %v2868 = vld [vmem:[#allocation4 + $0xa0] sm:$0xff]
          %v2869 = vld [vmem:[#allocation4 + $0xa8] sm:$0xff]
          %v2870 = vld [vmem:[#allocation4 + $0xb0] sm:$0xff]
          %v2871 = vld [vmem:[#allocation4 + $0xb8] sm:$0xff]
          %v2872 = vld [vmem:[#allocation4 + $0xc0] sm:$0xff]
          %v2873 = vld [vmem:[#allocation4 + $0xc8] sm:$0xff]
          %v2874 = vld [vmem:[#allocation4 + $0xd0] sm:$0xff]
          %v2875 = vld [vmem:[#allocation4 + $0xd8] sm:$0xff]
          %v2876 = vld [vmem:[#allocation4 + $0xe0] sm:$0xff]
          %v2877 = vld [vmem:[#allocation4 + $0xe8] sm:$0xff]
          %v2878 = vld [vmem:[#allocation4 + $0xf0] sm:$0xff]
          %v2879 = vld [vmem:[#allocation4 + $0xf8] sm:$0xff]
          %2881 = vset.pattern.permute.xlu0 0
          %2882 = vperm.xlu0 %2881, %v2816
          %v2883 = vpop.permute.xlu0 %2882
          %2886 = vset.pattern.permute.xlu0 0
          %2887 = vperm.xlu0 %2886, %v2817
          %v2888 = vpop.permute.xlu0 %2887
          %2891 = vset.pattern.permute.xlu0 0
          %2892 = vperm.xlu0 %2891, %v2818
          %v2893 = vpop.permute.xlu0 %2892
          %2896 = vset.pattern.permute.xlu0 0
          %2897 = vperm.xlu0 %2896, %v2819
          %v2898 = vpop.permute.xlu0 %2897
          %2901 = vset.pattern.permute.xlu0 0
          %2902 = vperm.xlu0 %2901, %v2820
          %v2903 = vpop.permute.xlu0 %2902
          %2906 = vset.pattern.permute.xlu0 0
          %2907 = vperm.xlu0 %2906, %v2821
          %v2908 = vpop.permute.xlu0 %2907
          %2911 = vset.pattern.permute.xlu0 0
          %2912 = vperm.xlu0 %2911, %v2822
          %v2913 = vpop.permute.xlu0 %2912
          %2916 = vset.pattern.permute.xlu0 0
          %2917 = vperm.xlu0 %2916, %v2823
          %v2918 = vpop.permute.xlu0 %2917
          %2921 = vset.pattern.permute.xlu0 0
          %2922 = vperm.xlu0 %2921, %v2824
          %v2923 = vpop.permute.xlu0 %2922
          %2926 = vset.pattern.permute.xlu0 0
          %2927 = vperm.xlu0 %2926, %v2825
          %v2928 = vpop.permute.xlu0 %2927
          %2931 = vset.pattern.permute.xlu0 0
          %2932 = vperm.xlu0 %2931, %v2826
          %v2933 = vpop.permute.xlu0 %2932
          %2936 = vset.pattern.permute.xlu0 0
          %2937 = vperm.xlu0 %2936, %v2827
          %v2938 = vpop.permute.xlu0 %2937
          %2941 = vset.pattern.permute.xlu0 0
          %2942 = vperm.xlu0 %2941, %v2828
          %v2943 = vpop.permute.xlu0 %2942
          %2946 = vset.pattern.permute.xlu0 0
          %2947 = vperm.xlu0 %2946, %v2829
          %v2948 = vpop.permute.xlu0 %2947
          %2951 = vset.pattern.permute.xlu0 0
          %2952 = vperm.xlu0 %2951, %v2830
          %v2953 = vpop.permute.xlu0 %2952
          %2956 = vset.pattern.permute.xlu0 0
          %2957 = vperm.xlu0 %2956, %v2831
          %v2958 = vpop.permute.xlu0 %2957
          %2961 = vset.pattern.permute.xlu0 0
          %2962 = vperm.xlu0 %2961, %v2832
          %v2963 = vpop.permute.xlu0 %2962
          %2966 = vset.pattern.permute.xlu0 0
          %2967 = vperm.xlu0 %2966, %v2833
          %v2968 = vpop.permute.xlu0 %2967
          %2971 = vset.pattern.permute.xlu0 0
          %2972 = vperm.xlu0 %2971, %v2834
          %v2973 = vpop.permute.xlu0 %2972
          %2976 = vset.pattern.permute.xlu0 0
          %2977 = vperm.xlu0 %2976, %v2835
          %v2978 = vpop.permute.xlu0 %2977
          %2981 = vset.pattern.permute.xlu0 0
          %2982 = vperm.xlu0 %2981, %v2836
          %v2983 = vpop.permute.xlu0 %2982
          %2986 = vset.pattern.permute.xlu0 0
          %2987 = vperm.xlu0 %2986, %v2837
          %v2988 = vpop.permute.xlu0 %2987
          %2991 = vset.pattern.permute.xlu0 0
          %2992 = vperm.xlu0 %2991, %v2838
          %v2993 = vpop.permute.xlu0 %2992
          %2996 = vset.pattern.permute.xlu0 0
          %2997 = vperm.xlu0 %2996, %v2839
          %v2998 = vpop.permute.xlu0 %2997
          %3001 = vset.pattern.permute.xlu0 0
          %3002 = vperm.xlu0 %3001, %v2840
          %v3003 = vpop.permute.xlu0 %3002
          %3006 = vset.pattern.permute.xlu0 0
          %3007 = vperm.xlu0 %3006, %v2841
          %v3008 = vpop.permute.xlu0 %3007
          %3011 = vset.pattern.permute.xlu0 0
          %3012 = vperm.xlu0 %3011, %v2842
          %v3013 = vpop.permute.xlu0 %3012
          %3016 = vset.pattern.permute.xlu0 0
          %3017 = vperm.xlu0 %3016, %v2843
          %v3018 = vpop.permute.xlu0 %3017
          %3021 = vset.pattern.permute.xlu0 0
          %3022 = vperm.xlu0 %3021, %v2844
          %v3023 = vpop.permute.xlu0 %3022
          %3026 = vset.pattern.permute.xlu0 0
          %3027 = vperm.xlu0 %3026, %v2845
          %v3028 = vpop.permute.xlu0 %3027
          %3031 = vset.pattern.permute.xlu0 0
          %3032 = vperm.xlu0 %3031, %v2846
          %v3033 = vpop.permute.xlu0 %3032
          %3036 = vset.pattern.permute.xlu0 0
          %3037 = vperm.xlu0 %3036, %v2847
          %v3038 = vpop.permute.xlu0 %3037
          %v3040 = vmul.f32 %v2848, %v2883
          %v3041 = vmul.f32 %v2849, %v2888
          %v3042 = vmul.f32 %v2850, %v2893
          %v3043 = vmul.f32 %v2851, %v2898
          %v3044 = vmul.f32 %v2852, %v2903
          %v3045 = vmul.f32 %v2853, %v2908
          %v3046 = vmul.f32 %v2854, %v2913
          %v3047 = vmul.f32 %v2855, %v2918
          %v3048 = vmul.f32 %v2856, %v2923
          %v3049 = vmul.f32 %v2857, %v2928
          %v3050 = vmul.f32 %v2858, %v2933
          %v3051 = vmul.f32 %v2859, %v2938
          %v3052 = vmul.f32 %v2860, %v2943
          %v3053 = vmul.f32 %v2861, %v2948
          %v3054 = vmul.f32 %v2862, %v2953
          %v3055 = vmul.f32 %v2863, %v2958
          %v3056 = vmul.f32 %v2864, %v2963
          %v3057 = vmul.f32 %v2865, %v2968
          %v3058 = vmul.f32 %v2866, %v2973
          %v3059 = vmul.f32 %v2867, %v2978
          %v3060 = vmul.f32 %v2868, %v2983
          %v3061 = vmul.f32 %v2869, %v2988
          %v3062 = vmul.f32 %v2870, %v2993
          %v3063 = vmul.f32 %v2871, %v2998
          %v3064 = vmul.f32 %v2872, %v3003
          %v3065 = vmul.f32 %v2873, %v3008
          %v3066 = vmul.f32 %v2874, %v3013
          %v3067 = vmul.f32 %v2875, %v3018
          %v3068 = vmul.f32 %v2876, %v3023
          %v3069 = vmul.f32 %v2877, %v3028
          %v3070 = vmul.f32 %v2878, %v3033
          %v3071 = vmul.f32 %v2879, %v3038
          %v3072 = vpack.c.bf16 %v3041, %v3040
          %v3073 = vpack.c.bf16 %v3043, %v3042
          %v3074 = vpack.c.bf16 %v3045, %v3044
          %v3075 = vpack.c.bf16 %v3047, %v3046
          %v3076 = vpack.c.bf16 %v3049, %v3048
          %v3077 = vpack.c.bf16 %v3051, %v3050
          %v3078 = vpack.c.bf16 %v3053, %v3052
          %v3079 = vpack.c.bf16 %v3055, %v3054
          %v3080 = vpack.c.bf16 %v3057, %v3056
          %v3081 = vpack.c.bf16 %v3059, %v3058
          %v3082 = vpack.c.bf16 %v3061, %v3060
          %v3083 = vpack.c.bf16 %v3063, %v3062
          %v3084 = vpack.c.bf16 %v3065, %v3064
          %v3085 = vpack.c.bf16 %v3067, %v3066
          %v3086 = vpack.c.bf16 %v3069, %v3068
          %v3087 = vpack.c.bf16 %v3071, %v3070
          %v3104 = vunpack.c.l.b16 %v3072
          %v3105 = vunpack.c.h.b16 %v3072
          %v3106 = vunpack.c.l.b16 %v3073
          %v3107 = vunpack.c.h.b16 %v3073
          %v3108 = vunpack.c.l.b16 %v3074
          %v3109 = vunpack.c.h.b16 %v3074
          %v3110 = vunpack.c.l.b16 %v3075
          %v3111 = vunpack.c.h.b16 %v3075
          %v3112 = vunpack.c.l.b16 %v3076
          %v3113 = vunpack.c.h.b16 %v3076
          %v3114 = vunpack.c.l.b16 %v3077
          %v3115 = vunpack.c.h.b16 %v3077
          %v3116 = vunpack.c.l.b16 %v3078
          %v3117 = vunpack.c.h.b16 %v3078
          %v3118 = vunpack.c.l.b16 %v3079
          %v3119 = vunpack.c.h.b16 %v3079
          %v3120 = vunpack.c.l.b16 %v3080
          %v3121 = vunpack.c.h.b16 %v3080
          %v3122 = vunpack.c.l.b16 %v3081
          %v3123 = vunpack.c.h.b16 %v3081
          %v3124 = vunpack.c.l.b16 %v3082
          %v3125 = vunpack.c.h.b16 %v3082
          %v3126 = vunpack.c.l.b16 %v3083
          %v3127 = vunpack.c.h.b16 %v3083
          %v3128 = vunpack.c.l.b16 %v3084
          %v3129 = vunpack.c.h.b16 %v3084
          %v3130 = vunpack.c.l.b16 %v3085
          %v3131 = vunpack.c.h.b16 %v3085
          %v3132 = vunpack.c.l.b16 %v3086
          %v3133 = vunpack.c.h.b16 %v3086
          %v3134 = vunpack.c.l.b16 %v3087
          %v3135 = vunpack.c.h.b16 %v3087
          %v3136 = vpack.c.b16 %v3104, %v3104
          %v3137 = vpack.c.b16 %v3105, %v3105
          %v3138 = vpack.c.b16 %v3106, %v3106
          %v3139 = vpack.c.b16 %v3107, %v3107
          %v3140 = vpack.c.b16 %v3108, %v3108
          %v3141 = vpack.c.b16 %v3109, %v3109
          %v3142 = vpack.c.b16 %v3110, %v3110
          %v3143 = vpack.c.b16 %v3111, %v3111
          %v3144 = vpack.c.b16 %v3112, %v3112
          %v3145 = vpack.c.b16 %v3113, %v3113
          %v3146 = vpack.c.b16 %v3114, %v3114
          %v3147 = vpack.c.b16 %v3115, %v3115
          %v3148 = vpack.c.b16 %v3116, %v3116
          %v3149 = vpack.c.b16 %v3117, %v3117
          %v3150 = vpack.c.b16 %v3118, %v3118
          %v3151 = vpack.c.b16 %v3119, %v3119
          %v3152 = vpack.c.b16 %v3120, %v3120
          %v3153 = vpack.c.b16 %v3121, %v3121
          %v3154 = vpack.c.b16 %v3122, %v3122
          %v3155 = vpack.c.b16 %v3123, %v3123
          %v3156 = vpack.c.b16 %v3124, %v3124
          %v3157 = vpack.c.b16 %v3125, %v3125
          %v3158 = vpack.c.b16 %v3126, %v3126
          %v3159 = vpack.c.b16 %v3127, %v3127
          %v3160 = vpack.c.b16 %v3128, %v3128
          %v3161 = vpack.c.b16 %v3129, %v3129
          %v3162 = vpack.c.b16 %v3130, %v3130
          %v3163 = vpack.c.b16 %v3131, %v3131
          %v3164 = vpack.c.b16 %v3132, %v3132
          %v3165 = vpack.c.b16 %v3133, %v3133
          %v3166 = vpack.c.b16 %v3134, %v3134
          %v3167 = vpack.c.b16 %v3135, %v3135
          %3200 = vst [vmem:[%s735] sm:$0xf] %v3136
          %3201 = vst [vmem:[%s735 + $0x4] sm:$0xf] %v3137
          %3202 = vst [vmem:[%s735 + $0x8] sm:$0xf] %v3138
          %3203 = vst [vmem:[%s735 + $0xc] sm:$0xf] %v3139
          %3204 = vst [vmem:[%s735 + $0x10] sm:$0xf] %v3140
          %3205 = vst [vmem:[%s735 + $0x14] sm:$0xf] %v3141
          %3206 = vst [vmem:[%s735 + $0x18] sm:$0xf] %v3142
          %3207 = vst [vmem:[%s735 + $0x1c] sm:$0xf] %v3143
          %3208 = vst [vmem:[%s735 + $0x20] sm:$0xf] %v3144
          %3209 = vst [vmem:[%s735 + $0x24] sm:$0xf] %v3145
          %3210 = vst [vmem:[%s735 + $0x28] sm:$0xf] %v3146
          %3211 = vst [vmem:[%s735 + $0x2c] sm:$0xf] %v3147
          %3212 = vst [vmem:[%s735 + $0x30] sm:$0xf] %v3148
          %3213 = vst [vmem:[%s735 + $0x34] sm:$0xf] %v3149
          %3214 = vst [vmem:[%s735 + $0x38] sm:$0xf] %v3150
          %3215 = vst [vmem:[%s735 + $0x3c] sm:$0xf] %v3151
          %3216 = vst [vmem:[%s735 + $0x40] sm:$0xf] %v3152
          %3217 = vst [vmem:[%s735 + $0x44] sm:$0xf] %v3153
          %3218 = vst [vmem:[%s735 + $0x48] sm:$0xf] %v3154
          %3219 = vst [vmem:[%s735 + $0x4c] sm:$0xf] %v3155
          %3220 = vst [vmem:[%s735 + $0x50] sm:$0xf] %v3156
          %3221 = vst [vmem:[%s735 + $0x54] sm:$0xf] %v3157
          %3222 = vst [vmem:[%s735 + $0x58] sm:$0xf] %v3158
          %3223 = vst [vmem:[%s735 + $0x5c] sm:$0xf] %v3159
          %3224 = vst [vmem:[%s735 + $0x60] sm:$0xf] %v3160
          %3225 = vst [vmem:[%s735 + $0x64] sm:$0xf] %v3161
          %3226 = vst [vmem:[%s735 + $0x68] sm:$0xf] %v3162
          %3227 = vst [vmem:[%s735 + $0x6c] sm:$0xf] %v3163
          %3228 = vst [vmem:[%s735 + $0x70] sm:$0xf] %v3164
          %3229 = vst [vmem:[%s735 + $0x74] sm:$0xf] %v3165
          %3230 = vst [vmem:[%s735 + $0x78] sm:$0xf] %v3166
          %3231 = vst [vmem:[%s735 + $0x7c] sm:$0xf] %v3167
        $region167: #{multi_head_attention.4} parent=142 // pred_fallthru
          _
        %s3232 = sand.u32 %s127, 1
        %s3233 = sand.u32 %s127, 1
        %s3234 = smul.addr %s3233, 128
        %s3235 = scalar_lea.vmem [#allocation8], %s3234
        // Predicated region
        $region168: #{multi_head_attention.4} parent=142 // pred_check
          %p3236 = pneg %p137
        $region169: #{multi_head_attention.4} parent=142 // pred_check_branch
          %3238 = sbr.rel (%p3236) target = $region171
        $region170: #{multi_head_attention.4} parent=142 // pred_region
          %s3239 = smul.u32 16, %s20
          %s3240 = smul.addr %s19, 64
          %s3241 = sadd.s32 %s3239, %s3240
          %s3242 = smul.addr %s3241, 4
          %s3243 = scalar_lea.vmem %s3, %s3242
          // Predicated region
          $region172: #{multi_head_attention.4} parent=170 // pred_check
            _
          $region173: #{multi_head_attention.4} parent=170 // pred_check_branch
            %3245 = sbr.rel (0) target = $region175
          $region174: #{multi_head_attention.4} parent=170 // pred_region
            // Predicated region
            $region176: #{multi_head_attention.4} parent=174 // pred_check
              _
            $region177: #{multi_head_attention.4} parent=174 // pred_check_branch
              %3247 = sbr.rel target = $region179
            $region178: #{multi_head_attention.4} parent=174 // pred_region
              // Predicated region
              $region191: #{multi_head_attention.4} parent=178 // pred_check
                _
              $region192: #{multi_head_attention.4} parent=178 // pred_check_branch
                %3324 = sbr.rel (0) target = $region194
              $region193: #{multi_head_attention.4} parent=178 // pred_region
                loop: start=0, step=1, limit=1
                $region195: #{multi_head_attention.4} parent=193 // loop_pre_header
                  _
                $region196: #{multi_head_attention.4} parent=193 // loop_header
                  %s3326 = sphi 0, %s3330
                  %p3327 = scmp.ge.s32.totalorder %s3326, 1
                  %s3331 = sphi %s3235, %s3235
                  %s3332 = sphi %s3243, %s3243
                $region197: #{multi_head_attention.4} parent=193 // loop_header_branch
                  %3329 = sbr.rel (%p3327) target = $region201
                $region198: #{multi_head_attention.4} parent=193 // loop_body
                  _
                $region199: #{multi_head_attention.4} parent=193 // loop_footer
                  %s3330 = sadd.s32 1, %s3326
                $region200: #{multi_head_attention.4} parent=193 // loop_footer_branch
                  %3325 = sbr.rel target = $region196
                $region201: #{multi_head_attention.4} parent=193 // loop_exit
                  _
                loop: start=0, step=1, limit=1
                $region202: #{multi_head_attention.4} parent=193 // loop_pre_header
                  _
                $region203: #{multi_head_attention.4} parent=193 // loop_header
                  %s3335 = sphi 0, %s3339
                  %p3336 = scmp.ge.s32.totalorder %s3335, 1
                  %s3340 = sphi %s3235, %s3235
                  %s3341 = sphi %s3243, %s3243
                $region204: #{multi_head_attention.4} parent=193 // loop_header_branch
                  %3338 = sbr.rel (%p3336) target = $region208
                $region205: #{multi_head_attention.4} parent=193 // loop_body
                  %v3342 = vld [vmem:[%s3340] sm:$0xf]
                  %3343 = vst [vmem:[%s3341] sm:$0xf] %v3342
                  %v3344 = vld [vmem:[%s3340 + $0x4] sm:$0xf]
                  %3345 = vst [vmem:[%s3341 + $0x4] sm:$0xf] %v3344
                  %v3346 = vld [vmem:[%s3340 + $0x8] sm:$0xf]
                  %3347 = vst [vmem:[%s3341 + $0x8] sm:$0xf] %v3346
                  %v3348 = vld [vmem:[%s3340 + $0xc] sm:$0xf]
                  %3349 = vst [vmem:[%s3341 + $0xc] sm:$0xf] %v3348
                  %v3350 = vld [vmem:[%s3340 + $0x10] sm:$0xf]
                  %3351 = vst [vmem:[%s3341 + $0x10] sm:$0xf] %v3350
                  %v3352 = vld [vmem:[%s3340 + $0x14] sm:$0xf]
                  %3353 = vst [vmem:[%s3341 + $0x14] sm:$0xf] %v3352
                  %v3354 = vld [vmem:[%s3340 + $0x18] sm:$0xf]
                  %3355 = vst [vmem:[%s3341 + $0x18] sm:$0xf] %v3354
                  %v3356 = vld [vmem:[%s3340 + $0x1c] sm:$0xf]
                  %3357 = vst [vmem:[%s3341 + $0x1c] sm:$0xf] %v3356
                  %v3358 = vld [vmem:[%s3340 + $0x20] sm:$0xf]
                  %3359 = vst [vmem:[%s3341 + $0x20] sm:$0xf] %v3358
                  %v3360 = vld [vmem:[%s3340 + $0x24] sm:$0xf]
                  %3361 = vst [vmem:[%s3341 + $0x24] sm:$0xf] %v3360
                  %v3362 = vld [vmem:[%s3340 + $0x28] sm:$0xf]
                  %3363 = vst [vmem:[%s3341 + $0x28] sm:$0xf] %v3362
                  %v3364 = vld [vmem:[%s3340 + $0x2c] sm:$0xf]
                  %3365 = vst [vmem:[%s3341 + $0x2c] sm:$0xf] %v3364
                  %v3366 = vld [vmem:[%s3340 + $0x30] sm:$0xf]
                  %3367 = vst [vmem:[%s3341 + $0x30] sm:$0xf] %v3366
                  %v3368 = vld [vmem:[%s3340 + $0x34] sm:$0xf]
                  %3369 = vst [vmem:[%s3341 + $0x34] sm:$0xf] %v3368
                  %v3370 = vld [vmem:[%s3340 + $0x38] sm:$0xf]
                  %3371 = vst [vmem:[%s3341 + $0x38] sm:$0xf] %v3370
                  %v3372 = vld [vmem:[%s3340 + $0x3c] sm:$0xf]
                  %3373 = vst [vmem:[%s3341 + $0x3c] sm:$0xf] %v3372
                  %v3374 = vld [vmem:[%s3340 + $0x40] sm:$0xf]
                  %3375 = vst [vmem:[%s3341 + $0x80] sm:$0xf] %v3374
                  %v3376 = vld [vmem:[%s3340 + $0x44] sm:$0xf]
                  %3377 = vst [vmem:[%s3341 + $0x84] sm:$0xf] %v3376
                  %v3378 = vld [vmem:[%s3340 + $0x48] sm:$0xf]
                  %3379 = vst [vmem:[%s3341 + $0x88] sm:$0xf] %v3378
                  %v3380 = vld [vmem:[%s3340 + $0x4c] sm:$0xf]
                  %3381 = vst [vmem:[%s3341 + $0x8c] sm:$0xf] %v3380
                  %v3382 = vld [vmem:[%s3340 + $0x50] sm:$0xf]
                  %3383 = vst [vmem:[%s3341 + $0x90] sm:$0xf] %v3382
                  %v3384 = vld [vmem:[%s3340 + $0x54] sm:$0xf]
                  %3385 = vst [vmem:[%s3341 + $0x94] sm:$0xf] %v3384
                  %v3386 = vld [vmem:[%s3340 + $0x58] sm:$0xf]
                  %3387 = vst [vmem:[%s3341 + $0x98] sm:$0xf] %v3386
                  %v3388 = vld [vmem:[%s3340 + $0x5c] sm:$0xf]
                  %3389 = vst [vmem:[%s3341 + $0x9c] sm:$0xf] %v3388
                  %v3390 = vld [vmem:[%s3340 + $0x60] sm:$0xf]
                  %3391 = vst [vmem:[%s3341 + $0xa0] sm:$0xf] %v3390
                  %v3392 = vld [vmem:[%s3340 + $0x64] sm:$0xf]
                  %3393 = vst [vmem:[%s3341 + $0xa4] sm:$0xf] %v3392
                  %v3394 = vld [vmem:[%s3340 + $0x68] sm:$0xf]
                  %3395 = vst [vmem:[%s3341 + $0xa8] sm:$0xf] %v3394
                  %v3396 = vld [vmem:[%s3340 + $0x6c] sm:$0xf]
                  %3397 = vst [vmem:[%s3341 + $0xac] sm:$0xf] %v3396
                  %v3398 = vld [vmem:[%s3340 + $0x70] sm:$0xf]
                  %3399 = vst [vmem:[%s3341 + $0xb0] sm:$0xf] %v3398
                  %v3400 = vld [vmem:[%s3340 + $0x74] sm:$0xf]
                  %3401 = vst [vmem:[%s3341 + $0xb4] sm:$0xf] %v3400
                  %v3402 = vld [vmem:[%s3340 + $0x78] sm:$0xf]
                  %3403 = vst [vmem:[%s3341 + $0xb8] sm:$0xf] %v3402
                  %v3404 = vld [vmem:[%s3340 + $0x7c] sm:$0xf]
                  %3405 = vst [vmem:[%s3341 + $0xbc] sm:$0xf] %v3404
                $region206: #{multi_head_attention.4} parent=193 // loop_footer
                  %s3339 = sadd.s32 1, %s3335
                $region207: #{multi_head_attention.4} parent=193 // loop_footer_branch
                  %3334 = sbr.rel target = $region203
                $region208: #{multi_head_attention.4} parent=193 // loop_exit
                  _
              $region194: #{multi_head_attention.4} parent=178 // pred_fallthru
                _
            $region179: #{multi_head_attention.4} parent=174 // pred_fallthru
              _
            // Predicated region
            $region180: #{multi_head_attention.4} parent=174 // pred_check
              _
            $region181: #{multi_head_attention.4} parent=174 // pred_check_branch
              %3249 = sbr.rel (0) target = $region183
            $region182: #{multi_head_attention.4} parent=174 // pred_region
              loop: start=0, step=1, limit=1
              $region184: #{multi_head_attention.4} parent=182 // loop_pre_header
                _
              $region185: #{multi_head_attention.4} parent=182 // loop_header
                %s3252 = sphi 0, %s3256
                %p3253 = scmp.ge.s32.totalorder %s3252, 1
                %s3257 = sphi %s3235, %s3235
                %s3258 = sphi %s3243, %s3243
              $region186: #{multi_head_attention.4} parent=182 // loop_header_branch
                %3255 = sbr.rel (%p3253) target = $region190
              $region187: #{multi_head_attention.4} parent=182 // loop_body
                %v3259 = vld [vmem:[%s3257] sm:$0xf]
                %3260 = vst [vmem:[%s3258] sm:$0xf] %v3259
                %v3261 = vld [vmem:[%s3257 + $0x4] sm:$0xf]
                %3262 = vst [vmem:[%s3258 + $0x4] sm:$0xf] %v3261
                %v3263 = vld [vmem:[%s3257 + $0x8] sm:$0xf]
                %3264 = vst [vmem:[%s3258 + $0x8] sm:$0xf] %v3263
                %v3265 = vld [vmem:[%s3257 + $0xc] sm:$0xf]
                %3266 = vst [vmem:[%s3258 + $0xc] sm:$0xf] %v3265
                %v3267 = vld [vmem:[%s3257 + $0x10] sm:$0xf]
                %3268 = vst [vmem:[%s3258 + $0x10] sm:$0xf] %v3267
                %v3269 = vld [vmem:[%s3257 + $0x14] sm:$0xf]
                %3270 = vst [vmem:[%s3258 + $0x14] sm:$0xf] %v3269
                %v3271 = vld [vmem:[%s3257 + $0x18] sm:$0xf]
                %3272 = vst [vmem:[%s3258 + $0x18] sm:$0xf] %v3271
                %v3273 = vld [vmem:[%s3257 + $0x1c] sm:$0xf]
                %3274 = vst [vmem:[%s3258 + $0x1c] sm:$0xf] %v3273
                %v3275 = vld [vmem:[%s3257 + $0x20] sm:$0xf]
                %3276 = vst [vmem:[%s3258 + $0x20] sm:$0xf] %v3275
                %v3277 = vld [vmem:[%s3257 + $0x24] sm:$0xf]
                %3278 = vst [vmem:[%s3258 + $0x24] sm:$0xf] %v3277
                %v3279 = vld [vmem:[%s3257 + $0x28] sm:$0xf]
                %3280 = vst [vmem:[%s3258 + $0x28] sm:$0xf] %v3279
                %v3281 = vld [vmem:[%s3257 + $0x2c] sm:$0xf]
                %3282 = vst [vmem:[%s3258 + $0x2c] sm:$0xf] %v3281
                %v3283 = vld [vmem:[%s3257 + $0x30] sm:$0xf]
                %3284 = vst [vmem:[%s3258 + $0x30] sm:$0xf] %v3283
                %v3285 = vld [vmem:[%s3257 + $0x34] sm:$0xf]
                %3286 = vst [vmem:[%s3258 + $0x34] sm:$0xf] %v3285
                %v3287 = vld [vmem:[%s3257 + $0x38] sm:$0xf]
                %3288 = vst [vmem:[%s3258 + $0x38] sm:$0xf] %v3287
                %v3289 = vld [vmem:[%s3257 + $0x3c] sm:$0xf]
                %3290 = vst [vmem:[%s3258 + $0x3c] sm:$0xf] %v3289
                %v3291 = vld [vmem:[%s3257 + $0x40] sm:$0xf]
                %3292 = vst [vmem:[%s3258 + $0x80] sm:$0xf] %v3291
                %v3293 = vld [vmem:[%s3257 + $0x44] sm:$0xf]
                %3294 = vst [vmem:[%s3258 + $0x84] sm:$0xf] %v3293
                %v3295 = vld [vmem:[%s3257 + $0x48] sm:$0xf]
                %3296 = vst [vmem:[%s3258 + $0x88] sm:$0xf] %v3295
                %v3297 = vld [vmem:[%s3257 + $0x4c] sm:$0xf]
                %3298 = vst [vmem:[%s3258 + $0x8c] sm:$0xf] %v3297
                %v3299 = vld [vmem:[%s3257 + $0x50] sm:$0xf]
                %3300 = vst [vmem:[%s3258 + $0x90] sm:$0xf] %v3299
                %v3301 = vld [vmem:[%s3257 + $0x54] sm:$0xf]
                %3302 = vst [vmem:[%s3258 + $0x94] sm:$0xf] %v3301
                %v3303 = vld [vmem:[%s3257 + $0x58] sm:$0xf]
                %3304 = vst [vmem:[%s3258 + $0x98] sm:$0xf] %v3303
                %v3305 = vld [vmem:[%s3257 + $0x5c] sm:$0xf]
                %3306 = vst [vmem:[%s3258 + $0x9c] sm:$0xf] %v3305
                %v3307 = vld [vmem:[%s3257 + $0x60] sm:$0xf]
                %3308 = vst [vmem:[%s3258 + $0xa0] sm:$0xf] %v3307
                %v3309 = vld [vmem:[%s3257 + $0x64] sm:$0xf]
                %3310 = vst [vmem:[%s3258 + $0xa4] sm:$0xf] %v3309
                %v3311 = vld [vmem:[%s3257 + $0x68] sm:$0xf]
                %3312 = vst [vmem:[%s3258 + $0xa8] sm:$0xf] %v3311
                %v3313 = vld [vmem:[%s3257 + $0x6c] sm:$0xf]
                %3314 = vst [vmem:[%s3258 + $0xac] sm:$0xf] %v3313
                %v3315 = vld [vmem:[%s3257 + $0x70] sm:$0xf]
                %3316 = vst [vmem:[%s3258 + $0xb0] sm:$0xf] %v3315
                %v3317 = vld [vmem:[%s3257 + $0x74] sm:$0xf]
                %3318 = vst [vmem:[%s3258 + $0xb4] sm:$0xf] %v3317
                %v3319 = vld [vmem:[%s3257 + $0x78] sm:$0xf]
                %3320 = vst [vmem:[%s3258 + $0xb8] sm:$0xf] %v3319
                %v3321 = vld [vmem:[%s3257 + $0x7c] sm:$0xf]
                %3322 = vst [vmem:[%s3258 + $0xbc] sm:$0xf] %v3321
              $region188: #{multi_head_attention.4} parent=182 // loop_footer
                %s3256 = sadd.s32 1, %s3252
              $region189: #{multi_head_attention.4} parent=182 // loop_footer_branch
                %3251 = sbr.rel target = $region185
              $region190: #{multi_head_attention.4} parent=182 // loop_exit
                _
            $region183: #{multi_head_attention.4} parent=174 // pred_fallthru
              _
          $region175: #{multi_head_attention.4} parent=170 // pred_fallthru
            _
          %3406 = vnop
        $region171: #{multi_head_attention.4} parent=142 // pred_fallthru
          _
      $region143: #{multi_head_attention.4} parent=5 // pred_fallthru
        _
      %p3407 = scmp.le.s32.totalorder 2, %s9
      // Predicated region
      $region209: #{multi_head_attention.4} parent=5 // pred_check
        %p3408 = pneg %p3407
      $region210: #{multi_head_attention.4} parent=5 // pred_check_branch
        %3410 = sbr.rel (%p3408) target = $region212
      $region211: #{multi_head_attention.4} parent=5 // pred_region
        %s3411 = ssub.s32 %s9, 2
        // Predicated region
        $region213: #{multi_head_attention.4} parent=211 // pred_check
          %p3412 = pneg %p143
        $region214: #{multi_head_attention.4} parent=211 // pred_check_branch
          %3414 = sbr.rel (%p3412) target = $region216
        $region215: #{multi_head_attention.4} parent=211 // pred_region
          %s3415 = sand.u32 %s128, 1
          %s3416 = sand.u32 %s128, 1
          %s3417 = smul.addr %s3416, 128
          %s3418 = scalar_lea.vmem [#allocation8], %s3417
        $region216: #{multi_head_attention.4} parent=211 // pred_fallthru
          _
      $region212: #{multi_head_attention.4} parent=5 // pred_fallthru
        _
    $region6: #{multi_head_attention.4} parent=1 // loop_footer
      %s13 = sadd.s32 1, %s9
    $region7: #{multi_head_attention.4} parent=1 // loop_footer_branch
      %8 = sbr.rel target = $region3
    $region8: #{multi_head_attention.4} parent=1 // loop_exit
      _

// kernel: multi_head_attention.5
$region0: #{multi_head_attention.5}
  #allocation0 [shape = 'u32[]', space=smem, size = 0x4, offset = 0x4, fixed_abs, tag = 'smem constant byte address 0x4 - core index']
  #allocation1 [shape = 'u32[144,128]{1,0:T(1,128)}', space=vmem, size = 0x12000, scoped, tag = 'internal scratch']
  %s0 = inlined_call_operand.vmem [shape: bf16[512,256], index: 0, kind: input, shape index: {}]
  %s1 = inlined_call_operand.vmem [shape: bf16[256,256], index: 1, kind: input, shape index: {}]
  %s2 = inlined_call_operand.vmem [shape: f32[1,256], index: 2, kind: input, shape index: {}]
  %s3 = inlined_call_operand.hbm [shape: f32[512,256], index: 3, kind: output, shape index: {}]
  %s4 = sld [smem:[#allocation0]]
  $region45: #{multi_head_attention.5} parent=0
    _
  %s6 = ssub.s32 1, %s4
  %s7 = scalar_select 0, %s6, %s4
  $region1: #{multi_head_attention.5} parent=0
    #allocation2 [shape = 'u8[524288]{0}', space=vmem, size = 0x80000, scoped, tag = 'output window, operand 0']
    #allocation3 [shape = 's32[2]{0}', space=sflag, size = 0x8, scoped, tag = 'scoped memory for multi_head_attention.5']
    %8 = vsyncpa [#allocation3], 0
    %s9 = scalar_lea.sflag [#allocation3], 1
    %10 = vsyncpa %s9, 0
    loop: start=0, step=1, limit=4
    $region2: #{multi_head_attention.5} parent=1 // loop_pre_header
      _
    $region3: #{multi_head_attention.5} parent=1 // loop_header
      %s12 = sphi 0, %s16
      %p13 = scmp.ge.s32.totalorder %s12, 4
      %s22 = sphi 0, %s24
      %s25 = sphi 0, %s22
      %s26 = sphi 0, %s25
      %s42 = sphi 0, %s26
      %s46 = sphi 0, %s46
      %s48 = sphi 0, %s46
      %s49 = sphi 0, %s48
      %s63 = sphi 0, %s49
      %s67 = sphi 0, %s67
      %s69 = sphi 0, %s67
      %s70 = sphi 0, %s69
      %s84 = sphi 0, %s70
      %s90 = sphi 0, %s92
      %s93 = sphi 0, %s90
      %s94 = sphi 0, %s93
      %s110 = sphi 0, %s94
    $region4: #{multi_head_attention.5} parent=1 // loop_header_branch
      %15 = sbr.rel (%p13) target = $region8
    $region5: #{multi_head_attention.5} parent=1 // loop_body
      %s17 = ssub.s32 %s12, 1
      %s18 = ssub.s32 %s12, 2
      %s19 = sadd.s32 %s12, 1
      %s20 = ssub.s32 %s12, %s19
      %p21 = scmp.eq.s32.totalorder %s20, 0
      %s23 = sadd.s32 %s22, 1
      %s24 = scalar_select %p21, %s22, %s23
      %p27 = pneg %p21
      %p28 = scmp.eq.s32.totalorder %s12, 1
      %p29 = por %p27, %p28
      %p30 = scmp.ne.s32.totalorder %s22, %s25
      %p31 = scmp.eq.s32.totalorder %s12, 0
      %p32 = por %p30, %p31
      %p33 = scmp.ne.s32.totalorder %s22, %s25
      %p34 = scmp.eq.s32.totalorder %s17, 1
      %p35 = por %p33, %p34
      %p36 = scmp.ne.s32.totalorder %s25, %s26
      %p37 = scmp.eq.s32.totalorder %s17, 0
      %p38 = por %p36, %p37
      %p39 = scmp.ne.s32.totalorder %s25, %s26
      %p40 = scmp.eq.s32.totalorder %s18, 1
      %p41 = por %p39, %p40
      %p43 = scmp.ne.s32.totalorder %s26, %s42
      %p44 = scmp.eq.s32.totalorder %s18, 0
      %p45 = por %p43, %p44
      %s47 = sadd.s32 %s46, 1
      %p50 = scmp.eq.s32.totalorder %s12, 1
      %p51 = scmp.ne.s32.totalorder %s46, %s48
      %p52 = scmp.eq.s32.totalorder %s12, 0
      %p53 = por %p51, %p52
      %p54 = scmp.ne.s32.totalorder %s46, %s48
      %p55 = scmp.eq.s32.totalorder %s17, 1
      %p56 = por %p54, %p55
      %p57 = scmp.ne.s32.totalorder %s48, %s49
      %p58 = scmp.eq.s32.totalorder %s17, 0
      %p59 = por %p57, %p58
      %p60 = scmp.ne.s32.totalorder %s48, %s49
      %p61 = scmp.eq.s32.totalorder %s18, 1
      %p62 = por %p60, %p61
      %p64 = scmp.ne.s32.totalorder %s49, %s63
      %p65 = scmp.eq.s32.totalorder %s18, 0
      %p66 = por %p64, %p65
      %s68 = sadd.s32 %s67, 1
      %p71 = scmp.eq.s32.totalorder %s12, 1
      %p72 = scmp.ne.s32.totalorder %s67, %s69
      %p73 = scmp.eq.s32.totalorder %s12, 0
      %p74 = por %p72, %p73
      %p75 = scmp.ne.s32.totalorder %s67, %s69
      %p76 = scmp.eq.s32.totalorder %s17, 1
      %p77 = por %p75, %p76
      %p78 = scmp.ne.s32.totalorder %s69, %s70
      %p79 = scmp.eq.s32.totalorder %s17, 0
      %p80 = por %p78, %p79
      %p81 = scmp.ne.s32.totalorder %s69, %s70
      %p82 = scmp.eq.s32.totalorder %s18, 1
      %p83 = por %p81, %p82
      %p85 = scmp.ne.s32.totalorder %s70, %s84
      %p86 = scmp.eq.s32.totalorder %s18, 0
      %p87 = por %p85, %p86
      %s88 = ssub.s32 %s12, %s19
      %p89 = scmp.eq.s32.totalorder %s88, 0
      %s91 = sadd.s32 %s90, 1
      %s92 = scalar_select %p89, %s90, %s91
      %p95 = pneg %p89
      %p96 = scmp.eq.s32.totalorder %s12, 1
      %p97 = por %p95, %p96
      %p98 = scmp.ne.s32.totalorder %s90, %s93
      %p99 = scmp.eq.s32.totalorder %s12, 0
      %p100 = por %p98, %p99
      %p101 = scmp.ne.s32.totalorder %s90, %s93
      %p102 = scmp.eq.s32.totalorder %s17, 1
      %p103 = por %p101, %p102
      %p104 = scmp.ne.s32.totalorder %s93, %s94
      %p105 = scmp.eq.s32.totalorder %s17, 0
      %p106 = por %p104, %p105
      %p107 = scmp.ne.s32.totalorder %s93, %s94
      %p108 = scmp.eq.s32.totalorder %s18, 1
      %p109 = por %p107, %p108
      %p111 = scmp.ne.s32.totalorder %s94, %s110
      %p112 = scmp.eq.s32.totalorder %s18, 0
      %p113 = por %p111, %p112
      %p114 = scmp.le.s32.totalorder 1, %s12
      %p115 = scmp.lt.s32.totalorder %s12, 3
      %p116 = pnand %p114, %p115
      %p117 = pneg %p116
      // Predicated region
      $region9: #{multi_head_attention.5} parent=5 // pred_check
        _
      $region10: #{multi_head_attention.5} parent=5 // pred_check_branch
        %119 = sbr.rel (%p116) target = $region12
      $region11: #{multi_head_attention.5} parent=5 // pred_region
        %s120 = ssub.s32 %s12, 1
        // Predicated region
        $region13: #{multi_head_attention.5} parent=11 // pred_check
          %p121 = pneg %p59
        $region14: #{multi_head_attention.5} parent=11 // pred_check_branch
          %123 = sbr.rel (%p121) target = $region16
        $region15: #{multi_head_attention.5} parent=11 // pred_region
          _
        $region16: #{multi_head_attention.5} parent=11 // pred_fallthru
          _
        // Predicated region
        $region17: #{multi_head_attention.5} parent=11 // pred_check
          %p124 = pneg %p80
        $region18: #{multi_head_attention.5} parent=11 // pred_check_branch
          %126 = sbr.rel (%p124) target = $region20
        $region19: #{multi_head_attention.5} parent=11 // pred_region
          _
        $region20: #{multi_head_attention.5} parent=11 // pred_fallthru
          _
      $region12: #{multi_head_attention.5} parent=5 // pred_fallthru
        _
      %p127 = scmp.lt.s32.totalorder %s12, 2
      // Predicated region
      $region21: #{multi_head_attention.5} parent=5 // pred_check
        %p128 = pneg %p127
      $region22: #{multi_head_attention.5} parent=5 // pred_check_branch
        %130 = sbr.rel (%p128) target = $region24
      $region23: #{multi_head_attention.5} parent=5 // pred_region
        // Predicated region
        $region25: #{multi_head_attention.5} parent=23 // pred_check
          %p131 = pneg %p32
        $region26: #{multi_head_attention.5} parent=23 // pred_check_branch
          %133 = sbr.rel (%p131) target = $region28
        $region27: #{multi_head_attention.5} parent=23 // pred_region
          %s134 = smul.u32 32, %s12
          %p135 = scmp.lt.s32.totalorder %s134, 63
          %s136 = scalar_select %p135, %s134, 63
          %s137 = smul.addr %s136, 2
          %s138 = smul.addr %s137, 4
          %s139 = scalar_lea.vmem %s0, %s138
          %s140 = smul.u32 32, %s12
        $region28: #{multi_head_attention.5} parent=23 // pred_fallthru
          _
      $region24: #{multi_head_attention.5} parent=5 // pred_fallthru
        _
      %p141 = scmp.le.s32.totalorder 1, %s12
      %p142 = scmp.lt.s32.totalorder %s12, 3
      %p143 = pnand %p141, %p142
      %p144 = pneg %p143
      // Predicated region
      $region29: #{multi_head_attention.5} parent=5 // pred_check
        _
      $region30: #{multi_head_attention.5} parent=5 // pred_check_branch
        %146 = sbr.rel (%p143) target = $region32
      $region31: #{multi_head_attention.5} parent=5 // pred_region
        %s147 = ssub.s32 %s12, 1
        %s148 = smul.u32 32, %s17
        %p149 = scmp.lt.s32.totalorder %s148, 63
        %s150 = scalar_select %p149, %s148, 63
        %s151 = smul.addr %s150, 2
        %s152 = smul.addr %s151, 4
        %s153 = scalar_lea.vmem %s0, %s152
        %p154 = pneg %p38
        %p155 = pneg %p35
        %p156 = pneg %p59
        %p157 = pneg %p56
        %p158 = pneg %p80
        %p159 = pneg %p77
        %p160 = pneg %p106
        %p161 = pneg %p103
        %s162 = sand.u32 %s93, 1
        %s163 = scalar_lea.sflag [#allocation3], %s162
        %s164 = sand.u32 %s93, 1
        %s165 = smul.addr %s164, 512
        %s166 = scalar_lea.vmem [#allocation2], %s165
        %s167 = smul.u32 32, %s17
        %p168 = scmp.lt.s32.totalorder %s167, 63
        %s169 = scalar_select %p168, %s167, 63
        %s170 = smul.addr %s169, 2
        %s171 = smul.addr %s170, 4
        %s172 = scalar_lea.vmem %s0, %s171
        %s173 = smul.u32 32, %s17
        %s174 = smul.u32 32, %s17
        %v175 = vld [vmem:[%s172] sm:$0xff]
        %v176 = vld [vmem:[%s172 + $0x8] sm:$0xff]
        %v177 = vld [vmem:[%s172 + $0x10] sm:$0xff]
        %v178 = vld [vmem:[%s172 + $0x18] sm:$0xff]
        %v179 = vld [vmem:[%s172 + $0x20] sm:$0xff]
        %v180 = vld [vmem:[%s172 + $0x28] sm:$0xff]
        %v181 = vld [vmem:[%s172 + $0x30] sm:$0xff]
        %v182 = vld [vmem:[%s172 + $0x38] sm:$0xff]
        %v183 = vld [vmem:[%s172 + $0x40] sm:$0xff]
        %v184 = vld [vmem:[%s172 + $0x48] sm:$0xff]
        %v185 = vld [vmem:[%s172 + $0x50] sm:$0xff]
        %v186 = vld [vmem:[%s172 + $0x58] sm:$0xff]
        %v187 = vld [vmem:[%s172 + $0x60] sm:$0xff]
        %v188 = vld [vmem:[%s172 + $0x68] sm:$0xff]
        %v189 = vld [vmem:[%s172 + $0x70] sm:$0xff]
        %v190 = vld [vmem:[%s172 + $0x78] sm:$0xff]
        %v191 = vld [vmem:[%s172 + $0x80] sm:$0xff]
        %v192 = vld [vmem:[%s172 + $0x88] sm:$0xff]
        %v193 = vld [vmem:[%s172 + $0x90] sm:$0xff]
        %v194 = vld [vmem:[%s172 + $0x98] sm:$0xff]
        %v195 = vld [vmem:[%s172 + $0xa0] sm:$0xff]
        %v196 = vld [vmem:[%s172 + $0xa8] sm:$0xff]
        %v197 = vld [vmem:[%s172 + $0xb0] sm:$0xff]
        %v198 = vld [vmem:[%s172 + $0xb8] sm:$0xff]
        %v199 = vld [vmem:[%s172 + $0xc0] sm:$0xff]
        %v200 = vld [vmem:[%s172 + $0xc8] sm:$0xff]
        %v201 = vld [vmem:[%s172 + $0xd0] sm:$0xff]
        %v202 = vld [vmem:[%s172 + $0xd8] sm:$0xff]
        %v203 = vld [vmem:[%s172 + $0xe0] sm:$0xff]
        %v204 = vld [vmem:[%s172 + $0xe8] sm:$0xff]
        %v205 = vld [vmem:[%s172 + $0xf0] sm:$0xff]
        %v206 = vld [vmem:[%s172 + $0xf8] sm:$0xff]
        %v207 = vld [vmem:[%s1] sm:$0xff]
        %v208 = vld [vmem:[%s1 + $0x8] sm:$0xff]
        %v209 = vld [vmem:[%s1 + $0x10] sm:$0xff]
        %v210 = vld [vmem:[%s1 + $0x18] sm:$0xff]
        %v211 = vld [vmem:[%s1 + $0x20] sm:$0xff]
        %v212 = vld [vmem:[%s1 + $0x28] sm:$0xff]
        %v213 = vld [vmem:[%s1 + $0x30] sm:$0xff]
        %v214 = vld [vmem:[%s1 + $0x38] sm:$0xff]
        %v215 = vld [vmem:[%s1 + $0x40] sm:$0xff]
        %v216 = vld [vmem:[%s1 + $0x48] sm:$0xff]
        %v217 = vld [vmem:[%s1 + $0x50] sm:$0xff]
        %v218 = vld [vmem:[%s1 + $0x58] sm:$0xff]
        %v219 = vld [vmem:[%s1 + $0x60] sm:$0xff]
        %v220 = vld [vmem:[%s1 + $0x68] sm:$0xff]
        %v221 = vld [vmem:[%s1 + $0x70] sm:$0xff]
        %v222 = vld [vmem:[%s1 + $0x78] sm:$0xff]
        %v223 = vld [vmem:[%s1 + $0x80] sm:$0xff]
        %v224 = vld [vmem:[%s1 + $0x88] sm:$0xff]
        %v225 = vld [vmem:[%s1 + $0x90] sm:$0xff]
        %v226 = vld [vmem:[%s1 + $0x98] sm:$0xff]
        %v227 = vld [vmem:[%s1 + $0xa0] sm:$0xff]
        %v228 = vld [vmem:[%s1 + $0xa8] sm:$0xff]
        %v229 = vld [vmem:[%s1 + $0xb0] sm:$0xff]
        %v230 = vld [vmem:[%s1 + $0xb8] sm:$0xff]
        %v231 = vld [vmem:[%s1 + $0xc0] sm:$0xff]
        %v232 = vld [vmem:[%s1 + $0xc8] sm:$0xff]
        %v233 = vld [vmem:[%s1 + $0xd0] sm:$0xff]
        %v234 = vld [vmem:[%s1 + $0xd8] sm:$0xff]
        %v235 = vld [vmem:[%s1 + $0xe0] sm:$0xff]
        %v236 = vld [vmem:[%s1 + $0xe8] sm:$0xff]
        %v237 = vld [vmem:[%s1 + $0xf0] sm:$0xff]
        %v238 = vld [vmem:[%s1 + $0xf8] sm:$0xff]
        %v239 = vld [vmem:[%s2] sm:$0x3]
        %v241 = vlaneseq
        %v242 = vshrl.u32 %v241, 7
        %v243 = vsub.s32 0, %v242
        %v244 = vrot.slane %v239, %v243
        %v245 = vlaneseq
        %v246 = vshrl.u32 %v245, 7
        %v247 = vsub.s32 1, %v246
        %v248 = vrot.slane %v239, %v247
        %v283 = vunpack.c.l.b16 %v175
        %v284 = vunpack.c.h.b16 %v175
        %v285 = vunpack.c.l.b16 %v176
        %v286 = vunpack.c.h.b16 %v176
        %v287 = vunpack.c.l.b16 %v177
        %v288 = vunpack.c.h.b16 %v177
        %v289 = vunpack.c.l.b16 %v178
        %v290 = vunpack.c.h.b16 %v178
        %v291 = vunpack.c.l.b16 %v179
        %v292 = vunpack.c.h.b16 %v179
        %v293 = vunpack.c.l.b16 %v180
        %v294 = vunpack.c.h.b16 %v180
        %v295 = vunpack.c.l.b16 %v181
        %v296 = vunpack.c.h.b16 %v181
        %v297 = vunpack.c.l.b16 %v182
        %v298 = vunpack.c.h.b16 %v182
        %v299 = vunpack.c.l.b16 %v183
        %v300 = vunpack.c.h.b16 %v183
        %v301 = vunpack.c.l.b16 %v184
        %v302 = vunpack.c.h.b16 %v184
        %v303 = vunpack.c.l.b16 %v185
        %v304 = vunpack.c.h.b16 %v185
        %v305 = vunpack.c.l.b16 %v186
        %v306 = vunpack.c.h.b16 %v186
        %v307 = vunpack.c.l.b16 %v187
        %v308 = vunpack.c.h.b16 %v187
        %v309 = vunpack.c.l.b16 %v188
        %v310 = vunpack.c.h.b16 %v188
        %v311 = vunpack.c.l.b16 %v189
        %v312 = vunpack.c.h.b16 %v189
        %v313 = vunpack.c.l.b16 %v190
        %v314 = vunpack.c.h.b16 %v190
        %v315 = vunpack.c.l.b16 %v191
        %v316 = vunpack.c.h.b16 %v191
        %v317 = vunpack.c.l.b16 %v192
        %v318 = vunpack.c.h.b16 %v192
        %v319 = vunpack.c.l.b16 %v193
        %v320 = vunpack.c.h.b16 %v193
        %v321 = vunpack.c.l.b16 %v194
        %v322 = vunpack.c.h.b16 %v194
        %v323 = vunpack.c.l.b16 %v195
        %v324 = vunpack.c.h.b16 %v195
        %v325 = vunpack.c.l.b16 %v196
        %v326 = vunpack.c.h.b16 %v196
        %v327 = vunpack.c.l.b16 %v197
        %v328 = vunpack.c.h.b16 %v197
        %v329 = vunpack.c.l.b16 %v198
        %v330 = vunpack.c.h.b16 %v198
        %v331 = vunpack.c.l.b16 %v199
        %v332 = vunpack.c.h.b16 %v199
        %v333 = vunpack.c.l.b16 %v200
        %v334 = vunpack.c.h.b16 %v200
        %v335 = vunpack.c.l.b16 %v201
        %v336 = vunpack.c.h.b16 %v201
        %v337 = vunpack.c.l.b16 %v202
        %v338 = vunpack.c.h.b16 %v202
        %v339 = vunpack.c.l.b16 %v203
        %v340 = vunpack.c.h.b16 %v203
        %v341 = vunpack.c.l.b16 %v204
        %v342 = vunpack.c.h.b16 %v204
        %v343 = vunpack.c.l.b16 %v205
        %v344 = vunpack.c.h.b16 %v205
        %v345 = vunpack.c.l.b16 %v206
        %v346 = vunpack.c.h.b16 %v206
        %v347 = vpack.c.b16 %v285, %v283
        %v348 = vpack.c.b16 %v286, %v284
        %v349 = vpack.c.b16 %v289, %v287
        %v350 = vpack.c.b16 %v290, %v288
        %v351 = vpack.c.b16 %v293, %v291
        %v352 = vpack.c.b16 %v294, %v292
        %v353 = vpack.c.b16 %v297, %v295
        %v354 = vpack.c.b16 %v298, %v296
        %v355 = vpack.c.b16 %v301, %v299
        %v356 = vpack.c.b16 %v302, %v300
        %v357 = vpack.c.b16 %v305, %v303
        %v358 = vpack.c.b16 %v306, %v304
        %v359 = vpack.c.b16 %v309, %v307
        %v360 = vpack.c.b16 %v310, %v308
        %v361 = vpack.c.b16 %v313, %v311
        %v362 = vpack.c.b16 %v314, %v312
        %v363 = vpack.c.b16 %v317, %v315
        %v364 = vpack.c.b16 %v318, %v316
        %v365 = vpack.c.b16 %v321, %v319
        %v366 = vpack.c.b16 %v322, %v320
        %v367 = vpack.c.b16 %v325, %v323
        %v368 = vpack.c.b16 %v326, %v324
        %v369 = vpack.c.b16 %v329, %v327
        %v370 = vpack.c.b16 %v330, %v328
        %v371 = vpack.c.b16 %v333, %v331
        %v372 = vpack.c.b16 %v334, %v332
        %v373 = vpack.c.b16 %v337, %v335
        %v374 = vpack.c.b16 %v338, %v336
        %v375 = vpack.c.b16 %v341, %v339
        %v376 = vpack.c.b16 %v342, %v340
        %v377 = vpack.c.b16 %v345, %v343
        %v378 = vpack.c.b16 %v346, %v344
        %v443 = vunpack.c.l.b16 %v207
        %v444 = vunpack.c.h.b16 %v207
        %v445 = vunpack.c.l.b16 %v208
        %v446 = vunpack.c.h.b16 %v208
        %v447 = vunpack.c.l.b16 %v209
        %v448 = vunpack.c.h.b16 %v209
        %v449 = vunpack.c.l.b16 %v210
        %v450 = vunpack.c.h.b16 %v210
        %v451 = vunpack.c.l.b16 %v211
        %v452 = vunpack.c.h.b16 %v211
        %v453 = vunpack.c.l.b16 %v212
        %v454 = vunpack.c.h.b16 %v212
        %v455 = vunpack.c.l.b16 %v213
        %v456 = vunpack.c.h.b16 %v213
        %v457 = vunpack.c.l.b16 %v214
        %v458 = vunpack.c.h.b16 %v214
        %v459 = vunpack.c.l.b16 %v215
        %v460 = vunpack.c.h.b16 %v215
        %v461 = vunpack.c.l.b16 %v216
        %v462 = vunpack.c.h.b16 %v216
        %v463 = vunpack.c.l.b16 %v217
        %v464 = vunpack.c.h.b16 %v217
        %v465 = vunpack.c.l.b16 %v218
        %v466 = vunpack.c.h.b16 %v218
        %v467 = vunpack.c.l.b16 %v219
        %v468 = vunpack.c.h.b16 %v219
        %v469 = vunpack.c.l.b16 %v220
        %v470 = vunpack.c.h.b16 %v220
        %v471 = vunpack.c.l.b16 %v221
        %v472 = vunpack.c.h.b16 %v221
        %v473 = vunpack.c.l.b16 %v222
        %v474 = vunpack.c.h.b16 %v222
        %v475 = vunpack.c.l.b16 %v223
        %v476 = vunpack.c.h.b16 %v223
        %v477 = vunpack.c.l.b16 %v224
        %v478 = vunpack.c.h.b16 %v224
        %v479 = vunpack.c.l.b16 %v225
        %v480 = vunpack.c.h.b16 %v225
        %v481 = vunpack.c.l.b16 %v226
        %v482 = vunpack.c.h.b16 %v226
        %v483 = vunpack.c.l.b16 %v227
        %v484 = vunpack.c.h.b16 %v227
        %v485 = vunpack.c.l.b16 %v228
        %v486 = vunpack.c.h.b16 %v228
        %v487 = vunpack.c.l.b16 %v229
        %v488 = vunpack.c.h.b16 %v229
        %v489 = vunpack.c.l.b16 %v230
        %v490 = vunpack.c.h.b16 %v230
        %v491 = vunpack.c.l.b16 %v231
        %v492 = vunpack.c.h.b16 %v231
        %v493 = vunpack.c.l.b16 %v232
        %v494 = vunpack.c.h.b16 %v232
        %v495 = vunpack.c.l.b16 %v233
        %v496 = vunpack.c.h.b16 %v233
        %v497 = vunpack.c.l.b16 %v234
        %v498 = vunpack.c.h.b16 %v234
        %v499 = vunpack.c.l.b16 %v235
        %v500 = vunpack.c.h.b16 %v235
        %v501 = vunpack.c.l.b16 %v236
        %v502 = vunpack.c.h.b16 %v236
        %v503 = vunpack.c.l.b16 %v237
        %v504 = vunpack.c.h.b16 %v237
        %v505 = vunpack.c.l.b16 %v238
        %v506 = vunpack.c.h.b16 %v238
        %v507 = vpack.c.b16 %v445, %v443
        %v508 = vpack.c.b16 %v446, %v444
        %v509 = vpack.c.b16 %v449, %v447
        %v510 = vpack.c.b16 %v450, %v448
        %v511 = vpack.c.b16 %v453, %v451
        %v512 = vpack.c.b16 %v454, %v452
        %v513 = vpack.c.b16 %v457, %v455
        %v514 = vpack.c.b16 %v458, %v456
        %v515 = vpack.c.b16 %v461, %v459
        %v516 = vpack.c.b16 %v462, %v460
        %v517 = vpack.c.b16 %v465, %v463
        %v518 = vpack.c.b16 %v466, %v464
        %v519 = vpack.c.b16 %v469, %v467
        %v520 = vpack.c.b16 %v470, %v468
        %v521 = vpack.c.b16 %v473, %v471
        %v522 = vpack.c.b16 %v474, %v472
        %v523 = vpack.c.b16 %v477, %v475
        %v524 = vpack.c.b16 %v478, %v476
        %v525 = vpack.c.b16 %v481, %v479
        %v526 = vpack.c.b16 %v482, %v480
        %v527 = vpack.c.b16 %v485, %v483
        %v528 = vpack.c.b16 %v486, %v484
        %v529 = vpack.c.b16 %v489, %v487
        %v530 = vpack.c.b16 %v490, %v488
        %v531 = vpack.c.b16 %v493, %v491
        %v532 = vpack.c.b16 %v494, %v492
        %v533 = vpack.c.b16 %v497, %v495
        %v534 = vpack.c.b16 %v498, %v496
        %v535 = vpack.c.b16 %v501, %v499
        %v536 = vpack.c.b16 %v502, %v500
        %v537 = vpack.c.b16 %v505, %v503
        %v538 = vpack.c.b16 %v506, %v504
        %571 = vmatprep.subr.bf16.mxu0 %v508
        %572 = vmatpush1.bf16.msra.mxu0 %v507
        %573 = vmatprep.subr.bf16.mxu0 %v510
        %574 = vmatpush1.bf16.msra.mxu0 %v509
        %575 = vmatprep.subr.bf16.mxu0 %v512
        %576 = vmatpush1.bf16.msra.mxu0 %v511
        %577 = vmatprep.subr.bf16.mxu0 %v514
        %578 = vmatpush1.bf16.msra.mxu0 %v513
        %579 = vmatprep.subr.bf16.mxu0 %v516
        %580 = vmatpush1.bf16.msra.mxu0 %v515
        %581 = vmatprep.subr.bf16.mxu0 %v518
        %582 = vmatpush1.bf16.msra.mxu0 %v517
        %583 = vmatprep.subr.bf16.mxu0 %v520
        %584 = vmatpush1.bf16.msra.mxu0 %v519
        %585 = vmatprep.subr.bf16.mxu0 %v522
        %586 = vmatpush1.bf16.msra.mxu0 %v521
        %587 = vmatprep.subr.bf16.mxu0 %v524
        %588 = vmatpush1.bf16.msra.mxu0 %v523
        %589 = vmatprep.subr.bf16.mxu0 %v526
        %590 = vmatpush1.bf16.msra.mxu0 %v525
        %591 = vmatprep.subr.bf16.mxu0 %v528
        %592 = vmatpush1.bf16.msra.mxu0 %v527
        %593 = vmatprep.subr.bf16.mxu0 %v530
        %594 = vmatpush1.bf16.msra.mxu0 %v529
        %595 = vmatprep.subr.bf16.mxu0 %v532
        %596 = vmatpush1.bf16.msra.mxu0 %v531
        %597 = vmatprep.subr.bf16.mxu0 %v534
        %598 = vmatpush1.bf16.msra.mxu0 %v533
        %599 = vmatprep.subr.bf16.mxu0 %v536
        %600 = vmatpush1.bf16.msra.mxu0 %v535
        %601 = vmatprep.subr.bf16.mxu0 %v538
        %602 = vmatpush1.bf16.msra.mxu0 %v537
        %603 = vmatprep.mubr.bf16.mxu0 %v348
        %604 = vmatmul.mubr.bf16.gmra.mrb[0].mxu0 %v347
        %v605 = vpop.f32.mrb[0].mxu0
        %v606 = vadd.f32 %v244, %v605
        %v607 = vpop.f32.mrb[0].mxu0
        %v608 = vadd.f32 %v248, %v607
        %v609 = vpop.f32.mrb[0].mxu0
        %v610 = vadd.f32 %v244, %v609
        %v611 = vpop.f32.mrb[0].mxu0
        %v612 = vadd.f32 %v248, %v611
        %613 = vmatprep.mubr.bf16.mxu0 %v350
        %614 = vmatmul.mubr.bf16.gmra.mrb[0].mxu0 %v349
        %v615 = vpop.f32.mrb[0].mxu0
        %v616 = vadd.f32 %v244, %v615
        %v617 = vpop.f32.mrb[0].mxu0
        %v618 = vadd.f32 %v248, %v617
        %v619 = vpop.f32.mrb[0].mxu0
        %v620 = vadd.f32 %v244, %v619
        %v621 = vpop.f32.mrb[0].mxu0
        %v622 = vadd.f32 %v248, %v621
        %623 = vmatprep.mubr.bf16.mxu0 %v352
        %624 = vmatmul.mubr.bf16.gmra.mrb[0].mxu0 %v351
        %v625 = vpop.f32.mrb[0].mxu0
        %v626 = vadd.f32 %v244, %v625
        %v627 = vpop.f32.mrb[0].mxu0
        %v628 = vadd.f32 %v248, %v627
        %v629 = vpop.f32.mrb[0].mxu0
        %v630 = vadd.f32 %v244, %v629
        %v631 = vpop.f32.mrb[0].mxu0
        %v632 = vadd.f32 %v248, %v631
        %633 = vmatprep.mubr.bf16.mxu0 %v354
        %634 = vmatmul.mubr.bf16.gmra.mrb[0].mxu0 %v353
        %v635 = vpop.f32.mrb[0].mxu0
        %v636 = vadd.f32 %v244, %v635
        %v637 = vpop.f32.mrb[0].mxu0
        %v638 = vadd.f32 %v248, %v637
        %v639 = vpop.f32.mrb[0].mxu0
        %v640 = vadd.f32 %v244, %v639
        %v641 = vpop.f32.mrb[0].mxu0
        %v642 = vadd.f32 %v248, %v641
        %643 = vmatprep.mubr.bf16.mxu0 %v356
        %644 = vmatmul.mubr.bf16.gmra.mrb[0].mxu0 %v355
        %v645 = vpop.f32.mrb[0].mxu0
        %v646 = vadd.f32 %v244, %v645
        %v647 = vpop.f32.mrb[0].mxu0
        %v648 = vadd.f32 %v248, %v647
        %v649 = vpop.f32.mrb[0].mxu0
        %v650 = vadd.f32 %v244, %v649
        %v651 = vpop.f32.mrb[0].mxu0
        %v652 = vadd.f32 %v248, %v651
        %653 = vmatprep.mubr.bf16.mxu0 %v358
        %654 = vmatmul.mubr.bf16.gmra.mrb[0].mxu0 %v357
        %v655 = vpop.f32.mrb[0].mxu0
        %v656 = vadd.f32 %v244, %v655
        %v657 = vpop.f32.mrb[0].mxu0
        %v658 = vadd.f32 %v248, %v657
        %v659 = vpop.f32.mrb[0].mxu0
        %v660 = vadd.f32 %v244, %v659
        %v661 = vpop.f32.mrb[0].mxu0
        %v662 = vadd.f32 %v248, %v661
        %663 = vmatprep.mubr.bf16.mxu0 %v360
        %664 = vmatmul.mubr.bf16.gmra.mrb[0].mxu0 %v359
        %v665 = vpop.f32.mrb[0].mxu0
        %v666 = vadd.f32 %v244, %v665
        %v667 = vpop.f32.mrb[0].mxu0
        %v668 = vadd.f32 %v248, %v667
        %v669 = vpop.f32.mrb[0].mxu0
        %v670 = vadd.f32 %v244, %v669
        %v671 = vpop.f32.mrb[0].mxu0
        %v672 = vadd.f32 %v248, %v671
        %673 = vmatprep.mubr.bf16.mxu0 %v362
        %674 = vmatmul.mubr.bf16.gmra.mrb[0].mxu0 %v361
        %v675 = vpop.f32.mrb[0].mxu0
        %v676 = vadd.f32 %v244, %v675
        %v677 = vpop.f32.mrb[0].mxu0
        %v678 = vadd.f32 %v248, %v677
        %v679 = vpop.f32.mrb[0].mxu0
        %v680 = vadd.f32 %v244, %v679
        %v681 = vpop.f32.mrb[0].mxu0
        %v682 = vadd.f32 %v248, %v681
        %683 = vmatprep.mubr.bf16.mxu0 %v364
        %684 = vmatmul.mubr.bf16.gmra.mrb[0].mxu0 %v363
        %v685 = vpop.f32.mrb[0].mxu0
        %v686 = vadd.f32 %v244, %v685
        %v687 = vpop.f32.mrb[0].mxu0
        %v688 = vadd.f32 %v248, %v687
        %v689 = vpop.f32.mrb[0].mxu0
        %v690 = vadd.f32 %v244, %v689
        %v691 = vpop.f32.mrb[0].mxu0
        %v692 = vadd.f32 %v248, %v691
        %693 = vmatprep.mubr.bf16.mxu0 %v366
        %694 = vmatmul.mubr.bf16.gmra.mrb[0].mxu0 %v365
        %v695 = vpop.f32.mrb[0].mxu0
        %v696 = vadd.f32 %v244, %v695
        %v697 = vpop.f32.mrb[0].mxu0
        %v698 = vadd.f32 %v248, %v697
        %v699 = vpop.f32.mrb[0].mxu0
        %v700 = vadd.f32 %v244, %v699
        %v701 = vpop.f32.mrb[0].mxu0
        %v702 = vadd.f32 %v248, %v701
        %703 = vmatprep.mubr.bf16.mxu0 %v368
        %704 = vmatmul.mubr.bf16.gmra.mrb[0].mxu0 %v367
        %v705 = vpop.f32.mrb[0].mxu0
        %v706 = vadd.f32 %v244, %v705
        %v707 = vpop.f32.mrb[0].mxu0
        %v708 = vadd.f32 %v248, %v707
        %v709 = vpop.f32.mrb[0].mxu0
        %v710 = vadd.f32 %v244, %v709
        %v711 = vpop.f32.mrb[0].mxu0
        %v712 = vadd.f32 %v248, %v711
        %713 = vmatprep.mubr.bf16.mxu0 %v370
        %714 = vmatmul.mubr.bf16.gmra.mrb[0].mxu0 %v369
        %v715 = vpop.f32.mrb[0].mxu0
        %v716 = vadd.f32 %v244, %v715
        %v717 = vpop.f32.mrb[0].mxu0
        %v718 = vadd.f32 %v248, %v717
        %v719 = vpop.f32.mrb[0].mxu0
        %v720 = vadd.f32 %v244, %v719
        %v721 = vpop.f32.mrb[0].mxu0
        %v722 = vadd.f32 %v248, %v721
        %723 = vmatprep.mubr.bf16.mxu0 %v372
        %724 = vmatmul.mubr.bf16.gmra.mrb[0].mxu0 %v371
        %v725 = vpop.f32.mrb[0].mxu0
        %v726 = vadd.f32 %v244, %v725
        %v727 = vpop.f32.mrb[0].mxu0
        %v728 = vadd.f32 %v248, %v727
        %v729 = vpop.f32.mrb[0].mxu0
        %v730 = vadd.f32 %v244, %v729
        %v731 = vpop.f32.mrb[0].mxu0
        %v732 = vadd.f32 %v248, %v731
        %733 = vmatprep.mubr.bf16.mxu0 %v374
        %734 = vmatmul.mubr.bf16.gmra.mrb[0].mxu0 %v373
        %v735 = vpop.f32.mrb[0].mxu0
        %v736 = vadd.f32 %v244, %v735
        %v737 = vpop.f32.mrb[0].mxu0
        %v738 = vadd.f32 %v248, %v737
        %v739 = vpop.f32.mrb[0].mxu0
        %v740 = vadd.f32 %v244, %v739
        %v741 = vpop.f32.mrb[0].mxu0
        %v742 = vadd.f32 %v248, %v741
        %743 = vmatprep.mubr.bf16.mxu0 %v376
        %744 = vmatmul.mubr.bf16.gmra.mrb[0].mxu0 %v375
        %v745 = vpop.f32.mrb[0].mxu0
        %v746 = vadd.f32 %v244, %v745
        %v747 = vpop.f32.mrb[0].mxu0
        %v748 = vadd.f32 %v248, %v747
        %v749 = vpop.f32.mrb[0].mxu0
        %v750 = vadd.f32 %v244, %v749
        %v751 = vpop.f32.mrb[0].mxu0
        %v752 = vadd.f32 %v248, %v751
        %753 = vmatprep.mubr.bf16.mxu0 %v378
        %754 = vmatmul.mubr.bf16.gmra.mrb[0].mxu0 %v377
        %v755 = vpop.f32.mrb[0].mxu0
        %v756 = vadd.f32 %v244, %v755
        %v757 = vpop.f32.mrb[0].mxu0
        %v758 = vadd.f32 %v248, %v757
        %v759 = vpop.f32.mrb[0].mxu0
        %v760 = vadd.f32 %v244, %v759
        %v761 = vpop.f32.mrb[0].mxu0
        %v762 = vadd.f32 %v248, %v761
        %763 = vdwg.mxu0
        %764 = vst [vmem:[%s166] sm:$0xff] %v606
        %765 = vst [vmem:[%s166 + $0x8] sm:$0xff] %v608
        %766 = vst [vmem:[%s166 + $0x10] sm:$0xff] %v610
        %767 = vst [vmem:[%s166 + $0x18] sm:$0xff] %v612
        %768 = vst [vmem:[%s166 + $0x20] sm:$0xff] %v616
        %769 = vst [vmem:[%s166 + $0x28] sm:$0xff] %v618
        %770 = vst [vmem:[%s166 + $0x30] sm:$0xff] %v620
        %771 = vst [vmem:[%s166 + $0x38] sm:$0xff] %v622
        %772 = vst [vmem:[%s166 + $0x40] sm:$0xff] %v626
        %773 = vst [vmem:[%s166 + $0x48] sm:$0xff] %v628
        %774 = vst [vmem:[%s166 + $0x50] sm:$0xff] %v630
        %775 = vst [vmem:[%s166 + $0x58] sm:$0xff] %v632
        %776 = vst [vmem:[%s166 + $0x60] sm:$0xff] %v636
        %777 = vst [vmem:[%s166 + $0x68] sm:$0xff] %v638
        %778 = vst [vmem:[%s166 + $0x70] sm:$0xff] %v640
        %779 = vst [vmem:[%s166 + $0x78] sm:$0xff] %v642
        %780 = vst [vmem:[%s166 + $0x80] sm:$0xff] %v646
        %781 = vst [vmem:[%s166 + $0x88] sm:$0xff] %v648
        %782 = vst [vmem:[%s166 + $0x90] sm:$0xff] %v650
        %783 = vst [vmem:[%s166 + $0x98] sm:$0xff] %v652
        %784 = vst [vmem:[%s166 + $0xa0] sm:$0xff] %v656
        %785 = vst [vmem:[%s166 + $0xa8] sm:$0xff] %v658
        %786 = vst [vmem:[%s166 + $0xb0] sm:$0xff] %v660
        %787 = vst [vmem:[%s166 + $0xb8] sm:$0xff] %v662
        %788 = vst [vmem:[%s166 + $0xc0] sm:$0xff] %v666
        %789 = vst [vmem:[%s166 + $0xc8] sm:$0xff] %v668
        %790 = vst [vmem:[%s166 + $0xd0] sm:$0xff] %v670
        %791 = vst [vmem:[%s166 + $0xd8] sm:$0xff] %v672
        %792 = vst [vmem:[%s166 + $0xe0] sm:$0xff] %v676
        %793 = vst [vmem:[%s166 + $0xe8] sm:$0xff] %v678
        %794 = vst [vmem:[%s166 + $0xf0] sm:$0xff] %v680
        %795 = vst [vmem:[%s166 + $0xf8] sm:$0xff] %v682
        %796 = vst [vmem:[%s166 + $0x100] sm:$0xff] %v686
        %797 = vst [vmem:[%s166 + $0x108] sm:$0xff] %v688
        %798 = vst [vmem:[%s166 + $0x110] sm:$0xff] %v690
        %799 = vst [vmem:[%s166 + $0x118] sm:$0xff] %v692
        %800 = vst [vmem:[%s166 + $0x120] sm:$0xff] %v696
        %801 = vst [vmem:[%s166 + $0x128] sm:$0xff] %v698
        %802 = vst [vmem:[%s166 + $0x130] sm:$0xff] %v700
        %803 = vst [vmem:[%s166 + $0x138] sm:$0xff] %v702
        %804 = vst [vmem:[%s166 + $0x140] sm:$0xff] %v706
        %805 = vst [vmem:[%s166 + $0x148] sm:$0xff] %v708
        %806 = vst [vmem:[%s166 + $0x150] sm:$0xff] %v710
        %807 = vst [vmem:[%s166 + $0x158] sm:$0xff] %v712
        %808 = vst [vmem:[%s166 + $0x160] sm:$0xff] %v716
        %809 = vst [vmem:[%s166 + $0x168] sm:$0xff] %v718
        %810 = vst [vmem:[%s166 + $0x170] sm:$0xff] %v720
        %811 = vst [vmem:[%s166 + $0x178] sm:$0xff] %v722
        %812 = vst [vmem:[%s166 + $0x180] sm:$0xff] %v726
        %813 = vst [vmem:[%s166 + $0x188] sm:$0xff] %v728
        %814 = vst [vmem:[%s166 + $0x190] sm:$0xff] %v730
        %815 = vst [vmem:[%s166 + $0x198] sm:$0xff] %v732
        %816 = vst [vmem:[%s166 + $0x1a0] sm:$0xff] %v736
        %817 = vst [vmem:[%s166 + $0x1a8] sm:$0xff] %v738
        %818 = vst [vmem:[%s166 + $0x1b0] sm:$0xff] %v740
        %819 = vst [vmem:[%s166 + $0x1b8] sm:$0xff] %v742
        %820 = vst [vmem:[%s166 + $0x1c0] sm:$0xff] %v746
        %821 = vst [vmem:[%s166 + $0x1c8] sm:$0xff] %v748
        %822 = vst [vmem:[%s166 + $0x1d0] sm:$0xff] %v750
        %823 = vst [vmem:[%s166 + $0x1d8] sm:$0xff] %v752
        %824 = vst [vmem:[%s166 + $0x1e0] sm:$0xff] %v756
        %825 = vst [vmem:[%s166 + $0x1e8] sm:$0xff] %v758
        %826 = vst [vmem:[%s166 + $0x1f0] sm:$0xff] %v760
        %827 = vst [vmem:[%s166 + $0x1f8] sm:$0xff] %v762
        %s828 = sand.u32 %s93, 1
        %s829 = scalar_lea.sflag [#allocation3], %s828
        %s830 = sand.u32 %s93, 1
        %s831 = smul.addr %s830, 512
        %s832 = scalar_lea.vmem [#allocation2], %s831
        // Predicated region
        $region33: #{multi_head_attention.5} parent=31 // pred_check
          %p833 = pneg %p103
        $region34: #{multi_head_attention.5} parent=31 // pred_check_branch
          %835 = sbr.rel (%p833) target = $region36
        $region35: #{multi_head_attention.5} parent=31 // pred_region
          %s836 = smul.u32 32, %s17
          %s838 = ssub.s32 8192, 8192
          %839 = vsyncadd %s829, %s838
          %s840 = smul.addr %s836, 2
          %s841 = smul.addr %s840, 128
          %s842 = scalar_lea.hbm %s3, %s841
          %s843 = sshll.u32 %s832, 4
          %s844 = int_to_ptr.vmem [resolvable:$true] %s843
          %849 = dma.vmem_to_hbm [thread:$0]  %s844, 8192, %s842, %s829, 256, 256, 16
        $region36: #{multi_head_attention.5} parent=31 // pred_fallthru
          _
      $region32: #{multi_head_attention.5} parent=5 // pred_fallthru
        _
      %p850 = scmp.le.s32.totalorder 2, %s12
      // Predicated region
      $region37: #{multi_head_attention.5} parent=5 // pred_check
        %p851 = pneg %p850
      $region38: #{multi_head_attention.5} parent=5 // pred_check_branch
        %853 = sbr.rel (%p851) target = $region40
      $region39: #{multi_head_attention.5} parent=5 // pred_region
        %s854 = ssub.s32 %s12, 2
        // Predicated region
        $region41: #{multi_head_attention.5} parent=39 // pred_check
          %p855 = pneg %p109
        $region42: #{multi_head_attention.5} parent=39 // pred_check_branch
          %857 = sbr.rel (%p855) target = $region44
        $region43: #{multi_head_attention.5} parent=39 // pred_region
          %s858 = sand.u32 %s94, 1
          %s859 = scalar_lea.sflag [#allocation3], %s858
          %s860 = sand.u32 %s94, 1
          %s861 = smul.addr %s860, 512
          %s862 = scalar_lea.vmem [#allocation2], %s861
          %863 = dma.done %s859, 8192
        $region44: #{multi_head_attention.5} parent=39 // pred_fallthru
          _
      $region40: #{multi_head_attention.5} parent=5 // pred_fallthru
        _
    $region6: #{multi_head_attention.5} parent=1 // loop_footer
      %s16 = sadd.s32 1, %s12
    $region7: #{multi_head_attention.5} parent=1 // loop_footer_branch
      %11 = sbr.rel target = $region3
    $region8: #{multi_head_attention.5} parent=1 // loop_exit
      _
    %864 = vsyncpa [#allocation3], 1
    %s865 = scalar_lea.sflag [#allocation3], 1
    %866 = vsyncpa %s865, 1

</llo_original>
